<compile_context>
chip_gen: v7x
topology: tpu7x:2x2x1
jax: 0.10.0
libtpu: 0.0.40
codegen_flags: <defaults>
</compile_context>

<pallas_src>
import math

import jax
import jax.numpy as jnp
from jax.experimental import pallas as pl
from jax.experimental.pallas import tpu as pltpu


# ------------------------------ fused Pallas kernel ------------------------------

def _fused_forward_kernel(x0_ref, x1_ref, x2_ref, x3_ref,
                          t1_ref, b1_ref, t2_ref, b2_ref,
                          wb1_ref, bf1_ref, wf2_ref, bf2_ref,
                          o_ref):
    """Whole MNIST forward for one batch tile (bt images, bt % 8 == 0).

    x{r}_ref : (7, bt, 28)   image rows h with h % 4 == r
    t1_ref   : (5, 28, 768)  conv1 Toeplitz slabs, col = wpar*384 + w1*32 + c
    b1_ref   : (1, 384)      conv1 bias tiled over w1
    t2_ref   : (5, 384, 256) conv2 Toeplitz slabs, col = wpar*128 + w3*32 + c
    b2_ref   : (1, 128)      conv2 bias tiled over w3
    wb1_ref  : (4, 128, 50)  fc1 weights regrouped per pooled row h3
    bf1_ref  : (1, 50), wf2_ref : (50, 10), bf2_ref : (1, 10)
    o_ref    : (bt, 10)      softmax probabilities
    """
    bt = o_ref.shape[0]
    xs = (x0_ref[...], x1_ref[...], x2_ref[...], x3_ref[...])   # each (7, bt, 28)

    # ---- stage 1: conv1 (1->32, 5x5) + bias + ReLU + 2x2 maxpool ------------
    # p1[q]: (6*bt, 384); row = u*bt + b  (pooled row h1 = 2u+q), lane = w1*32+c
    p1 = []
    for q in range(2):
        corners = []
        for p in range(2):                      # h-parity inside the 2x2 window
            acc = None
            for i in range(5):                  # conv1 kernel row
                t = 2 * q + p + i               # image row = 4*u + t
                lhs = xs[t % 4][t // 4:t // 4 + 6, :, :].reshape(6 * bt, 28)
                term = jnp.dot(lhs, t1_ref[i],
                               preferred_element_type=jnp.float32)
                acc = term if acc is None else acc + term
            corners.append(acc[:, :384])        # w-parity 0 columns
            corners.append(acc[:, 384:])        # w-parity 1 columns
        pooled = jnp.maximum(jnp.maximum(corners[0], corners[1]),
                             jnp.maximum(corners[2], corners[3]))
        p1.append(jnp.maximum(pooled + b1_ref[...], 0.0))

    # ---- stage 2: conv2 (32->32, 5x5) + bias + ReLU + 2x2 maxpool -----------
    # z: (4*bt, 128); row = h3*bt + b, lane = w3*32 + c
    corners2 = []
    for p in range(2):                          # h-parity inside the 2x2 window
        acc = None
        for i in range(5):                      # conv2 kernel row
            t = p + i                           # pooled1 row h1 = 2*h3 + t
            lhs = p1[t % 2][(t // 2) * bt:(t // 2 + 4) * bt, :]
            term = jnp.dot(lhs, t2_ref[i], preferred_element_type=jnp.float32)
            acc = term if acc is None else acc + term
        corners2.append(acc[:, :128])
        corners2.append(acc[:, 128:])
    pooled2 = jnp.maximum(jnp.maximum(corners2[0], corners2[1]),
                          jnp.maximum(corners2[2], corners2[3]))
    z = jnp.maximum(pooled2 + b2_ref[...], 0.0)            # (4*bt, 128)

    # ---- stage 3: Linear(512,50) -> tanh -> Linear(50,10) -> softmax --------
    hacc = None
    for h3 in range(4):                         # torch flatten folded into weights
        term = jnp.dot(z[h3 * bt:(h3 + 1) * bt, :], wb1_ref[h3],
                       preferred_element_type=jnp.float32)
        hacc = term if hacc is None else hacc + term
    h = jnp.tanh(hacc + bf1_ref[...])                       # (bt, 50)
    logits = jnp.dot(h, wf2_ref[...],
                     preferred_element_type=jnp.float32) + bf2_ref[...]
    mx = jnp.max(logits, axis=1, keepdims=True)
    e = jnp.exp(logits - mx)
    s = jnp.sum(e, axis=1, keepdims=True)
    # exact reciprocal keeps the f32 reference check tight; approx=True is a
    # free EUP-slot option if looser softmax numerics are acceptable.
    o_ref[...] = (e * pl.reciprocal(s, approx=False)).astype(o_ref.dtype)


# -------------------------- host-side weight repacking --------------------------

def _prepare_weights(params):
    """One-time repack of PyTorch-layout weights into MXU-friendly slabs (tiny)."""
    # conv1 -> Toeplitz over the width axis, columns grouped by pool-w parity.
    w1 = params["w_conv1"].reshape(32, 5, 5)                              # (c, i, j)
    w1p = jnp.concatenate([w1, jnp.zeros((32, 5, 1), w1.dtype)], axis=2)  # j=5 -> 0
    w_in = jnp.arange(28)[:, None, None]
    wpar = jnp.arange(2)[None, :, None]
    w1i = jnp.arange(12)[None, None, :]
    d = w_in - 2 * w1i - wpar                                             # (28,2,12)
    d = jnp.where((d >= 0) & (d < 5), d, 5)
    t1 = w1p[:, :, d]                                                     # (c,i,28,2,12)
    t1 = jnp.transpose(t1, (1, 2, 3, 4, 0)).reshape(5, 28, 768)

    # conv2 -> Toeplitz over the width axis of the packed (w1, c_in) lanes.
    w2 = params["w_conv2"]                                                # (co,ci,5,5)
    w2p = jnp.concatenate([w2, jnp.zeros((32, 32, 5, 1), w2.dtype)], axis=3)
    w1i = jnp.arange(12)[:, None, None]
    wpar = jnp.arange(2)[None, :, None]
    w3i = jnp.arange(4)[None, None, :]
    d2 = w1i - 2 * w3i - wpar                                             # (12,2,4)
    d2 = jnp.where((d2 >= 0) & (d2 < 5), d2, 5)
    t2 = w2p[:, :, :, d2]                                                 # (co,ci,5,12,2,4)
    t2 = jnp.transpose(t2, (2, 3, 1, 4, 5, 0)).reshape(5, 384, 256)

    # fc1: torch flatten order is (c, h3, w3); regroup rows per pooled row h3
    # with in-block order (w3, c) to match the kernel's packed lane layout.
    wb1 = params["w_fc1"].reshape(32, 4, 4, 50)                           # (c,h3,w3,n)
    wb1 = jnp.transpose(wb1, (1, 2, 0, 3)).reshape(4, 128, 50)

    return {
        "t1": t1,
        "b1": jnp.tile(params["b_conv1"], 12)[None, :],                   # (1, 384)
        "t2": t2,
        "b2": jnp.tile(params["b_conv2"], 4)[None, :],                    # (1, 128)
        "wb1": wb1,
        "bf1": params["b_fc1"][None, :],                                  # (1, 50)
        "wf2": params["w_fc2"],                                           # (50, 10)
        "bf2": params["b_fc2"][None, :],                                  # (1, 10)
    }


# ------------------------------ forward wrapper ------------------------------

def conv_mnist_forward(x_nchw, packed):
    """x_nchw: (N, 1, 28, 28) float32 -> (N, 10) softmax probabilities."""
    n = x_nchw.shape[0]
    bt = min(32, ((n + 7) // 8) * 8)            # batch tile, multiple of 8
    n_pad = ((n + bt - 1) // bt) * bt

    x = x_nchw.reshape(n, 28, 28)
    if n_pad != n:
        x = jnp.pad(x, ((0, n_pad - n), (0, 0), (0, 0)))
    xt = jnp.transpose(x, (1, 0, 2))            # (28, n_pad, 28): leading = image row
    xr = [xt[r::4] for r in range(4)]           # 4 x (7, n_pad, 28), rows h % 4 == r

    batch_spec = pl.BlockSpec((7, bt, 28), lambda i: (0, i, 0))

    def full(shape):
        return pl.BlockSpec(shape, lambda i: (0,) * len(shape))

    out = pl.pallas_call(
        _fused_forward_kernel,
        out_shape=jax.ShapeDtypeStruct((n_pad, 10), jnp.float32),
        grid_spec=pltpu.PrefetchScalarGridSpec(
            num_scalar_prefetch=0,
            grid=(n_pad // bt,),
            in_specs=[batch_spec, batch_spec, batch_spec, batch_spec,
                      full((5, 28, 768)), full((1, 384)),
                      full((5, 384, 256)), full((1, 128)),
                      full((4, 128, 50)), full((1, 50)),
                      full((50, 10)), full((1, 10))],
            out_specs=pl.BlockSpec((bt, 10), lambda i: (i, 0)),
        ),
        compiler_params=pltpu.CompilerParams(
            dimension_semantics=("parallel",),          # v7x: 2 TCs split the batch
            vmem_limit_bytes=32 * 1024 * 1024,
        ),
    )(xr[0], xr[1], xr[2], xr[3],
      packed["t1"], packed["b1"], packed["t2"], packed["b2"],
      packed["wb1"], packed["bf1"], packed["wf2"], packed["bf2"])
    return out[:n]


# ----------------------- deterministic parameter init -----------------------

def _xavier_uniform(key, shape, gain):
    cout, cin, kh, kw = shape
    fan_in, fan_out = cin * kh * kw, cout * kh * kw
    bound = gain * math.sqrt(6.0 / (fan_in + fan_out))
    return jax.random.uniform(key, shape, jnp.float32, -bound, bound)


def _uniform_fan_in(key, shape, fan_in):
    bound = 1.0 / math.sqrt(fan_in)
    return jax.random.uniform(key, shape, jnp.float32, -bound, bound)


def init_params(key):
    ks = jax.random.split(key, 8)
    return {
        "w_conv1": _xavier_uniform(ks[0], (32, 1, 5, 5), gain=1.414),
        "b_conv1": _uniform_fan_in(ks[1], (32,), 1 * 5 * 5),
        "w_conv2": _xavier_uniform(ks[2], (32, 32, 5, 5), gain=1.414),
        "b_conv2": _uniform_fan_in(ks[3], (32,), 32 * 5 * 5),
        "w_fc1": _uniform_fan_in(ks[4], (512, 50), 512),
        "b_fc1": _uniform_fan_in(ks[5], (50,), 512),
        "w_fc2": _uniform_fan_in(ks[6], (50, 10), 50),
        "b_fc2": _uniform_fan_in(ks[7], (10,), 50),
    }


# ------------------------------- pure-JAX reference -------------------------------

def reference_forward(x_nchw, params):
    def conv(x, w, b):
        y = jax.lax.conv_general_dilated(
            x, w, window_strides=(1, 1), padding="VALID",
            dimension_numbers=("NCHW", "OIHW", "NCHW"))
        return jnp.maximum(y + b[None, :, None, None], 0.0)

    def pool(x):  # NCHW maxpool 2x2
        N, C, H, W = x.shape
        return jnp.max(x.reshape(N, C, H // 2, 2, W // 2, 2), axis=(3, 5))

    y = pool(conv(x_nchw, params["w_conv1"], params["b_conv1"]))
    y = pool(conv(y, params["w_conv2"], params["b_conv2"]))
    feat = y.reshape(x_nchw.shape[0], -1)
    h = jnp.tanh(feat @ params["w_fc1"] + params["b_fc1"])
    logits = h @ params["w_fc2"] + params["b_fc2"]
    return jax.nn.softmax(logits, axis=1)


# --------------------------------- main ---------------------------------

if __name__ == "__main__":
    key = jax.random.PRNGKey(0)
    k_x, k_p = jax.random.split(key)
    x = jax.random.normal(k_x, (2, 1, 28, 28), jnp.float32)   # MNIST-shaped NCHW input
    params = init_params(k_p)

    packed = _prepare_weights(params)                          # one-time weight repack
    fwd = jax.jit(conv_mnist_forward)
    out = jax.block_until_ready(fwd(x, packed))
    assert out.shape == (2, 10), out.shape

    ref = jax.block_until_ready(reference_forward(x, params))
    max_err = float(jnp.max(jnp.abs(out - ref)))
    assert jnp.allclose(out, ref, atol=2e-3), max_err
    assert jnp.allclose(jnp.sum(out, axis=1), 1.0, atol=1e-5)

    # TODO(synk): CIFAR branch (Conv2d(3,32,5) / Linear(800,50), dataset_type
    # dispatch) follows the same fused-Toeplitz scheme; only MNIST is wired up.
    print("KERNEL_OK")
</pallas_src>

<mosaic_0001>
module attributes {stable_mosaic.version = 11 : i64} {
  func.func @_fused_forward_kernel(%arg0: i32, %arg1: memref<7x8x28xf32, #tpu.memory_space<vmem>>, %arg2: memref<7x8x28xf32, #tpu.memory_space<vmem>>, %arg3: memref<7x8x28xf32, #tpu.memory_space<vmem>>, %arg4: memref<7x8x28xf32, #tpu.memory_space<vmem>>, %arg5: memref<5x28x768xf32, #tpu.memory_space<vmem>>, %arg6: memref<1x384xf32, #tpu.memory_space<vmem>>, %arg7: memref<5x384x256xf32, #tpu.memory_space<vmem>>, %arg8: memref<1x128xf32, #tpu.memory_space<vmem>>, %arg9: memref<4x128x50xf32, #tpu.memory_space<vmem>>, %arg10: memref<1x50xf32, #tpu.memory_space<vmem>>, %arg11: memref<50x10xf32, #tpu.memory_space<vmem>>, %arg12: memref<1x10xf32, #tpu.memory_space<vmem>>, %arg13: memref<8x10xf32, #tpu.memory_space<vmem>>) attributes {dimension_semantics = [#tpu.dimension_semantics<parallel>], iteration_bounds = array<i64: 1>, scalar_prefetch = 0 : i64, scratch_operands = 0 : i64, tpu.core_type = #tpu.core_type<tc>, window_params = [{transform_indices = @transform_0, window_bounds = array<i64: 7, 8, 28>}, {transform_indices = @transform_1, window_bounds = array<i64: 7, 8, 28>}, {transform_indices = @transform_2, window_bounds = array<i64: 7, 8, 28>}, {transform_indices = @transform_3, window_bounds = array<i64: 7, 8, 28>}, {pipeline_mode = #tpu.pipeline_mode<synchronous>, transform_indices = @transform_4, window_bounds = array<i64: 5, 28, 768>}, {pipeline_mode = #tpu.pipeline_mode<synchronous>, transform_indices = @transform_5, window_bounds = array<i64: 1, 384>}, {pipeline_mode = #tpu.pipeline_mode<synchronous>, transform_indices = @transform_6, window_bounds = array<i64: 5, 384, 256>}, {pipeline_mode = #tpu.pipeline_mode<synchronous>, transform_indices = @transform_7, window_bounds = array<i64: 1, 128>}, {pipeline_mode = #tpu.pipeline_mode<synchronous>, transform_indices = @transform_8, window_bounds = array<i64: 4, 128, 50>}, {pipeline_mode = #tpu.pipeline_mode<synchronous>, transform_indices = @transform_9, window_bounds = array<i64: 1, 50>}, {pipeline_mode = #tpu.pipeline_mode<synchronous>, transform_indices = @transform_10, window_bounds = array<i64: 50, 10>}, {pipeline_mode = #tpu.pipeline_mode<synchronous>, transform_indices = @transform_11, window_bounds = array<i64: 1, 10>}, {transform_indices = @transform_12, window_bounds = array<i64: 8, 10>}]} {
    %c0 = arith.constant 0 : index
    %c0_0 = arith.constant 0 : index
    %c0_1 = arith.constant 0 : index
    %0 = vector.load %arg1[%c0, %c0_0, %c0_1] : memref<7x8x28xf32, #tpu.memory_space<vmem>>, vector<7x8x28xf32>
    %c0_2 = arith.constant 0 : index
    %c0_3 = arith.constant 0 : index
    %c0_4 = arith.constant 0 : index
    %1 = vector.load %arg2[%c0_2, %c0_3, %c0_4] : memref<7x8x28xf32, #tpu.memory_space<vmem>>, vector<7x8x28xf32>
    %c0_5 = arith.constant 0 : index
    %c0_6 = arith.constant 0 : index
    %c0_7 = arith.constant 0 : index
    %2 = vector.load %arg3[%c0_5, %c0_6, %c0_7] : memref<7x8x28xf32, #tpu.memory_space<vmem>>, vector<7x8x28xf32>
    %c0_8 = arith.constant 0 : index
    %c0_9 = arith.constant 0 : index
    %c0_10 = arith.constant 0 : index
    %3 = vector.load %arg4[%c0_8, %c0_9, %c0_10] : memref<7x8x28xf32, #tpu.memory_space<vmem>>, vector<7x8x28xf32>
    %4 = vector.extract_strided_slice %0 {offsets = [0, 0, 0], sizes = [6, 8, 28], strides = [1, 1, 1]} : vector<7x8x28xf32> to vector<6x8x28xf32>
    %5 = vector.shape_cast %4 : vector<6x8x28xf32> to vector<48x28xf32>
    %c0_11 = arith.constant 0 : index
    %c0_12 = arith.constant 0 : index
    %c0_13 = arith.constant 0 : index
    %6 = vector.load %arg5[%c0_11, %c0_12, %c0_13] : memref<5x28x768xf32, #tpu.memory_space<vmem>>, vector<1x28x768xf32>
    %7 = vector.shape_cast %6 : vector<1x28x768xf32> to vector<28x768xf32>
    %cst = arith.constant dense<0.000000e+00> : vector<48x768xf32>
    %8 = tpu.matmul %5, %7, %cst {dimension_numbers = #tpu.dot_dimension_numbers<[1], [0], [0], [1], [0, 0, 1, 1], [], []>} : vector<48x28xf32>, vector<28x768xf32>, vector<48x768xf32> -> vector<48x768xf32>
    %9 = vector.extract_strided_slice %1 {offsets = [0, 0, 0], sizes = [6, 8, 28], strides = [1, 1, 1]} : vector<7x8x28xf32> to vector<6x8x28xf32>
    %10 = vector.shape_cast %9 : vector<6x8x28xf32> to vector<48x28xf32>
    %c1 = arith.constant 1 : index
    %c0_14 = arith.constant 0 : index
    %c0_15 = arith.constant 0 : index
    %11 = vector.load %arg5[%c1, %c0_14, %c0_15] : memref<5x28x768xf32, #tpu.memory_space<vmem>>, vector<1x28x768xf32>
    %12 = vector.shape_cast %11 : vector<1x28x768xf32> to vector<28x768xf32>
    %cst_16 = arith.constant dense<0.000000e+00> : vector<48x768xf32>
    %13 = tpu.matmul %10, %12, %cst_16 {dimension_numbers = #tpu.dot_dimension_numbers<[1], [0], [0], [1], [0, 0, 1, 1], [], []>} : vector<48x28xf32>, vector<28x768xf32>, vector<48x768xf32> -> vector<48x768xf32>
    %14 = arith.addf %8, %13 : vector<48x768xf32>
    %15 = vector.extract_strided_slice %2 {offsets = [0, 0, 0], sizes = [6, 8, 28], strides = [1, 1, 1]} : vector<7x8x28xf32> to vector<6x8x28xf32>
    %16 = vector.shape_cast %15 : vector<6x8x28xf32> to vector<48x28xf32>
    %c2 = arith.constant 2 : index
    %c0_17 = arith.constant 0 : index
    %c0_18 = arith.constant 0 : index
    %17 = vector.load %arg5[%c2, %c0_17, %c0_18] : memref<5x28x768xf32, #tpu.memory_space<vmem>>, vector<1x28x768xf32>
    %18 = vector.shape_cast %17 : vector<1x28x768xf32> to vector<28x768xf32>
    %cst_19 = arith.constant dense<0.000000e+00> : vector<48x768xf32>
    %19 = tpu.matmul %16, %18, %cst_19 {dimension_numbers = #tpu.dot_dimension_numbers<[1], [0], [0], [1], [0, 0, 1, 1], [], []>} : vector<48x28xf32>, vector<28x768xf32>, vector<48x768xf32> -> vector<48x768xf32>
    %20 = arith.addf %14, %19 : vector<48x768xf32>
    %21 = vector.extract_strided_slice %3 {offsets = [0, 0, 0], sizes = [6, 8, 28], strides = [1, 1, 1]} : vector<7x8x28xf32> to vector<6x8x28xf32>
    %22 = vector.shape_cast %21 : vector<6x8x28xf32> to vector<48x28xf32>
    %c3 = arith.constant 3 : index
    %c0_20 = arith.constant 0 : index
    %c0_21 = arith.constant 0 : index
    %23 = vector.load %arg5[%c3, %c0_20, %c0_21] : memref<5x28x768xf32, #tpu.memory_space<vmem>>, vector<1x28x768xf32>
    %24 = vector.shape_cast %23 : vector<1x28x768xf32> to vector<28x768xf32>
    %cst_22 = arith.constant dense<0.000000e+00> : vector<48x768xf32>
    %25 = tpu.matmul %22, %24, %cst_22 {dimension_numbers = #tpu.dot_dimension_numbers<[1], [0], [0], [1], [0, 0, 1, 1], [], []>} : vector<48x28xf32>, vector<28x768xf32>, vector<48x768xf32> -> vector<48x768xf32>
    %26 = arith.addf %20, %25 : vector<48x768xf32>
    %27 = vector.extract_strided_slice %0 {offsets = [1, 0, 0], sizes = [6, 8, 28], strides = [1, 1, 1]} : vector<7x8x28xf32> to vector<6x8x28xf32>
    %28 = vector.shape_cast %27 : vector<6x8x28xf32> to vector<48x28xf32>
    %c4 = arith.constant 4 : index
    %c0_23 = arith.constant 0 : index
    %c0_24 = arith.constant 0 : index
    %29 = vector.load %arg5[%c4, %c0_23, %c0_24] : memref<5x28x768xf32, #tpu.memory_space<vmem>>, vector<1x28x768xf32>
    %30 = vector.shape_cast %29 : vector<1x28x768xf32> to vector<28x768xf32>
    %cst_25 = arith.constant dense<0.000000e+00> : vector<48x768xf32>
    %31 = tpu.matmul %28, %30, %cst_25 {dimension_numbers = #tpu.dot_dimension_numbers<[1], [0], [0], [1], [0, 0, 1, 1], [], []>} : vector<48x28xf32>, vector<28x768xf32>, vector<48x768xf32> -> vector<48x768xf32>
    %32 = arith.addf %26, %31 : vector<48x768xf32>
    %33 = vector.extract_strided_slice %32 {offsets = [0, 0], sizes = [48, 384], strides = [1, 1]} : vector<48x768xf32> to vector<48x384xf32>
    %34 = vector.extract_strided_slice %32 {offsets = [0, 384], sizes = [48, 384], strides = [1, 1]} : vector<48x768xf32> to vector<48x384xf32>
    %35 = vector.extract_strided_slice %1 {offsets = [0, 0, 0], sizes = [6, 8, 28], strides = [1, 1, 1]} : vector<7x8x28xf32> to vector<6x8x28xf32>
    %36 = vector.shape_cast %35 : vector<6x8x28xf32> to vector<48x28xf32>
    %c0_26 = arith.constant 0 : index
    %c0_27 = arith.constant 0 : index
    %c0_28 = arith.constant 0 : index
    %37 = vector.load %arg5[%c0_26, %c0_27, %c0_28] : memref<5x28x768xf32, #tpu.memory_space<vmem>>, vector<1x28x768xf32>
    %38 = vector.shape_cast %37 : vector<1x28x768xf32> to vector<28x768xf32>
    %cst_29 = arith.constant dense<0.000000e+00> : vector<48x768xf32>
    %39 = tpu.matmul %36, %38, %cst_29 {dimension_numbers = #tpu.dot_dimension_numbers<[1], [0], [0], [1], [0, 0, 1, 1], [], []>} : vector<48x28xf32>, vector<28x768xf32>, vector<48x768xf32> -> vector<48x768xf32>
    %40 = vector.extract_strided_slice %2 {offsets = [0, 0, 0], sizes = [6, 8, 28], strides = [1, 1, 1]} : vector<7x8x28xf32> to vector<6x8x28xf32>
    %41 = vector.shape_cast %40 : vector<6x8x28xf32> to vector<48x28xf32>
    %c1_30 = arith.constant 1 : index
    %c0_31 = arith.constant 0 : index
    %c0_32 = arith.constant 0 : index
    %42 = vector.load %arg5[%c1_30, %c0_31, %c0_32] : memref<5x28x768xf32, #tpu.memory_space<vmem>>, vector<1x28x768xf32>
    %43 = vector.shape_cast %42 : vector<1x28x768xf32> to vector<28x768xf32>
    %cst_33 = arith.constant dense<0.000000e+00> : vector<48x768xf32>
    %44 = tpu.matmul %41, %43, %cst_33 {dimension_numbers = #tpu.dot_dimension_numbers<[1], [0], [0], [1], [0, 0, 1, 1], [], []>} : vector<48x28xf32>, vector<28x768xf32>, vector<48x768xf32> -> vector<48x768xf32>
    %45 = arith.addf %39, %44 : vector<48x768xf32>
    %46 = vector.extract_strided_slice %3 {offsets = [0, 0, 0], sizes = [6, 8, 28], strides = [1, 1, 1]} : vector<7x8x28xf32> to vector<6x8x28xf32>
    %47 = vector.shape_cast %46 : vector<6x8x28xf32> to vector<48x28xf32>
    %c2_34 = arith.constant 2 : index
    %c0_35 = arith.constant 0 : index
    %c0_36 = arith.constant 0 : index
    %48 = vector.load %arg5[%c2_34, %c0_35, %c0_36] : memref<5x28x768xf32, #tpu.memory_space<vmem>>, vector<1x28x768xf32>
    %49 = vector.shape_cast %48 : vector<1x28x768xf32> to vector<28x768xf32>
    %cst_37 = arith.constant dense<0.000000e+00> : vector<48x768xf32>
    %50 = tpu.matmul %47, %49, %cst_37 {dimension_numbers = #tpu.dot_dimension_numbers<[1], [0], [0], [1], [0, 0, 1, 1], [], []>} : vector<48x28xf32>, vector<28x768xf32>, vector<48x768xf32> -> vector<48x768xf32>
    %51 = arith.addf %45, %50 : vector<48x768xf32>
    %52 = vector.extract_strided_slice %0 {offsets = [1, 0, 0], sizes = [6, 8, 28], strides = [1, 1, 1]} : vector<7x8x28xf32> to vector<6x8x28xf32>
    %53 = vector.shape_cast %52 : vector<6x8x28xf32> to vector<48x28xf32>
    %c3_38 = arith.constant 3 : index
    %c0_39 = arith.constant 0 : index
    %c0_40 = arith.constant 0 : index
    %54 = vector.load %arg5[%c3_38, %c0_39, %c0_40] : memref<5x28x768xf32, #tpu.memory_space<vmem>>, vector<1x28x768xf32>
    %55 = vector.shape_cast %54 : vector<1x28x768xf32> to vector<28x768xf32>
    %cst_41 = arith.constant dense<0.000000e+00> : vector<48x768xf32>
    %56 = tpu.matmul %53, %55, %cst_41 {dimension_numbers = #tpu.dot_dimension_numbers<[1], [0], [0], [1], [0, 0, 1, 1], [], []>} : vector<48x28xf32>, vector<28x768xf32>, vector<48x768xf32> -> vector<48x768xf32>
    %57 = arith.addf %51, %56 : vector<48x768xf32>
    %58 = vector.extract_strided_slice %1 {offsets = [1, 0, 0], sizes = [6, 8, 28], strides = [1, 1, 1]} : vector<7x8x28xf32> to vector<6x8x28xf32>
    %59 = vector.shape_cast %58 : vector<6x8x28xf32> to vector<48x28xf32>
    %c4_42 = arith.constant 4 : index
    %c0_43 = arith.constant 0 : index
    %c0_44 = arith.constant 0 : index
    %60 = vector.load %arg5[%c4_42, %c0_43, %c0_44] : memref<5x28x768xf32, #tpu.memory_space<vmem>>, vector<1x28x768xf32>
    %61 = vector.shape_cast %60 : vector<1x28x768xf32> to vector<28x768xf32>
    %cst_45 = arith.constant dense<0.000000e+00> : vector<48x768xf32>
    %62 = tpu.matmul %59, %61, %cst_45 {dimension_numbers = #tpu.dot_dimension_numbers<[1], [0], [0], [1], [0, 0, 1, 1], [], []>} : vector<48x28xf32>, vector<28x768xf32>, vector<48x768xf32> -> vector<48x768xf32>
    %63 = arith.addf %57, %62 : vector<48x768xf32>
    %64 = vector.extract_strided_slice %63 {offsets = [0, 0], sizes = [48, 384], strides = [1, 1]} : vector<48x768xf32> to vector<48x384xf32>
    %65 = vector.extract_strided_slice %63 {offsets = [0, 384], sizes = [48, 384], strides = [1, 1]} : vector<48x768xf32> to vector<48x384xf32>
    %66 = arith.maximumf %33, %34 : vector<48x384xf32>
    %67 = arith.maximumf %64, %65 : vector<48x384xf32>
    %68 = arith.maximumf %66, %67 : vector<48x384xf32>
    %c0_46 = arith.constant 0 : index
    %c0_47 = arith.constant 0 : index
    %69 = vector.load %arg6[%c0_46, %c0_47] : memref<1x384xf32, #tpu.memory_space<vmem>>, vector<1x384xf32>
    %70 = vector.broadcast %69 : vector<1x384xf32> to vector<48x384xf32>
    %71 = arith.addf %68, %70 : vector<48x384xf32>
    %cst_48 = arith.constant 0.000000e+00 : f32
    %72 = vector.broadcast %cst_48 : f32 to vector<48x384xf32>
    %73 = arith.maximumf %71, %72 : vector<48x384xf32>
    %74 = vector.extract_strided_slice %2 {offsets = [0, 0, 0], sizes = [6, 8, 28], strides = [1, 1, 1]} : vector<7x8x28xf32> to vector<6x8x28xf32>
    %75 = vector.shape_cast %74 : vector<6x8x28xf32> to vector<48x28xf32>
    %c0_49 = arith.constant 0 : index
    %c0_50 = arith.constant 0 : index
    %c0_51 = arith.constant 0 : index
    %76 = vector.load %arg5[%c0_49, %c0_50, %c0_51] : memref<5x28x768xf32, #tpu.memory_space<vmem>>, vector<1x28x768xf32>
    %77 = vector.shape_cast %76 : vector<1x28x768xf32> to vector<28x768xf32>
    %cst_52 = arith.constant dense<0.000000e+00> : vector<48x768xf32>
    %78 = tpu.matmul %75, %77, %cst_52 {dimension_numbers = #tpu.dot_dimension_numbers<[1], [0], [0], [1], [0, 0, 1, 1], [], []>} : vector<48x28xf32>, vector<28x768xf32>, vector<48x768xf32> -> vector<48x768xf32>
    %79 = vector.extract_strided_slice %3 {offsets = [0, 0, 0], sizes = [6, 8, 28], strides = [1, 1, 1]} : vector<7x8x28xf32> to vector<6x8x28xf32>
    %80 = vector.shape_cast %79 : vector<6x8x28xf32> to vector<48x28xf32>
    %c1_53 = arith.constant 1 : index
    %c0_54 = arith.constant 0 : index
    %c0_55 = arith.constant 0 : index
    %81 = vector.load %arg5[%c1_53, %c0_54, %c0_55] : memref<5x28x768xf32, #tpu.memory_space<vmem>>, vector<1x28x768xf32>
    %82 = vector.shape_cast %81 : vector<1x28x768xf32> to vector<28x768xf32>
    %cst_56 = arith.constant dense<0.000000e+00> : vector<48x768xf32>
    %83 = tpu.matmul %80, %82, %cst_56 {dimension_numbers = #tpu.dot_dimension_numbers<[1], [0], [0], [1], [0, 0, 1, 1], [], []>} : vector<48x28xf32>, vector<28x768xf32>, vector<48x768xf32> -> vector<48x768xf32>
    %84 = arith.addf %78, %83 : vector<48x768xf32>
    %85 = vector.extract_strided_slice %0 {offsets = [1, 0, 0], sizes = [6, 8, 28], strides = [1, 1, 1]} : vector<7x8x28xf32> to vector<6x8x28xf32>
    %86 = vector.shape_cast %85 : vector<6x8x28xf32> to vector<48x28xf32>
    %c2_57 = arith.constant 2 : index
    %c0_58 = arith.constant 0 : index
    %c0_59 = arith.constant 0 : index
    %87 = vector.load %arg5[%c2_57, %c0_58, %c0_59] : memref<5x28x768xf32, #tpu.memory_space<vmem>>, vector<1x28x768xf32>
    %88 = vector.shape_cast %87 : vector<1x28x768xf32> to vector<28x768xf32>
    %cst_60 = arith.constant dense<0.000000e+00> : vector<48x768xf32>
    %89 = tpu.matmul %86, %88, %cst_60 {dimension_numbers = #tpu.dot_dimension_numbers<[1], [0], [0], [1], [0, 0, 1, 1], [], []>} : vector<48x28xf32>, vector<28x768xf32>, vector<48x768xf32> -> vector<48x768xf32>
    %90 = arith.addf %84, %89 : vector<48x768xf32>
    %91 = vector.extract_strided_slice %1 {offsets = [1, 0, 0], sizes = [6, 8, 28], strides = [1, 1, 1]} : vector<7x8x28xf32> to vector<6x8x28xf32>
    %92 = vector.shape_cast %91 : vector<6x8x28xf32> to vector<48x28xf32>
    %c3_61 = arith.constant 3 : index
    %c0_62 = arith.constant 0 : index
    %c0_63 = arith.constant 0 : index
    %93 = vector.load %arg5[%c3_61, %c0_62, %c0_63] : memref<5x28x768xf32, #tpu.memory_space<vmem>>, vector<1x28x768xf32>
    %94 = vector.shape_cast %93 : vector<1x28x768xf32> to vector<28x768xf32>
    %cst_64 = arith.constant dense<0.000000e+00> : vector<48x768xf32>
    %95 = tpu.matmul %92, %94, %cst_64 {dimension_numbers = #tpu.dot_dimension_numbers<[1], [0], [0], [1], [0, 0, 1, 1], [], []>} : vector<48x28xf32>, vector<28x768xf32>, vector<48x768xf32> -> vector<48x768xf32>
    %96 = arith.addf %90, %95 : vector<48x768xf32>
    %97 = vector.extract_strided_slice %2 {offsets = [1, 0, 0], sizes = [6, 8, 28], strides = [1, 1, 1]} : vector<7x8x28xf32> to vector<6x8x28xf32>
    %98 = vector.shape_cast %97 : vector<6x8x28xf32> to vector<48x28xf32>
    %c4_65 = arith.constant 4 : index
    %c0_66 = arith.constant 0 : index
    %c0_67 = arith.constant 0 : index
    %99 = vector.load %arg5[%c4_65, %c0_66, %c0_67] : memref<5x28x768xf32, #tpu.memory_space<vmem>>, vector<1x28x768xf32>
    %100 = vector.shape_cast %99 : vector<1x28x768xf32> to vector<28x768xf32>
    %cst_68 = arith.constant dense<0.000000e+00> : vector<48x768xf32>
    %101 = tpu.matmul %98, %100, %cst_68 {dimension_numbers = #tpu.dot_dimension_numbers<[1], [0], [0], [1], [0, 0, 1, 1], [], []>} : vector<48x28xf32>, vector<28x768xf32>, vector<48x768xf32> -> vector<48x768xf32>
    %102 = arith.addf %96, %101 : vector<48x768xf32>
    %103 = vector.extract_strided_slice %102 {offsets = [0, 0], sizes = [48, 384], strides = [1, 1]} : vector<48x768xf32> to vector<48x384xf32>
    %104 = vector.extract_strided_slice %102 {offsets = [0, 384], sizes = [48, 384], strides = [1, 1]} : vector<48x768xf32> to vector<48x384xf32>
    %105 = vector.extract_strided_slice %3 {offsets = [0, 0, 0], sizes = [6, 8, 28], strides = [1, 1, 1]} : vector<7x8x28xf32> to vector<6x8x28xf32>
    %106 = vector.shape_cast %105 : vector<6x8x28xf32> to vector<48x28xf32>
    %c0_69 = arith.constant 0 : index
    %c0_70 = arith.constant 0 : index
    %c0_71 = arith.constant 0 : index
    %107 = vector.load %arg5[%c0_69, %c0_70, %c0_71] : memref<5x28x768xf32, #tpu.memory_space<vmem>>, vector<1x28x768xf32>
    %108 = vector.shape_cast %107 : vector<1x28x768xf32> to vector<28x768xf32>
    %cst_72 = arith.constant dense<0.000000e+00> : vector<48x768xf32>
    %109 = tpu.matmul %106, %108, %cst_72 {dimension_numbers = #tpu.dot_dimension_numbers<[1], [0], [0], [1], [0, 0, 1, 1], [], []>} : vector<48x28xf32>, vector<28x768xf32>, vector<48x768xf32> -> vector<48x768xf32>
    %110 = vector.extract_strided_slice %0 {offsets = [1, 0, 0], sizes = [6, 8, 28], strides = [1, 1, 1]} : vector<7x8x28xf32> to vector<6x8x28xf32>
    %111 = vector.shape_cast %110 : vector<6x8x28xf32> to vector<48x28xf32>
    %c1_73 = arith.constant 1 : index
    %c0_74 = arith.constant 0 : index
    %c0_75 = arith.constant 0 : index
    %112 = vector.load %arg5[%c1_73, %c0_74, %c0_75] : memref<5x28x768xf32, #tpu.memory_space<vmem>>, vector<1x28x768xf32>
    %113 = vector.shape_cast %112 : vector<1x28x768xf32> to vector<28x768xf32>
    %cst_76 = arith.constant dense<0.000000e+00> : vector<48x768xf32>
    %114 = tpu.matmul %111, %113, %cst_76 {dimension_numbers = #tpu.dot_dimension_numbers<[1], [0], [0], [1], [0, 0, 1, 1], [], []>} : vector<48x28xf32>, vector<28x768xf32>, vector<48x768xf32> -> vector<48x768xf32>
    %115 = arith.addf %109, %114 : vector<48x768xf32>
    %116 = vector.extract_strided_slice %1 {offsets = [1, 0, 0], sizes = [6, 8, 28], strides = [1, 1, 1]} : vector<7x8x28xf32> to vector<6x8x28xf32>
    %117 = vector.shape_cast %116 : vector<6x8x28xf32> to vector<48x28xf32>
    %c2_77 = arith.constant 2 : index
    %c0_78 = arith.constant 0 : index
    %c0_79 = arith.constant 0 : index
    %118 = vector.load %arg5[%c2_77, %c0_78, %c0_79] : memref<5x28x768xf32, #tpu.memory_space<vmem>>, vector<1x28x768xf32>
    %119 = vector.shape_cast %118 : vector<1x28x768xf32> to vector<28x768xf32>
    %cst_80 = arith.constant dense<0.000000e+00> : vector<48x768xf32>
    %120 = tpu.matmul %117, %119, %cst_80 {dimension_numbers = #tpu.dot_dimension_numbers<[1], [0], [0], [1], [0, 0, 1, 1], [], []>} : vector<48x28xf32>, vector<28x768xf32>, vector<48x768xf32> -> vector<48x768xf32>
    %121 = arith.addf %115, %120 : vector<48x768xf32>
    %122 = vector.extract_strided_slice %2 {offsets = [1, 0, 0], sizes = [6, 8, 28], strides = [1, 1, 1]} : vector<7x8x28xf32> to vector<6x8x28xf32>
    %123 = vector.shape_cast %122 : vector<6x8x28xf32> to vector<48x28xf32>
    %c3_81 = arith.constant 3 : index
    %c0_82 = arith.constant 0 : index
    %c0_83 = arith.constant 0 : index
    %124 = vector.load %arg5[%c3_81, %c0_82, %c0_83] : memref<5x28x768xf32, #tpu.memory_space<vmem>>, vector<1x28x768xf32>
    %125 = vector.shape_cast %124 : vector<1x28x768xf32> to vector<28x768xf32>
    %cst_84 = arith.constant dense<0.000000e+00> : vector<48x768xf32>
    %126 = tpu.matmul %123, %125, %cst_84 {dimension_numbers = #tpu.dot_dimension_numbers<[1], [0], [0], [1], [0, 0, 1, 1], [], []>} : vector<48x28xf32>, vector<28x768xf32>, vector<48x768xf32> -> vector<48x768xf32>
    %127 = arith.addf %121, %126 : vector<48x768xf32>
    %128 = vector.extract_strided_slice %3 {offsets = [1, 0, 0], sizes = [6, 8, 28], strides = [1, 1, 1]} : vector<7x8x28xf32> to vector<6x8x28xf32>
    %129 = vector.shape_cast %128 : vector<6x8x28xf32> to vector<48x28xf32>
    %c4_85 = arith.constant 4 : index
    %c0_86 = arith.constant 0 : index
    %c0_87 = arith.constant 0 : index
    %130 = vector.load %arg5[%c4_85, %c0_86, %c0_87] : memref<5x28x768xf32, #tpu.memory_space<vmem>>, vector<1x28x768xf32>
    %131 = vector.shape_cast %130 : vector<1x28x768xf32> to vector<28x768xf32>
    %cst_88 = arith.constant dense<0.000000e+00> : vector<48x768xf32>
    %132 = tpu.matmul %129, %131, %cst_88 {dimension_numbers = #tpu.dot_dimension_numbers<[1], [0], [0], [1], [0, 0, 1, 1], [], []>} : vector<48x28xf32>, vector<28x768xf32>, vector<48x768xf32> -> vector<48x768xf32>
    %133 = arith.addf %127, %132 : vector<48x768xf32>
    %134 = vector.extract_strided_slice %133 {offsets = [0, 0], sizes = [48, 384], strides = [1, 1]} : vector<48x768xf32> to vector<48x384xf32>
    %135 = vector.extract_strided_slice %133 {offsets = [0, 384], sizes = [48, 384], strides = [1, 1]} : vector<48x768xf32> to vector<48x384xf32>
    %136 = arith.maximumf %103, %104 : vector<48x384xf32>
    %137 = arith.maximumf %134, %135 : vector<48x384xf32>
    %138 = arith.maximumf %136, %137 : vector<48x384xf32>
    %c0_89 = arith.constant 0 : index
    %c0_90 = arith.constant 0 : index
    %139 = vector.load %arg6[%c0_89, %c0_90] : memref<1x384xf32, #tpu.memory_space<vmem>>, vector<1x384xf32>
    %140 = vector.broadcast %139 : vector<1x384xf32> to vector<48x384xf32>
    %141 = arith.addf %138, %140 : vector<48x384xf32>
    %cst_91 = arith.constant 0.000000e+00 : f32
    %142 = vector.broadcast %cst_91 : f32 to vector<48x384xf32>
    %143 = arith.maximumf %141, %142 : vector<48x384xf32>
    %144 = vector.extract_strided_slice %73 {offsets = [0, 0], sizes = [32, 384], strides = [1, 1]} : vector<48x384xf32> to vector<32x384xf32>
    %c0_92 = arith.constant 0 : index
    %c0_93 = arith.constant 0 : index
    %c0_94 = arith.constant 0 : index
    %145 = vector.load %arg7[%c0_92, %c0_93, %c0_94] : memref<5x384x256xf32, #tpu.memory_space<vmem>>, vector<1x384x256xf32>
    %146 = vector.shape_cast %145 : vector<1x384x256xf32> to vector<384x256xf32>
    %cst_95 = arith.constant dense<0.000000e+00> : vector<32x256xf32>
    %147 = tpu.matmul %144, %146, %cst_95 {dimension_numbers = #tpu.dot_dimension_numbers<[1], [0], [0], [1], [0, 0, 1, 1], [], []>} : vector<32x384xf32>, vector<384x256xf32>, vector<32x256xf32> -> vector<32x256xf32>
    %148 = vector.extract_strided_slice %143 {offsets = [0, 0], sizes = [32, 384], strides = [1, 1]} : vector<48x384xf32> to vector<32x384xf32>
    %c1_96 = arith.constant 1 : index
    %c0_97 = arith.constant 0 : index
    %c0_98 = arith.constant 0 : index
    %149 = vector.load %arg7[%c1_96, %c0_97, %c0_98] : memref<5x384x256xf32, #tpu.memory_space<vmem>>, vector<1x384x256xf32>
    %150 = vector.shape_cast %149 : vector<1x384x256xf32> to vector<384x256xf32>
    %cst_99 = arith.constant dense<0.000000e+00> : vector<32x256xf32>
    %151 = tpu.matmul %148, %150, %cst_99 {dimension_numbers = #tpu.dot_dimension_numbers<[1], [0], [0], [1], [0, 0, 1, 1], [], []>} : vector<32x384xf32>, vector<384x256xf32>, vector<32x256xf32> -> vector<32x256xf32>
    %152 = arith.addf %147, %151 : vector<32x256xf32>
    %153 = vector.extract_strided_slice %73 {offsets = [8, 0], sizes = [32, 384], strides = [1, 1]} : vector<48x384xf32> to vector<32x384xf32>
    %c2_100 = arith.constant 2 : index
    %c0_101 = arith.constant 0 : index
    %c0_102 = arith.constant 0 : index
    %154 = vector.load %arg7[%c2_100, %c0_101, %c0_102] : memref<5x384x256xf32, #tpu.memory_space<vmem>>, vector<1x384x256xf32>
    %155 = vector.shape_cast %154 : vector<1x384x256xf32> to vector<384x256xf32>
    %cst_103 = arith.constant dense<0.000000e+00> : vector<32x256xf32>
    %156 = tpu.matmul %153, %155, %cst_103 {dimension_numbers = #tpu.dot_dimension_numbers<[1], [0], [0], [1], [0, 0, 1, 1], [], []>} : vector<32x384xf32>, vector<384x256xf32>, vector<32x256xf32> -> vector<32x256xf32>
    %157 = arith.addf %152, %156 : vector<32x256xf32>
    %158 = vector.extract_strided_slice %143 {offsets = [8, 0], sizes = [32, 384], strides = [1, 1]} : vector<48x384xf32> to vector<32x384xf32>
    %c3_104 = arith.constant 3 : index
    %c0_105 = arith.constant 0 : index
    %c0_106 = arith.constant 0 : index
    %159 = vector.load %arg7[%c3_104, %c0_105, %c0_106] : memref<5x384x256xf32, #tpu.memory_space<vmem>>, vector<1x384x256xf32>
    %160 = vector.shape_cast %159 : vector<1x384x256xf32> to vector<384x256xf32>
    %cst_107 = arith.constant dense<0.000000e+00> : vector<32x256xf32>
    %161 = tpu.matmul %158, %160, %cst_107 {dimension_numbers = #tpu.dot_dimension_numbers<[1], [0], [0], [1], [0, 0, 1, 1], [], []>} : vector<32x384xf32>, vector<384x256xf32>, vector<32x256xf32> -> vector<32x256xf32>
    %162 = arith.addf %157, %161 : vector<32x256xf32>
    %163 = vector.extract_strided_slice %73 {offsets = [16, 0], sizes = [32, 384], strides = [1, 1]} : vector<48x384xf32> to vector<32x384xf32>
    %c4_108 = arith.constant 4 : index
    %c0_109 = arith.constant 0 : index
    %c0_110 = arith.constant 0 : index
    %164 = vector.load %arg7[%c4_108, %c0_109, %c0_110] : memref<5x384x256xf32, #tpu.memory_space<vmem>>, vector<1x384x256xf32>
    %165 = vector.shape_cast %164 : vector<1x384x256xf32> to vector<384x256xf32>
    %cst_111 = arith.constant dense<0.000000e+00> : vector<32x256xf32>
    %166 = tpu.matmul %163, %165, %cst_111 {dimension_numbers = #tpu.dot_dimension_numbers<[1], [0], [0], [1], [0, 0, 1, 1], [], []>} : vector<32x384xf32>, vector<384x256xf32>, vector<32x256xf32> -> vector<32x256xf32>
    %167 = arith.addf %162, %166 : vector<32x256xf32>
    %168 = vector.extract_strided_slice %167 {offsets = [0, 0], sizes = [32, 128], strides = [1, 1]} : vector<32x256xf32> to vector<32x128xf32>
    %169 = vector.extract_strided_slice %167 {offsets = [0, 128], sizes = [32, 128], strides = [1, 1]} : vector<32x256xf32> to vector<32x128xf32>
    %170 = vector.extract_strided_slice %143 {offsets = [0, 0], sizes = [32, 384], strides = [1, 1]} : vector<48x384xf32> to vector<32x384xf32>
    %c0_112 = arith.constant 0 : index
    %c0_113 = arith.constant 0 : index
    %c0_114 = arith.constant 0 : index
    %171 = vector.load %arg7[%c0_112, %c0_113, %c0_114] : memref<5x384x256xf32, #tpu.memory_space<vmem>>, vector<1x384x256xf32>
    %172 = vector.shape_cast %171 : vector<1x384x256xf32> to vector<384x256xf32>
    %cst_115 = arith.constant dense<0.000000e+00> : vector<32x256xf32>
    %173 = tpu.matmul %170, %172, %cst_115 {dimension_numbers = #tpu.dot_dimension_numbers<[1], [0], [0], [1], [0, 0, 1, 1], [], []>} : vector<32x384xf32>, vector<384x256xf32>, vector<32x256xf32> -> vector<32x256xf32>
    %174 = vector.extract_strided_slice %73 {offsets = [8, 0], sizes = [32, 384], strides = [1, 1]} : vector<48x384xf32> to vector<32x384xf32>
    %c1_116 = arith.constant 1 : index
    %c0_117 = arith.constant 0 : index
    %c0_118 = arith.constant 0 : index
    %175 = vector.load %arg7[%c1_116, %c0_117, %c0_118] : memref<5x384x256xf32, #tpu.memory_space<vmem>>, vector<1x384x256xf32>
    %176 = vector.shape_cast %175 : vector<1x384x256xf32> to vector<384x256xf32>
    %cst_119 = arith.constant dense<0.000000e+00> : vector<32x256xf32>
    %177 = tpu.matmul %174, %176, %cst_119 {dimension_numbers = #tpu.dot_dimension_numbers<[1], [0], [0], [1], [0, 0, 1, 1], [], []>} : vector<32x384xf32>, vector<384x256xf32>, vector<32x256xf32> -> vector<32x256xf32>
    %178 = arith.addf %173, %177 : vector<32x256xf32>
    %179 = vector.extract_strided_slice %143 {offsets = [8, 0], sizes = [32, 384], strides = [1, 1]} : vector<48x384xf32> to vector<32x384xf32>
    %c2_120 = arith.constant 2 : index
    %c0_121 = arith.constant 0 : index
    %c0_122 = arith.constant 0 : index
    %180 = vector.load %arg7[%c2_120, %c0_121, %c0_122] : memref<5x384x256xf32, #tpu.memory_space<vmem>>, vector<1x384x256xf32>
    %181 = vector.shape_cast %180 : vector<1x384x256xf32> to vector<384x256xf32>
    %cst_123 = arith.constant dense<0.000000e+00> : vector<32x256xf32>
    %182 = tpu.matmul %179, %181, %cst_123 {dimension_numbers = #tpu.dot_dimension_numbers<[1], [0], [0], [1], [0, 0, 1, 1], [], []>} : vector<32x384xf32>, vector<384x256xf32>, vector<32x256xf32> -> vector<32x256xf32>
    %183 = arith.addf %178, %182 : vector<32x256xf32>
    %184 = vector.extract_strided_slice %73 {offsets = [16, 0], sizes = [32, 384], strides = [1, 1]} : vector<48x384xf32> to vector<32x384xf32>
    %c3_124 = arith.constant 3 : index
    %c0_125 = arith.constant 0 : index
    %c0_126 = arith.constant 0 : index
    %185 = vector.load %arg7[%c3_124, %c0_125, %c0_126] : memref<5x384x256xf32, #tpu.memory_space<vmem>>, vector<1x384x256xf32>
    %186 = vector.shape_cast %185 : vector<1x384x256xf32> to vector<384x256xf32>
    %cst_127 = arith.constant dense<0.000000e+00> : vector<32x256xf32>
    %187 = tpu.matmul %184, %186, %cst_127 {dimension_numbers = #tpu.dot_dimension_numbers<[1], [0], [0], [1], [0, 0, 1, 1], [], []>} : vector<32x384xf32>, vector<384x256xf32>, vector<32x256xf32> -> vector<32x256xf32>
    %188 = arith.addf %183, %187 : vector<32x256xf32>
    %189 = vector.extract_strided_slice %143 {offsets = [16, 0], sizes = [32, 384], strides = [1, 1]} : vector<48x384xf32> to vector<32x384xf32>
    %c4_128 = arith.constant 4 : index
    %c0_129 = arith.constant 0 : index
    %c0_130 = arith.constant 0 : index
    %190 = vector.load %arg7[%c4_128, %c0_129, %c0_130] : memref<5x384x256xf32, #tpu.memory_space<vmem>>, vector<1x384x256xf32>
    %191 = vector.shape_cast %190 : vector<1x384x256xf32> to vector<384x256xf32>
    %cst_131 = arith.constant dense<0.000000e+00> : vector<32x256xf32>
    %192 = tpu.matmul %189, %191, %cst_131 {dimension_numbers = #tpu.dot_dimension_numbers<[1], [0], [0], [1], [0, 0, 1, 1], [], []>} : vector<32x384xf32>, vector<384x256xf32>, vector<32x256xf32> -> vector<32x256xf32>
    %193 = arith.addf %188, %192 : vector<32x256xf32>
    %194 = vector.extract_strided_slice %193 {offsets = [0, 0], sizes = [32, 128], strides = [1, 1]} : vector<32x256xf32> to vector<32x128xf32>
    %195 = vector.extract_strided_slice %193 {offsets = [0, 128], sizes = [32, 128], strides = [1, 1]} : vector<32x256xf32> to vector<32x128xf32>
    %196 = arith.maximumf %168, %169 : vector<32x128xf32>
    %197 = arith.maximumf %194, %195 : vector<32x128xf32>
    %198 = arith.maximumf %196, %197 : vector<32x128xf32>
    %c0_132 = arith.constant 0 : index
    %c0_133 = arith.constant 0 : index
    %199 = vector.load %arg8[%c0_132, %c0_133] : memref<1x128xf32, #tpu.memory_space<vmem>>, vector<1x128xf32>
    %200 = vector.broadcast %199 : vector<1x128xf32> to vector<32x128xf32>
    %201 = arith.addf %198, %200 : vector<32x128xf32>
    %cst_134 = arith.constant 0.000000e+00 : f32
    %202 = vector.broadcast %cst_134 : f32 to vector<32x128xf32>
    %203 = arith.maximumf %201, %202 : vector<32x128xf32>
    %204 = vector.extract_strided_slice %203 {offsets = [0, 0], sizes = [8, 128], strides = [1, 1]} : vector<32x128xf32> to vector<8x128xf32>
    %c0_135 = arith.constant 0 : index
    %c0_136 = arith.constant 0 : index
    %c0_137 = arith.constant 0 : index
    %205 = vector.load %arg9[%c0_135, %c0_136, %c0_137] : memref<4x128x50xf32, #tpu.memory_space<vmem>>, vector<1x128x50xf32>
    %206 = vector.shape_cast %205 : vector<1x128x50xf32> to vector<128x50xf32>
    %cst_138 = arith.constant dense<0.000000e+00> : vector<8x50xf32>
    %207 = tpu.matmul %204, %206, %cst_138 {dimension_numbers = #tpu.dot_dimension_numbers<[1], [0], [0], [1], [0, 0, 1, 1], [], []>} : vector<8x128xf32>, vector<128x50xf32>, vector<8x50xf32> -> vector<8x50xf32>
    %208 = vector.extract_strided_slice %203 {offsets = [8, 0], sizes = [8, 128], strides = [1, 1]} : vector<32x128xf32> to vector<8x128xf32>
    %c1_139 = arith.constant 1 : index
    %c0_140 = arith.constant 0 : index
    %c0_141 = arith.constant 0 : index
    %209 = vector.load %arg9[%c1_139, %c0_140, %c0_141] : memref<4x128x50xf32, #tpu.memory_space<vmem>>, vector<1x128x50xf32>
    %210 = vector.shape_cast %209 : vector<1x128x50xf32> to vector<128x50xf32>
    %cst_142 = arith.constant dense<0.000000e+00> : vector<8x50xf32>
    %211 = tpu.matmul %208, %210, %cst_142 {dimension_numbers = #tpu.dot_dimension_numbers<[1], [0], [0], [1], [0, 0, 1, 1], [], []>} : vector<8x128xf32>, vector<128x50xf32>, vector<8x50xf32> -> vector<8x50xf32>
    %212 = arith.addf %207, %211 : vector<8x50xf32>
    %213 = vector.extract_strided_slice %203 {offsets = [16, 0], sizes = [8, 128], strides = [1, 1]} : vector<32x128xf32> to vector<8x128xf32>
    %c2_143 = arith.constant 2 : index
    %c0_144 = arith.constant 0 : index
    %c0_145 = arith.constant 0 : index
    %214 = vector.load %arg9[%c2_143, %c0_144, %c0_145] : memref<4x128x50xf32, #tpu.memory_space<vmem>>, vector<1x128x50xf32>
    %215 = vector.shape_cast %214 : vector<1x128x50xf32> to vector<128x50xf32>
    %cst_146 = arith.constant dense<0.000000e+00> : vector<8x50xf32>
    %216 = tpu.matmul %213, %215, %cst_146 {dimension_numbers = #tpu.dot_dimension_numbers<[1], [0], [0], [1], [0, 0, 1, 1], [], []>} : vector<8x128xf32>, vector<128x50xf32>, vector<8x50xf32> -> vector<8x50xf32>
    %217 = arith.addf %212, %216 : vector<8x50xf32>
    %218 = vector.extract_strided_slice %203 {offsets = [24, 0], sizes = [8, 128], strides = [1, 1]} : vector<32x128xf32> to vector<8x128xf32>
    %c3_147 = arith.constant 3 : index
    %c0_148 = arith.constant 0 : index
    %c0_149 = arith.constant 0 : index
    %219 = vector.load %arg9[%c3_147, %c0_148, %c0_149] : memref<4x128x50xf32, #tpu.memory_space<vmem>>, vector<1x128x50xf32>
    %220 = vector.shape_cast %219 : vector<1x128x50xf32> to vector<128x50xf32>
    %cst_150 = arith.constant dense<0.000000e+00> : vector<8x50xf32>
    %221 = tpu.matmul %218, %220, %cst_150 {dimension_numbers = #tpu.dot_dimension_numbers<[1], [0], [0], [1], [0, 0, 1, 1], [], []>} : vector<8x128xf32>, vector<128x50xf32>, vector<8x50xf32> -> vector<8x50xf32>
    %222 = arith.addf %217, %221 : vector<8x50xf32>
    %c0_151 = arith.constant 0 : index
    %c0_152 = arith.constant 0 : index
    %223 = vector.load %arg10[%c0_151, %c0_152] : memref<1x50xf32, #tpu.memory_space<vmem>>, vector<1x50xf32>
    %224 = vector.broadcast %223 : vector<1x50xf32> to vector<8x50xf32>
    %225 = arith.addf %222, %224 : vector<8x50xf32>
    %226 = math.tanh %225 : vector<8x50xf32>
    %c0_153 = arith.constant 0 : index
    %c0_154 = arith.constant 0 : index
    %227 = vector.load %arg11[%c0_153, %c0_154] : memref<50x10xf32, #tpu.memory_space<vmem>>, vector<50x10xf32>
    %cst_155 = arith.constant dense<0.000000e+00> : vector<8x10xf32>
    %228 = tpu.matmul %226, %227, %cst_155 {dimension_numbers = #tpu.dot_dimension_numbers<[1], [0], [0], [1], [0, 0, 1, 1], [], []>} : vector<8x50xf32>, vector<50x10xf32>, vector<8x10xf32> -> vector<8x10xf32>
    %c0_156 = arith.constant 0 : index
    %c0_157 = arith.constant 0 : index
    %229 = vector.load %arg12[%c0_156, %c0_157] : memref<1x10xf32, #tpu.memory_space<vmem>>, vector<1x10xf32>
    %230 = vector.broadcast %229 : vector<1x10xf32> to vector<8x10xf32>
    %231 = arith.addf %228, %230 : vector<8x10xf32>
    %cst_158 = arith.constant dense<0xFF800000> : vector<8xf32>
    %232 = vector.multi_reduction <maximumf>, %231, %cst_158 [1] : vector<8x10xf32> to vector<8xf32>
    %233 = vector.shape_cast %232 : vector<8xf32> to vector<8x1xf32>
    %234 = vector.broadcast %233 : vector<8x1xf32> to vector<8x10xf32>
    %235 = arith.subf %231, %234 : vector<8x10xf32>
    %236 = math.exp %235 : vector<8x10xf32>
    %cst_159 = arith.constant dense<0.000000e+00> : vector<8xf32>
    %237 = vector.multi_reduction <add>, %236, %cst_159 [1] : vector<8x10xf32> to vector<8xf32>
    %238 = vector.shape_cast %237 : vector<8xf32> to vector<8x1xf32>
    %239 = tpu.reciprocal %238 : vector<8x1xf32> -> vector<8x1xf32>
    %240 = vector.broadcast %239 : vector<8x1xf32> to vector<8x10xf32>
    %241 = arith.mulf %236, %240 : vector<8x10xf32>
    %c0_160 = arith.constant 0 : index
    %c0_161 = arith.constant 0 : index
    %242 = vector.load %arg13[%c0_160, %c0_161] : memref<8x10xf32, #tpu.memory_space<vmem>>, vector<8x10xf32>
    tpu.vector_store %arg13[%c0_160, %c0_161], %241 {strides = array<i32>} : memref<8x10xf32, #tpu.memory_space<vmem>>, vector<8x10xf32>,
    return
  }
  func.func @transform_0(%arg0: i32) -> (i32, i32, i32) {
    %c0_i32 = arith.constant 0 : i32
    %c0_i32_0 = arith.constant 0 : i32
    %c0_i32_1 = arith.constant 0 : i32
    return %c0_i32, %arg0, %c0_i32_0 : i32, i32, i32
  }
  func.func @transform_1(%arg0: i32) -> (i32, i32, i32) {
    %c0_i32 = arith.constant 0 : i32
    %c0_i32_0 = arith.constant 0 : i32
    %c0_i32_1 = arith.constant 0 : i32
    return %c0_i32, %arg0, %c0_i32_0 : i32, i32, i32
  }
  func.func @transform_2(%arg0: i32) -> (i32, i32, i32) {
    %c0_i32 = arith.constant 0 : i32
    %c0_i32_0 = arith.constant 0 : i32
    %c0_i32_1 = arith.constant 0 : i32
    return %c0_i32, %arg0, %c0_i32_0 : i32, i32, i32
  }
  func.func @transform_3(%arg0: i32) -> (i32, i32, i32) {
    %c0_i32 = arith.constant 0 : i32
    %c0_i32_0 = arith.constant 0 : i32
    %c0_i32_1 = arith.constant 0 : i32
    return %c0_i32, %arg0, %c0_i32_0 : i32, i32, i32
  }
  func.func @transform_4(%arg0: i32) -> (i32, i32, i32) {
    %c0_i32 = arith.constant 0 : i32
    %c0_i32_0 = arith.constant 0 : i32
    %c0_i32_1 = arith.constant 0 : i32
    %c0_i32_2 = arith.constant 0 : i32
    return %c0_i32, %c0_i32_0, %c0_i32_1 : i32, i32, i32
  }
  func.func @transform_5(%arg0: i32) -> (i32, i32) {
    %c0_i32 = arith.constant 0 : i32
    %c0_i32_0 = arith.constant 0 : i32
    %c0_i32_1 = arith.constant 0 : i32
    return %c0_i32, %c0_i32_0 : i32, i32
  }
  func.func @transform_6(%arg0: i32) -> (i32, i32, i32) {
    %c0_i32 = arith.constant 0 : i32
    %c0_i32_0 = arith.constant 0 : i32
    %c0_i32_1 = arith.constant 0 : i32
    %c0_i32_2 = arith.constant 0 : i32
    return %c0_i32, %c0_i32_0, %c0_i32_1 : i32, i32, i32
  }
  func.func @transform_7(%arg0: i32) -> (i32, i32) {
    %c0_i32 = arith.constant 0 : i32
    %c0_i32_0 = arith.constant 0 : i32
    %c0_i32_1 = arith.constant 0 : i32
    return %c0_i32, %c0_i32_0 : i32, i32
  }
  func.func @transform_8(%arg0: i32) -> (i32, i32, i32) {
    %c0_i32 = arith.constant 0 : i32
    %c0_i32_0 = arith.constant 0 : i32
    %c0_i32_1 = arith.constant 0 : i32
    %c0_i32_2 = arith.constant 0 : i32
    return %c0_i32, %c0_i32_0, %c0_i32_1 : i32, i32, i32
  }
  func.func @transform_9(%arg0: i32) -> (i32, i32) {
    %c0_i32 = arith.constant 0 : i32
    %c0_i32_0 = arith.constant 0 : i32
    %c0_i32_1 = arith.constant 0 : i32
    return %c0_i32, %c0_i32_0 : i32, i32
  }
  func.func @transform_10(%arg0: i32) -> (i32, i32) {
    %c0_i32 = arith.constant 0 : i32
    %c0_i32_0 = arith.constant 0 : i32
    %c0_i32_1 = arith.constant 0 : i32
    return %c0_i32, %c0_i32_0 : i32, i32
  }
  func.func @transform_11(%arg0: i32) -> (i32, i32) {
    %c0_i32 = arith.constant 0 : i32
    %c0_i32_0 = arith.constant 0 : i32
    %c0_i32_1 = arith.constant 0 : i32
    return %c0_i32, %c0_i32_0 : i32, i32
  }
  func.func @transform_12(%arg0: i32) -> (i32, i32) {
    %c0_i32 = arith.constant 0 : i32
    %c0_i32_0 = arith.constant 0 : i32
    return %arg0, %c0_i32 : i32, i32
  }
}

</mosaic_0001>

<llo_original>
// kernel: conv_mnist_forward.1
$region0: #{conv_mnist_forward.1}
  #allocation0 [shape = 'u32[]', space=smem, size = 0x4, offset = 0x4, fixed_abs, tag = 'smem constant byte address 0x4 - core index']
  #allocation1 [shape = 'u32[144,128]{1,0:T(1,128)}', space=vmem, size = 0x12000, scoped, tag = 'internal scratch']
  %s0 = inlined_call_operand.vmem [shape: f32[7,8,28], index: 0, kind: input, shape index: {}]
  %s1 = inlined_call_operand.vmem [shape: f32[7,8,28], index: 1, kind: input, shape index: {}]
  %s2 = inlined_call_operand.vmem [shape: f32[7,8,28], index: 2, kind: input, shape index: {}]
  %s3 = inlined_call_operand.vmem [shape: f32[7,8,28], index: 3, kind: input, shape index: {}]
  %s4 = inlined_call_operand.hbm [shape: f32[5,28,768], index: 4, kind: input, shape index: {}]
  %s5 = inlined_call_operand.hbm [shape: f32[1,384], index: 5, kind: input, shape index: {}]
  %s6 = inlined_call_operand.hbm [shape: f32[5,384,256], index: 6, kind: input, shape index: {}]
  %s7 = inlined_call_operand.hbm [shape: f32[1,128], index: 7, kind: input, shape index: {}]
  %s8 = inlined_call_operand.vmem [shape: f32[4,128,50], index: 8, kind: input, shape index: {}]
  %s9 = inlined_call_operand.hbm [shape: f32[1,50], index: 9, kind: input, shape index: {}]
  %s10 = inlined_call_operand.vmem [shape: f32[50,10], index: 10, kind: input, shape index: {}]
  %s11 = inlined_call_operand.hbm [shape: f32[1,10], index: 11, kind: input, shape index: {}]
  %s12 = inlined_call_operand.vmem [shape: f32[8,10], index: 12, kind: output, shape index: {}]
  %s13 = sld [smem:[#allocation0]]
  $region82: #{conv_mnist_forward.1} parent=0
    _
  %s15 = ssub.s32 1, %s13
  %s16 = scalar_select 0, %s15, %s13
  $region1: #{conv_mnist_forward.1} parent=0
    #allocation2 [shape = 'u8[491520]{0}', space=vmem, size = 0x78000, scoped, tag = 'input window, operand 4, single buffered']
    #allocation3 [shape = 's32[1]{0}', space=sflag, size = 0x4, scoped, tag = 'scoped memory for conv_mnist_forward.1']
    #allocation4 [shape = 'u8[1536]{0}', space=vmem, size = 0x800, scoped, tag = 'input window, operand 5, single buffered']
    #allocation5 [shape = 's32[1]{0}', space=sflag, size = 0x4, scoped, tag = 'scoped memory for conv_mnist_forward.1']
    #allocation6 [shape = 'u8[1966080]{0}', space=vmem, size = 0x1e0000, scoped, tag = 'input window, operand 6, single buffered']
    #allocation7 [shape = 'u8[512]{0}', space=vmem, size = 0x400, scoped, tag = 'input window, operand 7, single buffered']
    #allocation8 [shape = 's32[1]{0}', space=sflag, size = 0x4, scoped, tag = 'scoped memory for conv_mnist_forward.1']
    #allocation9 [shape = 'u8[512]{0}', space=vmem, size = 0x400, scoped, tag = 'input window, operand 9, single buffered']
    #allocation10 [shape = 'u8[512]{0}', space=vmem, size = 0x400, scoped, tag = 'input window, operand 11, single buffered']
    #allocation11 [shape = 's32[1]{0}', space=sflag, size = 0x4, scoped, tag = 'scoped memory for conv_mnist_forward.1']
    %17 = vsyncpa [#allocation3], 0
    %18 = vsyncpa [#allocation5], 0
    %19 = vsyncpa [#allocation8], 0
    %20 = vsyncpa [#allocation11], 0
    // Predicated region
    $region2: #{conv_mnist_forward.1} parent=1 // pred_check
      _
    $region3: #{conv_mnist_forward.1} parent=1 // pred_check_branch
      %22 = sbr.rel (0) target = $region5
    $region4: #{conv_mnist_forward.1} parent=1 // pred_region
      _
    $region5: #{conv_mnist_forward.1} parent=1 // pred_fallthru
      _
    // Predicated region
    $region6: #{conv_mnist_forward.1} parent=1 // pred_check
      _
    $region7: #{conv_mnist_forward.1} parent=1 // pred_check_branch
      %24 = sbr.rel (0) target = $region9
    $region8: #{conv_mnist_forward.1} parent=1 // pred_region
      _
    $region9: #{conv_mnist_forward.1} parent=1 // pred_fallthru
      _
    // Predicated region
    $region10: #{conv_mnist_forward.1} parent=1 // pred_check
      _
    $region11: #{conv_mnist_forward.1} parent=1 // pred_check_branch
      %26 = sbr.rel (0) target = $region13
    $region12: #{conv_mnist_forward.1} parent=1 // pred_region
      _
    $region13: #{conv_mnist_forward.1} parent=1 // pred_fallthru
      _
    // Predicated region
    $region14: #{conv_mnist_forward.1} parent=1 // pred_check
      _
    $region15: #{conv_mnist_forward.1} parent=1 // pred_check_branch
      %28 = sbr.rel (0) target = $region17
    $region16: #{conv_mnist_forward.1} parent=1 // pred_region
      _
    $region17: #{conv_mnist_forward.1} parent=1 // pred_fallthru
      _
    // Predicated region
    $region18: #{conv_mnist_forward.1} parent=1 // pred_check
      _
    $region19: #{conv_mnist_forward.1} parent=1 // pred_check_branch
      %30 = sbr.rel (0) target = $region21
    $region20: #{conv_mnist_forward.1} parent=1 // pred_region
      %s32 = ssub.s32 15360, 15360
      %33 = vsyncadd [#allocation3], %s32
      %s34 = sshll.u32 [#allocation2], 4
      %s35 = int_to_ptr.vmem [resolvable:$true] %s34
      %40 = dma.hbm_to_vmem [thread:$0]  %s4, 15360, %s35, [#allocation3], 768, 768, 48
    $region21: #{conv_mnist_forward.1} parent=1 // pred_fallthru
      _
    // Predicated region
    $region22: #{conv_mnist_forward.1} parent=1 // pred_check
      _
    $region23: #{conv_mnist_forward.1} parent=1 // pred_check_branch
      %42 = sbr.rel (0) target = $region25
    $region24: #{conv_mnist_forward.1} parent=1 // pred_region
      %s44 = ssub.s32 48, 48
      %45 = vsyncadd [#allocation5], %s44
      %s47 = sshll.u32 [#allocation4], 4
      %s48 = int_to_ptr.vmem [resolvable:$true] %s47
      %50 = dma.hbm_to_vmem [thread:$0]  %s5, 48, %s48, [#allocation5]
    $region25: #{conv_mnist_forward.1} parent=1 // pred_fallthru
      _
    // Predicated region
    $region26: #{conv_mnist_forward.1} parent=1 // pred_check
      _
    $region27: #{conv_mnist_forward.1} parent=1 // pred_check_branch
      %52 = sbr.rel (0) target = $region29
    $region28: #{conv_mnist_forward.1} parent=1 // pred_region
      %s54 = ssub.s32 61440, 61440
      %55 = vsyncadd [#allocation5], %s54
      %s56 = sshll.u32 [#allocation6], 4
      %s57 = int_to_ptr.vmem [resolvable:$true] %s56
      %62 = dma.hbm_to_vmem [thread:$0]  %s6, 61440, %s57, [#allocation5], 256, 256, 16
    $region29: #{conv_mnist_forward.1} parent=1 // pred_fallthru
      _
    // Predicated region
    $region30: #{conv_mnist_forward.1} parent=1 // pred_check
      _
    $region31: #{conv_mnist_forward.1} parent=1 // pred_check_branch
      %64 = sbr.rel (0) target = $region33
    $region32: #{conv_mnist_forward.1} parent=1 // pred_region
      %s66 = ssub.s32 16, 16
      %67 = vsyncadd [#allocation8], %s66
      %s69 = sshll.u32 [#allocation7], 4
      %s70 = int_to_ptr.vmem [resolvable:$true] %s69
      %72 = dma.hbm_to_vmem [thread:$0]  %s7, 16, %s70, [#allocation8]
    $region33: #{conv_mnist_forward.1} parent=1 // pred_fallthru
      _
    // Predicated region
    $region34: #{conv_mnist_forward.1} parent=1 // pred_check
      _
    $region35: #{conv_mnist_forward.1} parent=1 // pred_check_branch
      %74 = sbr.rel (0) target = $region37
    $region36: #{conv_mnist_forward.1} parent=1 // pred_region
      _
    $region37: #{conv_mnist_forward.1} parent=1 // pred_fallthru
      _
    // Predicated region
    $region38: #{conv_mnist_forward.1} parent=1 // pred_check
      _
    $region39: #{conv_mnist_forward.1} parent=1 // pred_check_branch
      %76 = sbr.rel (0) target = $region41
    $region40: #{conv_mnist_forward.1} parent=1 // pred_region
      %s78 = ssub.s32 16, 16
      %79 = vsyncadd [#allocation8], %s78
      %s81 = sshll.u32 [#allocation9], 4
      %s82 = int_to_ptr.vmem [resolvable:$true] %s81
      %84 = dma.hbm_to_vmem [thread:$0]  %s9, 16, %s82, [#allocation8]
    $region41: #{conv_mnist_forward.1} parent=1 // pred_fallthru
      _
    // Predicated region
    $region42: #{conv_mnist_forward.1} parent=1 // pred_check
      _
    $region43: #{conv_mnist_forward.1} parent=1 // pred_check_branch
      %86 = sbr.rel (0) target = $region45
    $region44: #{conv_mnist_forward.1} parent=1 // pred_region
      _
    $region45: #{conv_mnist_forward.1} parent=1 // pred_fallthru
      _
    // Predicated region
    $region46: #{conv_mnist_forward.1} parent=1 // pred_check
      _
    $region47: #{conv_mnist_forward.1} parent=1 // pred_check_branch
      %88 = sbr.rel (0) target = $region49
    $region48: #{conv_mnist_forward.1} parent=1 // pred_region
      %s90 = ssub.s32 16, 16
      %91 = vsyncadd [#allocation11], %s90
      %s93 = sshll.u32 [#allocation10], 4
      %s94 = int_to_ptr.vmem [resolvable:$true] %s93
      %96 = dma.hbm_to_vmem [thread:$0]  %s11, 16, %s94, [#allocation11]
    $region49: #{conv_mnist_forward.1} parent=1 // pred_fallthru
      _
    // Predicated region
    $region50: #{conv_mnist_forward.1} parent=1 // pred_check
      _
    $region51: #{conv_mnist_forward.1} parent=1 // pred_check_branch
      %98 = sbr.rel (0) target = $region53
    $region52: #{conv_mnist_forward.1} parent=1 // pred_region
      %99 = dma.done [#allocation3], 15360
    $region53: #{conv_mnist_forward.1} parent=1 // pred_fallthru
      _
    // Predicated region
    $region54: #{conv_mnist_forward.1} parent=1 // pred_check
      _
    $region55: #{conv_mnist_forward.1} parent=1 // pred_check_branch
      %101 = sbr.rel (0) target = $region57
    $region56: #{conv_mnist_forward.1} parent=1 // pred_region
      %102 = dma.done [#allocation5], 48
    $region57: #{conv_mnist_forward.1} parent=1 // pred_fallthru
      _
    // Predicated region
    $region58: #{conv_mnist_forward.1} parent=1 // pred_check
      _
    $region59: #{conv_mnist_forward.1} parent=1 // pred_check_branch
      %104 = sbr.rel (0) target = $region61
    $region60: #{conv_mnist_forward.1} parent=1 // pred_region
      %105 = dma.done [#allocation5], 61440
    $region61: #{conv_mnist_forward.1} parent=1 // pred_fallthru
      _
    // Predicated region
    $region62: #{conv_mnist_forward.1} parent=1 // pred_check
      _
    $region63: #{conv_mnist_forward.1} parent=1 // pred_check_branch
      %107 = sbr.rel (0) target = $region65
    $region64: #{conv_mnist_forward.1} parent=1 // pred_region
      %108 = dma.done [#allocation8], 16
    $region65: #{conv_mnist_forward.1} parent=1 // pred_fallthru
      _
    // Predicated region
    $region66: #{conv_mnist_forward.1} parent=1 // pred_check
      _
    $region67: #{conv_mnist_forward.1} parent=1 // pred_check_branch
      %110 = sbr.rel (0) target = $region69
    $region68: #{conv_mnist_forward.1} parent=1 // pred_region
      %111 = dma.done [#allocation8], 16
    $region69: #{conv_mnist_forward.1} parent=1 // pred_fallthru
      _
    // Predicated region
    $region70: #{conv_mnist_forward.1} parent=1 // pred_check
      _
    $region71: #{conv_mnist_forward.1} parent=1 // pred_check_branch
      %113 = sbr.rel (0) target = $region73
    $region72: #{conv_mnist_forward.1} parent=1 // pred_region
      %114 = dma.done [#allocation11], 16
    $region73: #{conv_mnist_forward.1} parent=1 // pred_fallthru
      _
    %v115 = vld [vmem:[%s0] sm:$0xff]
    %v116 = vld [vmem:[%s0 + $0x8] sm:$0xff]
    %v117 = vld [vmem:[%s0 + $0x10] sm:$0xff]
    %v118 = vld [vmem:[%s0 + $0x18] sm:$0xff]
    %v119 = vld [vmem:[%s0 + $0x20] sm:$0xff]
    %v120 = vld [vmem:[%s0 + $0x28] sm:$0xff]
    %v121 = vld [vmem:[%s0 + $0x30] sm:$0xff]
    %v122 = vld [vmem:[%s1] sm:$0xff]
    %v123 = vld [vmem:[%s1 + $0x8] sm:$0xff]
    %v124 = vld [vmem:[%s1 + $0x10] sm:$0xff]
    %v125 = vld [vmem:[%s1 + $0x18] sm:$0xff]
    %v126 = vld [vmem:[%s1 + $0x20] sm:$0xff]
    %v127 = vld [vmem:[%s1 + $0x28] sm:$0xff]
    %v128 = vld [vmem:[%s1 + $0x30] sm:$0xff]
    %v129 = vld [vmem:[%s2] sm:$0xff]
    %v130 = vld [vmem:[%s2 + $0x8] sm:$0xff]
    %v131 = vld [vmem:[%s2 + $0x10] sm:$0xff]
    %v132 = vld [vmem:[%s2 + $0x18] sm:$0xff]
    %v133 = vld [vmem:[%s2 + $0x20] sm:$0xff]
    %v134 = vld [vmem:[%s2 + $0x28] sm:$0xff]
    %v135 = vld [vmem:[%s2 + $0x30] sm:$0xff]
    %v136 = vld [vmem:[%s3] sm:$0xff]
    %v137 = vld [vmem:[%s3 + $0x8] sm:$0xff]
    %v138 = vld [vmem:[%s3 + $0x10] sm:$0xff]
    %v139 = vld [vmem:[%s3 + $0x18] sm:$0xff]
    %v140 = vld [vmem:[%s3 + $0x20] sm:$0xff]
    %v141 = vld [vmem:[%s3 + $0x28] sm:$0xff]
    %v142 = vld [vmem:[%s3 + $0x30] sm:$0xff]
    %v143 = vld [vmem:[#allocation2] sm:$0xff]
    %v144 = vld [vmem:[#allocation2 + $0x8] sm:$0xff]
    %v145 = vld [vmem:[#allocation2 + $0x10] sm:$0xff]
    %v146 = vld [vmem:[#allocation2 + $0x18] sm:$0xff]
    %v147 = vld [vmem:[#allocation2 + $0x20] sm:$0xff]
    %v148 = vld [vmem:[#allocation2 + $0x28] sm:$0xff]
    %v149 = vld [vmem:[#allocation2 + $0x30] sm:$0xff]
    %v150 = vld [vmem:[#allocation2 + $0x38] sm:$0xff]
    %v151 = vld [vmem:[#allocation2 + $0x40] sm:$0xff]
    %v152 = vld [vmem:[#allocation2 + $0x48] sm:$0xff]
    %v153 = vld [vmem:[#allocation2 + $0x50] sm:$0xff]
    %v154 = vld [vmem:[#allocation2 + $0x58] sm:$0xff]
    %v155 = vld [vmem:[#allocation2 + $0x60] sm:$0xff]
    %v156 = vld [vmem:[#allocation2 + $0x68] sm:$0xff]
    %v157 = vld [vmem:[#allocation2 + $0x70] sm:$0xff]
    %v158 = vld [vmem:[#allocation2 + $0x78] sm:$0xff]
    %v159 = vld [vmem:[#allocation2 + $0x80] sm:$0xff]
    %v160 = vld [vmem:[#allocation2 + $0x88] sm:$0xff]
    %v161 = vld [vmem:[#allocation2 + $0x90] sm:$0xf]
    %v162 = vld [vmem:[#allocation2 + $0x98] sm:$0xf]
    %v163 = vld [vmem:[#allocation2 + $0xa0] sm:$0xf]
    %v164 = vld [vmem:[#allocation2 + $0xa8] sm:$0xf]
    %v165 = vld [vmem:[#allocation2 + $0xb0] sm:$0xf]
    %v166 = vld [vmem:[#allocation2 + $0xb8] sm:$0xf]
    %s167 = scalar_lea.vmem [#allocation2], 192
    %v168 = vld [vmem:[%s167] sm:$0xff]
    %v169 = vld [vmem:[%s167 + $0x8] sm:$0xff]
    %v170 = vld [vmem:[%s167 + $0x10] sm:$0xff]
    %v171 = vld [vmem:[%s167 + $0x18] sm:$0xff]
    %v172 = vld [vmem:[%s167 + $0x20] sm:$0xff]
    %v173 = vld [vmem:[%s167 + $0x28] sm:$0xff]
    %v174 = vld [vmem:[%s167 + $0x30] sm:$0xff]
    %v175 = vld [vmem:[%s167 + $0x38] sm:$0xff]
    %v176 = vld [vmem:[%s167 + $0x40] sm:$0xff]
    %v177 = vld [vmem:[%s167 + $0x48] sm:$0xff]
    %v178 = vld [vmem:[%s167 + $0x50] sm:$0xff]
    %v179 = vld [vmem:[%s167 + $0x58] sm:$0xff]
    %v180 = vld [vmem:[%s167 + $0x60] sm:$0xff]
    %v181 = vld [vmem:[%s167 + $0x68] sm:$0xff]
    %v182 = vld [vmem:[%s167 + $0x70] sm:$0xff]
    %v183 = vld [vmem:[%s167 + $0x78] sm:$0xff]
    %v184 = vld [vmem:[%s167 + $0x80] sm:$0xff]
    %v185 = vld [vmem:[%s167 + $0x88] sm:$0xff]
    %v186 = vld [vmem:[%s167 + $0x90] sm:$0xf]
    %v187 = vld [vmem:[%s167 + $0x98] sm:$0xf]
    %v188 = vld [vmem:[%s167 + $0xa0] sm:$0xf]
    %v189 = vld [vmem:[%s167 + $0xa8] sm:$0xf]
    %v190 = vld [vmem:[%s167 + $0xb0] sm:$0xf]
    %v191 = vld [vmem:[%s167 + $0xb8] sm:$0xf]
    %vm192 = vcmask 228352
    %v194 = vsel %vm192, %v122, 0
    %v197 = vsel %vm192, %v123, 0
    %v200 = vsel %vm192, %v124, 0
    %v203 = vsel %vm192, %v125, 0
    %v206 = vsel %vm192, %v126, 0
    %v209 = vsel %vm192, %v127, 0
    %vm211 = vcmask 1043456
    %v213 = vsel %vm211, %v186, 0
    %v216 = vsel %vm211, %v187, 0
    %v219 = vsel %vm211, %v188, 0
    %v222 = vsel %vm211, %v189, 0
    %v225 = vsel %vm211, %v190, 0
    %v228 = vsel %vm211, %v191, 0
    %230 = vmatprep.subr.mxu0 %v169
    %231 = vmatpush1.msra.mxu0 %v168
    %232 = vmatprep.subr.mxu0 %v175
    %233 = vmatpush1.msra.mxu0 %v174
    %234 = vmatprep.subr.mxu0 %v181
    %235 = vmatpush1.msra.mxu0 %v180
    %236 = vmatprep.subr.mxu0 %v216
    %237 = vmatpush1.msra.mxu0 %v213
    %238 = vmatprep.subr.mxu0 0.0
    %239 = vmatpush1.msra.mxu0 0.0
    %240 = vmatprep.subr.mxu0 0.0
    %241 = vmatpush1.msra.mxu0 0.0
    %242 = vmatprep.subr.mxu0 0.0
    %243 = vmatpush1.msra.mxu0 0.0
    %244 = vmatprep.subr.mxu0 0.0
    %245 = vmatpush1.msra.mxu0 0.0
    %246 = vmatprep.subr.mxu0 0.0
    %247 = vmatpush1.msra.mxu0 0.0
    %248 = vmatprep.subr.mxu0 0.0
    %249 = vmatpush1.msra.mxu0 0.0
    %250 = vmatprep.subr.mxu0 0.0
    %251 = vmatpush1.msra.mxu0 0.0
    %252 = vmatprep.subr.mxu0 0.0
    %253 = vmatpush1.msra.mxu0 0.0
    %254 = vmatprep.subr.mxu0 0.0
    %255 = vmatpush1.msra.mxu0 0.0
    %256 = vmatprep.subr.mxu0 0.0
    %257 = vmatpush1.msra.mxu0 0.0
    %258 = vmatprep.subr.mxu0 0.0
    %259 = vmatpush1.msra.mxu0 0.0
    %260 = vmatprep.subr.mxu0 0.0
    %261 = vmatpush1.msra.mxu0 0.0
    %262 = vmatprep.subr.mxu0 0.0
    %263 = vmatpush1.msra.mxu0 0.0
    %264 = vmatprep.subr.mxu0 0.0
    %265 = vmatpush1.msra.mxu0 0.0
    %266 = vmatprep.subr.mxu0 0.0
    %267 = vmatpush1.msra.mxu0 0.0
    %268 = vmatprep.subr.mxu0 0.0
    %269 = vmatpush1.msra.mxu0 0.0
    %270 = vmatprep.subr.mxu0 0.0
    %271 = vmatpush1.msra.mxu0 0.0
    %272 = vmatprep.subr.mxu0 0.0
    %273 = vmatpush1.msra.mxu0 0.0
    %274 = vmatprep.subr.mxu0 0.0
    %275 = vmatpush1.msra.mxu0 0.0
    %276 = vmatprep.subr.mxu0 0.0
    %277 = vmatpush1.msra.mxu0 0.0
    %278 = vmatprep.subr.mxu0 0.0
    %279 = vmatpush1.msra.mxu0 0.0
    %280 = vmatprep.subr.mxu0 0.0
    %281 = vmatpush1.msra.mxu0 0.0
    %282 = vmatprep.subr.mxu0 0.0
    %283 = vmatpush1.msra.mxu0 0.0
    %284 = vmatprep.subr.mxu0 0.0
    %285 = vmatpush1.msra.mxu0 0.0
    %286 = vmatprep.subr.mxu0 0.0
    %287 = vmatpush1.msra.mxu0 0.0
    %288 = vmatprep.subr.mxu0 0.0
    %289 = vmatpush1.msra.mxu0 0.0
    %290 = vmatprep.subr.mxu0 0.0
    %291 = vmatpush1.msra.mxu0 0.0
    %292 = vmatprep.subr.mxu0 0.0
    %293 = vmatpush1.msra.mxu0 0.0
    %294 = vmatprep.mubr.f32.mxu0 0.0
    %295 = vmatmul.mubr.f32.gmra.mrb[0].mxu0 %v194
    %v296 = vpop.f32.mrb[0].mxu0
    %v297 = vadd.f32 0.0, %v296
    %v298 = vpop.f32.mrb[0].mxu0
    %v299 = vadd.f32 0.0, %v298
    %300 = vmatprep.mubr.f32.mxu0 0.0
    %301 = vmatmul.mubr.f32.gmra.mrb[0].mxu0 %v197
    %v302 = vpop.f32.mrb[0].mxu0
    %v303 = vadd.f32 0.0, %v302
    %v304 = vpop.f32.mrb[0].mxu0
    %v305 = vadd.f32 0.0, %v304
    %306 = vmatprep.mubr.f32.mxu0 0.0
    %307 = vmatmul.mubr.f32.gmra.mrb[0].mxu0 %v200
    %v308 = vpop.f32.mrb[0].mxu0
    %v309 = vadd.f32 0.0, %v308
    %v310 = vpop.f32.mrb[0].mxu0
    %v311 = vadd.f32 0.0, %v310
    %312 = vmatprep.mubr.f32.mxu0 0.0
    %313 = vmatmul.mubr.f32.gmra.mrb[0].mxu0 %v203
    %v314 = vpop.f32.mrb[0].mxu0
    %v315 = vadd.f32 0.0, %v314
    %v316 = vpop.f32.mrb[0].mxu0
    %v317 = vadd.f32 0.0, %v316
    %318 = vmatprep.mubr.f32.mxu0 0.0
    %319 = vmatmul.mubr.f32.gmra.mrb[0].mxu0 %v206
    %v320 = vpop.f32.mrb[0].mxu0
    %v321 = vadd.f32 0.0, %v320
    %v322 = vpop.f32.mrb[0].mxu0
    %v323 = vadd.f32 0.0, %v322
    %324 = vmatprep.mubr.f32.mxu0 0.0
    %325 = vmatmul.mubr.f32.gmra.mrb[0].mxu0 %v209
    %v326 = vpop.f32.mrb[0].mxu0
    %v327 = vadd.f32 0.0, %v326
    %v328 = vpop.f32.mrb[0].mxu0
    %v329 = vadd.f32 0.0, %v328
    %330 = vdwg.mxu0
    %331 = vmatprep.subr.mxu0 %v171
    %332 = vmatpush1.msra.mxu0 %v170
    %333 = vmatprep.subr.mxu0 %v177
    %334 = vmatpush1.msra.mxu0 %v176
    %335 = vmatprep.subr.mxu0 %v183
    %336 = vmatpush1.msra.mxu0 %v182
    %337 = vmatprep.subr.mxu0 %v222
    %338 = vmatpush1.msra.mxu0 %v219
    %339 = vmatprep.subr.mxu0 0.0
    %340 = vmatpush1.msra.mxu0 0.0
    %341 = vmatprep.subr.mxu0 0.0
    %342 = vmatpush1.msra.mxu0 0.0
    %343 = vmatprep.subr.mxu0 0.0
    %344 = vmatpush1.msra.mxu0 0.0
    %345 = vmatprep.subr.mxu0 0.0
    %346 = vmatpush1.msra.mxu0 0.0
    %347 = vmatprep.subr.mxu0 0.0
    %348 = vmatpush1.msra.mxu0 0.0
    %349 = vmatprep.subr.mxu0 0.0
    %350 = vmatpush1.msra.mxu0 0.0
    %351 = vmatprep.subr.mxu0 0.0
    %352 = vmatpush1.msra.mxu0 0.0
    %353 = vmatprep.subr.mxu0 0.0
    %354 = vmatpush1.msra.mxu0 0.0
    %355 = vmatprep.subr.mxu0 0.0
    %356 = vmatpush1.msra.mxu0 0.0
    %357 = vmatprep.subr.mxu0 0.0
    %358 = vmatpush1.msra.mxu0 0.0
    %359 = vmatprep.subr.mxu0 0.0
    %360 = vmatpush1.msra.mxu0 0.0
    %361 = vmatprep.subr.mxu0 0.0
    %362 = vmatpush1.msra.mxu0 0.0
    %363 = vmatprep.subr.mxu0 0.0
    %364 = vmatpush1.msra.mxu0 0.0
    %365 = vmatprep.subr.mxu0 0.0
    %366 = vmatpush1.msra.mxu0 0.0
    %367 = vmatprep.subr.mxu0 0.0
    %368 = vmatpush1.msra.mxu0 0.0
    %369 = vmatprep.subr.mxu0 0.0
    %370 = vmatpush1.msra.mxu0 0.0
    %371 = vmatprep.subr.mxu0 0.0
    %372 = vmatpush1.msra.mxu0 0.0
    %373 = vmatprep.subr.mxu0 0.0
    %374 = vmatpush1.msra.mxu0 0.0
    %375 = vmatprep.subr.mxu0 0.0
    %376 = vmatpush1.msra.mxu0 0.0
    %377 = vmatprep.subr.mxu0 0.0
    %378 = vmatpush1.msra.mxu0 0.0
    %379 = vmatprep.subr.mxu0 0.0
    %380 = vmatpush1.msra.mxu0 0.0
    %381 = vmatprep.subr.mxu0 0.0
    %382 = vmatpush1.msra.mxu0 0.0
    %383 = vmatprep.subr.mxu0 0.0
    %384 = vmatpush1.msra.mxu0 0.0
    %385 = vmatprep.subr.mxu0 0.0
    %386 = vmatpush1.msra.mxu0 0.0
    %387 = vmatprep.subr.mxu0 0.0
    %388 = vmatpush1.msra.mxu0 0.0
    %389 = vmatprep.subr.mxu0 0.0
    %390 = vmatpush1.msra.mxu0 0.0
    %391 = vmatprep.subr.mxu0 0.0
    %392 = vmatpush1.msra.mxu0 0.0
    %393 = vmatprep.subr.mxu0 0.0
    %394 = vmatpush1.msra.mxu0 0.0
    %395 = vmatprep.mubr.f32.mxu0 0.0
    %396 = vmatmul.mubr.f32.gmra.mrb[0].mxu0 %v194
    %v397 = vpop.f32.mrb[0].mxu0
    %v398 = vadd.f32 0.0, %v397
    %v399 = vpop.f32.mrb[0].mxu0
    %v400 = vadd.f32 0.0, %v399
    %401 = vmatprep.mubr.f32.mxu0 0.0
    %402 = vmatmul.mubr.f32.gmra.mrb[0].mxu0 %v197
    %v403 = vpop.f32.mrb[0].mxu0
    %v404 = vadd.f32 0.0, %v403
    %v405 = vpop.f32.mrb[0].mxu0
    %v406 = vadd.f32 0.0, %v405
    %407 = vmatprep.mubr.f32.mxu0 0.0
    %408 = vmatmul.mubr.f32.gmra.mrb[0].mxu0 %v200
    %v409 = vpop.f32.mrb[0].mxu0
    %v410 = vadd.f32 0.0, %v409
    %v411 = vpop.f32.mrb[0].mxu0
    %v412 = vadd.f32 0.0, %v411
    %413 = vmatprep.mubr.f32.mxu0 0.0
    %414 = vmatmul.mubr.f32.gmra.mrb[0].mxu0 %v203
    %v415 = vpop.f32.mrb[0].mxu0
    %v416 = vadd.f32 0.0, %v415
    %v417 = vpop.f32.mrb[0].mxu0
    %v418 = vadd.f32 0.0, %v417
    %419 = vmatprep.mubr.f32.mxu0 0.0
    %420 = vmatmul.mubr.f32.gmra.mrb[0].mxu0 %v206
    %v421 = vpop.f32.mrb[0].mxu0
    %v422 = vadd.f32 0.0, %v421
    %v423 = vpop.f32.mrb[0].mxu0
    %v424 = vadd.f32 0.0, %v423
    %425 = vmatprep.mubr.f32.mxu0 0.0
    %426 = vmatmul.mubr.f32.gmra.mrb[0].mxu0 %v209
    %v427 = vpop.f32.mrb[0].mxu0
    %v428 = vadd.f32 0.0, %v427
    %v429 = vpop.f32.mrb[0].mxu0
    %v430 = vadd.f32 0.0, %v429
    %431 = vdwg.mxu0
    %432 = vmatprep.subr.mxu0 %v173
    %433 = vmatpush1.msra.mxu0 %v172
    %434 = vmatprep.subr.mxu0 %v179
    %435 = vmatpush1.msra.mxu0 %v178
    %436 = vmatprep.subr.mxu0 %v185
    %437 = vmatpush1.msra.mxu0 %v184
    %438 = vmatprep.subr.mxu0 %v228
    %439 = vmatpush1.msra.mxu0 %v225
    %440 = vmatprep.subr.mxu0 0.0
    %441 = vmatpush1.msra.mxu0 0.0
    %442 = vmatprep.subr.mxu0 0.0
    %443 = vmatpush1.msra.mxu0 0.0
    %444 = vmatprep.subr.mxu0 0.0
    %445 = vmatpush1.msra.mxu0 0.0
    %446 = vmatprep.subr.mxu0 0.0
    %447 = vmatpush1.msra.mxu0 0.0
    %448 = vmatprep.subr.mxu0 0.0
    %449 = vmatpush1.msra.mxu0 0.0
    %450 = vmatprep.subr.mxu0 0.0
    %451 = vmatpush1.msra.mxu0 0.0
    %452 = vmatprep.subr.mxu0 0.0
    %453 = vmatpush1.msra.mxu0 0.0
    %454 = vmatprep.subr.mxu0 0.0
    %455 = vmatpush1.msra.mxu0 0.0
    %456 = vmatprep.subr.mxu0 0.0
    %457 = vmatpush1.msra.mxu0 0.0
    %458 = vmatprep.subr.mxu0 0.0
    %459 = vmatpush1.msra.mxu0 0.0
    %460 = vmatprep.subr.mxu0 0.0
    %461 = vmatpush1.msra.mxu0 0.0
    %462 = vmatprep.subr.mxu0 0.0
    %463 = vmatpush1.msra.mxu0 0.0
    %464 = vmatprep.subr.mxu0 0.0
    %465 = vmatpush1.msra.mxu0 0.0
    %466 = vmatprep.subr.mxu0 0.0
    %467 = vmatpush1.msra.mxu0 0.0
    %468 = vmatprep.subr.mxu0 0.0
    %469 = vmatpush1.msra.mxu0 0.0
    %470 = vmatprep.subr.mxu0 0.0
    %471 = vmatpush1.msra.mxu0 0.0
    %472 = vmatprep.subr.mxu0 0.0
    %473 = vmatpush1.msra.mxu0 0.0
    %474 = vmatprep.subr.mxu0 0.0
    %475 = vmatpush1.msra.mxu0 0.0
    %476 = vmatprep.subr.mxu0 0.0
    %477 = vmatpush1.msra.mxu0 0.0
    %478 = vmatprep.subr.mxu0 0.0
    %479 = vmatpush1.msra.mxu0 0.0
    %480 = vmatprep.subr.mxu0 0.0
    %481 = vmatpush1.msra.mxu0 0.0
    %482 = vmatprep.subr.mxu0 0.0
    %483 = vmatpush1.msra.mxu0 0.0
    %484 = vmatprep.subr.mxu0 0.0
    %485 = vmatpush1.msra.mxu0 0.0
    %486 = vmatprep.subr.mxu0 0.0
    %487 = vmatpush1.msra.mxu0 0.0
    %488 = vmatprep.subr.mxu0 0.0
    %489 = vmatpush1.msra.mxu0 0.0
    %490 = vmatprep.subr.mxu0 0.0
    %491 = vmatpush1.msra.mxu0 0.0
    %492 = vmatprep.subr.mxu0 0.0
    %493 = vmatpush1.msra.mxu0 0.0
    %494 = vmatprep.subr.mxu0 0.0
    %495 = vmatpush1.msra.mxu0 0.0
    %496 = vmatprep.mubr.f32.mxu0 0.0
    %497 = vmatmul.mubr.f32.gmra.mrb[0].mxu0 %v194
    %v498 = vpop.f32.mrb[0].mxu0
    %v499 = vadd.f32 0.0, %v498
    %v500 = vpop.f32.mrb[0].mxu0
    %v501 = vadd.f32 0.0, %v500
    %502 = vmatprep.mubr.f32.mxu0 0.0
    %503 = vmatmul.mubr.f32.gmra.mrb[0].mxu0 %v197
    %v504 = vpop.f32.mrb[0].mxu0
    %v505 = vadd.f32 0.0, %v504
    %v506 = vpop.f32.mrb[0].mxu0
    %v507 = vadd.f32 0.0, %v506
    %508 = vmatprep.mubr.f32.mxu0 0.0
    %509 = vmatmul.mubr.f32.gmra.mrb[0].mxu0 %v200
    %v510 = vpop.f32.mrb[0].mxu0
    %v511 = vadd.f32 0.0, %v510
    %v512 = vpop.f32.mrb[0].mxu0
    %v513 = vadd.f32 0.0, %v512
    %514 = vmatprep.mubr.f32.mxu0 0.0
    %515 = vmatmul.mubr.f32.gmra.mrb[0].mxu0 %v203
    %v516 = vpop.f32.mrb[0].mxu0
    %v517 = vadd.f32 0.0, %v516
    %v518 = vpop.f32.mrb[0].mxu0
    %v519 = vadd.f32 0.0, %v518
    %520 = vmatprep.mubr.f32.mxu0 0.0
    %521 = vmatmul.mubr.f32.gmra.mrb[0].mxu0 %v206
    %v522 = vpop.f32.mrb[0].mxu0
    %v523 = vadd.f32 0.0, %v522
    %v524 = vpop.f32.mrb[0].mxu0
    %v525 = vadd.f32 0.0, %v524
    %526 = vmatprep.mubr.f32.mxu0 0.0
    %527 = vmatmul.mubr.f32.gmra.mrb[0].mxu0 %v209
    %v528 = vpop.f32.mrb[0].mxu0
    %v529 = vadd.f32 0.0, %v528
    %v530 = vpop.f32.mrb[0].mxu0
    %v531 = vadd.f32 0.0, %v530
    %532 = vdwg.mxu0
    %v534 = vsel %vm192, %v115, 0
    %v537 = vsel %vm192, %v116, 0
    %v540 = vsel %vm192, %v117, 0
    %v543 = vsel %vm192, %v118, 0
    %v546 = vsel %vm192, %v119, 0
    %v549 = vsel %vm192, %v120, 0
    %v552 = vsel %vm211, %v161, 0
    %v555 = vsel %vm211, %v162, 0
    %v558 = vsel %vm211, %v163, 0
    %v561 = vsel %vm211, %v164, 0
    %v564 = vsel %vm211, %v165, 0
    %v567 = vsel %vm211, %v166, 0
    %569 = vmatprep.subr.mxu0 %v144
    %570 = vmatpush1.msra.mxu0 %v143
    %571 = vmatprep.subr.mxu0 %v150
    %572 = vmatpush1.msra.mxu0 %v149
    %573 = vmatprep.subr.mxu0 %v156
    %574 = vmatpush1.msra.mxu0 %v155
    %575 = vmatprep.subr.mxu0 %v555
    %576 = vmatpush1.msra.mxu0 %v552
    %577 = vmatprep.subr.mxu0 0.0
    %578 = vmatpush1.msra.mxu0 0.0
    %579 = vmatprep.subr.mxu0 0.0
    %580 = vmatpush1.msra.mxu0 0.0
    %581 = vmatprep.subr.mxu0 0.0
    %582 = vmatpush1.msra.mxu0 0.0
    %583 = vmatprep.subr.mxu0 0.0
    %584 = vmatpush1.msra.mxu0 0.0
    %585 = vmatprep.subr.mxu0 0.0
    %586 = vmatpush1.msra.mxu0 0.0
    %587 = vmatprep.subr.mxu0 0.0
    %588 = vmatpush1.msra.mxu0 0.0
    %589 = vmatprep.subr.mxu0 0.0
    %590 = vmatpush1.msra.mxu0 0.0
    %591 = vmatprep.subr.mxu0 0.0
    %592 = vmatpush1.msra.mxu0 0.0
    %593 = vmatprep.subr.mxu0 0.0
    %594 = vmatpush1.msra.mxu0 0.0
    %595 = vmatprep.subr.mxu0 0.0
    %596 = vmatpush1.msra.mxu0 0.0
    %597 = vmatprep.subr.mxu0 0.0
    %598 = vmatpush1.msra.mxu0 0.0
    %599 = vmatprep.subr.mxu0 0.0
    %600 = vmatpush1.msra.mxu0 0.0
    %601 = vmatprep.subr.mxu0 0.0
    %602 = vmatpush1.msra.mxu0 0.0
    %603 = vmatprep.subr.mxu0 0.0
    %604 = vmatpush1.msra.mxu0 0.0
    %605 = vmatprep.subr.mxu0 0.0
    %606 = vmatpush1.msra.mxu0 0.0
    %607 = vmatprep.subr.mxu0 0.0
    %608 = vmatpush1.msra.mxu0 0.0
    %609 = vmatprep.subr.mxu0 0.0
    %610 = vmatpush1.msra.mxu0 0.0
    %611 = vmatprep.subr.mxu0 0.0
    %612 = vmatpush1.msra.mxu0 0.0
    %613 = vmatprep.subr.mxu0 0.0
    %614 = vmatpush1.msra.mxu0 0.0
    %615 = vmatprep.subr.mxu0 0.0
    %616 = vmatpush1.msra.mxu0 0.0
    %617 = vmatprep.subr.mxu0 0.0
    %618 = vmatpush1.msra.mxu0 0.0
    %619 = vmatprep.subr.mxu0 0.0
    %620 = vmatpush1.msra.mxu0 0.0
    %621 = vmatprep.subr.mxu0 0.0
    %622 = vmatpush1.msra.mxu0 0.0
    %623 = vmatprep.subr.mxu0 0.0
    %624 = vmatpush1.msra.mxu0 0.0
    %625 = vmatprep.subr.mxu0 0.0
    %626 = vmatpush1.msra.mxu0 0.0
    %627 = vmatprep.subr.mxu0 0.0
    %628 = vmatpush1.msra.mxu0 0.0
    %629 = vmatprep.subr.mxu0 0.0
    %630 = vmatpush1.msra.mxu0 0.0
    %631 = vmatprep.subr.mxu0 0.0
    %632 = vmatpush1.msra.mxu0 0.0
    %633 = vmatprep.mubr.f32.mxu0 0.0
    %634 = vmatmul.mubr.f32.gmra.mrb[0].mxu0 %v534
    %v635 = vpop.f32.mrb[0].mxu0
    %v636 = vadd.f32 %v297, %v635
    %v637 = vpop.f32.mrb[0].mxu0
    %v638 = vadd.f32 %v299, %v637
    %639 = vmatprep.mubr.f32.mxu0 0.0
    %640 = vmatmul.mubr.f32.gmra.mrb[0].mxu0 %v537
    %v641 = vpop.f32.mrb[0].mxu0
    %v642 = vadd.f32 %v303, %v641
    %v643 = vpop.f32.mrb[0].mxu0
    %v644 = vadd.f32 %v305, %v643
    %645 = vmatprep.mubr.f32.mxu0 0.0
    %646 = vmatmul.mubr.f32.gmra.mrb[0].mxu0 %v540
    %v647 = vpop.f32.mrb[0].mxu0
    %v648 = vadd.f32 %v309, %v647
    %v649 = vpop.f32.mrb[0].mxu0
    %v650 = vadd.f32 %v311, %v649
    %651 = vmatprep.mubr.f32.mxu0 0.0
    %652 = vmatmul.mubr.f32.gmra.mrb[0].mxu0 %v543
    %v653 = vpop.f32.mrb[0].mxu0
    %v654 = vadd.f32 %v315, %v653
    %v655 = vpop.f32.mrb[0].mxu0
    %v656 = vadd.f32 %v317, %v655
    %657 = vmatprep.mubr.f32.mxu0 0.0
    %658 = vmatmul.mubr.f32.gmra.mrb[0].mxu0 %v546
    %v659 = vpop.f32.mrb[0].mxu0
    %v660 = vadd.f32 %v321, %v659
    %v661 = vpop.f32.mrb[0].mxu0
    %v662 = vadd.f32 %v323, %v661
    %663 = vmatprep.mubr.f32.mxu0 0.0
    %664 = vmatmul.mubr.f32.gmra.mrb[0].mxu0 %v549
    %v665 = vpop.f32.mrb[0].mxu0
    %v666 = vadd.f32 %v327, %v665
    %v667 = vpop.f32.mrb[0].mxu0
    %v668 = vadd.f32 %v329, %v667
    %669 = vdwg.mxu0
    %670 = vmatprep.subr.mxu0 %v146
    %671 = vmatpush1.msra.mxu0 %v145
    %672 = vmatprep.subr.mxu0 %v152
    %673 = vmatpush1.msra.mxu0 %v151
    %674 = vmatprep.subr.mxu0 %v158
    %675 = vmatpush1.msra.mxu0 %v157
    %676 = vmatprep.subr.mxu0 %v561
    %677 = vmatpush1.msra.mxu0 %v558
    %678 = vmatprep.subr.mxu0 0.0
    %679 = vmatpush1.msra.mxu0 0.0
    %680 = vmatprep.subr.mxu0 0.0
    %681 = vmatpush1.msra.mxu0 0.0
    %682 = vmatprep.subr.mxu0 0.0
    %683 = vmatpush1.msra.mxu0 0.0
    %684 = vmatprep.subr.mxu0 0.0
    %685 = vmatpush1.msra.mxu0 0.0
    %686 = vmatprep.subr.mxu0 0.0
    %687 = vmatpush1.msra.mxu0 0.0
    %688 = vmatprep.subr.mxu0 0.0
    %689 = vmatpush1.msra.mxu0 0.0
    %690 = vmatprep.subr.mxu0 0.0
    %691 = vmatpush1.msra.mxu0 0.0
    %692 = vmatprep.subr.mxu0 0.0
    %693 = vmatpush1.msra.mxu0 0.0
    %694 = vmatprep.subr.mxu0 0.0
    %695 = vmatpush1.msra.mxu0 0.0
    %696 = vmatprep.subr.mxu0 0.0
    %697 = vmatpush1.msra.mxu0 0.0
    %698 = vmatprep.subr.mxu0 0.0
    %699 = vmatpush1.msra.mxu0 0.0
    %700 = vmatprep.subr.mxu0 0.0
    %701 = vmatpush1.msra.mxu0 0.0
    %702 = vmatprep.subr.mxu0 0.0
    %703 = vmatpush1.msra.mxu0 0.0
    %704 = vmatprep.subr.mxu0 0.0
    %705 = vmatpush1.msra.mxu0 0.0
    %706 = vmatprep.subr.mxu0 0.0
    %707 = vmatpush1.msra.mxu0 0.0
    %708 = vmatprep.subr.mxu0 0.0
    %709 = vmatpush1.msra.mxu0 0.0
    %710 = vmatprep.subr.mxu0 0.0
    %711 = vmatpush1.msra.mxu0 0.0
    %712 = vmatprep.subr.mxu0 0.0
    %713 = vmatpush1.msra.mxu0 0.0
    %714 = vmatprep.subr.mxu0 0.0
    %715 = vmatpush1.msra.mxu0 0.0
    %716 = vmatprep.subr.mxu0 0.0
    %717 = vmatpush1.msra.mxu0 0.0
    %718 = vmatprep.subr.mxu0 0.0
    %719 = vmatpush1.msra.mxu0 0.0
    %720 = vmatprep.subr.mxu0 0.0
    %721 = vmatpush1.msra.mxu0 0.0
    %722 = vmatprep.subr.mxu0 0.0
    %723 = vmatpush1.msra.mxu0 0.0
    %724 = vmatprep.subr.mxu0 0.0
    %725 = vmatpush1.msra.mxu0 0.0
    %726 = vmatprep.subr.mxu0 0.0
    %727 = vmatpush1.msra.mxu0 0.0
    %728 = vmatprep.subr.mxu0 0.0
    %729 = vmatpush1.msra.mxu0 0.0
    %730 = vmatprep.subr.mxu0 0.0
    %731 = vmatpush1.msra.mxu0 0.0
    %732 = vmatprep.subr.mxu0 0.0
    %733 = vmatpush1.msra.mxu0 0.0
    %734 = vmatprep.mubr.f32.mxu0 0.0
    %735 = vmatmul.mubr.f32.gmra.mrb[0].mxu0 %v534
    %v736 = vpop.f32.mrb[0].mxu0
    %v737 = vadd.f32 %v398, %v736
    %v738 = vpop.f32.mrb[0].mxu0
    %v739 = vadd.f32 %v400, %v738
    %740 = vmatprep.mubr.f32.mxu0 0.0
    %741 = vmatmul.mubr.f32.gmra.mrb[0].mxu0 %v537
    %v742 = vpop.f32.mrb[0].mxu0
    %v743 = vadd.f32 %v404, %v742
    %v744 = vpop.f32.mrb[0].mxu0
    %v745 = vadd.f32 %v406, %v744
    %746 = vmatprep.mubr.f32.mxu0 0.0
    %747 = vmatmul.mubr.f32.gmra.mrb[0].mxu0 %v540
    %v748 = vpop.f32.mrb[0].mxu0
    %v749 = vadd.f32 %v410, %v748
    %v750 = vpop.f32.mrb[0].mxu0
    %v751 = vadd.f32 %v412, %v750
    %752 = vmatprep.mubr.f32.mxu0 0.0
    %753 = vmatmul.mubr.f32.gmra.mrb[0].mxu0 %v543
    %v754 = vpop.f32.mrb[0].mxu0
    %v755 = vadd.f32 %v416, %v754
    %v756 = vpop.f32.mrb[0].mxu0
    %v757 = vadd.f32 %v418, %v756
    %758 = vmatprep.mubr.f32.mxu0 0.0
    %759 = vmatmul.mubr.f32.gmra.mrb[0].mxu0 %v546
    %v760 = vpop.f32.mrb[0].mxu0
    %v761 = vadd.f32 %v422, %v760
    %v762 = vpop.f32.mrb[0].mxu0
    %v763 = vadd.f32 %v424, %v762
    %764 = vmatprep.mubr.f32.mxu0 0.0
    %765 = vmatmul.mubr.f32.gmra.mrb[0].mxu0 %v549
    %v766 = vpop.f32.mrb[0].mxu0
    %v767 = vadd.f32 %v428, %v766
    %v768 = vpop.f32.mrb[0].mxu0
    %v769 = vadd.f32 %v430, %v768
    %770 = vdwg.mxu0
    %771 = vmatprep.subr.mxu0 %v148
    %772 = vmatpush1.msra.mxu0 %v147
    %773 = vmatprep.subr.mxu0 %v154
    %774 = vmatpush1.msra.mxu0 %v153
    %775 = vmatprep.subr.mxu0 %v160
    %776 = vmatpush1.msra.mxu0 %v159
    %777 = vmatprep.subr.mxu0 %v567
    %778 = vmatpush1.msra.mxu0 %v564
    %779 = vmatprep.subr.mxu0 0.0
    %780 = vmatpush1.msra.mxu0 0.0
    %781 = vmatprep.subr.mxu0 0.0
    %782 = vmatpush1.msra.mxu0 0.0
    %783 = vmatprep.subr.mxu0 0.0
    %784 = vmatpush1.msra.mxu0 0.0
    %785 = vmatprep.subr.mxu0 0.0
    %786 = vmatpush1.msra.mxu0 0.0
    %787 = vmatprep.subr.mxu0 0.0
    %788 = vmatpush1.msra.mxu0 0.0
    %789 = vmatprep.subr.mxu0 0.0
    %790 = vmatpush1.msra.mxu0 0.0
    %791 = vmatprep.subr.mxu0 0.0
    %792 = vmatpush1.msra.mxu0 0.0
    %793 = vmatprep.subr.mxu0 0.0
    %794 = vmatpush1.msra.mxu0 0.0
    %795 = vmatprep.subr.mxu0 0.0
    %796 = vmatpush1.msra.mxu0 0.0
    %797 = vmatprep.subr.mxu0 0.0
    %798 = vmatpush1.msra.mxu0 0.0
    %799 = vmatprep.subr.mxu0 0.0
    %800 = vmatpush1.msra.mxu0 0.0
    %801 = vmatprep.subr.mxu0 0.0
    %802 = vmatpush1.msra.mxu0 0.0
    %803 = vmatprep.subr.mxu0 0.0
    %804 = vmatpush1.msra.mxu0 0.0
    %805 = vmatprep.subr.mxu0 0.0
    %806 = vmatpush1.msra.mxu0 0.0
    %807 = vmatprep.subr.mxu0 0.0
    %808 = vmatpush1.msra.mxu0 0.0
    %809 = vmatprep.subr.mxu0 0.0
    %810 = vmatpush1.msra.mxu0 0.0
    %811 = vmatprep.subr.mxu0 0.0
    %812 = vmatpush1.msra.mxu0 0.0
    %813 = vmatprep.subr.mxu0 0.0
    %814 = vmatpush1.msra.mxu0 0.0
    %815 = vmatprep.subr.mxu0 0.0
    %816 = vmatpush1.msra.mxu0 0.0
    %817 = vmatprep.subr.mxu0 0.0
    %818 = vmatpush1.msra.mxu0 0.0
    %819 = vmatprep.subr.mxu0 0.0
    %820 = vmatpush1.msra.mxu0 0.0
    %821 = vmatprep.subr.mxu0 0.0
    %822 = vmatpush1.msra.mxu0 0.0
    %823 = vmatprep.subr.mxu0 0.0
    %824 = vmatpush1.msra.mxu0 0.0
    %825 = vmatprep.subr.mxu0 0.0
    %826 = vmatpush1.msra.mxu0 0.0
    %827 = vmatprep.subr.mxu0 0.0
    %828 = vmatpush1.msra.mxu0 0.0
    %829 = vmatprep.subr.mxu0 0.0
    %830 = vmatpush1.msra.mxu0 0.0
    %831 = vmatprep.subr.mxu0 0.0
    %832 = vmatpush1.msra.mxu0 0.0
    %833 = vmatprep.subr.mxu0 0.0
    %834 = vmatpush1.msra.mxu0 0.0
    %835 = vmatprep.mubr.f32.mxu0 0.0
    %836 = vmatmul.mubr.f32.gmra.mrb[0].mxu0 %v534
    %v837 = vpop.f32.mrb[0].mxu0
    %v838 = vadd.f32 %v499, %v837
    %v839 = vpop.f32.mrb[0].mxu0
    %v840 = vadd.f32 %v501, %v839
    %841 = vmatprep.mubr.f32.mxu0 0.0
    %842 = vmatmul.mubr.f32.gmra.mrb[0].mxu0 %v537
    %v843 = vpop.f32.mrb[0].mxu0
    %v844 = vadd.f32 %v505, %v843
    %v845 = vpop.f32.mrb[0].mxu0
    %v846 = vadd.f32 %v507, %v845
    %847 = vmatprep.mubr.f32.mxu0 0.0
    %848 = vmatmul.mubr.f32.gmra.mrb[0].mxu0 %v540
    %v849 = vpop.f32.mrb[0].mxu0
    %v850 = vadd.f32 %v511, %v849
    %v851 = vpop.f32.mrb[0].mxu0
    %v852 = vadd.f32 %v513, %v851
    %853 = vmatprep.mubr.f32.mxu0 0.0
    %854 = vmatmul.mubr.f32.gmra.mrb[0].mxu0 %v543
    %v855 = vpop.f32.mrb[0].mxu0
    %v856 = vadd.f32 %v517, %v855
    %v857 = vpop.f32.mrb[0].mxu0
    %v858 = vadd.f32 %v519, %v857
    %859 = vmatprep.mubr.f32.mxu0 0.0
    %860 = vmatmul.mubr.f32.gmra.mrb[0].mxu0 %v546
    %v861 = vpop.f32.mrb[0].mxu0
    %v862 = vadd.f32 %v523, %v861
    %v863 = vpop.f32.mrb[0].mxu0
    %v864 = vadd.f32 %v525, %v863
    %865 = vmatprep.mubr.f32.mxu0 0.0
    %866 = vmatmul.mubr.f32.gmra.mrb[0].mxu0 %v549
    %v867 = vpop.f32.mrb[0].mxu0
    %v868 = vadd.f32 %v529, %v867
    %v869 = vpop.f32.mrb[0].mxu0
    %v870 = vadd.f32 %v531, %v869
    %871 = vdwg.mxu0
    %s872 = scalar_lea.vmem [#allocation2], 384
    %v873 = vld [vmem:[%s872] sm:$0xff]
    %v874 = vld [vmem:[%s872 + $0x8] sm:$0xff]
    %v875 = vld [vmem:[%s872 + $0x10] sm:$0xff]
    %v876 = vld [vmem:[%s872 + $0x18] sm:$0xff]
    %v877 = vld [vmem:[%s872 + $0x20] sm:$0xff]
    %v878 = vld [vmem:[%s872 + $0x28] sm:$0xff]
    %v879 = vld [vmem:[%s872 + $0x30] sm:$0xff]
    %v880 = vld [vmem:[%s872 + $0x38] sm:$0xff]
    %v881 = vld [vmem:[%s872 + $0x40] sm:$0xff]
    %v882 = vld [vmem:[%s872 + $0x48] sm:$0xff]
    %v883 = vld [vmem:[%s872 + $0x50] sm:$0xff]
    %v884 = vld [vmem:[%s872 + $0x58] sm:$0xff]
    %v885 = vld [vmem:[%s872 + $0x60] sm:$0xff]
    %v886 = vld [vmem:[%s872 + $0x68] sm:$0xff]
    %v887 = vld [vmem:[%s872 + $0x70] sm:$0xff]
    %v888 = vld [vmem:[%s872 + $0x78] sm:$0xff]
    %v889 = vld [vmem:[%s872 + $0x80] sm:$0xff]
    %v890 = vld [vmem:[%s872 + $0x88] sm:$0xff]
    %v891 = vld [vmem:[%s872 + $0x90] sm:$0xf]
    %v892 = vld [vmem:[%s872 + $0x98] sm:$0xf]
    %v893 = vld [vmem:[%s872 + $0xa0] sm:$0xf]
    %v894 = vld [vmem:[%s872 + $0xa8] sm:$0xf]
    %v895 = vld [vmem:[%s872 + $0xb0] sm:$0xf]
    %v896 = vld [vmem:[%s872 + $0xb8] sm:$0xf]
    %v898 = vsel %vm192, %v129, 0
    %v901 = vsel %vm192, %v130, 0
    %v904 = vsel %vm192, %v131, 0
    %v907 = vsel %vm192, %v132, 0
    %v910 = vsel %vm192, %v133, 0
    %v913 = vsel %vm192, %v134, 0
    %v916 = vsel %vm211, %v891, 0
    %v919 = vsel %vm211, %v892, 0
    %v922 = vsel %vm211, %v893, 0
    %v925 = vsel %vm211, %v894, 0
    %v928 = vsel %vm211, %v895, 0
    %v931 = vsel %vm211, %v896, 0
    %933 = vmatprep.subr.mxu0 %v874
    %934 = vmatpush1.msra.mxu0 %v873
    %935 = vmatprep.subr.mxu0 %v880
    %936 = vmatpush1.msra.mxu0 %v879
    %937 = vmatprep.subr.mxu0 %v886
    %938 = vmatpush1.msra.mxu0 %v885
    %939 = vmatprep.subr.mxu0 %v919
    %940 = vmatpush1.msra.mxu0 %v916
    %941 = vmatprep.subr.mxu0 0.0
    %942 = vmatpush1.msra.mxu0 0.0
    %943 = vmatprep.subr.mxu0 0.0
    %944 = vmatpush1.msra.mxu0 0.0
    %945 = vmatprep.subr.mxu0 0.0
    %946 = vmatpush1.msra.mxu0 0.0
    %947 = vmatprep.subr.mxu0 0.0
    %948 = vmatpush1.msra.mxu0 0.0
    %949 = vmatprep.subr.mxu0 0.0
    %950 = vmatpush1.msra.mxu0 0.0
    %951 = vmatprep.subr.mxu0 0.0
    %952 = vmatpush1.msra.mxu0 0.0
    %953 = vmatprep.subr.mxu0 0.0
    %954 = vmatpush1.msra.mxu0 0.0
    %955 = vmatprep.subr.mxu0 0.0
    %956 = vmatpush1.msra.mxu0 0.0
    %957 = vmatprep.subr.mxu0 0.0
    %958 = vmatpush1.msra.mxu0 0.0
    %959 = vmatprep.subr.mxu0 0.0
    %960 = vmatpush1.msra.mxu0 0.0
    %961 = vmatprep.subr.mxu0 0.0
    %962 = vmatpush1.msra.mxu0 0.0
    %963 = vmatprep.subr.mxu0 0.0
    %964 = vmatpush1.msra.mxu0 0.0
    %965 = vmatprep.subr.mxu0 0.0
    %966 = vmatpush1.msra.mxu0 0.0
    %967 = vmatprep.subr.mxu0 0.0
    %968 = vmatpush1.msra.mxu0 0.0
    %969 = vmatprep.subr.mxu0 0.0
    %970 = vmatpush1.msra.mxu0 0.0
    %971 = vmatprep.subr.mxu0 0.0
    %972 = vmatpush1.msra.mxu0 0.0
    %973 = vmatprep.subr.mxu0 0.0
    %974 = vmatpush1.msra.mxu0 0.0
    %975 = vmatprep.subr.mxu0 0.0
    %976 = vmatpush1.msra.mxu0 0.0
    %977 = vmatprep.subr.mxu0 0.0
    %978 = vmatpush1.msra.mxu0 0.0
    %979 = vmatprep.subr.mxu0 0.0
    %980 = vmatpush1.msra.mxu0 0.0
    %981 = vmatprep.subr.mxu0 0.0
    %982 = vmatpush1.msra.mxu0 0.0
    %983 = vmatprep.subr.mxu0 0.0
    %984 = vmatpush1.msra.mxu0 0.0
    %985 = vmatprep.subr.mxu0 0.0
    %986 = vmatpush1.msra.mxu0 0.0
    %987 = vmatprep.subr.mxu0 0.0
    %988 = vmatpush1.msra.mxu0 0.0
    %989 = vmatprep.subr.mxu0 0.0
    %990 = vmatpush1.msra.mxu0 0.0
    %991 = vmatprep.subr.mxu0 0.0
    %992 = vmatpush1.msra.mxu0 0.0
    %993 = vmatprep.subr.mxu0 0.0
    %994 = vmatpush1.msra.mxu0 0.0
    %995 = vmatprep.subr.mxu0 0.0
    %996 = vmatpush1.msra.mxu0 0.0
    %997 = vmatprep.mubr.f32.mxu0 0.0
    %998 = vmatmul.mubr.f32.gmra.mrb[0].mxu0 %v898
    %v999 = vpop.f32.mrb[0].mxu0
    %v1000 = vadd.f32 0.0, %v999
    %v1001 = vpop.f32.mrb[0].mxu0
    %v1002 = vadd.f32 0.0, %v1001
    %1003 = vmatprep.mubr.f32.mxu0 0.0
    %1004 = vmatmul.mubr.f32.gmra.mrb[0].mxu0 %v901
    %v1005 = vpop.f32.mrb[0].mxu0
    %v1006 = vadd.f32 0.0, %v1005
    %v1007 = vpop.f32.mrb[0].mxu0
    %v1008 = vadd.f32 0.0, %v1007
    %1009 = vmatprep.mubr.f32.mxu0 0.0
    %1010 = vmatmul.mubr.f32.gmra.mrb[0].mxu0 %v904
    %v1011 = vpop.f32.mrb[0].mxu0
    %v1012 = vadd.f32 0.0, %v1011
    %v1013 = vpop.f32.mrb[0].mxu0
    %v1014 = vadd.f32 0.0, %v1013
    %1015 = vmatprep.mubr.f32.mxu0 0.0
    %1016 = vmatmul.mubr.f32.gmra.mrb[0].mxu0 %v907
    %v1017 = vpop.f32.mrb[0].mxu0
    %v1018 = vadd.f32 0.0, %v1017
    %v1019 = vpop.f32.mrb[0].mxu0
    %v1020 = vadd.f32 0.0, %v1019
    %1021 = vmatprep.mubr.f32.mxu0 0.0
    %1022 = vmatmul.mubr.f32.gmra.mrb[0].mxu0 %v910
    %v1023 = vpop.f32.mrb[0].mxu0
    %v1024 = vadd.f32 0.0, %v1023
    %v1025 = vpop.f32.mrb[0].mxu0
    %v1026 = vadd.f32 0.0, %v1025
    %1027 = vmatprep.mubr.f32.mxu0 0.0
    %1028 = vmatmul.mubr.f32.gmra.mrb[0].mxu0 %v913
    %v1029 = vpop.f32.mrb[0].mxu0
    %v1030 = vadd.f32 0.0, %v1029
    %v1031 = vpop.f32.mrb[0].mxu0
    %v1032 = vadd.f32 0.0, %v1031
    %1033 = vdwg.mxu0
    %1034 = vmatprep.subr.mxu0 %v876
    %1035 = vmatpush1.msra.mxu0 %v875
    %1036 = vmatprep.subr.mxu0 %v882
    %1037 = vmatpush1.msra.mxu0 %v881
    %1038 = vmatprep.subr.mxu0 %v888
    %1039 = vmatpush1.msra.mxu0 %v887
    %1040 = vmatprep.subr.mxu0 %v925
    %1041 = vmatpush1.msra.mxu0 %v922
    %1042 = vmatprep.subr.mxu0 0.0
    %1043 = vmatpush1.msra.mxu0 0.0
    %1044 = vmatprep.subr.mxu0 0.0
    %1045 = vmatpush1.msra.mxu0 0.0
    %1046 = vmatprep.subr.mxu0 0.0
    %1047 = vmatpush1.msra.mxu0 0.0
    %1048 = vmatprep.subr.mxu0 0.0
    %1049 = vmatpush1.msra.mxu0 0.0
    %1050 = vmatprep.subr.mxu0 0.0
    %1051 = vmatpush1.msra.mxu0 0.0
    %1052 = vmatprep.subr.mxu0 0.0
    %1053 = vmatpush1.msra.mxu0 0.0
    %1054 = vmatprep.subr.mxu0 0.0
    %1055 = vmatpush1.msra.mxu0 0.0
    %1056 = vmatprep.subr.mxu0 0.0
    %1057 = vmatpush1.msra.mxu0 0.0
    %1058 = vmatprep.subr.mxu0 0.0
    %1059 = vmatpush1.msra.mxu0 0.0
    %1060 = vmatprep.subr.mxu0 0.0
    %1061 = vmatpush1.msra.mxu0 0.0
    %1062 = vmatprep.subr.mxu0 0.0
    %1063 = vmatpush1.msra.mxu0 0.0
    %1064 = vmatprep.subr.mxu0 0.0
    %1065 = vmatpush1.msra.mxu0 0.0
    %1066 = vmatprep.subr.mxu0 0.0
    %1067 = vmatpush1.msra.mxu0 0.0
    %1068 = vmatprep.subr.mxu0 0.0
    %1069 = vmatpush1.msra.mxu0 0.0
    %1070 = vmatprep.subr.mxu0 0.0
    %1071 = vmatpush1.msra.mxu0 0.0
    %1072 = vmatprep.subr.mxu0 0.0
    %1073 = vmatpush1.msra.mxu0 0.0
    %1074 = vmatprep.subr.mxu0 0.0
    %1075 = vmatpush1.msra.mxu0 0.0
    %1076 = vmatprep.subr.mxu0 0.0
    %1077 = vmatpush1.msra.mxu0 0.0
    %1078 = vmatprep.subr.mxu0 0.0
    %1079 = vmatpush1.msra.mxu0 0.0
    %1080 = vmatprep.subr.mxu0 0.0
    %1081 = vmatpush1.msra.mxu0 0.0
    %1082 = vmatprep.subr.mxu0 0.0
    %1083 = vmatpush1.msra.mxu0 0.0
    %1084 = vmatprep.subr.mxu0 0.0
    %1085 = vmatpush1.msra.mxu0 0.0
    %1086 = vmatprep.subr.mxu0 0.0
    %1087 = vmatpush1.msra.mxu0 0.0
    %1088 = vmatprep.subr.mxu0 0.0
    %1089 = vmatpush1.msra.mxu0 0.0
    %1090 = vmatprep.subr.mxu0 0.0
    %1091 = vmatpush1.msra.mxu0 0.0
    %1092 = vmatprep.subr.mxu0 0.0
    %1093 = vmatpush1.msra.mxu0 0.0
    %1094 = vmatprep.subr.mxu0 0.0
    %1095 = vmatpush1.msra.mxu0 0.0
    %1096 = vmatprep.subr.mxu0 0.0
    %1097 = vmatpush1.msra.mxu0 0.0
    %1098 = vmatprep.mubr.f32.mxu0 0.0
    %1099 = vmatmul.mubr.f32.gmra.mrb[0].mxu0 %v898
    %v1100 = vpop.f32.mrb[0].mxu0
    %v1101 = vadd.f32 0.0, %v1100
    %v1102 = vpop.f32.mrb[0].mxu0
    %v1103 = vadd.f32 0.0, %v1102
    %1104 = vmatprep.mubr.f32.mxu0 0.0
    %1105 = vmatmul.mubr.f32.gmra.mrb[0].mxu0 %v901
    %v1106 = vpop.f32.mrb[0].mxu0
    %v1107 = vadd.f32 0.0, %v1106
    %v1108 = vpop.f32.mrb[0].mxu0
    %v1109 = vadd.f32 0.0, %v1108
    %1110 = vmatprep.mubr.f32.mxu0 0.0
    %1111 = vmatmul.mubr.f32.gmra.mrb[0].mxu0 %v904
    %v1112 = vpop.f32.mrb[0].mxu0
    %v1113 = vadd.f32 0.0, %v1112
    %v1114 = vpop.f32.mrb[0].mxu0
    %v1115 = vadd.f32 0.0, %v1114
    %1116 = vmatprep.mubr.f32.mxu0 0.0
    %1117 = vmatmul.mubr.f32.gmra.mrb[0].mxu0 %v907
    %v1118 = vpop.f32.mrb[0].mxu0
    %v1119 = vadd.f32 0.0, %v1118
    %v1120 = vpop.f32.mrb[0].mxu0
    %v1121 = vadd.f32 0.0, %v1120
    %1122 = vmatprep.mubr.f32.mxu0 0.0
    %1123 = vmatmul.mubr.f32.gmra.mrb[0].mxu0 %v910
    %v1124 = vpop.f32.mrb[0].mxu0
    %v1125 = vadd.f32 0.0, %v1124
    %v1126 = vpop.f32.mrb[0].mxu0
    %v1127 = vadd.f32 0.0, %v1126
    %1128 = vmatprep.mubr.f32.mxu0 0.0
    %1129 = vmatmul.mubr.f32.gmra.mrb[0].mxu0 %v913
    %v1130 = vpop.f32.mrb[0].mxu0
    %v1131 = vadd.f32 0.0, %v1130
    %v1132 = vpop.f32.mrb[0].mxu0
    %v1133 = vadd.f32 0.0, %v1132
    %1134 = vdwg.mxu0
    %1135 = vmatprep.subr.mxu0 %v878
    %1136 = vmatpush1.msra.mxu0 %v877
    %1137 = vmatprep.subr.mxu0 %v884
    %1138 = vmatpush1.msra.mxu0 %v883
    %1139 = vmatprep.subr.mxu0 %v890
    %1140 = vmatpush1.msra.mxu0 %v889
    %1141 = vmatprep.subr.mxu0 %v931
    %1142 = vmatpush1.msra.mxu0 %v928
    %1143 = vmatprep.subr.mxu0 0.0
    %1144 = vmatpush1.msra.mxu0 0.0
    %1145 = vmatprep.subr.mxu0 0.0
    %1146 = vmatpush1.msra.mxu0 0.0
    %1147 = vmatprep.subr.mxu0 0.0
    %1148 = vmatpush1.msra.mxu0 0.0
    %1149 = vmatprep.subr.mxu0 0.0
    %1150 = vmatpush1.msra.mxu0 0.0
    %1151 = vmatprep.subr.mxu0 0.0
    %1152 = vmatpush1.msra.mxu0 0.0
    %1153 = vmatprep.subr.mxu0 0.0
    %1154 = vmatpush1.msra.mxu0 0.0
    %1155 = vmatprep.subr.mxu0 0.0
    %1156 = vmatpush1.msra.mxu0 0.0
    %1157 = vmatprep.subr.mxu0 0.0
    %1158 = vmatpush1.msra.mxu0 0.0
    %1159 = vmatprep.subr.mxu0 0.0
    %1160 = vmatpush1.msra.mxu0 0.0
    %1161 = vmatprep.subr.mxu0 0.0
    %1162 = vmatpush1.msra.mxu0 0.0
    %1163 = vmatprep.subr.mxu0 0.0
    %1164 = vmatpush1.msra.mxu0 0.0
    %1165 = vmatprep.subr.mxu0 0.0
    %1166 = vmatpush1.msra.mxu0 0.0
    %1167 = vmatprep.subr.mxu0 0.0
    %1168 = vmatpush1.msra.mxu0 0.0
    %1169 = vmatprep.subr.mxu0 0.0
    %1170 = vmatpush1.msra.mxu0 0.0
    %1171 = vmatprep.subr.mxu0 0.0
    %1172 = vmatpush1.msra.mxu0 0.0
    %1173 = vmatprep.subr.mxu0 0.0
    %1174 = vmatpush1.msra.mxu0 0.0
    %1175 = vmatprep.subr.mxu0 0.0
    %1176 = vmatpush1.msra.mxu0 0.0
    %1177 = vmatprep.subr.mxu0 0.0
    %1178 = vmatpush1.msra.mxu0 0.0
    %1179 = vmatprep.subr.mxu0 0.0
    %1180 = vmatpush1.msra.mxu0 0.0
    %1181 = vmatprep.subr.mxu0 0.0
    %1182 = vmatpush1.msra.mxu0 0.0
    %1183 = vmatprep.subr.mxu0 0.0
    %1184 = vmatpush1.msra.mxu0 0.0
    %1185 = vmatprep.subr.mxu0 0.0
    %1186 = vmatpush1.msra.mxu0 0.0
    %1187 = vmatprep.subr.mxu0 0.0
    %1188 = vmatpush1.msra.mxu0 0.0
    %1189 = vmatprep.subr.mxu0 0.0
    %1190 = vmatpush1.msra.mxu0 0.0
    %1191 = vmatprep.subr.mxu0 0.0
    %1192 = vmatpush1.msra.mxu0 0.0
    %1193 = vmatprep.subr.mxu0 0.0
    %1194 = vmatpush1.msra.mxu0 0.0
    %1195 = vmatprep.subr.mxu0 0.0
    %1196 = vmatpush1.msra.mxu0 0.0
    %1197 = vmatprep.subr.mxu0 0.0
    %1198 = vmatpush1.msra.mxu0 0.0
    %1199 = vmatprep.mubr.f32.mxu0 0.0
    %1200 = vmatmul.mubr.f32.gmra.mrb[0].mxu0 %v898
    %v1201 = vpop.f32.mrb[0].mxu0
    %v1202 = vadd.f32 0.0, %v1201
    %v1203 = vpop.f32.mrb[0].mxu0
    %v1204 = vadd.f32 0.0, %v1203
    %1205 = vmatprep.mubr.f32.mxu0 0.0
    %1206 = vmatmul.mubr.f32.gmra.mrb[0].mxu0 %v901
    %v1207 = vpop.f32.mrb[0].mxu0
    %v1208 = vadd.f32 0.0, %v1207
    %v1209 = vpop.f32.mrb[0].mxu0
    %v1210 = vadd.f32 0.0, %v1209
    %1211 = vmatprep.mubr.f32.mxu0 0.0
    %1212 = vmatmul.mubr.f32.gmra.mrb[0].mxu0 %v904
    %v1213 = vpop.f32.mrb[0].mxu0
    %v1214 = vadd.f32 0.0, %v1213
    %v1215 = vpop.f32.mrb[0].mxu0
    %v1216 = vadd.f32 0.0, %v1215
    %1217 = vmatprep.mubr.f32.mxu0 0.0
    %1218 = vmatmul.mubr.f32.gmra.mrb[0].mxu0 %v907
    %v1219 = vpop.f32.mrb[0].mxu0
    %v1220 = vadd.f32 0.0, %v1219
    %v1221 = vpop.f32.mrb[0].mxu0
    %v1222 = vadd.f32 0.0, %v1221
    %1223 = vmatprep.mubr.f32.mxu0 0.0
    %1224 = vmatmul.mubr.f32.gmra.mrb[0].mxu0 %v910
    %v1225 = vpop.f32.mrb[0].mxu0
    %v1226 = vadd.f32 0.0, %v1225
    %v1227 = vpop.f32.mrb[0].mxu0
    %v1228 = vadd.f32 0.0, %v1227
    %1229 = vmatprep.mubr.f32.mxu0 0.0
    %1230 = vmatmul.mubr.f32.gmra.mrb[0].mxu0 %v913
    %v1231 = vpop.f32.mrb[0].mxu0
    %v1232 = vadd.f32 0.0, %v1231
    %v1233 = vpop.f32.mrb[0].mxu0
    %v1234 = vadd.f32 0.0, %v1233
    %1235 = vdwg.mxu0
    %v1236 = vadd.f32 %v636, %v1000
    %v1237 = vadd.f32 %v638, %v1002
    %v1238 = vadd.f32 %v737, %v1101
    %v1239 = vadd.f32 %v739, %v1103
    %v1240 = vadd.f32 %v838, %v1202
    %v1241 = vadd.f32 %v840, %v1204
    %v1242 = vadd.f32 %v642, %v1006
    %v1243 = vadd.f32 %v644, %v1008
    %v1244 = vadd.f32 %v743, %v1107
    %v1245 = vadd.f32 %v745, %v1109
    %v1246 = vadd.f32 %v844, %v1208
    %v1247 = vadd.f32 %v846, %v1210
    %v1248 = vadd.f32 %v648, %v1012
    %v1249 = vadd.f32 %v650, %v1014
    %v1250 = vadd.f32 %v749, %v1113
    %v1251 = vadd.f32 %v751, %v1115
    %v1252 = vadd.f32 %v850, %v1214
    %v1253 = vadd.f32 %v852, %v1216
    %v1254 = vadd.f32 %v654, %v1018
    %v1255 = vadd.f32 %v656, %v1020
    %v1256 = vadd.f32 %v755, %v1119
    %v1257 = vadd.f32 %v757, %v1121
    %v1258 = vadd.f32 %v856, %v1220
    %v1259 = vadd.f32 %v858, %v1222
    %v1260 = vadd.f32 %v660, %v1024
    %v1261 = vadd.f32 %v662, %v1026
    %v1262 = vadd.f32 %v761, %v1125
    %v1263 = vadd.f32 %v763, %v1127
    %v1264 = vadd.f32 %v862, %v1226
    %v1265 = vadd.f32 %v864, %v1228
    %v1266 = vadd.f32 %v666, %v1030
    %v1267 = vadd.f32 %v668, %v1032
    %v1268 = vadd.f32 %v767, %v1131
    %v1269 = vadd.f32 %v769, %v1133
    %v1270 = vadd.f32 %v868, %v1232
    %v1271 = vadd.f32 %v870, %v1234
    %s1272 = scalar_lea.vmem [#allocation2], 576
    %v1273 = vld [vmem:[%s1272] sm:$0xff]
    %v1274 = vld [vmem:[%s1272 + $0x8] sm:$0xff]
    %v1275 = vld [vmem:[%s1272 + $0x10] sm:$0xff]
    %v1276 = vld [vmem:[%s1272 + $0x18] sm:$0xff]
    %v1277 = vld [vmem:[%s1272 + $0x20] sm:$0xff]
    %v1278 = vld [vmem:[%s1272 + $0x28] sm:$0xff]
    %v1279 = vld [vmem:[%s1272 + $0x30] sm:$0xff]
    %v1280 = vld [vmem:[%s1272 + $0x38] sm:$0xff]
    %v1281 = vld [vmem:[%s1272 + $0x40] sm:$0xff]
    %v1282 = vld [vmem:[%s1272 + $0x48] sm:$0xff]
    %v1283 = vld [vmem:[%s1272 + $0x50] sm:$0xff]
    %v1284 = vld [vmem:[%s1272 + $0x58] sm:$0xff]
    %v1285 = vld [vmem:[%s1272 + $0x60] sm:$0xff]
    %v1286 = vld [vmem:[%s1272 + $0x68] sm:$0xff]
    %v1287 = vld [vmem:[%s1272 + $0x70] sm:$0xff]
    %v1288 = vld [vmem:[%s1272 + $0x78] sm:$0xff]
    %v1289 = vld [vmem:[%s1272 + $0x80] sm:$0xff]
    %v1290 = vld [vmem:[%s1272 + $0x88] sm:$0xff]
    %v1291 = vld [vmem:[%s1272 + $0x90] sm:$0xf]
    %v1292 = vld [vmem:[%s1272 + $0x98] sm:$0xf]
    %v1293 = vld [vmem:[%s1272 + $0xa0] sm:$0xf]
    %v1294 = vld [vmem:[%s1272 + $0xa8] sm:$0xf]
    %v1295 = vld [vmem:[%s1272 + $0xb0] sm:$0xf]
    %v1296 = vld [vmem:[%s1272 + $0xb8] sm:$0xf]
    %v1298 = vsel %vm192, %v136, 0
    %v1301 = vsel %vm192, %v137, 0
    %v1304 = vsel %vm192, %v138, 0
    %v1307 = vsel %vm192, %v139, 0
    %v1310 = vsel %vm192, %v140, 0
    %v1313 = vsel %vm192, %v141, 0
    %v1316 = vsel %vm211, %v1291, 0
    %v1319 = vsel %vm211, %v1292, 0
    %v1322 = vsel %vm211, %v1293, 0
    %v1325 = vsel %vm211, %v1294, 0
    %v1328 = vsel %vm211, %v1295, 0
    %v1331 = vsel %vm211, %v1296, 0
    %1333 = vmatprep.subr.mxu0 %v1274
    %1334 = vmatpush1.msra.mxu0 %v1273
    %1335 = vmatprep.subr.mxu0 %v1280
    %1336 = vmatpush1.msra.mxu0 %v1279
    %1337 = vmatprep.subr.mxu0 %v1286
    %1338 = vmatpush1.msra.mxu0 %v1285
    %1339 = vmatprep.subr.mxu0 %v1319
    %1340 = vmatpush1.msra.mxu0 %v1316
    %1341 = vmatprep.subr.mxu0 0.0
    %1342 = vmatpush1.msra.mxu0 0.0
    %1343 = vmatprep.subr.mxu0 0.0
    %1344 = vmatpush1.msra.mxu0 0.0
    %1345 = vmatprep.subr.mxu0 0.0
    %1346 = vmatpush1.msra.mxu0 0.0
    %1347 = vmatprep.subr.mxu0 0.0
    %1348 = vmatpush1.msra.mxu0 0.0
    %1349 = vmatprep.subr.mxu0 0.0
    %1350 = vmatpush1.msra.mxu0 0.0
    %1351 = vmatprep.subr.mxu0 0.0
    %1352 = vmatpush1.msra.mxu0 0.0
    %1353 = vmatprep.subr.mxu0 0.0
    %1354 = vmatpush1.msra.mxu0 0.0
    %1355 = vmatprep.subr.mxu0 0.0
    %1356 = vmatpush1.msra.mxu0 0.0
    %1357 = vmatprep.subr.mxu0 0.0
    %1358 = vmatpush1.msra.mxu0 0.0
    %1359 = vmatprep.subr.mxu0 0.0
    %1360 = vmatpush1.msra.mxu0 0.0
    %1361 = vmatprep.subr.mxu0 0.0
    %1362 = vmatpush1.msra.mxu0 0.0
    %1363 = vmatprep.subr.mxu0 0.0
    %1364 = vmatpush1.msra.mxu0 0.0
    %1365 = vmatprep.subr.mxu0 0.0
    %1366 = vmatpush1.msra.mxu0 0.0
    %1367 = vmatprep.subr.mxu0 0.0
    %1368 = vmatpush1.msra.mxu0 0.0
    %1369 = vmatprep.subr.mxu0 0.0
    %1370 = vmatpush1.msra.mxu0 0.0
    %1371 = vmatprep.subr.mxu0 0.0
    %1372 = vmatpush1.msra.mxu0 0.0
    %1373 = vmatprep.subr.mxu0 0.0
    %1374 = vmatpush1.msra.mxu0 0.0
    %1375 = vmatprep.subr.mxu0 0.0
    %1376 = vmatpush1.msra.mxu0 0.0
    %1377 = vmatprep.subr.mxu0 0.0
    %1378 = vmatpush1.msra.mxu0 0.0
    %1379 = vmatprep.subr.mxu0 0.0
    %1380 = vmatpush1.msra.mxu0 0.0
    %1381 = vmatprep.subr.mxu0 0.0
    %1382 = vmatpush1.msra.mxu0 0.0
    %1383 = vmatprep.subr.mxu0 0.0
    %1384 = vmatpush1.msra.mxu0 0.0
    %1385 = vmatprep.subr.mxu0 0.0
    %1386 = vmatpush1.msra.mxu0 0.0
    %1387 = vmatprep.subr.mxu0 0.0
    %1388 = vmatpush1.msra.mxu0 0.0
    %1389 = vmatprep.subr.mxu0 0.0
    %1390 = vmatpush1.msra.mxu0 0.0
    %1391 = vmatprep.subr.mxu0 0.0
    %1392 = vmatpush1.msra.mxu0 0.0
    %1393 = vmatprep.subr.mxu0 0.0
    %1394 = vmatpush1.msra.mxu0 0.0
    %1395 = vmatprep.subr.mxu0 0.0
    %1396 = vmatpush1.msra.mxu0 0.0
    %1397 = vmatprep.mubr.f32.mxu0 0.0
    %1398 = vmatmul.mubr.f32.gmra.mrb[0].mxu0 %v1298
    %v1399 = vpop.f32.mrb[0].mxu0
    %v1400 = vadd.f32 0.0, %v1399
    %v1401 = vpop.f32.mrb[0].mxu0
    %v1402 = vadd.f32 0.0, %v1401
    %1403 = vmatprep.mubr.f32.mxu0 0.0
    %1404 = vmatmul.mubr.f32.gmra.mrb[0].mxu0 %v1301
    %v1405 = vpop.f32.mrb[0].mxu0
    %v1406 = vadd.f32 0.0, %v1405
    %v1407 = vpop.f32.mrb[0].mxu0
    %v1408 = vadd.f32 0.0, %v1407
    %1409 = vmatprep.mubr.f32.mxu0 0.0
    %1410 = vmatmul.mubr.f32.gmra.mrb[0].mxu0 %v1304
    %v1411 = vpop.f32.mrb[0].mxu0
    %v1412 = vadd.f32 0.0, %v1411
    %v1413 = vpop.f32.mrb[0].mxu0
    %v1414 = vadd.f32 0.0, %v1413
    %1415 = vmatprep.mubr.f32.mxu0 0.0
    %1416 = vmatmul.mubr.f32.gmra.mrb[0].mxu0 %v1307
    %v1417 = vpop.f32.mrb[0].mxu0
    %v1418 = vadd.f32 0.0, %v1417
    %v1419 = vpop.f32.mrb[0].mxu0
    %v1420 = vadd.f32 0.0, %v1419
    %1421 = vmatprep.mubr.f32.mxu0 0.0
    %1422 = vmatmul.mubr.f32.gmra.mrb[0].mxu0 %v1310
    %v1423 = vpop.f32.mrb[0].mxu0
    %v1424 = vadd.f32 0.0, %v1423
    %v1425 = vpop.f32.mrb[0].mxu0
    %v1426 = vadd.f32 0.0, %v1425
    %1427 = vmatprep.mubr.f32.mxu0 0.0
    %1428 = vmatmul.mubr.f32.gmra.mrb[0].mxu0 %v1313
    %v1429 = vpop.f32.mrb[0].mxu0
    %v1430 = vadd.f32 0.0, %v1429
    %v1431 = vpop.f32.mrb[0].mxu0
    %v1432 = vadd.f32 0.0, %v1431
    %1433 = vdwg.mxu0
    %1434 = vmatprep.subr.mxu0 %v1276
    %1435 = vmatpush1.msra.mxu0 %v1275
    %1436 = vmatprep.subr.mxu0 %v1282
    %1437 = vmatpush1.msra.mxu0 %v1281
    %1438 = vmatprep.subr.mxu0 %v1288
    %1439 = vmatpush1.msra.mxu0 %v1287
    %1440 = vmatprep.subr.mxu0 %v1325
    %1441 = vmatpush1.msra.mxu0 %v1322
    %1442 = vmatprep.subr.mxu0 0.0
    %1443 = vmatpush1.msra.mxu0 0.0
    %1444 = vmatprep.subr.mxu0 0.0
    %1445 = vmatpush1.msra.mxu0 0.0
    %1446 = vmatprep.subr.mxu0 0.0
    %1447 = vmatpush1.msra.mxu0 0.0
    %1448 = vmatprep.subr.mxu0 0.0
    %1449 = vmatpush1.msra.mxu0 0.0
    %1450 = vmatprep.subr.mxu0 0.0
    %1451 = vmatpush1.msra.mxu0 0.0
    %1452 = vmatprep.subr.mxu0 0.0
    %1453 = vmatpush1.msra.mxu0 0.0
    %1454 = vmatprep.subr.mxu0 0.0
    %1455 = vmatpush1.msra.mxu0 0.0
    %1456 = vmatprep.subr.mxu0 0.0
    %1457 = vmatpush1.msra.mxu0 0.0
    %1458 = vmatprep.subr.mxu0 0.0
    %1459 = vmatpush1.msra.mxu0 0.0
    %1460 = vmatprep.subr.mxu0 0.0
    %1461 = vmatpush1.msra.mxu0 0.0
    %1462 = vmatprep.subr.mxu0 0.0
    %1463 = vmatpush1.msra.mxu0 0.0
    %1464 = vmatprep.subr.mxu0 0.0
    %1465 = vmatpush1.msra.mxu0 0.0
    %1466 = vmatprep.subr.mxu0 0.0
    %1467 = vmatpush1.msra.mxu0 0.0
    %1468 = vmatprep.subr.mxu0 0.0
    %1469 = vmatpush1.msra.mxu0 0.0
    %1470 = vmatprep.subr.mxu0 0.0
    %1471 = vmatpush1.msra.mxu0 0.0
    %1472 = vmatprep.subr.mxu0 0.0
    %1473 = vmatpush1.msra.mxu0 0.0
    %1474 = vmatprep.subr.mxu0 0.0
    %1475 = vmatpush1.msra.mxu0 0.0
    %1476 = vmatprep.subr.mxu0 0.0
    %1477 = vmatpush1.msra.mxu0 0.0
    %1478 = vmatprep.subr.mxu0 0.0
    %1479 = vmatpush1.msra.mxu0 0.0
    %1480 = vmatprep.subr.mxu0 0.0
    %1481 = vmatpush1.msra.mxu0 0.0
    %1482 = vmatprep.subr.mxu0 0.0
    %1483 = vmatpush1.msra.mxu0 0.0
    %1484 = vmatprep.subr.mxu0 0.0
    %1485 = vmatpush1.msra.mxu0 0.0
    %1486 = vmatprep.subr.mxu0 0.0
    %1487 = vmatpush1.msra.mxu0 0.0
    %1488 = vmatprep.subr.mxu0 0.0
    %1489 = vmatpush1.msra.mxu0 0.0
    %1490 = vmatprep.subr.mxu0 0.0
    %1491 = vmatpush1.msra.mxu0 0.0
    %1492 = vmatprep.subr.mxu0 0.0
    %1493 = vmatpush1.msra.mxu0 0.0
    %1494 = vmatprep.subr.mxu0 0.0
    %1495 = vmatpush1.msra.mxu0 0.0
    %1496 = vmatprep.subr.mxu0 0.0
    %1497 = vmatpush1.msra.mxu0 0.0
    %1498 = vmatprep.mubr.f32.mxu0 0.0
    %1499 = vmatmul.mubr.f32.gmra.mrb[0].mxu0 %v1298
    %v1500 = vpop.f32.mrb[0].mxu0
    %v1501 = vadd.f32 0.0, %v1500
    %v1502 = vpop.f32.mrb[0].mxu0
    %v1503 = vadd.f32 0.0, %v1502
    %1504 = vmatprep.mubr.f32.mxu0 0.0
    %1505 = vmatmul.mubr.f32.gmra.mrb[0].mxu0 %v1301
    %v1506 = vpop.f32.mrb[0].mxu0
    %v1507 = vadd.f32 0.0, %v1506
    %v1508 = vpop.f32.mrb[0].mxu0
    %v1509 = vadd.f32 0.0, %v1508
    %1510 = vmatprep.mubr.f32.mxu0 0.0
    %1511 = vmatmul.mubr.f32.gmra.mrb[0].mxu0 %v1304
    %v1512 = vpop.f32.mrb[0].mxu0
    %v1513 = vadd.f32 0.0, %v1512
    %v1514 = vpop.f32.mrb[0].mxu0
    %v1515 = vadd.f32 0.0, %v1514
    %1516 = vmatprep.mubr.f32.mxu0 0.0
    %1517 = vmatmul.mubr.f32.gmra.mrb[0].mxu0 %v1307
    %v1518 = vpop.f32.mrb[0].mxu0
    %v1519 = vadd.f32 0.0, %v1518
    %v1520 = vpop.f32.mrb[0].mxu0
    %v1521 = vadd.f32 0.0, %v1520
    %1522 = vmatprep.mubr.f32.mxu0 0.0
    %1523 = vmatmul.mubr.f32.gmra.mrb[0].mxu0 %v1310
    %v1524 = vpop.f32.mrb[0].mxu0
    %v1525 = vadd.f32 0.0, %v1524
    %v1526 = vpop.f32.mrb[0].mxu0
    %v1527 = vadd.f32 0.0, %v1526
    %1528 = vmatprep.mubr.f32.mxu0 0.0
    %1529 = vmatmul.mubr.f32.gmra.mrb[0].mxu0 %v1313
    %v1530 = vpop.f32.mrb[0].mxu0
    %v1531 = vadd.f32 0.0, %v1530
    %v1532 = vpop.f32.mrb[0].mxu0
    %v1533 = vadd.f32 0.0, %v1532
    %1534 = vdwg.mxu0
    %1535 = vmatprep.subr.mxu0 %v1278
    %1536 = vmatpush1.msra.mxu0 %v1277
    %1537 = vmatprep.subr.mxu0 %v1284
    %1538 = vmatpush1.msra.mxu0 %v1283
    %1539 = vmatprep.subr.mxu0 %v1290
    %1540 = vmatpush1.msra.mxu0 %v1289
    %1541 = vmatprep.subr.mxu0 %v1331
    %1542 = vmatpush1.msra.mxu0 %v1328
    %1543 = vmatprep.subr.mxu0 0.0
    %1544 = vmatpush1.msra.mxu0 0.0
    %1545 = vmatprep.subr.mxu0 0.0
    %1546 = vmatpush1.msra.mxu0 0.0
    %1547 = vmatprep.subr.mxu0 0.0
    %1548 = vmatpush1.msra.mxu0 0.0
    %1549 = vmatprep.subr.mxu0 0.0
    %1550 = vmatpush1.msra.mxu0 0.0
    %1551 = vmatprep.subr.mxu0 0.0
    %1552 = vmatpush1.msra.mxu0 0.0
    %1553 = vmatprep.subr.mxu0 0.0
    %1554 = vmatpush1.msra.mxu0 0.0
    %1555 = vmatprep.subr.mxu0 0.0
    %1556 = vmatpush1.msra.mxu0 0.0
    %1557 = vmatprep.subr.mxu0 0.0
    %1558 = vmatpush1.msra.mxu0 0.0
    %1559 = vmatprep.subr.mxu0 0.0
    %1560 = vmatpush1.msra.mxu0 0.0
    %1561 = vmatprep.subr.mxu0 0.0
    %1562 = vmatpush1.msra.mxu0 0.0
    %1563 = vmatprep.subr.mxu0 0.0
    %1564 = vmatpush1.msra.mxu0 0.0
    %1565 = vmatprep.subr.mxu0 0.0
    %1566 = vmatpush1.msra.mxu0 0.0
    %1567 = vmatprep.subr.mxu0 0.0
    %1568 = vmatpush1.msra.mxu0 0.0
    %1569 = vmatprep.subr.mxu0 0.0
    %1570 = vmatpush1.msra.mxu0 0.0
    %1571 = vmatprep.subr.mxu0 0.0
    %1572 = vmatpush1.msra.mxu0 0.0
    %1573 = vmatprep.subr.mxu0 0.0
    %1574 = vmatpush1.msra.mxu0 0.0
    %1575 = vmatprep.subr.mxu0 0.0
    %1576 = vmatpush1.msra.mxu0 0.0
    %1577 = vmatprep.subr.mxu0 0.0
    %1578 = vmatpush1.msra.mxu0 0.0
    %1579 = vmatprep.subr.mxu0 0.0
    %1580 = vmatpush1.msra.mxu0 0.0
    %1581 = vmatprep.subr.mxu0 0.0
    %1582 = vmatpush1.msra.mxu0 0.0
    %1583 = vmatprep.subr.mxu0 0.0
    %1584 = vmatpush1.msra.mxu0 0.0
    %1585 = vmatprep.subr.mxu0 0.0
    %1586 = vmatpush1.msra.mxu0 0.0
    %1587 = vmatprep.subr.mxu0 0.0
    %1588 = vmatpush1.msra.mxu0 0.0
    %1589 = vmatprep.subr.mxu0 0.0
    %1590 = vmatpush1.msra.mxu0 0.0
    %1591 = vmatprep.subr.mxu0 0.0
    %1592 = vmatpush1.msra.mxu0 0.0
    %1593 = vmatprep.subr.mxu0 0.0
    %1594 = vmatpush1.msra.mxu0 0.0
    %1595 = vmatprep.subr.mxu0 0.0
    %1596 = vmatpush1.msra.mxu0 0.0
    %1597 = vmatprep.subr.mxu0 0.0
    %1598 = vmatpush1.msra.mxu0 0.0
    %1599 = vmatprep.mubr.f32.mxu0 0.0
    %1600 = vmatmul.mubr.f32.gmra.mrb[0].mxu0 %v1298
    %v1601 = vpop.f32.mrb[0].mxu0
    %v1602 = vadd.f32 0.0, %v1601
    %v1603 = vpop.f32.mrb[0].mxu0
    %v1604 = vadd.f32 0.0, %v1603
    %1605 = vmatprep.mubr.f32.mxu0 0.0
    %1606 = vmatmul.mubr.f32.gmra.mrb[0].mxu0 %v1301
    %v1607 = vpop.f32.mrb[0].mxu0
    %v1608 = vadd.f32 0.0, %v1607
    %v1609 = vpop.f32.mrb[0].mxu0
    %v1610 = vadd.f32 0.0, %v1609
    %1611 = vmatprep.mubr.f32.mxu0 0.0
    %1612 = vmatmul.mubr.f32.gmra.mrb[0].mxu0 %v1304
    %v1613 = vpop.f32.mrb[0].mxu0
    %v1614 = vadd.f32 0.0, %v1613
    %v1615 = vpop.f32.mrb[0].mxu0
    %v1616 = vadd.f32 0.0, %v1615
    %1617 = vmatprep.mubr.f32.mxu0 0.0
    %1618 = vmatmul.mubr.f32.gmra.mrb[0].mxu0 %v1307
    %v1619 = vpop.f32.mrb[0].mxu0
    %v1620 = vadd.f32 0.0, %v1619
    %v1621 = vpop.f32.mrb[0].mxu0
    %v1622 = vadd.f32 0.0, %v1621
    %1623 = vmatprep.mubr.f32.mxu0 0.0
    %1624 = vmatmul.mubr.f32.gmra.mrb[0].mxu0 %v1310
    %v1625 = vpop.f32.mrb[0].mxu0
    %v1626 = vadd.f32 0.0, %v1625
    %v1627 = vpop.f32.mrb[0].mxu0
    %v1628 = vadd.f32 0.0, %v1627
    %1629 = vmatprep.mubr.f32.mxu0 0.0
    %1630 = vmatmul.mubr.f32.gmra.mrb[0].mxu0 %v1313
    %v1631 = vpop.f32.mrb[0].mxu0
    %v1632 = vadd.f32 0.0, %v1631
    %v1633 = vpop.f32.mrb[0].mxu0
    %v1634 = vadd.f32 0.0, %v1633
    %1635 = vdwg.mxu0
    %v1636 = vadd.f32 %v1236, %v1400
    %v1637 = vadd.f32 %v1237, %v1402
    %v1638 = vadd.f32 %v1238, %v1501
    %v1639 = vadd.f32 %v1239, %v1503
    %v1640 = vadd.f32 %v1240, %v1602
    %v1641 = vadd.f32 %v1241, %v1604
    %v1642 = vadd.f32 %v1242, %v1406
    %v1643 = vadd.f32 %v1243, %v1408
    %v1644 = vadd.f32 %v1244, %v1507
    %v1645 = vadd.f32 %v1245, %v1509
    %v1646 = vadd.f32 %v1246, %v1608
    %v1647 = vadd.f32 %v1247, %v1610
    %v1648 = vadd.f32 %v1248, %v1412
    %v1649 = vadd.f32 %v1249, %v1414
    %v1650 = vadd.f32 %v1250, %v1513
    %v1651 = vadd.f32 %v1251, %v1515
    %v1652 = vadd.f32 %v1252, %v1614
    %v1653 = vadd.f32 %v1253, %v1616
    %v1654 = vadd.f32 %v1254, %v1418
    %v1655 = vadd.f32 %v1255, %v1420
    %v1656 = vadd.f32 %v1256, %v1519
    %v1657 = vadd.f32 %v1257, %v1521
    %v1658 = vadd.f32 %v1258, %v1620
    %v1659 = vadd.f32 %v1259, %v1622
    %v1660 = vadd.f32 %v1260, %v1424
    %v1661 = vadd.f32 %v1261, %v1426
    %v1662 = vadd.f32 %v1262, %v1525
    %v1663 = vadd.f32 %v1263, %v1527
    %v1664 = vadd.f32 %v1264, %v1626
    %v1665 = vadd.f32 %v1265, %v1628
    %v1666 = vadd.f32 %v1266, %v1430
    %v1667 = vadd.f32 %v1267, %v1432
    %v1668 = vadd.f32 %v1268, %v1531
    %v1669 = vadd.f32 %v1269, %v1533
    %v1670 = vadd.f32 %v1270, %v1632
    %v1671 = vadd.f32 %v1271, %v1634
    %s1672 = scalar_lea.vmem [#allocation2], 768
    %v1673 = vld [vmem:[%s1672] sm:$0xff]
    %v1674 = vld [vmem:[%s1672 + $0x8] sm:$0xff]
    %v1675 = vld [vmem:[%s1672 + $0x10] sm:$0xff]
    %v1676 = vld [vmem:[%s1672 + $0x18] sm:$0xff]
    %v1677 = vld [vmem:[%s1672 + $0x20] sm:$0xff]
    %v1678 = vld [vmem:[%s1672 + $0x28] sm:$0xff]
    %v1679 = vld [vmem:[%s1672 + $0x30] sm:$0xff]
    %v1680 = vld [vmem:[%s1672 + $0x38] sm:$0xff]
    %v1681 = vld [vmem:[%s1672 + $0x40] sm:$0xff]
    %v1682 = vld [vmem:[%s1672 + $0x48] sm:$0xff]
    %v1683 = vld [vmem:[%s1672 + $0x50] sm:$0xff]
    %v1684 = vld [vmem:[%s1672 + $0x58] sm:$0xff]
    %v1685 = vld [vmem:[%s1672 + $0x60] sm:$0xff]
    %v1686 = vld [vmem:[%s1672 + $0x68] sm:$0xff]
    %v1687 = vld [vmem:[%s1672 + $0x70] sm:$0xff]
    %v1688 = vld [vmem:[%s1672 + $0x78] sm:$0xff]
    %v1689 = vld [vmem:[%s1672 + $0x80] sm:$0xff]
    %v1690 = vld [vmem:[%s1672 + $0x88] sm:$0xff]
    %v1691 = vld [vmem:[%s1672 + $0x90] sm:$0xf]
    %v1692 = vld [vmem:[%s1672 + $0x98] sm:$0xf]
    %v1693 = vld [vmem:[%s1672 + $0xa0] sm:$0xf]
    %v1694 = vld [vmem:[%s1672 + $0xa8] sm:$0xf]
    %v1695 = vld [vmem:[%s1672 + $0xb0] sm:$0xf]
    %v1696 = vld [vmem:[%s1672 + $0xb8] sm:$0xf]
    %v1698 = vsel %vm192, %v121, 0
    %v1701 = vsel %vm211, %v1691, 0
    %v1704 = vsel %vm211, %v1692, 0
    %v1707 = vsel %vm211, %v1693, 0
    %v1710 = vsel %vm211, %v1694, 0
    %v1713 = vsel %vm211, %v1695, 0
    %v1716 = vsel %vm211, %v1696, 0
    %1718 = vmatprep.subr.mxu0 %v1674
    %1719 = vmatpush1.msra.mxu0 %v1673
    %1720 = vmatprep.subr.mxu0 %v1680
    %1721 = vmatpush1.msra.mxu0 %v1679
    %1722 = vmatprep.subr.mxu0 %v1686
    %1723 = vmatpush1.msra.mxu0 %v1685
    %1724 = vmatprep.subr.mxu0 %v1704
    %1725 = vmatpush1.msra.mxu0 %v1701
    %1726 = vmatprep.subr.mxu0 0.0
    %1727 = vmatpush1.msra.mxu0 0.0
    %1728 = vmatprep.subr.mxu0 0.0
    %1729 = vmatpush1.msra.mxu0 0.0
    %1730 = vmatprep.subr.mxu0 0.0
    %1731 = vmatpush1.msra.mxu0 0.0
    %1732 = vmatprep.subr.mxu0 0.0
    %1733 = vmatpush1.msra.mxu0 0.0
    %1734 = vmatprep.subr.mxu0 0.0
    %1735 = vmatpush1.msra.mxu0 0.0
    %1736 = vmatprep.subr.mxu0 0.0
    %1737 = vmatpush1.msra.mxu0 0.0
    %1738 = vmatprep.subr.mxu0 0.0
    %1739 = vmatpush1.msra.mxu0 0.0
    %1740 = vmatprep.subr.mxu0 0.0
    %1741 = vmatpush1.msra.mxu0 0.0
    %1742 = vmatprep.subr.mxu0 0.0
    %1743 = vmatpush1.msra.mxu0 0.0
    %1744 = vmatprep.subr.mxu0 0.0
    %1745 = vmatpush1.msra.mxu0 0.0
    %1746 = vmatprep.subr.mxu0 0.0
    %1747 = vmatpush1.msra.mxu0 0.0
    %1748 = vmatprep.subr.mxu0 0.0
    %1749 = vmatpush1.msra.mxu0 0.0
    %1750 = vmatprep.subr.mxu0 0.0
    %1751 = vmatpush1.msra.mxu0 0.0
    %1752 = vmatprep.subr.mxu0 0.0
    %1753 = vmatpush1.msra.mxu0 0.0
    %1754 = vmatprep.subr.mxu0 0.0
    %1755 = vmatpush1.msra.mxu0 0.0
    %1756 = vmatprep.subr.mxu0 0.0
    %1757 = vmatpush1.msra.mxu0 0.0
    %1758 = vmatprep.subr.mxu0 0.0
    %1759 = vmatpush1.msra.mxu0 0.0
    %1760 = vmatprep.subr.mxu0 0.0
    %1761 = vmatpush1.msra.mxu0 0.0
    %1762 = vmatprep.subr.mxu0 0.0
    %1763 = vmatpush1.msra.mxu0 0.0
    %1764 = vmatprep.subr.mxu0 0.0
    %1765 = vmatpush1.msra.mxu0 0.0
    %1766 = vmatprep.subr.mxu0 0.0
    %1767 = vmatpush1.msra.mxu0 0.0
    %1768 = vmatprep.subr.mxu0 0.0
    %1769 = vmatpush1.msra.mxu0 0.0
    %1770 = vmatprep.subr.mxu0 0.0
    %1771 = vmatpush1.msra.mxu0 0.0
    %1772 = vmatprep.subr.mxu0 0.0
    %1773 = vmatpush1.msra.mxu0 0.0
    %1774 = vmatprep.subr.mxu0 0.0
    %1775 = vmatpush1.msra.mxu0 0.0
    %1776 = vmatprep.subr.mxu0 0.0
    %1777 = vmatpush1.msra.mxu0 0.0
    %1778 = vmatprep.subr.mxu0 0.0
    %1779 = vmatpush1.msra.mxu0 0.0
    %1780 = vmatprep.subr.mxu0 0.0
    %1781 = vmatpush1.msra.mxu0 0.0
    %1782 = vmatprep.mubr.f32.mxu0 0.0
    %1783 = vmatmul.mubr.f32.gmra.mrb[0].mxu0 %v537
    %v1784 = vpop.f32.mrb[0].mxu0
    %v1785 = vadd.f32 0.0, %v1784
    %v1786 = vpop.f32.mrb[0].mxu0
    %v1787 = vadd.f32 0.0, %v1786
    %1788 = vmatprep.mubr.f32.mxu0 0.0
    %1789 = vmatmul.mubr.f32.gmra.mrb[0].mxu0 %v540
    %v1790 = vpop.f32.mrb[0].mxu0
    %v1791 = vadd.f32 0.0, %v1790
    %v1792 = vpop.f32.mrb[0].mxu0
    %v1793 = vadd.f32 0.0, %v1792
    %1794 = vmatprep.mubr.f32.mxu0 0.0
    %1795 = vmatmul.mubr.f32.gmra.mrb[0].mxu0 %v543
    %v1796 = vpop.f32.mrb[0].mxu0
    %v1797 = vadd.f32 0.0, %v1796
    %v1798 = vpop.f32.mrb[0].mxu0
    %v1799 = vadd.f32 0.0, %v1798
    %1800 = vmatprep.mubr.f32.mxu0 0.0
    %1801 = vmatmul.mubr.f32.gmra.mrb[0].mxu0 %v546
    %v1802 = vpop.f32.mrb[0].mxu0
    %v1803 = vadd.f32 0.0, %v1802
    %v1804 = vpop.f32.mrb[0].mxu0
    %v1805 = vadd.f32 0.0, %v1804
    %1806 = vmatprep.mubr.f32.mxu0 0.0
    %1807 = vmatmul.mubr.f32.gmra.mrb[0].mxu0 %v549
    %v1808 = vpop.f32.mrb[0].mxu0
    %v1809 = vadd.f32 0.0, %v1808
    %v1810 = vpop.f32.mrb[0].mxu0
    %v1811 = vadd.f32 0.0, %v1810
    %1812 = vmatprep.mubr.f32.mxu0 0.0
    %1813 = vmatmul.mubr.f32.gmra.mrb[0].mxu0 %v1698
    %v1814 = vpop.f32.mrb[0].mxu0
    %v1815 = vadd.f32 0.0, %v1814
    %v1816 = vpop.f32.mrb[0].mxu0
    %v1817 = vadd.f32 0.0, %v1816
    %1818 = vdwg.mxu0
    %1819 = vmatprep.subr.mxu0 %v1676
    %1820 = vmatpush1.msra.mxu0 %v1675
    %1821 = vmatprep.subr.mxu0 %v1682
    %1822 = vmatpush1.msra.mxu0 %v1681
    %1823 = vmatprep.subr.mxu0 %v1688
    %1824 = vmatpush1.msra.mxu0 %v1687
    %1825 = vmatprep.subr.mxu0 %v1710
    %1826 = vmatpush1.msra.mxu0 %v1707
    %1827 = vmatprep.subr.mxu0 0.0
    %1828 = vmatpush1.msra.mxu0 0.0
    %1829 = vmatprep.subr.mxu0 0.0
    %1830 = vmatpush1.msra.mxu0 0.0
    %1831 = vmatprep.subr.mxu0 0.0
    %1832 = vmatpush1.msra.mxu0 0.0
    %1833 = vmatprep.subr.mxu0 0.0
    %1834 = vmatpush1.msra.mxu0 0.0
    %1835 = vmatprep.subr.mxu0 0.0
    %1836 = vmatpush1.msra.mxu0 0.0
    %1837 = vmatprep.subr.mxu0 0.0
    %1838 = vmatpush1.msra.mxu0 0.0
    %1839 = vmatprep.subr.mxu0 0.0
    %1840 = vmatpush1.msra.mxu0 0.0
    %1841 = vmatprep.subr.mxu0 0.0
    %1842 = vmatpush1.msra.mxu0 0.0
    %1843 = vmatprep.subr.mxu0 0.0
    %1844 = vmatpush1.msra.mxu0 0.0
    %1845 = vmatprep.subr.mxu0 0.0
    %1846 = vmatpush1.msra.mxu0 0.0
    %1847 = vmatprep.subr.mxu0 0.0
    %1848 = vmatpush1.msra.mxu0 0.0
    %1849 = vmatprep.subr.mxu0 0.0
    %1850 = vmatpush1.msra.mxu0 0.0
    %1851 = vmatprep.subr.mxu0 0.0
    %1852 = vmatpush1.msra.mxu0 0.0
    %1853 = vmatprep.subr.mxu0 0.0
    %1854 = vmatpush1.msra.mxu0 0.0
    %1855 = vmatprep.subr.mxu0 0.0
    %1856 = vmatpush1.msra.mxu0 0.0
    %1857 = vmatprep.subr.mxu0 0.0
    %1858 = vmatpush1.msra.mxu0 0.0
    %1859 = vmatprep.subr.mxu0 0.0
    %1860 = vmatpush1.msra.mxu0 0.0
    %1861 = vmatprep.subr.mxu0 0.0
    %1862 = vmatpush1.msra.mxu0 0.0
    %1863 = vmatprep.subr.mxu0 0.0
    %1864 = vmatpush1.msra.mxu0 0.0
    %1865 = vmatprep.subr.mxu0 0.0
    %1866 = vmatpush1.msra.mxu0 0.0
    %1867 = vmatprep.subr.mxu0 0.0
    %1868 = vmatpush1.msra.mxu0 0.0
    %1869 = vmatprep.subr.mxu0 0.0
    %1870 = vmatpush1.msra.mxu0 0.0
    %1871 = vmatprep.subr.mxu0 0.0
    %1872 = vmatpush1.msra.mxu0 0.0
    %1873 = vmatprep.subr.mxu0 0.0
    %1874 = vmatpush1.msra.mxu0 0.0
    %1875 = vmatprep.subr.mxu0 0.0
    %1876 = vmatpush1.msra.mxu0 0.0
    %1877 = vmatprep.subr.mxu0 0.0
    %1878 = vmatpush1.msra.mxu0 0.0
    %1879 = vmatprep.subr.mxu0 0.0
    %1880 = vmatpush1.msra.mxu0 0.0
    %1881 = vmatprep.subr.mxu0 0.0
    %1882 = vmatpush1.msra.mxu0 0.0
    %1883 = vmatprep.mubr.f32.mxu0 0.0
    %1884 = vmatmul.mubr.f32.gmra.mrb[0].mxu0 %v537
    %v1885 = vpop.f32.mrb[0].mxu0
    %v1886 = vadd.f32 0.0, %v1885
    %v1887 = vpop.f32.mrb[0].mxu0
    %v1888 = vadd.f32 0.0, %v1887
    %1889 = vmatprep.mubr.f32.mxu0 0.0
    %1890 = vmatmul.mubr.f32.gmra.mrb[0].mxu0 %v540
    %v1891 = vpop.f32.mrb[0].mxu0
    %v1892 = vadd.f32 0.0, %v1891
    %v1893 = vpop.f32.mrb[0].mxu0
    %v1894 = vadd.f32 0.0, %v1893
    %1895 = vmatprep.mubr.f32.mxu0 0.0
    %1896 = vmatmul.mubr.f32.gmra.mrb[0].mxu0 %v543
    %v1897 = vpop.f32.mrb[0].mxu0
    %v1898 = vadd.f32 0.0, %v1897
    %v1899 = vpop.f32.mrb[0].mxu0
    %v1900 = vadd.f32 0.0, %v1899
    %1901 = vmatprep.mubr.f32.mxu0 0.0
    %1902 = vmatmul.mubr.f32.gmra.mrb[0].mxu0 %v546
    %v1903 = vpop.f32.mrb[0].mxu0
    %v1904 = vadd.f32 0.0, %v1903
    %v1905 = vpop.f32.mrb[0].mxu0
    %v1906 = vadd.f32 0.0, %v1905
    %1907 = vmatprep.mubr.f32.mxu0 0.0
    %1908 = vmatmul.mubr.f32.gmra.mrb[0].mxu0 %v549
    %v1909 = vpop.f32.mrb[0].mxu0
    %v1910 = vadd.f32 0.0, %v1909
    %v1911 = vpop.f32.mrb[0].mxu0
    %v1912 = vadd.f32 0.0, %v1911
    %1913 = vmatprep.mubr.f32.mxu0 0.0
    %1914 = vmatmul.mubr.f32.gmra.mrb[0].mxu0 %v1698
    %v1915 = vpop.f32.mrb[0].mxu0
    %v1916 = vadd.f32 0.0, %v1915
    %v1917 = vpop.f32.mrb[0].mxu0
    %v1918 = vadd.f32 0.0, %v1917
    %1919 = vdwg.mxu0
    %1920 = vmatprep.subr.mxu0 %v1678
    %1921 = vmatpush1.msra.mxu0 %v1677
    %1922 = vmatprep.subr.mxu0 %v1684
    %1923 = vmatpush1.msra.mxu0 %v1683
    %1924 = vmatprep.subr.mxu0 %v1690
    %1925 = vmatpush1.msra.mxu0 %v1689
    %1926 = vmatprep.subr.mxu0 %v1716
    %1927 = vmatpush1.msra.mxu0 %v1713
    %1928 = vmatprep.subr.mxu0 0.0
    %1929 = vmatpush1.msra.mxu0 0.0
    %1930 = vmatprep.subr.mxu0 0.0
    %1931 = vmatpush1.msra.mxu0 0.0
    %1932 = vmatprep.subr.mxu0 0.0
    %1933 = vmatpush1.msra.mxu0 0.0
    %1934 = vmatprep.subr.mxu0 0.0
    %1935 = vmatpush1.msra.mxu0 0.0
    %1936 = vmatprep.subr.mxu0 0.0
    %1937 = vmatpush1.msra.mxu0 0.0
    %1938 = vmatprep.subr.mxu0 0.0
    %1939 = vmatpush1.msra.mxu0 0.0
    %1940 = vmatprep.subr.mxu0 0.0
    %1941 = vmatpush1.msra.mxu0 0.0
    %1942 = vmatprep.subr.mxu0 0.0
    %1943 = vmatpush1.msra.mxu0 0.0
    %1944 = vmatprep.subr.mxu0 0.0
    %1945 = vmatpush1.msra.mxu0 0.0
    %1946 = vmatprep.subr.mxu0 0.0
    %1947 = vmatpush1.msra.mxu0 0.0
    %1948 = vmatprep.subr.mxu0 0.0
    %1949 = vmatpush1.msra.mxu0 0.0
    %1950 = vmatprep.subr.mxu0 0.0
    %1951 = vmatpush1.msra.mxu0 0.0
    %1952 = vmatprep.subr.mxu0 0.0
    %1953 = vmatpush1.msra.mxu0 0.0
    %1954 = vmatprep.subr.mxu0 0.0
    %1955 = vmatpush1.msra.mxu0 0.0
    %1956 = vmatprep.subr.mxu0 0.0
    %1957 = vmatpush1.msra.mxu0 0.0
    %1958 = vmatprep.subr.mxu0 0.0
    %1959 = vmatpush1.msra.mxu0 0.0
    %1960 = vmatprep.subr.mxu0 0.0
    %1961 = vmatpush1.msra.mxu0 0.0
    %1962 = vmatprep.subr.mxu0 0.0
    %1963 = vmatpush1.msra.mxu0 0.0
    %1964 = vmatprep.subr.mxu0 0.0
    %1965 = vmatpush1.msra.mxu0 0.0
    %1966 = vmatprep.subr.mxu0 0.0
    %1967 = vmatpush1.msra.mxu0 0.0
    %1968 = vmatprep.subr.mxu0 0.0
    %1969 = vmatpush1.msra.mxu0 0.0
    %1970 = vmatprep.subr.mxu0 0.0
    %1971 = vmatpush1.msra.mxu0 0.0
    %1972 = vmatprep.subr.mxu0 0.0
    %1973 = vmatpush1.msra.mxu0 0.0
    %1974 = vmatprep.subr.mxu0 0.0
    %1975 = vmatpush1.msra.mxu0 0.0
    %1976 = vmatprep.subr.mxu0 0.0
    %1977 = vmatpush1.msra.mxu0 0.0
    %1978 = vmatprep.subr.mxu0 0.0
    %1979 = vmatpush1.msra.mxu0 0.0
    %1980 = vmatprep.subr.mxu0 0.0
    %1981 = vmatpush1.msra.mxu0 0.0
    %1982 = vmatprep.subr.mxu0 0.0
    %1983 = vmatpush1.msra.mxu0 0.0
    %1984 = vmatprep.mubr.f32.mxu0 0.0
    %1985 = vmatmul.mubr.f32.gmra.mrb[0].mxu0 %v537
    %v1986 = vpop.f32.mrb[0].mxu0
    %v1987 = vadd.f32 0.0, %v1986
    %v1988 = vpop.f32.mrb[0].mxu0
    %v1989 = vadd.f32 0.0, %v1988
    %1990 = vmatprep.mubr.f32.mxu0 0.0
    %1991 = vmatmul.mubr.f32.gmra.mrb[0].mxu0 %v540
    %v1992 = vpop.f32.mrb[0].mxu0
    %v1993 = vadd.f32 0.0, %v1992
    %v1994 = vpop.f32.mrb[0].mxu0
    %v1995 = vadd.f32 0.0, %v1994
    %1996 = vmatprep.mubr.f32.mxu0 0.0
    %1997 = vmatmul.mubr.f32.gmra.mrb[0].mxu0 %v543
    %v1998 = vpop.f32.mrb[0].mxu0
    %v1999 = vadd.f32 0.0, %v1998
    %v2000 = vpop.f32.mrb[0].mxu0
    %v2001 = vadd.f32 0.0, %v2000
    %2002 = vmatprep.mubr.f32.mxu0 0.0
    %2003 = vmatmul.mubr.f32.gmra.mrb[0].mxu0 %v546
    %v2004 = vpop.f32.mrb[0].mxu0
    %v2005 = vadd.f32 0.0, %v2004
    %v2006 = vpop.f32.mrb[0].mxu0
    %v2007 = vadd.f32 0.0, %v2006
    %2008 = vmatprep.mubr.f32.mxu0 0.0
    %2009 = vmatmul.mubr.f32.gmra.mrb[0].mxu0 %v549
    %v2010 = vpop.f32.mrb[0].mxu0
    %v2011 = vadd.f32 0.0, %v2010
    %v2012 = vpop.f32.mrb[0].mxu0
    %v2013 = vadd.f32 0.0, %v2012
    %2014 = vmatprep.mubr.f32.mxu0 0.0
    %2015 = vmatmul.mubr.f32.gmra.mrb[0].mxu0 %v1698
    %v2016 = vpop.f32.mrb[0].mxu0
    %v2017 = vadd.f32 0.0, %v2016
    %v2018 = vpop.f32.mrb[0].mxu0
    %v2019 = vadd.f32 0.0, %v2018
    %2020 = vdwg.mxu0
    %v2021 = vadd.f32 %v1636, %v1785
    %v2022 = vadd.f32 %v1637, %v1787
    %v2023 = vadd.f32 %v1638, %v1886
    %v2024 = vadd.f32 %v1639, %v1888
    %v2025 = vadd.f32 %v1640, %v1987
    %v2026 = vadd.f32 %v1641, %v1989
    %v2027 = vadd.f32 %v1642, %v1791
    %v2028 = vadd.f32 %v1643, %v1793
    %v2029 = vadd.f32 %v1644, %v1892
    %v2030 = vadd.f32 %v1645, %v1894
    %v2031 = vadd.f32 %v1646, %v1993
    %v2032 = vadd.f32 %v1647, %v1995
    %v2033 = vadd.f32 %v1648, %v1797
    %v2034 = vadd.f32 %v1649, %v1799
    %v2035 = vadd.f32 %v1650, %v1898
    %v2036 = vadd.f32 %v1651, %v1900
    %v2037 = vadd.f32 %v1652, %v1999
    %v2038 = vadd.f32 %v1653, %v2001
    %v2039 = vadd.f32 %v1654, %v1803
    %v2040 = vadd.f32 %v1655, %v1805
    %v2041 = vadd.f32 %v1656, %v1904
    %v2042 = vadd.f32 %v1657, %v1906
    %v2043 = vadd.f32 %v1658, %v2005
    %v2044 = vadd.f32 %v1659, %v2007
    %v2045 = vadd.f32 %v1660, %v1809
    %v2046 = vadd.f32 %v1661, %v1811
    %v2047 = vadd.f32 %v1662, %v1910
    %v2048 = vadd.f32 %v1663, %v1912
    %v2049 = vadd.f32 %v1664, %v2011
    %v2050 = vadd.f32 %v1665, %v2013
    %v2051 = vadd.f32 %v1666, %v1815
    %v2052 = vadd.f32 %v1667, %v1817
    %v2053 = vadd.f32 %v1668, %v1916
    %v2054 = vadd.f32 %v1669, %v1918
    %v2055 = vadd.f32 %v1670, %v2017
    %v2056 = vadd.f32 %v1671, %v2019
    %2057 = vmatprep.subr.mxu0 %v169
    %2058 = vmatpush1.msra.mxu0 %v168
    %2059 = vmatprep.subr.mxu0 %v175
    %2060 = vmatpush1.msra.mxu0 %v174
    %2061 = vmatprep.subr.mxu0 %v181
    %2062 = vmatpush1.msra.mxu0 %v180
    %2063 = vmatprep.subr.mxu0 %v216
    %2064 = vmatpush1.msra.mxu0 %v213
    %2065 = vmatprep.subr.mxu0 0.0
    %2066 = vmatpush1.msra.mxu0 0.0
    %2067 = vmatprep.subr.mxu0 0.0
    %2068 = vmatpush1.msra.mxu0 0.0
    %2069 = vmatprep.subr.mxu0 0.0
    %2070 = vmatpush1.msra.mxu0 0.0
    %2071 = vmatprep.subr.mxu0 0.0
    %2072 = vmatpush1.msra.mxu0 0.0
    %2073 = vmatprep.subr.mxu0 0.0
    %2074 = vmatpush1.msra.mxu0 0.0
    %2075 = vmatprep.subr.mxu0 0.0
    %2076 = vmatpush1.msra.mxu0 0.0
    %2077 = vmatprep.subr.mxu0 0.0
    %2078 = vmatpush1.msra.mxu0 0.0
    %2079 = vmatprep.subr.mxu0 0.0
    %2080 = vmatpush1.msra.mxu0 0.0
    %2081 = vmatprep.subr.mxu0 0.0
    %2082 = vmatpush1.msra.mxu0 0.0
    %2083 = vmatprep.subr.mxu0 0.0
    %2084 = vmatpush1.msra.mxu0 0.0
    %2085 = vmatprep.subr.mxu0 0.0
    %2086 = vmatpush1.msra.mxu0 0.0
    %2087 = vmatprep.subr.mxu0 0.0
    %2088 = vmatpush1.msra.mxu0 0.0
    %2089 = vmatprep.subr.mxu0 0.0
    %2090 = vmatpush1.msra.mxu0 0.0
    %2091 = vmatprep.subr.mxu0 0.0
    %2092 = vmatpush1.msra.mxu0 0.0
    %2093 = vmatprep.subr.mxu0 0.0
    %2094 = vmatpush1.msra.mxu0 0.0
    %2095 = vmatprep.subr.mxu0 0.0
    %2096 = vmatpush1.msra.mxu0 0.0
    %2097 = vmatprep.subr.mxu0 0.0
    %2098 = vmatpush1.msra.mxu0 0.0
    %2099 = vmatprep.subr.mxu0 0.0
    %2100 = vmatpush1.msra.mxu0 0.0
    %2101 = vmatprep.subr.mxu0 0.0
    %2102 = vmatpush1.msra.mxu0 0.0
    %2103 = vmatprep.subr.mxu0 0.0
    %2104 = vmatpush1.msra.mxu0 0.0
    %2105 = vmatprep.subr.mxu0 0.0
    %2106 = vmatpush1.msra.mxu0 0.0
    %2107 = vmatprep.subr.mxu0 0.0
    %2108 = vmatpush1.msra.mxu0 0.0
    %2109 = vmatprep.subr.mxu0 0.0
    %2110 = vmatpush1.msra.mxu0 0.0
    %2111 = vmatprep.subr.mxu0 0.0
    %2112 = vmatpush1.msra.mxu0 0.0
    %2113 = vmatprep.subr.mxu0 0.0
    %2114 = vmatpush1.msra.mxu0 0.0
    %2115 = vmatprep.subr.mxu0 0.0
    %2116 = vmatpush1.msra.mxu0 0.0
    %2117 = vmatprep.subr.mxu0 0.0
    %2118 = vmatpush1.msra.mxu0 0.0
    %2119 = vmatprep.subr.mxu0 0.0
    %2120 = vmatpush1.msra.mxu0 0.0
    %2121 = vmatprep.mubr.f32.mxu0 0.0
    %2122 = vmatmul.mubr.f32.gmra.mrb[0].mxu0 %v898
    %v2123 = vpop.f32.mrb[0].mxu0
    %v2124 = vadd.f32 0.0, %v2123
    %v2125 = vpop.f32.mrb[0].mxu0
    %v2126 = vadd.f32 0.0, %v2125
    %2127 = vmatprep.mubr.f32.mxu0 0.0
    %2128 = vmatmul.mubr.f32.gmra.mrb[0].mxu0 %v901
    %v2129 = vpop.f32.mrb[0].mxu0
    %v2130 = vadd.f32 0.0, %v2129
    %v2131 = vpop.f32.mrb[0].mxu0
    %v2132 = vadd.f32 0.0, %v2131
    %2133 = vmatprep.mubr.f32.mxu0 0.0
    %2134 = vmatmul.mubr.f32.gmra.mrb[0].mxu0 %v904
    %v2135 = vpop.f32.mrb[0].mxu0
    %v2136 = vadd.f32 0.0, %v2135
    %v2137 = vpop.f32.mrb[0].mxu0
    %v2138 = vadd.f32 0.0, %v2137
    %2139 = vmatprep.mubr.f32.mxu0 0.0
    %2140 = vmatmul.mubr.f32.gmra.mrb[0].mxu0 %v907
    %v2141 = vpop.f32.mrb[0].mxu0
    %v2142 = vadd.f32 0.0, %v2141
    %v2143 = vpop.f32.mrb[0].mxu0
    %v2144 = vadd.f32 0.0, %v2143
    %2145 = vmatprep.mubr.f32.mxu0 0.0
    %2146 = vmatmul.mubr.f32.gmra.mrb[0].mxu0 %v910
    %v2147 = vpop.f32.mrb[0].mxu0
    %v2148 = vadd.f32 0.0, %v2147
    %v2149 = vpop.f32.mrb[0].mxu0
    %v2150 = vadd.f32 0.0, %v2149
    %2151 = vmatprep.mubr.f32.mxu0 0.0
    %2152 = vmatmul.mubr.f32.gmra.mrb[0].mxu0 %v913
    %v2153 = vpop.f32.mrb[0].mxu0
    %v2154 = vadd.f32 0.0, %v2153
    %v2155 = vpop.f32.mrb[0].mxu0
    %v2156 = vadd.f32 0.0, %v2155
    %2157 = vdwg.mxu0
    %2158 = vmatprep.subr.mxu0 %v171
    %2159 = vmatpush1.msra.mxu0 %v170
    %2160 = vmatprep.subr.mxu0 %v177
    %2161 = vmatpush1.msra.mxu0 %v176
    %2162 = vmatprep.subr.mxu0 %v183
    %2163 = vmatpush1.msra.mxu0 %v182
    %2164 = vmatprep.subr.mxu0 %v222
    %2165 = vmatpush1.msra.mxu0 %v219
    %2166 = vmatprep.subr.mxu0 0.0
    %2167 = vmatpush1.msra.mxu0 0.0
    %2168 = vmatprep.subr.mxu0 0.0
    %2169 = vmatpush1.msra.mxu0 0.0
    %2170 = vmatprep.subr.mxu0 0.0
    %2171 = vmatpush1.msra.mxu0 0.0
    %2172 = vmatprep.subr.mxu0 0.0
    %2173 = vmatpush1.msra.mxu0 0.0
    %2174 = vmatprep.subr.mxu0 0.0
    %2175 = vmatpush1.msra.mxu0 0.0
    %2176 = vmatprep.subr.mxu0 0.0
    %2177 = vmatpush1.msra.mxu0 0.0
    %2178 = vmatprep.subr.mxu0 0.0
    %2179 = vmatpush1.msra.mxu0 0.0
    %2180 = vmatprep.subr.mxu0 0.0
    %2181 = vmatpush1.msra.mxu0 0.0
    %2182 = vmatprep.subr.mxu0 0.0
    %2183 = vmatpush1.msra.mxu0 0.0
    %2184 = vmatprep.subr.mxu0 0.0
    %2185 = vmatpush1.msra.mxu0 0.0
    %2186 = vmatprep.subr.mxu0 0.0
    %2187 = vmatpush1.msra.mxu0 0.0
    %2188 = vmatprep.subr.mxu0 0.0
    %2189 = vmatpush1.msra.mxu0 0.0
    %2190 = vmatprep.subr.mxu0 0.0
    %2191 = vmatpush1.msra.mxu0 0.0
    %2192 = vmatprep.subr.mxu0 0.0
    %2193 = vmatpush1.msra.mxu0 0.0
    %2194 = vmatprep.subr.mxu0 0.0
    %2195 = vmatpush1.msra.mxu0 0.0
    %2196 = vmatprep.subr.mxu0 0.0
    %2197 = vmatpush1.msra.mxu0 0.0
    %2198 = vmatprep.subr.mxu0 0.0
    %2199 = vmatpush1.msra.mxu0 0.0
    %2200 = vmatprep.subr.mxu0 0.0
    %2201 = vmatpush1.msra.mxu0 0.0
    %2202 = vmatprep.subr.mxu0 0.0
    %2203 = vmatpush1.msra.mxu0 0.0
    %2204 = vmatprep.subr.mxu0 0.0
    %2205 = vmatpush1.msra.mxu0 0.0
    %2206 = vmatprep.subr.mxu0 0.0
    %2207 = vmatpush1.msra.mxu0 0.0
    %2208 = vmatprep.subr.mxu0 0.0
    %2209 = vmatpush1.msra.mxu0 0.0
    %2210 = vmatprep.subr.mxu0 0.0
    %2211 = vmatpush1.msra.mxu0 0.0
    %2212 = vmatprep.subr.mxu0 0.0
    %2213 = vmatpush1.msra.mxu0 0.0
    %2214 = vmatprep.subr.mxu0 0.0
    %2215 = vmatpush1.msra.mxu0 0.0
    %2216 = vmatprep.subr.mxu0 0.0
    %2217 = vmatpush1.msra.mxu0 0.0
    %2218 = vmatprep.subr.mxu0 0.0
    %2219 = vmatpush1.msra.mxu0 0.0
    %2220 = vmatprep.subr.mxu0 0.0
    %2221 = vmatpush1.msra.mxu0 0.0
    %2222 = vmatprep.mubr.f32.mxu0 0.0
    %2223 = vmatmul.mubr.f32.gmra.mrb[0].mxu0 %v898
    %v2224 = vpop.f32.mrb[0].mxu0
    %v2225 = vadd.f32 0.0, %v2224
    %v2226 = vpop.f32.mrb[0].mxu0
    %v2227 = vadd.f32 0.0, %v2226
    %2228 = vmatprep.mubr.f32.mxu0 0.0
    %2229 = vmatmul.mubr.f32.gmra.mrb[0].mxu0 %v901
    %v2230 = vpop.f32.mrb[0].mxu0
    %v2231 = vadd.f32 0.0, %v2230
    %v2232 = vpop.f32.mrb[0].mxu0
    %v2233 = vadd.f32 0.0, %v2232
    %2234 = vmatprep.mubr.f32.mxu0 0.0
    %2235 = vmatmul.mubr.f32.gmra.mrb[0].mxu0 %v904
    %v2236 = vpop.f32.mrb[0].mxu0
    %v2237 = vadd.f32 0.0, %v2236
    %v2238 = vpop.f32.mrb[0].mxu0
    %v2239 = vadd.f32 0.0, %v2238
    %2240 = vmatprep.mubr.f32.mxu0 0.0
    %2241 = vmatmul.mubr.f32.gmra.mrb[0].mxu0 %v907
    %v2242 = vpop.f32.mrb[0].mxu0
    %v2243 = vadd.f32 0.0, %v2242
    %v2244 = vpop.f32.mrb[0].mxu0
    %v2245 = vadd.f32 0.0, %v2244
    %2246 = vmatprep.mubr.f32.mxu0 0.0
    %2247 = vmatmul.mubr.f32.gmra.mrb[0].mxu0 %v910
    %v2248 = vpop.f32.mrb[0].mxu0
    %v2249 = vadd.f32 0.0, %v2248
    %v2250 = vpop.f32.mrb[0].mxu0
    %v2251 = vadd.f32 0.0, %v2250
    %2252 = vmatprep.mubr.f32.mxu0 0.0
    %2253 = vmatmul.mubr.f32.gmra.mrb[0].mxu0 %v913
    %v2254 = vpop.f32.mrb[0].mxu0
    %v2255 = vadd.f32 0.0, %v2254
    %v2256 = vpop.f32.mrb[0].mxu0
    %v2257 = vadd.f32 0.0, %v2256
    %2258 = vdwg.mxu0
    %2259 = vmatprep.subr.mxu0 %v173
    %2260 = vmatpush1.msra.mxu0 %v172
    %2261 = vmatprep.subr.mxu0 %v179
    %2262 = vmatpush1.msra.mxu0 %v178
    %2263 = vmatprep.subr.mxu0 %v185
    %2264 = vmatpush1.msra.mxu0 %v184
    %2265 = vmatprep.subr.mxu0 %v228
    %2266 = vmatpush1.msra.mxu0 %v225
    %2267 = vmatprep.subr.mxu0 0.0
    %2268 = vmatpush1.msra.mxu0 0.0
    %2269 = vmatprep.subr.mxu0 0.0
    %2270 = vmatpush1.msra.mxu0 0.0
    %2271 = vmatprep.subr.mxu0 0.0
    %2272 = vmatpush1.msra.mxu0 0.0
    %2273 = vmatprep.subr.mxu0 0.0
    %2274 = vmatpush1.msra.mxu0 0.0
    %2275 = vmatprep.subr.mxu0 0.0
    %2276 = vmatpush1.msra.mxu0 0.0
    %2277 = vmatprep.subr.mxu0 0.0
    %2278 = vmatpush1.msra.mxu0 0.0
    %2279 = vmatprep.subr.mxu0 0.0
    %2280 = vmatpush1.msra.mxu0 0.0
    %2281 = vmatprep.subr.mxu0 0.0
    %2282 = vmatpush1.msra.mxu0 0.0
    %2283 = vmatprep.subr.mxu0 0.0
    %2284 = vmatpush1.msra.mxu0 0.0
    %2285 = vmatprep.subr.mxu0 0.0
    %2286 = vmatpush1.msra.mxu0 0.0
    %2287 = vmatprep.subr.mxu0 0.0
    %2288 = vmatpush1.msra.mxu0 0.0
    %2289 = vmatprep.subr.mxu0 0.0
    %2290 = vmatpush1.msra.mxu0 0.0
    %2291 = vmatprep.subr.mxu0 0.0
    %2292 = vmatpush1.msra.mxu0 0.0
    %2293 = vmatprep.subr.mxu0 0.0
    %2294 = vmatpush1.msra.mxu0 0.0
    %2295 = vmatprep.subr.mxu0 0.0
    %2296 = vmatpush1.msra.mxu0 0.0
    %2297 = vmatprep.subr.mxu0 0.0
    %2298 = vmatpush1.msra.mxu0 0.0
    %2299 = vmatprep.subr.mxu0 0.0
    %2300 = vmatpush1.msra.mxu0 0.0
    %2301 = vmatprep.subr.mxu0 0.0
    %2302 = vmatpush1.msra.mxu0 0.0
    %2303 = vmatprep.subr.mxu0 0.0
    %2304 = vmatpush1.msra.mxu0 0.0
    %2305 = vmatprep.subr.mxu0 0.0
    %2306 = vmatpush1.msra.mxu0 0.0
    %2307 = vmatprep.subr.mxu0 0.0
    %2308 = vmatpush1.msra.mxu0 0.0
    %2309 = vmatprep.subr.mxu0 0.0
    %2310 = vmatpush1.msra.mxu0 0.0
    %2311 = vmatprep.subr.mxu0 0.0
    %2312 = vmatpush1.msra.mxu0 0.0
    %2313 = vmatprep.subr.mxu0 0.0
    %2314 = vmatpush1.msra.mxu0 0.0
    %2315 = vmatprep.subr.mxu0 0.0
    %2316 = vmatpush1.msra.mxu0 0.0
    %2317 = vmatprep.subr.mxu0 0.0
    %2318 = vmatpush1.msra.mxu0 0.0
    %2319 = vmatprep.subr.mxu0 0.0
    %2320 = vmatpush1.msra.mxu0 0.0
    %2321 = vmatprep.subr.mxu0 0.0
    %2322 = vmatpush1.msra.mxu0 0.0
    %2323 = vmatprep.mubr.f32.mxu0 0.0
    %2324 = vmatmul.mubr.f32.gmra.mrb[0].mxu0 %v898
    %v2325 = vpop.f32.mrb[0].mxu0
    %v2326 = vadd.f32 0.0, %v2325
    %v2327 = vpop.f32.mrb[0].mxu0
    %v2328 = vadd.f32 0.0, %v2327
    %2329 = vmatprep.mubr.f32.mxu0 0.0
    %2330 = vmatmul.mubr.f32.gmra.mrb[0].mxu0 %v901
    %v2331 = vpop.f32.mrb[0].mxu0
    %v2332 = vadd.f32 0.0, %v2331
    %v2333 = vpop.f32.mrb[0].mxu0
    %v2334 = vadd.f32 0.0, %v2333
    %2335 = vmatprep.mubr.f32.mxu0 0.0
    %2336 = vmatmul.mubr.f32.gmra.mrb[0].mxu0 %v904
    %v2337 = vpop.f32.mrb[0].mxu0
    %v2338 = vadd.f32 0.0, %v2337
    %v2339 = vpop.f32.mrb[0].mxu0
    %v2340 = vadd.f32 0.0, %v2339
    %2341 = vmatprep.mubr.f32.mxu0 0.0
    %2342 = vmatmul.mubr.f32.gmra.mrb[0].mxu0 %v907
    %v2343 = vpop.f32.mrb[0].mxu0
    %v2344 = vadd.f32 0.0, %v2343
    %v2345 = vpop.f32.mrb[0].mxu0
    %v2346 = vadd.f32 0.0, %v2345
    %2347 = vmatprep.mubr.f32.mxu0 0.0
    %2348 = vmatmul.mubr.f32.gmra.mrb[0].mxu0 %v910
    %v2349 = vpop.f32.mrb[0].mxu0
    %v2350 = vadd.f32 0.0, %v2349
    %v2351 = vpop.f32.mrb[0].mxu0
    %v2352 = vadd.f32 0.0, %v2351
    %2353 = vmatprep.mubr.f32.mxu0 0.0
    %2354 = vmatmul.mubr.f32.gmra.mrb[0].mxu0 %v913
    %v2355 = vpop.f32.mrb[0].mxu0
    %v2356 = vadd.f32 0.0, %v2355
    %v2357 = vpop.f32.mrb[0].mxu0
    %v2358 = vadd.f32 0.0, %v2357
    %2359 = vdwg.mxu0
    %2360 = vmatprep.subr.mxu0 %v144
    %2361 = vmatpush1.msra.mxu0 %v143
    %2362 = vmatprep.subr.mxu0 %v150
    %2363 = vmatpush1.msra.mxu0 %v149
    %2364 = vmatprep.subr.mxu0 %v156
    %2365 = vmatpush1.msra.mxu0 %v155
    %2366 = vmatprep.subr.mxu0 %v555
    %2367 = vmatpush1.msra.mxu0 %v552
    %2368 = vmatprep.subr.mxu0 0.0
    %2369 = vmatpush1.msra.mxu0 0.0
    %2370 = vmatprep.subr.mxu0 0.0
    %2371 = vmatpush1.msra.mxu0 0.0
    %2372 = vmatprep.subr.mxu0 0.0
    %2373 = vmatpush1.msra.mxu0 0.0
    %2374 = vmatprep.subr.mxu0 0.0
    %2375 = vmatpush1.msra.mxu0 0.0
    %2376 = vmatprep.subr.mxu0 0.0
    %2377 = vmatpush1.msra.mxu0 0.0
    %2378 = vmatprep.subr.mxu0 0.0
    %2379 = vmatpush1.msra.mxu0 0.0
    %2380 = vmatprep.subr.mxu0 0.0
    %2381 = vmatpush1.msra.mxu0 0.0
    %2382 = vmatprep.subr.mxu0 0.0
    %2383 = vmatpush1.msra.mxu0 0.0
    %2384 = vmatprep.subr.mxu0 0.0
    %2385 = vmatpush1.msra.mxu0 0.0
    %2386 = vmatprep.subr.mxu0 0.0
    %2387 = vmatpush1.msra.mxu0 0.0
    %2388 = vmatprep.subr.mxu0 0.0
    %2389 = vmatpush1.msra.mxu0 0.0
    %2390 = vmatprep.subr.mxu0 0.0
    %2391 = vmatpush1.msra.mxu0 0.0
    %2392 = vmatprep.subr.mxu0 0.0
    %2393 = vmatpush1.msra.mxu0 0.0
    %2394 = vmatprep.subr.mxu0 0.0
    %2395 = vmatpush1.msra.mxu0 0.0
    %2396 = vmatprep.subr.mxu0 0.0
    %2397 = vmatpush1.msra.mxu0 0.0
    %2398 = vmatprep.subr.mxu0 0.0
    %2399 = vmatpush1.msra.mxu0 0.0
    %2400 = vmatprep.subr.mxu0 0.0
    %2401 = vmatpush1.msra.mxu0 0.0
    %2402 = vmatprep.subr.mxu0 0.0
    %2403 = vmatpush1.msra.mxu0 0.0
    %2404 = vmatprep.subr.mxu0 0.0
    %2405 = vmatpush1.msra.mxu0 0.0
    %2406 = vmatprep.subr.mxu0 0.0
    %2407 = vmatpush1.msra.mxu0 0.0
    %2408 = vmatprep.subr.mxu0 0.0
    %2409 = vmatpush1.msra.mxu0 0.0
    %2410 = vmatprep.subr.mxu0 0.0
    %2411 = vmatpush1.msra.mxu0 0.0
    %2412 = vmatprep.subr.mxu0 0.0
    %2413 = vmatpush1.msra.mxu0 0.0
    %2414 = vmatprep.subr.mxu0 0.0
    %2415 = vmatpush1.msra.mxu0 0.0
    %2416 = vmatprep.subr.mxu0 0.0
    %2417 = vmatpush1.msra.mxu0 0.0
    %2418 = vmatprep.subr.mxu0 0.0
    %2419 = vmatpush1.msra.mxu0 0.0
    %2420 = vmatprep.subr.mxu0 0.0
    %2421 = vmatpush1.msra.mxu0 0.0
    %2422 = vmatprep.subr.mxu0 0.0
    %2423 = vmatpush1.msra.mxu0 0.0
    %2424 = vmatprep.mubr.f32.mxu0 0.0
    %2425 = vmatmul.mubr.f32.gmra.mrb[0].mxu0 %v194
    %v2426 = vpop.f32.mrb[0].mxu0
    %v2427 = vadd.f32 %v2124, %v2426
    %v2428 = vpop.f32.mrb[0].mxu0
    %v2429 = vadd.f32 %v2126, %v2428
    %2430 = vmatprep.mubr.f32.mxu0 0.0
    %2431 = vmatmul.mubr.f32.gmra.mrb[0].mxu0 %v197
    %v2432 = vpop.f32.mrb[0].mxu0
    %v2433 = vadd.f32 %v2130, %v2432
    %v2434 = vpop.f32.mrb[0].mxu0
    %v2435 = vadd.f32 %v2132, %v2434
    %2436 = vmatprep.mubr.f32.mxu0 0.0
    %2437 = vmatmul.mubr.f32.gmra.mrb[0].mxu0 %v200
    %v2438 = vpop.f32.mrb[0].mxu0
    %v2439 = vadd.f32 %v2136, %v2438
    %v2440 = vpop.f32.mrb[0].mxu0
    %v2441 = vadd.f32 %v2138, %v2440
    %2442 = vmatprep.mubr.f32.mxu0 0.0
    %2443 = vmatmul.mubr.f32.gmra.mrb[0].mxu0 %v203
    %v2444 = vpop.f32.mrb[0].mxu0
    %v2445 = vadd.f32 %v2142, %v2444
    %v2446 = vpop.f32.mrb[0].mxu0
    %v2447 = vadd.f32 %v2144, %v2446
    %2448 = vmatprep.mubr.f32.mxu0 0.0
    %2449 = vmatmul.mubr.f32.gmra.mrb[0].mxu0 %v206
    %v2450 = vpop.f32.mrb[0].mxu0
    %v2451 = vadd.f32 %v2148, %v2450
    %v2452 = vpop.f32.mrb[0].mxu0
    %v2453 = vadd.f32 %v2150, %v2452
    %2454 = vmatprep.mubr.f32.mxu0 0.0
    %2455 = vmatmul.mubr.f32.gmra.mrb[0].mxu0 %v209
    %v2456 = vpop.f32.mrb[0].mxu0
    %v2457 = vadd.f32 %v2154, %v2456
    %v2458 = vpop.f32.mrb[0].mxu0
    %v2459 = vadd.f32 %v2156, %v2458
    %2460 = vdwg.mxu0
    %2461 = vmatprep.subr.mxu0 %v146
    %2462 = vmatpush1.msra.mxu0 %v145
    %2463 = vmatprep.subr.mxu0 %v152
    %2464 = vmatpush1.msra.mxu0 %v151
    %2465 = vmatprep.subr.mxu0 %v158
    %2466 = vmatpush1.msra.mxu0 %v157
    %2467 = vmatprep.subr.mxu0 %v561
    %2468 = vmatpush1.msra.mxu0 %v558
    %2469 = vmatprep.subr.mxu0 0.0
    %2470 = vmatpush1.msra.mxu0 0.0
    %2471 = vmatprep.subr.mxu0 0.0
    %2472 = vmatpush1.msra.mxu0 0.0
    %2473 = vmatprep.subr.mxu0 0.0
    %2474 = vmatpush1.msra.mxu0 0.0
    %2475 = vmatprep.subr.mxu0 0.0
    %2476 = vmatpush1.msra.mxu0 0.0
    %2477 = vmatprep.subr.mxu0 0.0
    %2478 = vmatpush1.msra.mxu0 0.0
    %2479 = vmatprep.subr.mxu0 0.0
    %2480 = vmatpush1.msra.mxu0 0.0
    %2481 = vmatprep.subr.mxu0 0.0
    %2482 = vmatpush1.msra.mxu0 0.0
    %2483 = vmatprep.subr.mxu0 0.0
    %2484 = vmatpush1.msra.mxu0 0.0
    %2485 = vmatprep.subr.mxu0 0.0
    %2486 = vmatpush1.msra.mxu0 0.0
    %2487 = vmatprep.subr.mxu0 0.0
    %2488 = vmatpush1.msra.mxu0 0.0
    %2489 = vmatprep.subr.mxu0 0.0
    %2490 = vmatpush1.msra.mxu0 0.0
    %2491 = vmatprep.subr.mxu0 0.0
    %2492 = vmatpush1.msra.mxu0 0.0
    %2493 = vmatprep.subr.mxu0 0.0
    %2494 = vmatpush1.msra.mxu0 0.0
    %2495 = vmatprep.subr.mxu0 0.0
    %2496 = vmatpush1.msra.mxu0 0.0
    %2497 = vmatprep.subr.mxu0 0.0
    %2498 = vmatpush1.msra.mxu0 0.0
    %2499 = vmatprep.subr.mxu0 0.0
    %2500 = vmatpush1.msra.mxu0 0.0
    %2501 = vmatprep.subr.mxu0 0.0
    %2502 = vmatpush1.msra.mxu0 0.0
    %2503 = vmatprep.subr.mxu0 0.0
    %2504 = vmatpush1.msra.mxu0 0.0
    %2505 = vmatprep.subr.mxu0 0.0
    %2506 = vmatpush1.msra.mxu0 0.0
    %2507 = vmatprep.subr.mxu0 0.0
    %2508 = vmatpush1.msra.mxu0 0.0
    %2509 = vmatprep.subr.mxu0 0.0
    %2510 = vmatpush1.msra.mxu0 0.0
    %2511 = vmatprep.subr.mxu0 0.0
    %2512 = vmatpush1.msra.mxu0 0.0
    %2513 = vmatprep.subr.mxu0 0.0
    %2514 = vmatpush1.msra.mxu0 0.0
    %2515 = vmatprep.subr.mxu0 0.0
    %2516 = vmatpush1.msra.mxu0 0.0
    %2517 = vmatprep.subr.mxu0 0.0
    %2518 = vmatpush1.msra.mxu0 0.0
    %2519 = vmatprep.subr.mxu0 0.0
    %2520 = vmatpush1.msra.mxu0 0.0
    %2521 = vmatprep.subr.mxu0 0.0
    %2522 = vmatpush1.msra.mxu0 0.0
    %2523 = vmatprep.subr.mxu0 0.0
    %2524 = vmatpush1.msra.mxu0 0.0
    %2525 = vmatprep.mubr.f32.mxu0 0.0
    %2526 = vmatmul.mubr.f32.gmra.mrb[0].mxu0 %v194
    %v2527 = vpop.f32.mrb[0].mxu0
    %v2528 = vadd.f32 %v2225, %v2527
    %v2529 = vpop.f32.mrb[0].mxu0
    %v2530 = vadd.f32 %v2227, %v2529
    %2531 = vmatprep.mubr.f32.mxu0 0.0
    %2532 = vmatmul.mubr.f32.gmra.mrb[0].mxu0 %v197
    %v2533 = vpop.f32.mrb[0].mxu0
    %v2534 = vadd.f32 %v2231, %v2533
    %v2535 = vpop.f32.mrb[0].mxu0
    %v2536 = vadd.f32 %v2233, %v2535
    %2537 = vmatprep.mubr.f32.mxu0 0.0
    %2538 = vmatmul.mubr.f32.gmra.mrb[0].mxu0 %v200
    %v2539 = vpop.f32.mrb[0].mxu0
    %v2540 = vadd.f32 %v2237, %v2539
    %v2541 = vpop.f32.mrb[0].mxu0
    %v2542 = vadd.f32 %v2239, %v2541
    %2543 = vmatprep.mubr.f32.mxu0 0.0
    %2544 = vmatmul.mubr.f32.gmra.mrb[0].mxu0 %v203
    %v2545 = vpop.f32.mrb[0].mxu0
    %v2546 = vadd.f32 %v2243, %v2545
    %v2547 = vpop.f32.mrb[0].mxu0
    %v2548 = vadd.f32 %v2245, %v2547
    %2549 = vmatprep.mubr.f32.mxu0 0.0
    %2550 = vmatmul.mubr.f32.gmra.mrb[0].mxu0 %v206
    %v2551 = vpop.f32.mrb[0].mxu0
    %v2552 = vadd.f32 %v2249, %v2551
    %v2553 = vpop.f32.mrb[0].mxu0
    %v2554 = vadd.f32 %v2251, %v2553
    %2555 = vmatprep.mubr.f32.mxu0 0.0
    %2556 = vmatmul.mubr.f32.gmra.mrb[0].mxu0 %v209
    %v2557 = vpop.f32.mrb[0].mxu0
    %v2558 = vadd.f32 %v2255, %v2557
    %v2559 = vpop.f32.mrb[0].mxu0
    %v2560 = vadd.f32 %v2257, %v2559
    %2561 = vdwg.mxu0
    %2562 = vmatprep.subr.mxu0 %v148
    %2563 = vmatpush1.msra.mxu0 %v147
    %2564 = vmatprep.subr.mxu0 %v154
    %2565 = vmatpush1.msra.mxu0 %v153
    %2566 = vmatprep.subr.mxu0 %v160
    %2567 = vmatpush1.msra.mxu0 %v159
    %2568 = vmatprep.subr.mxu0 %v567
    %2569 = vmatpush1.msra.mxu0 %v564
    %2570 = vmatprep.subr.mxu0 0.0
    %2571 = vmatpush1.msra.mxu0 0.0
    %2572 = vmatprep.subr.mxu0 0.0
    %2573 = vmatpush1.msra.mxu0 0.0
    %2574 = vmatprep.subr.mxu0 0.0
    %2575 = vmatpush1.msra.mxu0 0.0
    %2576 = vmatprep.subr.mxu0 0.0
    %2577 = vmatpush1.msra.mxu0 0.0
    %2578 = vmatprep.subr.mxu0 0.0
    %2579 = vmatpush1.msra.mxu0 0.0
    %2580 = vmatprep.subr.mxu0 0.0
    %2581 = vmatpush1.msra.mxu0 0.0
    %2582 = vmatprep.subr.mxu0 0.0
    %2583 = vmatpush1.msra.mxu0 0.0
    %2584 = vmatprep.subr.mxu0 0.0
    %2585 = vmatpush1.msra.mxu0 0.0
    %2586 = vmatprep.subr.mxu0 0.0
    %2587 = vmatpush1.msra.mxu0 0.0
    %2588 = vmatprep.subr.mxu0 0.0
    %2589 = vmatpush1.msra.mxu0 0.0
    %2590 = vmatprep.subr.mxu0 0.0
    %2591 = vmatpush1.msra.mxu0 0.0
    %2592 = vmatprep.subr.mxu0 0.0
    %2593 = vmatpush1.msra.mxu0 0.0
    %2594 = vmatprep.subr.mxu0 0.0
    %2595 = vmatpush1.msra.mxu0 0.0
    %2596 = vmatprep.subr.mxu0 0.0
    %2597 = vmatpush1.msra.mxu0 0.0
    %2598 = vmatprep.subr.mxu0 0.0
    %2599 = vmatpush1.msra.mxu0 0.0
    %2600 = vmatprep.subr.mxu0 0.0
    %2601 = vmatpush1.msra.mxu0 0.0
    %2602 = vmatprep.subr.mxu0 0.0
    %2603 = vmatpush1.msra.mxu0 0.0
    %2604 = vmatprep.subr.mxu0 0.0
    %2605 = vmatpush1.msra.mxu0 0.0
    %2606 = vmatprep.subr.mxu0 0.0
    %2607 = vmatpush1.msra.mxu0 0.0
    %2608 = vmatprep.subr.mxu0 0.0
    %2609 = vmatpush1.msra.mxu0 0.0
    %2610 = vmatprep.subr.mxu0 0.0
    %2611 = vmatpush1.msra.mxu0 0.0
    %2612 = vmatprep.subr.mxu0 0.0
    %2613 = vmatpush1.msra.mxu0 0.0
    %2614 = vmatprep.subr.mxu0 0.0
    %2615 = vmatpush1.msra.mxu0 0.0
    %2616 = vmatprep.subr.mxu0 0.0
    %2617 = vmatpush1.msra.mxu0 0.0
    %2618 = vmatprep.subr.mxu0 0.0
    %2619 = vmatpush1.msra.mxu0 0.0
    %2620 = vmatprep.subr.mxu0 0.0
    %2621 = vmatpush1.msra.mxu0 0.0
    %2622 = vmatprep.subr.mxu0 0.0
    %2623 = vmatpush1.msra.mxu0 0.0
    %2624 = vmatprep.subr.mxu0 0.0
    %2625 = vmatpush1.msra.mxu0 0.0
    %2626 = vmatprep.mubr.f32.mxu0 0.0
    %2627 = vmatmul.mubr.f32.gmra.mrb[0].mxu0 %v194
    %v2628 = vpop.f32.mrb[0].mxu0
    %v2629 = vadd.f32 %v2326, %v2628
    %v2630 = vpop.f32.mrb[0].mxu0
    %v2631 = vadd.f32 %v2328, %v2630
    %2632 = vmatprep.mubr.f32.mxu0 0.0
    %2633 = vmatmul.mubr.f32.gmra.mrb[0].mxu0 %v197
    %v2634 = vpop.f32.mrb[0].mxu0
    %v2635 = vadd.f32 %v2332, %v2634
    %v2636 = vpop.f32.mrb[0].mxu0
    %v2637 = vadd.f32 %v2334, %v2636
    %2638 = vmatprep.mubr.f32.mxu0 0.0
    %2639 = vmatmul.mubr.f32.gmra.mrb[0].mxu0 %v200
    %v2640 = vpop.f32.mrb[0].mxu0
    %v2641 = vadd.f32 %v2338, %v2640
    %v2642 = vpop.f32.mrb[0].mxu0
    %v2643 = vadd.f32 %v2340, %v2642
    %2644 = vmatprep.mubr.f32.mxu0 0.0
    %2645 = vmatmul.mubr.f32.gmra.mrb[0].mxu0 %v203
    %v2646 = vpop.f32.mrb[0].mxu0
    %v2647 = vadd.f32 %v2344, %v2646
    %v2648 = vpop.f32.mrb[0].mxu0
    %v2649 = vadd.f32 %v2346, %v2648
    %2650 = vmatprep.mubr.f32.mxu0 0.0
    %2651 = vmatmul.mubr.f32.gmra.mrb[0].mxu0 %v206
    %v2652 = vpop.f32.mrb[0].mxu0
    %v2653 = vadd.f32 %v2350, %v2652
    %v2654 = vpop.f32.mrb[0].mxu0
    %v2655 = vadd.f32 %v2352, %v2654
    %2656 = vmatprep.mubr.f32.mxu0 0.0
    %2657 = vmatmul.mubr.f32.gmra.mrb[0].mxu0 %v209
    %v2658 = vpop.f32.mrb[0].mxu0
    %v2659 = vadd.f32 %v2356, %v2658
    %v2660 = vpop.f32.mrb[0].mxu0
    %v2661 = vadd.f32 %v2358, %v2660
    %2662 = vdwg.mxu0
    %2663 = vmatprep.subr.mxu0 %v874
    %2664 = vmatpush1.msra.mxu0 %v873
    %2665 = vmatprep.subr.mxu0 %v880
    %2666 = vmatpush1.msra.mxu0 %v879
    %2667 = vmatprep.subr.mxu0 %v886
    %2668 = vmatpush1.msra.mxu0 %v885
    %2669 = vmatprep.subr.mxu0 %v919
    %2670 = vmatpush1.msra.mxu0 %v916
    %2671 = vmatprep.subr.mxu0 0.0
    %2672 = vmatpush1.msra.mxu0 0.0
    %2673 = vmatprep.subr.mxu0 0.0
    %2674 = vmatpush1.msra.mxu0 0.0
    %2675 = vmatprep.subr.mxu0 0.0
    %2676 = vmatpush1.msra.mxu0 0.0
    %2677 = vmatprep.subr.mxu0 0.0
    %2678 = vmatpush1.msra.mxu0 0.0
    %2679 = vmatprep.subr.mxu0 0.0
    %2680 = vmatpush1.msra.mxu0 0.0
    %2681 = vmatprep.subr.mxu0 0.0
    %2682 = vmatpush1.msra.mxu0 0.0
    %2683 = vmatprep.subr.mxu0 0.0
    %2684 = vmatpush1.msra.mxu0 0.0
    %2685 = vmatprep.subr.mxu0 0.0
    %2686 = vmatpush1.msra.mxu0 0.0
    %2687 = vmatprep.subr.mxu0 0.0
    %2688 = vmatpush1.msra.mxu0 0.0
    %2689 = vmatprep.subr.mxu0 0.0
    %2690 = vmatpush1.msra.mxu0 0.0
    %2691 = vmatprep.subr.mxu0 0.0
    %2692 = vmatpush1.msra.mxu0 0.0
    %2693 = vmatprep.subr.mxu0 0.0
    %2694 = vmatpush1.msra.mxu0 0.0
    %2695 = vmatprep.subr.mxu0 0.0
    %2696 = vmatpush1.msra.mxu0 0.0
    %2697 = vmatprep.subr.mxu0 0.0
    %2698 = vmatpush1.msra.mxu0 0.0
    %2699 = vmatprep.subr.mxu0 0.0
    %2700 = vmatpush1.msra.mxu0 0.0
    %2701 = vmatprep.subr.mxu0 0.0
    %2702 = vmatpush1.msra.mxu0 0.0
    %2703 = vmatprep.subr.mxu0 0.0
    %2704 = vmatpush1.msra.mxu0 0.0
    %2705 = vmatprep.subr.mxu0 0.0
    %2706 = vmatpush1.msra.mxu0 0.0
    %2707 = vmatprep.subr.mxu0 0.0
    %2708 = vmatpush1.msra.mxu0 0.0
    %2709 = vmatprep.subr.mxu0 0.0
    %2710 = vmatpush1.msra.mxu0 0.0
    %2711 = vmatprep.subr.mxu0 0.0
    %2712 = vmatpush1.msra.mxu0 0.0
    %2713 = vmatprep.subr.mxu0 0.0
    %2714 = vmatpush1.msra.mxu0 0.0
    %2715 = vmatprep.subr.mxu0 0.0
    %2716 = vmatpush1.msra.mxu0 0.0
    %2717 = vmatprep.subr.mxu0 0.0
    %2718 = vmatpush1.msra.mxu0 0.0
    %2719 = vmatprep.subr.mxu0 0.0
    %2720 = vmatpush1.msra.mxu0 0.0
    %2721 = vmatprep.subr.mxu0 0.0
    %2722 = vmatpush1.msra.mxu0 0.0
    %2723 = vmatprep.subr.mxu0 0.0
    %2724 = vmatpush1.msra.mxu0 0.0
    %2725 = vmatprep.subr.mxu0 0.0
    %2726 = vmatpush1.msra.mxu0 0.0
    %2727 = vmatprep.mubr.f32.mxu0 0.0
    %2728 = vmatmul.mubr.f32.gmra.mrb[0].mxu0 %v1298
    %v2729 = vpop.f32.mrb[0].mxu0
    %v2730 = vadd.f32 0.0, %v2729
    %v2731 = vpop.f32.mrb[0].mxu0
    %v2732 = vadd.f32 0.0, %v2731
    %2733 = vmatprep.mubr.f32.mxu0 0.0
    %2734 = vmatmul.mubr.f32.gmra.mrb[0].mxu0 %v1301
    %v2735 = vpop.f32.mrb[0].mxu0
    %v2736 = vadd.f32 0.0, %v2735
    %v2737 = vpop.f32.mrb[0].mxu0
    %v2738 = vadd.f32 0.0, %v2737
    %2739 = vmatprep.mubr.f32.mxu0 0.0
    %2740 = vmatmul.mubr.f32.gmra.mrb[0].mxu0 %v1304
    %v2741 = vpop.f32.mrb[0].mxu0
    %v2742 = vadd.f32 0.0, %v2741
    %v2743 = vpop.f32.mrb[0].mxu0
    %v2744 = vadd.f32 0.0, %v2743
    %2745 = vmatprep.mubr.f32.mxu0 0.0
    %2746 = vmatmul.mubr.f32.gmra.mrb[0].mxu0 %v1307
    %v2747 = vpop.f32.mrb[0].mxu0
    %v2748 = vadd.f32 0.0, %v2747
    %v2749 = vpop.f32.mrb[0].mxu0
    %v2750 = vadd.f32 0.0, %v2749
    %2751 = vmatprep.mubr.f32.mxu0 0.0
    %2752 = vmatmul.mubr.f32.gmra.mrb[0].mxu0 %v1310
    %v2753 = vpop.f32.mrb[0].mxu0
    %v2754 = vadd.f32 0.0, %v2753
    %v2755 = vpop.f32.mrb[0].mxu0
    %v2756 = vadd.f32 0.0, %v2755
    %2757 = vmatprep.mubr.f32.mxu0 0.0
    %2758 = vmatmul.mubr.f32.gmra.mrb[0].mxu0 %v1313
    %v2759 = vpop.f32.mrb[0].mxu0
    %v2760 = vadd.f32 0.0, %v2759
    %v2761 = vpop.f32.mrb[0].mxu0
    %v2762 = vadd.f32 0.0, %v2761
    %2763 = vdwg.mxu0
    %2764 = vmatprep.subr.mxu0 %v876
    %2765 = vmatpush1.msra.mxu0 %v875
    %2766 = vmatprep.subr.mxu0 %v882
    %2767 = vmatpush1.msra.mxu0 %v881
    %2768 = vmatprep.subr.mxu0 %v888
    %2769 = vmatpush1.msra.mxu0 %v887
    %2770 = vmatprep.subr.mxu0 %v925
    %2771 = vmatpush1.msra.mxu0 %v922
    %2772 = vmatprep.subr.mxu0 0.0
    %2773 = vmatpush1.msra.mxu0 0.0
    %2774 = vmatprep.subr.mxu0 0.0
    %2775 = vmatpush1.msra.mxu0 0.0
    %2776 = vmatprep.subr.mxu0 0.0
    %2777 = vmatpush1.msra.mxu0 0.0
    %2778 = vmatprep.subr.mxu0 0.0
    %2779 = vmatpush1.msra.mxu0 0.0
    %2780 = vmatprep.subr.mxu0 0.0
    %2781 = vmatpush1.msra.mxu0 0.0
    %2782 = vmatprep.subr.mxu0 0.0
    %2783 = vmatpush1.msra.mxu0 0.0
    %2784 = vmatprep.subr.mxu0 0.0
    %2785 = vmatpush1.msra.mxu0 0.0
    %2786 = vmatprep.subr.mxu0 0.0
    %2787 = vmatpush1.msra.mxu0 0.0
    %2788 = vmatprep.subr.mxu0 0.0
    %2789 = vmatpush1.msra.mxu0 0.0
    %2790 = vmatprep.subr.mxu0 0.0
    %2791 = vmatpush1.msra.mxu0 0.0
    %2792 = vmatprep.subr.mxu0 0.0
    %2793 = vmatpush1.msra.mxu0 0.0
    %2794 = vmatprep.subr.mxu0 0.0
    %2795 = vmatpush1.msra.mxu0 0.0
    %2796 = vmatprep.subr.mxu0 0.0
    %2797 = vmatpush1.msra.mxu0 0.0
    %2798 = vmatprep.subr.mxu0 0.0
    %2799 = vmatpush1.msra.mxu0 0.0
    %2800 = vmatprep.subr.mxu0 0.0
    %2801 = vmatpush1.msra.mxu0 0.0
    %2802 = vmatprep.subr.mxu0 0.0
    %2803 = vmatpush1.msra.mxu0 0.0
    %2804 = vmatprep.subr.mxu0 0.0
    %2805 = vmatpush1.msra.mxu0 0.0
    %2806 = vmatprep.subr.mxu0 0.0
    %2807 = vmatpush1.msra.mxu0 0.0
    %2808 = vmatprep.subr.mxu0 0.0
    %2809 = vmatpush1.msra.mxu0 0.0
    %2810 = vmatprep.subr.mxu0 0.0
    %2811 = vmatpush1.msra.mxu0 0.0
    %2812 = vmatprep.subr.mxu0 0.0
    %2813 = vmatpush1.msra.mxu0 0.0
    %2814 = vmatprep.subr.mxu0 0.0
    %2815 = vmatpush1.msra.mxu0 0.0
    %2816 = vmatprep.subr.mxu0 0.0
    %2817 = vmatpush1.msra.mxu0 0.0
    %2818 = vmatprep.subr.mxu0 0.0
    %2819 = vmatpush1.msra.mxu0 0.0
    %2820 = vmatprep.subr.mxu0 0.0
    %2821 = vmatpush1.msra.mxu0 0.0
    %2822 = vmatprep.subr.mxu0 0.0
    %2823 = vmatpush1.msra.mxu0 0.0
    %2824 = vmatprep.subr.mxu0 0.0
    %2825 = vmatpush1.msra.mxu0 0.0
    %2826 = vmatprep.subr.mxu0 0.0
    %2827 = vmatpush1.msra.mxu0 0.0
    %2828 = vmatprep.mubr.f32.mxu0 0.0
    %2829 = vmatmul.mubr.f32.gmra.mrb[0].mxu0 %v1298
    %v2830 = vpop.f32.mrb[0].mxu0
    %v2831 = vadd.f32 0.0, %v2830
    %v2832 = vpop.f32.mrb[0].mxu0
    %v2833 = vadd.f32 0.0, %v2832
    %2834 = vmatprep.mubr.f32.mxu0 0.0
    %2835 = vmatmul.mubr.f32.gmra.mrb[0].mxu0 %v1301
    %v2836 = vpop.f32.mrb[0].mxu0
    %v2837 = vadd.f32 0.0, %v2836
    %v2838 = vpop.f32.mrb[0].mxu0
    %v2839 = vadd.f32 0.0, %v2838
    %2840 = vmatprep.mubr.f32.mxu0 0.0
    %2841 = vmatmul.mubr.f32.gmra.mrb[0].mxu0 %v1304
    %v2842 = vpop.f32.mrb[0].mxu0
    %v2843 = vadd.f32 0.0, %v2842
    %v2844 = vpop.f32.mrb[0].mxu0
    %v2845 = vadd.f32 0.0, %v2844
    %2846 = vmatprep.mubr.f32.mxu0 0.0
    %2847 = vmatmul.mubr.f32.gmra.mrb[0].mxu0 %v1307
    %v2848 = vpop.f32.mrb[0].mxu0
    %v2849 = vadd.f32 0.0, %v2848
    %v2850 = vpop.f32.mrb[0].mxu0
    %v2851 = vadd.f32 0.0, %v2850
    %2852 = vmatprep.mubr.f32.mxu0 0.0
    %2853 = vmatmul.mubr.f32.gmra.mrb[0].mxu0 %v1310
    %v2854 = vpop.f32.mrb[0].mxu0
    %v2855 = vadd.f32 0.0, %v2854
    %v2856 = vpop.f32.mrb[0].mxu0
    %v2857 = vadd.f32 0.0, %v2856
    %2858 = vmatprep.mubr.f32.mxu0 0.0
    %2859 = vmatmul.mubr.f32.gmra.mrb[0].mxu0 %v1313
    %v2860 = vpop.f32.mrb[0].mxu0
    %v2861 = vadd.f32 0.0, %v2860
    %v2862 = vpop.f32.mrb[0].mxu0
    %v2863 = vadd.f32 0.0, %v2862
    %2864 = vdwg.mxu0
    %2865 = vmatprep.subr.mxu0 %v878
    %2866 = vmatpush1.msra.mxu0 %v877
    %2867 = vmatprep.subr.mxu0 %v884
    %2868 = vmatpush1.msra.mxu0 %v883
    %2869 = vmatprep.subr.mxu0 %v890
    %2870 = vmatpush1.msra.mxu0 %v889
    %2871 = vmatprep.subr.mxu0 %v931
    %2872 = vmatpush1.msra.mxu0 %v928
    %2873 = vmatprep.subr.mxu0 0.0
    %2874 = vmatpush1.msra.mxu0 0.0
    %2875 = vmatprep.subr.mxu0 0.0
    %2876 = vmatpush1.msra.mxu0 0.0
    %2877 = vmatprep.subr.mxu0 0.0
    %2878 = vmatpush1.msra.mxu0 0.0
    %2879 = vmatprep.subr.mxu0 0.0
    %2880 = vmatpush1.msra.mxu0 0.0
    %2881 = vmatprep.subr.mxu0 0.0
    %2882 = vmatpush1.msra.mxu0 0.0
    %2883 = vmatprep.subr.mxu0 0.0
    %2884 = vmatpush1.msra.mxu0 0.0
    %2885 = vmatprep.subr.mxu0 0.0
    %2886 = vmatpush1.msra.mxu0 0.0
    %2887 = vmatprep.subr.mxu0 0.0
    %2888 = vmatpush1.msra.mxu0 0.0
    %2889 = vmatprep.subr.mxu0 0.0
    %2890 = vmatpush1.msra.mxu0 0.0
    %2891 = vmatprep.subr.mxu0 0.0
    %2892 = vmatpush1.msra.mxu0 0.0
    %2893 = vmatprep.subr.mxu0 0.0
    %2894 = vmatpush1.msra.mxu0 0.0
    %2895 = vmatprep.subr.mxu0 0.0
    %2896 = vmatpush1.msra.mxu0 0.0
    %2897 = vmatprep.subr.mxu0 0.0
    %2898 = vmatpush1.msra.mxu0 0.0
    %2899 = vmatprep.subr.mxu0 0.0
    %2900 = vmatpush1.msra.mxu0 0.0
    %2901 = vmatprep.subr.mxu0 0.0
    %2902 = vmatpush1.msra.mxu0 0.0
    %2903 = vmatprep.subr.mxu0 0.0
    %2904 = vmatpush1.msra.mxu0 0.0
    %2905 = vmatprep.subr.mxu0 0.0
    %2906 = vmatpush1.msra.mxu0 0.0
    %2907 = vmatprep.subr.mxu0 0.0
    %2908 = vmatpush1.msra.mxu0 0.0
    %2909 = vmatprep.subr.mxu0 0.0
    %2910 = vmatpush1.msra.mxu0 0.0
    %2911 = vmatprep.subr.mxu0 0.0
    %2912 = vmatpush1.msra.mxu0 0.0
    %2913 = vmatprep.subr.mxu0 0.0
    %2914 = vmatpush1.msra.mxu0 0.0
    %2915 = vmatprep.subr.mxu0 0.0
    %2916 = vmatpush1.msra.mxu0 0.0
    %2917 = vmatprep.subr.mxu0 0.0
    %2918 = vmatpush1.msra.mxu0 0.0
    %2919 = vmatprep.subr.mxu0 0.0
    %2920 = vmatpush1.msra.mxu0 0.0
    %2921 = vmatprep.subr.mxu0 0.0
    %2922 = vmatpush1.msra.mxu0 0.0
    %2923 = vmatprep.subr.mxu0 0.0
    %2924 = vmatpush1.msra.mxu0 0.0
    %2925 = vmatprep.subr.mxu0 0.0
    %2926 = vmatpush1.msra.mxu0 0.0
    %2927 = vmatprep.subr.mxu0 0.0
    %2928 = vmatpush1.msra.mxu0 0.0
    %2929 = vmatprep.mubr.f32.mxu0 0.0
    %2930 = vmatmul.mubr.f32.gmra.mrb[0].mxu0 %v1298
    %v2931 = vpop.f32.mrb[0].mxu0
    %v2932 = vadd.f32 0.0, %v2931
    %v2933 = vpop.f32.mrb[0].mxu0
    %v2934 = vadd.f32 0.0, %v2933
    %2935 = vmatprep.mubr.f32.mxu0 0.0
    %2936 = vmatmul.mubr.f32.gmra.mrb[0].mxu0 %v1301
    %v2937 = vpop.f32.mrb[0].mxu0
    %v2938 = vadd.f32 0.0, %v2937
    %v2939 = vpop.f32.mrb[0].mxu0
    %v2940 = vadd.f32 0.0, %v2939
    %2941 = vmatprep.mubr.f32.mxu0 0.0
    %2942 = vmatmul.mubr.f32.gmra.mrb[0].mxu0 %v1304
    %v2943 = vpop.f32.mrb[0].mxu0
    %v2944 = vadd.f32 0.0, %v2943
    %v2945 = vpop.f32.mrb[0].mxu0
    %v2946 = vadd.f32 0.0, %v2945
    %2947 = vmatprep.mubr.f32.mxu0 0.0
    %2948 = vmatmul.mubr.f32.gmra.mrb[0].mxu0 %v1307
    %v2949 = vpop.f32.mrb[0].mxu0
    %v2950 = vadd.f32 0.0, %v2949
    %v2951 = vpop.f32.mrb[0].mxu0
    %v2952 = vadd.f32 0.0, %v2951
    %2953 = vmatprep.mubr.f32.mxu0 0.0
    %2954 = vmatmul.mubr.f32.gmra.mrb[0].mxu0 %v1310
    %v2955 = vpop.f32.mrb[0].mxu0
    %v2956 = vadd.f32 0.0, %v2955
    %v2957 = vpop.f32.mrb[0].mxu0
    %v2958 = vadd.f32 0.0, %v2957
    %2959 = vmatprep.mubr.f32.mxu0 0.0
    %2960 = vmatmul.mubr.f32.gmra.mrb[0].mxu0 %v1313
    %v2961 = vpop.f32.mrb[0].mxu0
    %v2962 = vadd.f32 0.0, %v2961
    %v2963 = vpop.f32.mrb[0].mxu0
    %v2964 = vadd.f32 0.0, %v2963
    %2965 = vdwg.mxu0
    %v2966 = vadd.f32 %v2427, %v2730
    %v2967 = vadd.f32 %v2429, %v2732
    %v2968 = vadd.f32 %v2528, %v2831
    %v2969 = vadd.f32 %v2530, %v2833
    %v2970 = vadd.f32 %v2629, %v2932
    %v2971 = vadd.f32 %v2631, %v2934
    %v2972 = vadd.f32 %v2433, %v2736
    %v2973 = vadd.f32 %v2435, %v2738
    %v2974 = vadd.f32 %v2534, %v2837
    %v2975 = vadd.f32 %v2536, %v2839
    %v2976 = vadd.f32 %v2635, %v2938
    %v2977 = vadd.f32 %v2637, %v2940
    %v2978 = vadd.f32 %v2439, %v2742
    %v2979 = vadd.f32 %v2441, %v2744
    %v2980 = vadd.f32 %v2540, %v2843
    %v2981 = vadd.f32 %v2542, %v2845
    %v2982 = vadd.f32 %v2641, %v2944
    %v2983 = vadd.f32 %v2643, %v2946
    %v2984 = vadd.f32 %v2445, %v2748
    %v2985 = vadd.f32 %v2447, %v2750
    %v2986 = vadd.f32 %v2546, %v2849
    %v2987 = vadd.f32 %v2548, %v2851
    %v2988 = vadd.f32 %v2647, %v2950
    %v2989 = vadd.f32 %v2649, %v2952
    %v2990 = vadd.f32 %v2451, %v2754
    %v2991 = vadd.f32 %v2453, %v2756
    %v2992 = vadd.f32 %v2552, %v2855
    %v2993 = vadd.f32 %v2554, %v2857
    %v2994 = vadd.f32 %v2653, %v2956
    %v2995 = vadd.f32 %v2655, %v2958
    %v2996 = vadd.f32 %v2457, %v2760
    %v2997 = vadd.f32 %v2459, %v2762
    %v2998 = vadd.f32 %v2558, %v2861
    %v2999 = vadd.f32 %v2560, %v2863
    %v3000 = vadd.f32 %v2659, %v2962
    %v3001 = vadd.f32 %v2661, %v2964
    %3002 = vmatprep.subr.mxu0 %v1274
    %3003 = vmatpush1.msra.mxu0 %v1273
    %3004 = vmatprep.subr.mxu0 %v1280
    %3005 = vmatpush1.msra.mxu0 %v1279
    %3006 = vmatprep.subr.mxu0 %v1286
    %3007 = vmatpush1.msra.mxu0 %v1285
    %3008 = vmatprep.subr.mxu0 %v1319
    %3009 = vmatpush1.msra.mxu0 %v1316
    %3010 = vmatprep.subr.mxu0 0.0
    %3011 = vmatpush1.msra.mxu0 0.0
    %3012 = vmatprep.subr.mxu0 0.0
    %3013 = vmatpush1.msra.mxu0 0.0
    %3014 = vmatprep.subr.mxu0 0.0
    %3015 = vmatpush1.msra.mxu0 0.0
    %3016 = vmatprep.subr.mxu0 0.0
    %3017 = vmatpush1.msra.mxu0 0.0
    %3018 = vmatprep.subr.mxu0 0.0
    %3019 = vmatpush1.msra.mxu0 0.0
    %3020 = vmatprep.subr.mxu0 0.0
    %3021 = vmatpush1.msra.mxu0 0.0
    %3022 = vmatprep.subr.mxu0 0.0
    %3023 = vmatpush1.msra.mxu0 0.0
    %3024 = vmatprep.subr.mxu0 0.0
    %3025 = vmatpush1.msra.mxu0 0.0
    %3026 = vmatprep.subr.mxu0 0.0
    %3027 = vmatpush1.msra.mxu0 0.0
    %3028 = vmatprep.subr.mxu0 0.0
    %3029 = vmatpush1.msra.mxu0 0.0
    %3030 = vmatprep.subr.mxu0 0.0
    %3031 = vmatpush1.msra.mxu0 0.0
    %3032 = vmatprep.subr.mxu0 0.0
    %3033 = vmatpush1.msra.mxu0 0.0
    %3034 = vmatprep.subr.mxu0 0.0
    %3035 = vmatpush1.msra.mxu0 0.0
    %3036 = vmatprep.subr.mxu0 0.0
    %3037 = vmatpush1.msra.mxu0 0.0
    %3038 = vmatprep.subr.mxu0 0.0
    %3039 = vmatpush1.msra.mxu0 0.0
    %3040 = vmatprep.subr.mxu0 0.0
    %3041 = vmatpush1.msra.mxu0 0.0
    %3042 = vmatprep.subr.mxu0 0.0
    %3043 = vmatpush1.msra.mxu0 0.0
    %3044 = vmatprep.subr.mxu0 0.0
    %3045 = vmatpush1.msra.mxu0 0.0
    %3046 = vmatprep.subr.mxu0 0.0
    %3047 = vmatpush1.msra.mxu0 0.0
    %3048 = vmatprep.subr.mxu0 0.0
    %3049 = vmatpush1.msra.mxu0 0.0
    %3050 = vmatprep.subr.mxu0 0.0
    %3051 = vmatpush1.msra.mxu0 0.0
    %3052 = vmatprep.subr.mxu0 0.0
    %3053 = vmatpush1.msra.mxu0 0.0
    %3054 = vmatprep.subr.mxu0 0.0
    %3055 = vmatpush1.msra.mxu0 0.0
    %3056 = vmatprep.subr.mxu0 0.0
    %3057 = vmatpush1.msra.mxu0 0.0
    %3058 = vmatprep.subr.mxu0 0.0
    %3059 = vmatpush1.msra.mxu0 0.0
    %3060 = vmatprep.subr.mxu0 0.0
    %3061 = vmatpush1.msra.mxu0 0.0
    %3062 = vmatprep.subr.mxu0 0.0
    %3063 = vmatpush1.msra.mxu0 0.0
    %3064 = vmatprep.subr.mxu0 0.0
    %3065 = vmatpush1.msra.mxu0 0.0
    %3066 = vmatprep.mubr.f32.mxu0 0.0
    %3067 = vmatmul.mubr.f32.gmra.mrb[0].mxu0 %v537
    %v3068 = vpop.f32.mrb[0].mxu0
    %v3069 = vadd.f32 0.0, %v3068
    %v3070 = vpop.f32.mrb[0].mxu0
    %v3071 = vadd.f32 0.0, %v3070
    %3072 = vmatprep.mubr.f32.mxu0 0.0
    %3073 = vmatmul.mubr.f32.gmra.mrb[0].mxu0 %v540
    %v3074 = vpop.f32.mrb[0].mxu0
    %v3075 = vadd.f32 0.0, %v3074
    %v3076 = vpop.f32.mrb[0].mxu0
    %v3077 = vadd.f32 0.0, %v3076
    %3078 = vmatprep.mubr.f32.mxu0 0.0
    %3079 = vmatmul.mubr.f32.gmra.mrb[0].mxu0 %v543
    %v3080 = vpop.f32.mrb[0].mxu0
    %v3081 = vadd.f32 0.0, %v3080
    %v3082 = vpop.f32.mrb[0].mxu0
    %v3083 = vadd.f32 0.0, %v3082
    %3084 = vmatprep.mubr.f32.mxu0 0.0
    %3085 = vmatmul.mubr.f32.gmra.mrb[0].mxu0 %v546
    %v3086 = vpop.f32.mrb[0].mxu0
    %v3087 = vadd.f32 0.0, %v3086
    %v3088 = vpop.f32.mrb[0].mxu0
    %v3089 = vadd.f32 0.0, %v3088
    %3090 = vmatprep.mubr.f32.mxu0 0.0
    %3091 = vmatmul.mubr.f32.gmra.mrb[0].mxu0 %v549
    %v3092 = vpop.f32.mrb[0].mxu0
    %v3093 = vadd.f32 0.0, %v3092
    %v3094 = vpop.f32.mrb[0].mxu0
    %v3095 = vadd.f32 0.0, %v3094
    %3096 = vmatprep.mubr.f32.mxu0 0.0
    %3097 = vmatmul.mubr.f32.gmra.mrb[0].mxu0 %v1698
    %v3098 = vpop.f32.mrb[0].mxu0
    %v3099 = vadd.f32 0.0, %v3098
    %v3100 = vpop.f32.mrb[0].mxu0
    %v3101 = vadd.f32 0.0, %v3100
    %3102 = vdwg.mxu0
    %3103 = vmatprep.subr.mxu0 %v1276
    %3104 = vmatpush1.msra.mxu0 %v1275
    %3105 = vmatprep.subr.mxu0 %v1282
    %3106 = vmatpush1.msra.mxu0 %v1281
    %3107 = vmatprep.subr.mxu0 %v1288
    %3108 = vmatpush1.msra.mxu0 %v1287
    %3109 = vmatprep.subr.mxu0 %v1325
    %3110 = vmatpush1.msra.mxu0 %v1322
    %3111 = vmatprep.subr.mxu0 0.0
    %3112 = vmatpush1.msra.mxu0 0.0
    %3113 = vmatprep.subr.mxu0 0.0
    %3114 = vmatpush1.msra.mxu0 0.0
    %3115 = vmatprep.subr.mxu0 0.0
    %3116 = vmatpush1.msra.mxu0 0.0
    %3117 = vmatprep.subr.mxu0 0.0
    %3118 = vmatpush1.msra.mxu0 0.0
    %3119 = vmatprep.subr.mxu0 0.0
    %3120 = vmatpush1.msra.mxu0 0.0
    %3121 = vmatprep.subr.mxu0 0.0
    %3122 = vmatpush1.msra.mxu0 0.0
    %3123 = vmatprep.subr.mxu0 0.0
    %3124 = vmatpush1.msra.mxu0 0.0
    %3125 = vmatprep.subr.mxu0 0.0
    %3126 = vmatpush1.msra.mxu0 0.0
    %3127 = vmatprep.subr.mxu0 0.0
    %3128 = vmatpush1.msra.mxu0 0.0
    %3129 = vmatprep.subr.mxu0 0.0
    %3130 = vmatpush1.msra.mxu0 0.0
    %3131 = vmatprep.subr.mxu0 0.0
    %3132 = vmatpush1.msra.mxu0 0.0
    %3133 = vmatprep.subr.mxu0 0.0
    %3134 = vmatpush1.msra.mxu0 0.0
    %3135 = vmatprep.subr.mxu0 0.0
    %3136 = vmatpush1.msra.mxu0 0.0
    %3137 = vmatprep.subr.mxu0 0.0
    %3138 = vmatpush1.msra.mxu0 0.0
    %3139 = vmatprep.subr.mxu0 0.0
    %3140 = vmatpush1.msra.mxu0 0.0
    %3141 = vmatprep.subr.mxu0 0.0
    %3142 = vmatpush1.msra.mxu0 0.0
    %3143 = vmatprep.subr.mxu0 0.0
    %3144 = vmatpush1.msra.mxu0 0.0
    %3145 = vmatprep.subr.mxu0 0.0
    %3146 = vmatpush1.msra.mxu0 0.0
    %3147 = vmatprep.subr.mxu0 0.0
    %3148 = vmatpush1.msra.mxu0 0.0
    %3149 = vmatprep.subr.mxu0 0.0
    %3150 = vmatpush1.msra.mxu0 0.0
    %3151 = vmatprep.subr.mxu0 0.0
    %3152 = vmatpush1.msra.mxu0 0.0
    %3153 = vmatprep.subr.mxu0 0.0
    %3154 = vmatpush1.msra.mxu0 0.0
    %3155 = vmatprep.subr.mxu0 0.0
    %3156 = vmatpush1.msra.mxu0 0.0
    %3157 = vmatprep.subr.mxu0 0.0
    %3158 = vmatpush1.msra.mxu0 0.0
    %3159 = vmatprep.subr.mxu0 0.0
    %3160 = vmatpush1.msra.mxu0 0.0
    %3161 = vmatprep.subr.mxu0 0.0
    %3162 = vmatpush1.msra.mxu0 0.0
    %3163 = vmatprep.subr.mxu0 0.0
    %3164 = vmatpush1.msra.mxu0 0.0
    %3165 = vmatprep.subr.mxu0 0.0
    %3166 = vmatpush1.msra.mxu0 0.0
    %3167 = vmatprep.mubr.f32.mxu0 0.0
    %3168 = vmatmul.mubr.f32.gmra.mrb[0].mxu0 %v537
    %v3169 = vpop.f32.mrb[0].mxu0
    %v3170 = vadd.f32 0.0, %v3169
    %v3171 = vpop.f32.mrb[0].mxu0
    %v3172 = vadd.f32 0.0, %v3171
    %3173 = vmatprep.mubr.f32.mxu0 0.0
    %3174 = vmatmul.mubr.f32.gmra.mrb[0].mxu0 %v540
    %v3175 = vpop.f32.mrb[0].mxu0
    %v3176 = vadd.f32 0.0, %v3175
    %v3177 = vpop.f32.mrb[0].mxu0
    %v3178 = vadd.f32 0.0, %v3177
    %3179 = vmatprep.mubr.f32.mxu0 0.0
    %3180 = vmatmul.mubr.f32.gmra.mrb[0].mxu0 %v543
    %v3181 = vpop.f32.mrb[0].mxu0
    %v3182 = vadd.f32 0.0, %v3181
    %v3183 = vpop.f32.mrb[0].mxu0
    %v3184 = vadd.f32 0.0, %v3183
    %3185 = vmatprep.mubr.f32.mxu0 0.0
    %3186 = vmatmul.mubr.f32.gmra.mrb[0].mxu0 %v546
    %v3187 = vpop.f32.mrb[0].mxu0
    %v3188 = vadd.f32 0.0, %v3187
    %v3189 = vpop.f32.mrb[0].mxu0
    %v3190 = vadd.f32 0.0, %v3189
    %3191 = vmatprep.mubr.f32.mxu0 0.0
    %3192 = vmatmul.mubr.f32.gmra.mrb[0].mxu0 %v549
    %v3193 = vpop.f32.mrb[0].mxu0
    %v3194 = vadd.f32 0.0, %v3193
    %v3195 = vpop.f32.mrb[0].mxu0
    %v3196 = vadd.f32 0.0, %v3195
    %3197 = vmatprep.mubr.f32.mxu0 0.0
    %3198 = vmatmul.mubr.f32.gmra.mrb[0].mxu0 %v1698
    %v3199 = vpop.f32.mrb[0].mxu0
    %v3200 = vadd.f32 0.0, %v3199
    %v3201 = vpop.f32.mrb[0].mxu0
    %v3202 = vadd.f32 0.0, %v3201
    %3203 = vdwg.mxu0
    %3204 = vmatprep.subr.mxu0 %v1278
    %3205 = vmatpush1.msra.mxu0 %v1277
    %3206 = vmatprep.subr.mxu0 %v1284
    %3207 = vmatpush1.msra.mxu0 %v1283
    %3208 = vmatprep.subr.mxu0 %v1290
    %3209 = vmatpush1.msra.mxu0 %v1289
    %3210 = vmatprep.subr.mxu0 %v1331
    %3211 = vmatpush1.msra.mxu0 %v1328
    %3212 = vmatprep.subr.mxu0 0.0
    %3213 = vmatpush1.msra.mxu0 0.0
    %3214 = vmatprep.subr.mxu0 0.0
    %3215 = vmatpush1.msra.mxu0 0.0
    %3216 = vmatprep.subr.mxu0 0.0
    %3217 = vmatpush1.msra.mxu0 0.0
    %3218 = vmatprep.subr.mxu0 0.0
    %3219 = vmatpush1.msra.mxu0 0.0
    %3220 = vmatprep.subr.mxu0 0.0
    %3221 = vmatpush1.msra.mxu0 0.0
    %3222 = vmatprep.subr.mxu0 0.0
    %3223 = vmatpush1.msra.mxu0 0.0
    %3224 = vmatprep.subr.mxu0 0.0
    %3225 = vmatpush1.msra.mxu0 0.0
    %3226 = vmatprep.subr.mxu0 0.0
    %3227 = vmatpush1.msra.mxu0 0.0
    %3228 = vmatprep.subr.mxu0 0.0
    %3229 = vmatpush1.msra.mxu0 0.0
    %3230 = vmatprep.subr.mxu0 0.0
    %3231 = vmatpush1.msra.mxu0 0.0
    %3232 = vmatprep.subr.mxu0 0.0
    %3233 = vmatpush1.msra.mxu0 0.0
    %3234 = vmatprep.subr.mxu0 0.0
    %3235 = vmatpush1.msra.mxu0 0.0
    %3236 = vmatprep.subr.mxu0 0.0
    %3237 = vmatpush1.msra.mxu0 0.0
    %3238 = vmatprep.subr.mxu0 0.0
    %3239 = vmatpush1.msra.mxu0 0.0
    %3240 = vmatprep.subr.mxu0 0.0
    %3241 = vmatpush1.msra.mxu0 0.0
    %3242 = vmatprep.subr.mxu0 0.0
    %3243 = vmatpush1.msra.mxu0 0.0
    %3244 = vmatprep.subr.mxu0 0.0
    %3245 = vmatpush1.msra.mxu0 0.0
    %3246 = vmatprep.subr.mxu0 0.0
    %3247 = vmatpush1.msra.mxu0 0.0
    %3248 = vmatprep.subr.mxu0 0.0
    %3249 = vmatpush1.msra.mxu0 0.0
    %3250 = vmatprep.subr.mxu0 0.0
    %3251 = vmatpush1.msra.mxu0 0.0
    %3252 = vmatprep.subr.mxu0 0.0
    %3253 = vmatpush1.msra.mxu0 0.0
    %3254 = vmatprep.subr.mxu0 0.0
    %3255 = vmatpush1.msra.mxu0 0.0
    %3256 = vmatprep.subr.mxu0 0.0
    %3257 = vmatpush1.msra.mxu0 0.0
    %3258 = vmatprep.subr.mxu0 0.0
    %3259 = vmatpush1.msra.mxu0 0.0
    %3260 = vmatprep.subr.mxu0 0.0
    %3261 = vmatpush1.msra.mxu0 0.0
    %3262 = vmatprep.subr.mxu0 0.0
    %3263 = vmatpush1.msra.mxu0 0.0
    %3264 = vmatprep.subr.mxu0 0.0
    %3265 = vmatpush1.msra.mxu0 0.0
    %3266 = vmatprep.subr.mxu0 0.0
    %3267 = vmatpush1.msra.mxu0 0.0
    %3268 = vmatprep.mubr.f32.mxu0 0.0
    %3269 = vmatmul.mubr.f32.gmra.mrb[0].mxu0 %v537
    %v3270 = vpop.f32.mrb[0].mxu0
    %v3271 = vadd.f32 0.0, %v3270
    %v3272 = vpop.f32.mrb[0].mxu0
    %v3273 = vadd.f32 0.0, %v3272
    %3274 = vmatprep.mubr.f32.mxu0 0.0
    %3275 = vmatmul.mubr.f32.gmra.mrb[0].mxu0 %v540
    %v3276 = vpop.f32.mrb[0].mxu0
    %v3277 = vadd.f32 0.0, %v3276
    %v3278 = vpop.f32.mrb[0].mxu0
    %v3279 = vadd.f32 0.0, %v3278
    %3280 = vmatprep.mubr.f32.mxu0 0.0
    %3281 = vmatmul.mubr.f32.gmra.mrb[0].mxu0 %v543
    %v3282 = vpop.f32.mrb[0].mxu0
    %v3283 = vadd.f32 0.0, %v3282
    %v3284 = vpop.f32.mrb[0].mxu0
    %v3285 = vadd.f32 0.0, %v3284
    %3286 = vmatprep.mubr.f32.mxu0 0.0
    %3287 = vmatmul.mubr.f32.gmra.mrb[0].mxu0 %v546
    %v3288 = vpop.f32.mrb[0].mxu0
    %v3289 = vadd.f32 0.0, %v3288
    %v3290 = vpop.f32.mrb[0].mxu0
    %v3291 = vadd.f32 0.0, %v3290
    %3292 = vmatprep.mubr.f32.mxu0 0.0
    %3293 = vmatmul.mubr.f32.gmra.mrb[0].mxu0 %v549
    %v3294 = vpop.f32.mrb[0].mxu0
    %v3295 = vadd.f32 0.0, %v3294
    %v3296 = vpop.f32.mrb[0].mxu0
    %v3297 = vadd.f32 0.0, %v3296
    %3298 = vmatprep.mubr.f32.mxu0 0.0
    %3299 = vmatmul.mubr.f32.gmra.mrb[0].mxu0 %v1698
    %v3300 = vpop.f32.mrb[0].mxu0
    %v3301 = vadd.f32 0.0, %v3300
    %v3302 = vpop.f32.mrb[0].mxu0
    %v3303 = vadd.f32 0.0, %v3302
    %3304 = vdwg.mxu0
    %v3305 = vadd.f32 %v2966, %v3069
    %v3306 = vadd.f32 %v2967, %v3071
    %v3307 = vadd.f32 %v2968, %v3170
    %v3308 = vadd.f32 %v2969, %v3172
    %v3309 = vadd.f32 %v2970, %v3271
    %v3310 = vadd.f32 %v2971, %v3273
    %v3311 = vadd.f32 %v2972, %v3075
    %v3312 = vadd.f32 %v2973, %v3077
    %v3313 = vadd.f32 %v2974, %v3176
    %v3314 = vadd.f32 %v2975, %v3178
    %v3315 = vadd.f32 %v2976, %v3277
    %v3316 = vadd.f32 %v2977, %v3279
    %v3317 = vadd.f32 %v2978, %v3081
    %v3318 = vadd.f32 %v2979, %v3083
    %v3319 = vadd.f32 %v2980, %v3182
    %v3320 = vadd.f32 %v2981, %v3184
    %v3321 = vadd.f32 %v2982, %v3283
    %v3322 = vadd.f32 %v2983, %v3285
    %v3323 = vadd.f32 %v2984, %v3087
    %v3324 = vadd.f32 %v2985, %v3089
    %v3325 = vadd.f32 %v2986, %v3188
    %v3326 = vadd.f32 %v2987, %v3190
    %v3327 = vadd.f32 %v2988, %v3289
    %v3328 = vadd.f32 %v2989, %v3291
    %v3329 = vadd.f32 %v2990, %v3093
    %v3330 = vadd.f32 %v2991, %v3095
    %v3331 = vadd.f32 %v2992, %v3194
    %v3332 = vadd.f32 %v2993, %v3196
    %v3333 = vadd.f32 %v2994, %v3295
    %v3334 = vadd.f32 %v2995, %v3297
    %v3335 = vadd.f32 %v2996, %v3099
    %v3336 = vadd.f32 %v2997, %v3101
    %v3337 = vadd.f32 %v2998, %v3200
    %v3338 = vadd.f32 %v2999, %v3202
    %v3339 = vadd.f32 %v3000, %v3301
    %v3340 = vadd.f32 %v3001, %v3303
    %v3342 = vsel %vm192, %v128, 0
    %3344 = vmatprep.subr.mxu0 %v1674
    %3345 = vmatpush1.msra.mxu0 %v1673
    %3346 = vmatprep.subr.mxu0 %v1680
    %3347 = vmatpush1.msra.mxu0 %v1679
    %3348 = vmatprep.subr.mxu0 %v1686
    %3349 = vmatpush1.msra.mxu0 %v1685
    %3350 = vmatprep.subr.mxu0 %v1704
    %3351 = vmatpush1.msra.mxu0 %v1701
    %3352 = vmatprep.subr.mxu0 0.0
    %3353 = vmatpush1.msra.mxu0 0.0
    %3354 = vmatprep.subr.mxu0 0.0
    %3355 = vmatpush1.msra.mxu0 0.0
    %3356 = vmatprep.subr.mxu0 0.0
    %3357 = vmatpush1.msra.mxu0 0.0
    %3358 = vmatprep.subr.mxu0 0.0
    %3359 = vmatpush1.msra.mxu0 0.0
    %3360 = vmatprep.subr.mxu0 0.0
    %3361 = vmatpush1.msra.mxu0 0.0
    %3362 = vmatprep.subr.mxu0 0.0
    %3363 = vmatpush1.msra.mxu0 0.0
    %3364 = vmatprep.subr.mxu0 0.0
    %3365 = vmatpush1.msra.mxu0 0.0
    %3366 = vmatprep.subr.mxu0 0.0
    %3367 = vmatpush1.msra.mxu0 0.0
    %3368 = vmatprep.subr.mxu0 0.0
    %3369 = vmatpush1.msra.mxu0 0.0
    %3370 = vmatprep.subr.mxu0 0.0
    %3371 = vmatpush1.msra.mxu0 0.0
    %3372 = vmatprep.subr.mxu0 0.0
    %3373 = vmatpush1.msra.mxu0 0.0
    %3374 = vmatprep.subr.mxu0 0.0
    %3375 = vmatpush1.msra.mxu0 0.0
    %3376 = vmatprep.subr.mxu0 0.0
    %3377 = vmatpush1.msra.mxu0 0.0
    %3378 = vmatprep.subr.mxu0 0.0
    %3379 = vmatpush1.msra.mxu0 0.0
    %3380 = vmatprep.subr.mxu0 0.0
    %3381 = vmatpush1.msra.mxu0 0.0
    %3382 = vmatprep.subr.mxu0 0.0
    %3383 = vmatpush1.msra.mxu0 0.0
    %3384 = vmatprep.subr.mxu0 0.0
    %3385 = vmatpush1.msra.mxu0 0.0
    %3386 = vmatprep.subr.mxu0 0.0
    %3387 = vmatpush1.msra.mxu0 0.0
    %3388 = vmatprep.subr.mxu0 0.0
    %3389 = vmatpush1.msra.mxu0 0.0
    %3390 = vmatprep.subr.mxu0 0.0
    %3391 = vmatpush1.msra.mxu0 0.0
    %3392 = vmatprep.subr.mxu0 0.0
    %3393 = vmatpush1.msra.mxu0 0.0
    %3394 = vmatprep.subr.mxu0 0.0
    %3395 = vmatpush1.msra.mxu0 0.0
    %3396 = vmatprep.subr.mxu0 0.0
    %3397 = vmatpush1.msra.mxu0 0.0
    %3398 = vmatprep.subr.mxu0 0.0
    %3399 = vmatpush1.msra.mxu0 0.0
    %3400 = vmatprep.subr.mxu0 0.0
    %3401 = vmatpush1.msra.mxu0 0.0
    %3402 = vmatprep.subr.mxu0 0.0
    %3403 = vmatpush1.msra.mxu0 0.0
    %3404 = vmatprep.subr.mxu0 0.0
    %3405 = vmatpush1.msra.mxu0 0.0
    %3406 = vmatprep.subr.mxu0 0.0
    %3407 = vmatpush1.msra.mxu0 0.0
    %3408 = vmatprep.mubr.f32.mxu0 0.0
    %3409 = vmatmul.mubr.f32.gmra.mrb[0].mxu0 %v197
    %v3410 = vpop.f32.mrb[0].mxu0
    %v3411 = vadd.f32 0.0, %v3410
    %v3412 = vpop.f32.mrb[0].mxu0
    %v3413 = vadd.f32 0.0, %v3412
    %3414 = vmatprep.mubr.f32.mxu0 0.0
    %3415 = vmatmul.mubr.f32.gmra.mrb[0].mxu0 %v200
    %v3416 = vpop.f32.mrb[0].mxu0
    %v3417 = vadd.f32 0.0, %v3416
    %v3418 = vpop.f32.mrb[0].mxu0
    %v3419 = vadd.f32 0.0, %v3418
    %3420 = vmatprep.mubr.f32.mxu0 0.0
    %3421 = vmatmul.mubr.f32.gmra.mrb[0].mxu0 %v203
    %v3422 = vpop.f32.mrb[0].mxu0
    %v3423 = vadd.f32 0.0, %v3422
    %v3424 = vpop.f32.mrb[0].mxu0
    %v3425 = vadd.f32 0.0, %v3424
    %3426 = vmatprep.mubr.f32.mxu0 0.0
    %3427 = vmatmul.mubr.f32.gmra.mrb[0].mxu0 %v206
    %v3428 = vpop.f32.mrb[0].mxu0
    %v3429 = vadd.f32 0.0, %v3428
    %v3430 = vpop.f32.mrb[0].mxu0
    %v3431 = vadd.f32 0.0, %v3430
    %3432 = vmatprep.mubr.f32.mxu0 0.0
    %3433 = vmatmul.mubr.f32.gmra.mrb[0].mxu0 %v209
    %v3434 = vpop.f32.mrb[0].mxu0
    %v3435 = vadd.f32 0.0, %v3434
    %v3436 = vpop.f32.mrb[0].mxu0
    %v3437 = vadd.f32 0.0, %v3436
    %3438 = vmatprep.mubr.f32.mxu0 0.0
    %3439 = vmatmul.mubr.f32.gmra.mrb[0].mxu0 %v3342
    %v3440 = vpop.f32.mrb[0].mxu0
    %v3441 = vadd.f32 0.0, %v3440
    %v3442 = vpop.f32.mrb[0].mxu0
    %v3443 = vadd.f32 0.0, %v3442
    %3444 = vdwg.mxu0
    %3445 = vmatprep.subr.mxu0 %v1676
    %3446 = vmatpush1.msra.mxu0 %v1675
    %3447 = vmatprep.subr.mxu0 %v1682
    %3448 = vmatpush1.msra.mxu0 %v1681
    %3449 = vmatprep.subr.mxu0 %v1688
    %3450 = vmatpush1.msra.mxu0 %v1687
    %3451 = vmatprep.subr.mxu0 %v1710
    %3452 = vmatpush1.msra.mxu0 %v1707
    %3453 = vmatprep.subr.mxu0 0.0
    %3454 = vmatpush1.msra.mxu0 0.0
    %3455 = vmatprep.subr.mxu0 0.0
    %3456 = vmatpush1.msra.mxu0 0.0
    %3457 = vmatprep.subr.mxu0 0.0
    %3458 = vmatpush1.msra.mxu0 0.0
    %3459 = vmatprep.subr.mxu0 0.0
    %3460 = vmatpush1.msra.mxu0 0.0
    %3461 = vmatprep.subr.mxu0 0.0
    %3462 = vmatpush1.msra.mxu0 0.0
    %3463 = vmatprep.subr.mxu0 0.0
    %3464 = vmatpush1.msra.mxu0 0.0
    %3465 = vmatprep.subr.mxu0 0.0
    %3466 = vmatpush1.msra.mxu0 0.0
    %3467 = vmatprep.subr.mxu0 0.0
    %3468 = vmatpush1.msra.mxu0 0.0
    %3469 = vmatprep.subr.mxu0 0.0
    %3470 = vmatpush1.msra.mxu0 0.0
    %3471 = vmatprep.subr.mxu0 0.0
    %3472 = vmatpush1.msra.mxu0 0.0
    %3473 = vmatprep.subr.mxu0 0.0
    %3474 = vmatpush1.msra.mxu0 0.0
    %3475 = vmatprep.subr.mxu0 0.0
    %3476 = vmatpush1.msra.mxu0 0.0
    %3477 = vmatprep.subr.mxu0 0.0
    %3478 = vmatpush1.msra.mxu0 0.0
    %3479 = vmatprep.subr.mxu0 0.0
    %3480 = vmatpush1.msra.mxu0 0.0
    %3481 = vmatprep.subr.mxu0 0.0
    %3482 = vmatpush1.msra.mxu0 0.0
    %3483 = vmatprep.subr.mxu0 0.0
    %3484 = vmatpush1.msra.mxu0 0.0
    %3485 = vmatprep.subr.mxu0 0.0
    %3486 = vmatpush1.msra.mxu0 0.0
    %3487 = vmatprep.subr.mxu0 0.0
    %3488 = vmatpush1.msra.mxu0 0.0
    %3489 = vmatprep.subr.mxu0 0.0
    %3490 = vmatpush1.msra.mxu0 0.0
    %3491 = vmatprep.subr.mxu0 0.0
    %3492 = vmatpush1.msra.mxu0 0.0
    %3493 = vmatprep.subr.mxu0 0.0
    %3494 = vmatpush1.msra.mxu0 0.0
    %3495 = vmatprep.subr.mxu0 0.0
    %3496 = vmatpush1.msra.mxu0 0.0
    %3497 = vmatprep.subr.mxu0 0.0
    %3498 = vmatpush1.msra.mxu0 0.0
    %3499 = vmatprep.subr.mxu0 0.0
    %3500 = vmatpush1.msra.mxu0 0.0
    %3501 = vmatprep.subr.mxu0 0.0
    %3502 = vmatpush1.msra.mxu0 0.0
    %3503 = vmatprep.subr.mxu0 0.0
    %3504 = vmatpush1.msra.mxu0 0.0
    %3505 = vmatprep.subr.mxu0 0.0
    %3506 = vmatpush1.msra.mxu0 0.0
    %3507 = vmatprep.subr.mxu0 0.0
    %3508 = vmatpush1.msra.mxu0 0.0
    %3509 = vmatprep.mubr.f32.mxu0 0.0
    %3510 = vmatmul.mubr.f32.gmra.mrb[0].mxu0 %v197
    %v3511 = vpop.f32.mrb[0].mxu0
    %v3512 = vadd.f32 0.0, %v3511
    %v3513 = vpop.f32.mrb[0].mxu0
    %v3514 = vadd.f32 0.0, %v3513
    %3515 = vmatprep.mubr.f32.mxu0 0.0
    %3516 = vmatmul.mubr.f32.gmra.mrb[0].mxu0 %v200
    %v3517 = vpop.f32.mrb[0].mxu0
    %v3518 = vadd.f32 0.0, %v3517
    %v3519 = vpop.f32.mrb[0].mxu0
    %v3520 = vadd.f32 0.0, %v3519
    %3521 = vmatprep.mubr.f32.mxu0 0.0
    %3522 = vmatmul.mubr.f32.gmra.mrb[0].mxu0 %v203
    %v3523 = vpop.f32.mrb[0].mxu0
    %v3524 = vadd.f32 0.0, %v3523
    %v3525 = vpop.f32.mrb[0].mxu0
    %v3526 = vadd.f32 0.0, %v3525
    %3527 = vmatprep.mubr.f32.mxu0 0.0
    %3528 = vmatmul.mubr.f32.gmra.mrb[0].mxu0 %v206
    %v3529 = vpop.f32.mrb[0].mxu0
    %v3530 = vadd.f32 0.0, %v3529
    %v3531 = vpop.f32.mrb[0].mxu0
    %v3532 = vadd.f32 0.0, %v3531
    %3533 = vmatprep.mubr.f32.mxu0 0.0
    %3534 = vmatmul.mubr.f32.gmra.mrb[0].mxu0 %v209
    %v3535 = vpop.f32.mrb[0].mxu0
    %v3536 = vadd.f32 0.0, %v3535
    %v3537 = vpop.f32.mrb[0].mxu0
    %v3538 = vadd.f32 0.0, %v3537
    %3539 = vmatprep.mubr.f32.mxu0 0.0
    %3540 = vmatmul.mubr.f32.gmra.mrb[0].mxu0 %v3342
    %v3541 = vpop.f32.mrb[0].mxu0
    %v3542 = vadd.f32 0.0, %v3541
    %v3543 = vpop.f32.mrb[0].mxu0
    %v3544 = vadd.f32 0.0, %v3543
    %3545 = vdwg.mxu0
    %3546 = vmatprep.subr.mxu0 %v1678
    %3547 = vmatpush1.msra.mxu0 %v1677
    %3548 = vmatprep.subr.mxu0 %v1684
    %3549 = vmatpush1.msra.mxu0 %v1683
    %3550 = vmatprep.subr.mxu0 %v1690
    %3551 = vmatpush1.msra.mxu0 %v1689
    %3552 = vmatprep.subr.mxu0 %v1716
    %3553 = vmatpush1.msra.mxu0 %v1713
    %3554 = vmatprep.subr.mxu0 0.0
    %3555 = vmatpush1.msra.mxu0 0.0
    %3556 = vmatprep.subr.mxu0 0.0
    %3557 = vmatpush1.msra.mxu0 0.0
    %3558 = vmatprep.subr.mxu0 0.0
    %3559 = vmatpush1.msra.mxu0 0.0
    %3560 = vmatprep.subr.mxu0 0.0
    %3561 = vmatpush1.msra.mxu0 0.0
    %3562 = vmatprep.subr.mxu0 0.0
    %3563 = vmatpush1.msra.mxu0 0.0
    %3564 = vmatprep.subr.mxu0 0.0
    %3565 = vmatpush1.msra.mxu0 0.0
    %3566 = vmatprep.subr.mxu0 0.0
    %3567 = vmatpush1.msra.mxu0 0.0
    %3568 = vmatprep.subr.mxu0 0.0
    %3569 = vmatpush1.msra.mxu0 0.0
    %3570 = vmatprep.subr.mxu0 0.0
    %3571 = vmatpush1.msra.mxu0 0.0
    %3572 = vmatprep.subr.mxu0 0.0
    %3573 = vmatpush1.msra.mxu0 0.0
    %3574 = vmatprep.subr.mxu0 0.0
    %3575 = vmatpush1.msra.mxu0 0.0
    %3576 = vmatprep.subr.mxu0 0.0
    %3577 = vmatpush1.msra.mxu0 0.0
    %3578 = vmatprep.subr.mxu0 0.0
    %3579 = vmatpush1.msra.mxu0 0.0
    %3580 = vmatprep.subr.mxu0 0.0
    %3581 = vmatpush1.msra.mxu0 0.0
    %3582 = vmatprep.subr.mxu0 0.0
    %3583 = vmatpush1.msra.mxu0 0.0
    %3584 = vmatprep.subr.mxu0 0.0
    %3585 = vmatpush1.msra.mxu0 0.0
    %3586 = vmatprep.subr.mxu0 0.0
    %3587 = vmatpush1.msra.mxu0 0.0
    %3588 = vmatprep.subr.mxu0 0.0
    %3589 = vmatpush1.msra.mxu0 0.0
    %3590 = vmatprep.subr.mxu0 0.0
    %3591 = vmatpush1.msra.mxu0 0.0
    %3592 = vmatprep.subr.mxu0 0.0
    %3593 = vmatpush1.msra.mxu0 0.0
    %3594 = vmatprep.subr.mxu0 0.0
    %3595 = vmatpush1.msra.mxu0 0.0
    %3596 = vmatprep.subr.mxu0 0.0
    %3597 = vmatpush1.msra.mxu0 0.0
    %3598 = vmatprep.subr.mxu0 0.0
    %3599 = vmatpush1.msra.mxu0 0.0
    %3600 = vmatprep.subr.mxu0 0.0
    %3601 = vmatpush1.msra.mxu0 0.0
    %3602 = vmatprep.subr.mxu0 0.0
    %3603 = vmatpush1.msra.mxu0 0.0
    %3604 = vmatprep.subr.mxu0 0.0
    %3605 = vmatpush1.msra.mxu0 0.0
    %3606 = vmatprep.subr.mxu0 0.0
    %3607 = vmatpush1.msra.mxu0 0.0
    %3608 = vmatprep.subr.mxu0 0.0
    %3609 = vmatpush1.msra.mxu0 0.0
    %3610 = vmatprep.mubr.f32.mxu0 0.0
    %3611 = vmatmul.mubr.f32.gmra.mrb[0].mxu0 %v197
    %v3612 = vpop.f32.mrb[0].mxu0
    %v3613 = vadd.f32 0.0, %v3612
    %v3614 = vpop.f32.mrb[0].mxu0
    %v3615 = vadd.f32 0.0, %v3614
    %3616 = vmatprep.mubr.f32.mxu0 0.0
    %3617 = vmatmul.mubr.f32.gmra.mrb[0].mxu0 %v200
    %v3618 = vpop.f32.mrb[0].mxu0
    %v3619 = vadd.f32 0.0, %v3618
    %v3620 = vpop.f32.mrb[0].mxu0
    %v3621 = vadd.f32 0.0, %v3620
    %3622 = vmatprep.mubr.f32.mxu0 0.0
    %3623 = vmatmul.mubr.f32.gmra.mrb[0].mxu0 %v203
    %v3624 = vpop.f32.mrb[0].mxu0
    %v3625 = vadd.f32 0.0, %v3624
    %v3626 = vpop.f32.mrb[0].mxu0
    %v3627 = vadd.f32 0.0, %v3626
    %3628 = vmatprep.mubr.f32.mxu0 0.0
    %3629 = vmatmul.mubr.f32.gmra.mrb[0].mxu0 %v206
    %v3630 = vpop.f32.mrb[0].mxu0
    %v3631 = vadd.f32 0.0, %v3630
    %v3632 = vpop.f32.mrb[0].mxu0
    %v3633 = vadd.f32 0.0, %v3632
    %3634 = vmatprep.mubr.f32.mxu0 0.0
    %3635 = vmatmul.mubr.f32.gmra.mrb[0].mxu0 %v209
    %v3636 = vpop.f32.mrb[0].mxu0
    %v3637 = vadd.f32 0.0, %v3636
    %v3638 = vpop.f32.mrb[0].mxu0
    %v3639 = vadd.f32 0.0, %v3638
    %3640 = vmatprep.mubr.f32.mxu0 0.0
    %3641 = vmatmul.mubr.f32.gmra.mrb[0].mxu0 %v3342
    %v3642 = vpop.f32.mrb[0].mxu0
    %v3643 = vadd.f32 0.0, %v3642
    %v3644 = vpop.f32.mrb[0].mxu0
    %v3645 = vadd.f32 0.0, %v3644
    %3646 = vdwg.mxu0
    %v3647 = vadd.f32 %v3305, %v3411
    %v3648 = vadd.f32 %v3306, %v3413
    %v3649 = vadd.f32 %v3307, %v3512
    %v3650 = vadd.f32 %v3308, %v3514
    %v3651 = vadd.f32 %v3309, %v3613
    %v3652 = vadd.f32 %v3310, %v3615
    %v3653 = vadd.f32 %v3311, %v3417
    %v3654 = vadd.f32 %v3312, %v3419
    %v3655 = vadd.f32 %v3313, %v3518
    %v3656 = vadd.f32 %v3314, %v3520
    %v3657 = vadd.f32 %v3315, %v3619
    %v3658 = vadd.f32 %v3316, %v3621
    %v3659 = vadd.f32 %v3317, %v3423
    %v3660 = vadd.f32 %v3318, %v3425
    %v3661 = vadd.f32 %v3319, %v3524
    %v3662 = vadd.f32 %v3320, %v3526
    %v3663 = vadd.f32 %v3321, %v3625
    %v3664 = vadd.f32 %v3322, %v3627
    %v3665 = vadd.f32 %v3323, %v3429
    %v3666 = vadd.f32 %v3324, %v3431
    %v3667 = vadd.f32 %v3325, %v3530
    %v3668 = vadd.f32 %v3326, %v3532
    %v3669 = vadd.f32 %v3327, %v3631
    %v3670 = vadd.f32 %v3328, %v3633
    %v3671 = vadd.f32 %v3329, %v3435
    %v3672 = vadd.f32 %v3330, %v3437
    %v3673 = vadd.f32 %v3331, %v3536
    %v3674 = vadd.f32 %v3332, %v3538
    %v3675 = vadd.f32 %v3333, %v3637
    %v3676 = vadd.f32 %v3334, %v3639
    %v3677 = vadd.f32 %v3335, %v3441
    %v3678 = vadd.f32 %v3336, %v3443
    %v3679 = vadd.f32 %v3337, %v3542
    %v3680 = vadd.f32 %v3338, %v3544
    %v3681 = vadd.f32 %v3339, %v3643
    %v3682 = vadd.f32 %v3340, %v3645
    %v3683 = vmax.f32 %v2021, %v2024
    %v3684 = vmax.f32 %v2022, %v2025
    %v3685 = vmax.f32 %v2023, %v2026
    %v3686 = vmax.f32 %v2027, %v2030
    %v3687 = vmax.f32 %v2028, %v2031
    %v3688 = vmax.f32 %v2029, %v2032
    %v3689 = vmax.f32 %v2033, %v2036
    %v3690 = vmax.f32 %v2034, %v2037
    %v3691 = vmax.f32 %v2035, %v2038
    %v3692 = vmax.f32 %v2039, %v2042
    %v3693 = vmax.f32 %v2040, %v2043
    %v3694 = vmax.f32 %v2041, %v2044
    %v3695 = vmax.f32 %v2045, %v2048
    %v3696 = vmax.f32 %v2046, %v2049
    %v3697 = vmax.f32 %v2047, %v2050
    %v3698 = vmax.f32 %v2051, %v2054
    %v3699 = vmax.f32 %v2052, %v2055
    %v3700 = vmax.f32 %v2053, %v2056
    %v3701 = vmax.f32 %v3647, %v3650
    %v3702 = vmax.f32 %v3648, %v3651
    %v3703 = vmax.f32 %v3649, %v3652
    %v3704 = vmax.f32 %v3653, %v3656
    %v3705 = vmax.f32 %v3654, %v3657
    %v3706 = vmax.f32 %v3655, %v3658
    %v3707 = vmax.f32 %v3659, %v3662
    %v3708 = vmax.f32 %v3660, %v3663
    %v3709 = vmax.f32 %v3661, %v3664
    %v3710 = vmax.f32 %v3665, %v3668
    %v3711 = vmax.f32 %v3666, %v3669
    %v3712 = vmax.f32 %v3667, %v3670
    %v3713 = vmax.f32 %v3671, %v3674
    %v3714 = vmax.f32 %v3672, %v3675
    %v3715 = vmax.f32 %v3673, %v3676
    %v3716 = vmax.f32 %v3677, %v3680
    %v3717 = vmax.f32 %v3678, %v3681
    %v3718 = vmax.f32 %v3679, %v3682
    %v3719 = vmax.f32 %v3683, %v3701
    %v3720 = vmax.f32 %v3684, %v3702
    %v3721 = vmax.f32 %v3685, %v3703
    %v3722 = vmax.f32 %v3686, %v3704
    %v3723 = vmax.f32 %v3687, %v3705
    %v3724 = vmax.f32 %v3688, %v3706
    %v3725 = vmax.f32 %v3689, %v3707
    %v3726 = vmax.f32 %v3690, %v3708
    %v3727 = vmax.f32 %v3691, %v3709
    %v3728 = vmax.f32 %v3692, %v3710
    %v3729 = vmax.f32 %v3693, %v3711
    %v3730 = vmax.f32 %v3694, %v3712
    %v3731 = vmax.f32 %v3695, %v3713
    %v3732 = vmax.f32 %v3696, %v3714
    %v3733 = vmax.f32 %v3697, %v3715
    %v3734 = vmax.f32 %v3698, %v3716
    %v3735 = vmax.f32 %v3699, %v3717
    %v3736 = vmax.f32 %v3700, %v3718
    %v3737 = vld [vmem:[#allocation4] sm:$0x7]
    %v3739 = vlaneseq
    %v3740 = vshrl.u32 %v3739, 7
    %v3741 = vsub.s32 0, %v3740
    %v3742 = vrot.slane %v3737, %v3741
    %v3743 = vlaneseq
    %v3744 = vshrl.u32 %v3743, 7
    %v3745 = vsub.s32 1, %v3744
    %v3746 = vrot.slane %v3737, %v3745
    %v3747 = vlaneseq
    %v3748 = vshrl.u32 %v3747, 7
    %v3749 = vsub.s32 2, %v3748
    %v3750 = vrot.slane %v3737, %v3749
    %v3754 = vadd.f32 %v3719, %v3742
    %v3755 = vadd.f32 %v3720, %v3746
    %v3756 = vadd.f32 %v3721, %v3750
    %v3757 = vadd.f32 %v3722, %v3742
    %v3758 = vadd.f32 %v3723, %v3746
    %v3759 = vadd.f32 %v3724, %v3750
    %v3760 = vadd.f32 %v3725, %v3742
    %v3761 = vadd.f32 %v3726, %v3746
    %v3762 = vadd.f32 %v3727, %v3750
    %v3763 = vadd.f32 %v3728, %v3742
    %v3764 = vadd.f32 %v3729, %v3746
    %v3765 = vadd.f32 %v3730, %v3750
    %v3766 = vadd.f32 %v3731, %v3742
    %v3767 = vadd.f32 %v3732, %v3746
    %v3768 = vadd.f32 %v3733, %v3750
    %v3769 = vadd.f32 %v3734, %v3742
    %v3770 = vadd.f32 %v3735, %v3746
    %v3771 = vadd.f32 %v3736, %v3750
    %v3772 = vmax.f32 %v3754, 0.0
    %v3773 = vmax.f32 %v3755, 0.0
    %v3774 = vmax.f32 %v3756, 0.0
    %v3775 = vmax.f32 %v3757, 0.0
    %v3776 = vmax.f32 %v3758, 0.0
    %v3777 = vmax.f32 %v3759, 0.0
    %v3778 = vmax.f32 %v3760, 0.0
    %v3779 = vmax.f32 %v3761, 0.0
    %v3780 = vmax.f32 %v3762, 0.0
    %v3781 = vmax.f32 %v3763, 0.0
    %v3782 = vmax.f32 %v3764, 0.0
    %v3783 = vmax.f32 %v3765, 0.0
    %v3784 = vmax.f32 %v3766, 0.0
    %v3785 = vmax.f32 %v3767, 0.0
    %v3786 = vmax.f32 %v3768, 0.0
    %v3787 = vmax.f32 %v3769, 0.0
    %v3788 = vmax.f32 %v3770, 0.0
    %v3789 = vmax.f32 %v3771, 0.0
    %3790 = vmatprep.subr.mxu0 %v169
    %3791 = vmatpush1.msra.mxu0 %v168
    %3792 = vmatprep.subr.mxu0 %v175
    %3793 = vmatpush1.msra.mxu0 %v174
    %3794 = vmatprep.subr.mxu0 %v181
    %3795 = vmatpush1.msra.mxu0 %v180
    %3796 = vmatprep.subr.mxu0 %v216
    %3797 = vmatpush1.msra.mxu0 %v213
    %3798 = vmatprep.subr.mxu0 0.0
    %3799 = vmatpush1.msra.mxu0 0.0
    %3800 = vmatprep.subr.mxu0 0.0
    %3801 = vmatpush1.msra.mxu0 0.0
    %3802 = vmatprep.subr.mxu0 0.0
    %3803 = vmatpush1.msra.mxu0 0.0
    %3804 = vmatprep.subr.mxu0 0.0
    %3805 = vmatpush1.msra.mxu0 0.0
    %3806 = vmatprep.subr.mxu0 0.0
    %3807 = vmatpush1.msra.mxu0 0.0
    %3808 = vmatprep.subr.mxu0 0.0
    %3809 = vmatpush1.msra.mxu0 0.0
    %3810 = vmatprep.subr.mxu0 0.0
    %3811 = vmatpush1.msra.mxu0 0.0
    %3812 = vmatprep.subr.mxu0 0.0
    %3813 = vmatpush1.msra.mxu0 0.0
    %3814 = vmatprep.subr.mxu0 0.0
    %3815 = vmatpush1.msra.mxu0 0.0
    %3816 = vmatprep.subr.mxu0 0.0
    %3817 = vmatpush1.msra.mxu0 0.0
    %3818 = vmatprep.subr.mxu0 0.0
    %3819 = vmatpush1.msra.mxu0 0.0
    %3820 = vmatprep.subr.mxu0 0.0
    %3821 = vmatpush1.msra.mxu0 0.0
    %3822 = vmatprep.subr.mxu0 0.0
    %3823 = vmatpush1.msra.mxu0 0.0
    %3824 = vmatprep.subr.mxu0 0.0
    %3825 = vmatpush1.msra.mxu0 0.0
    %3826 = vmatprep.subr.mxu0 0.0
    %3827 = vmatpush1.msra.mxu0 0.0
    %3828 = vmatprep.subr.mxu0 0.0
    %3829 = vmatpush1.msra.mxu0 0.0
    %3830 = vmatprep.subr.mxu0 0.0
    %3831 = vmatpush1.msra.mxu0 0.0
    %3832 = vmatprep.subr.mxu0 0.0
    %3833 = vmatpush1.msra.mxu0 0.0
    %3834 = vmatprep.subr.mxu0 0.0
    %3835 = vmatpush1.msra.mxu0 0.0
    %3836 = vmatprep.subr.mxu0 0.0
    %3837 = vmatpush1.msra.mxu0 0.0
    %3838 = vmatprep.subr.mxu0 0.0
    %3839 = vmatpush1.msra.mxu0 0.0
    %3840 = vmatprep.subr.mxu0 0.0
    %3841 = vmatpush1.msra.mxu0 0.0
    %3842 = vmatprep.subr.mxu0 0.0
    %3843 = vmatpush1.msra.mxu0 0.0
    %3844 = vmatprep.subr.mxu0 0.0
    %3845 = vmatpush1.msra.mxu0 0.0
    %3846 = vmatprep.subr.mxu0 0.0
    %3847 = vmatpush1.msra.mxu0 0.0
    %3848 = vmatprep.subr.mxu0 0.0
    %3849 = vmatpush1.msra.mxu0 0.0
    %3850 = vmatprep.subr.mxu0 0.0
    %3851 = vmatpush1.msra.mxu0 0.0
    %3852 = vmatprep.subr.mxu0 0.0
    %3853 = vmatpush1.msra.mxu0 0.0
    %3854 = vmatprep.mubr.f32.mxu0 0.0
    %3855 = vmatmul.mubr.f32.gmra.mrb[0].mxu0 %v1298
    %v3856 = vpop.f32.mrb[0].mxu0
    %v3857 = vadd.f32 0.0, %v3856
    %v3858 = vpop.f32.mrb[0].mxu0
    %v3859 = vadd.f32 0.0, %v3858
    %3860 = vmatprep.mubr.f32.mxu0 0.0
    %3861 = vmatmul.mubr.f32.gmra.mrb[0].mxu0 %v1301
    %v3862 = vpop.f32.mrb[0].mxu0
    %v3863 = vadd.f32 0.0, %v3862
    %v3864 = vpop.f32.mrb[0].mxu0
    %v3865 = vadd.f32 0.0, %v3864
    %3866 = vmatprep.mubr.f32.mxu0 0.0
    %3867 = vmatmul.mubr.f32.gmra.mrb[0].mxu0 %v1304
    %v3868 = vpop.f32.mrb[0].mxu0
    %v3869 = vadd.f32 0.0, %v3868
    %v3870 = vpop.f32.mrb[0].mxu0
    %v3871 = vadd.f32 0.0, %v3870
    %3872 = vmatprep.mubr.f32.mxu0 0.0
    %3873 = vmatmul.mubr.f32.gmra.mrb[0].mxu0 %v1307
    %v3874 = vpop.f32.mrb[0].mxu0
    %v3875 = vadd.f32 0.0, %v3874
    %v3876 = vpop.f32.mrb[0].mxu0
    %v3877 = vadd.f32 0.0, %v3876
    %3878 = vmatprep.mubr.f32.mxu0 0.0
    %3879 = vmatmul.mubr.f32.gmra.mrb[0].mxu0 %v1310
    %v3880 = vpop.f32.mrb[0].mxu0
    %v3881 = vadd.f32 0.0, %v3880
    %v3882 = vpop.f32.mrb[0].mxu0
    %v3883 = vadd.f32 0.0, %v3882
    %3884 = vmatprep.mubr.f32.mxu0 0.0
    %3885 = vmatmul.mubr.f32.gmra.mrb[0].mxu0 %v1313
    %v3886 = vpop.f32.mrb[0].mxu0
    %v3887 = vadd.f32 0.0, %v3886
    %v3888 = vpop.f32.mrb[0].mxu0
    %v3889 = vadd.f32 0.0, %v3888
    %3890 = vdwg.mxu0
    %3891 = vmatprep.subr.mxu0 %v171
    %3892 = vmatpush1.msra.mxu0 %v170
    %3893 = vmatprep.subr.mxu0 %v177
    %3894 = vmatpush1.msra.mxu0 %v176
    %3895 = vmatprep.subr.mxu0 %v183
    %3896 = vmatpush1.msra.mxu0 %v182
    %3897 = vmatprep.subr.mxu0 %v222
    %3898 = vmatpush1.msra.mxu0 %v219
    %3899 = vmatprep.subr.mxu0 0.0
    %3900 = vmatpush1.msra.mxu0 0.0
    %3901 = vmatprep.subr.mxu0 0.0
    %3902 = vmatpush1.msra.mxu0 0.0
    %3903 = vmatprep.subr.mxu0 0.0
    %3904 = vmatpush1.msra.mxu0 0.0
    %3905 = vmatprep.subr.mxu0 0.0
    %3906 = vmatpush1.msra.mxu0 0.0
    %3907 = vmatprep.subr.mxu0 0.0
    %3908 = vmatpush1.msra.mxu0 0.0
    %3909 = vmatprep.subr.mxu0 0.0
    %3910 = vmatpush1.msra.mxu0 0.0
    %3911 = vmatprep.subr.mxu0 0.0
    %3912 = vmatpush1.msra.mxu0 0.0
    %3913 = vmatprep.subr.mxu0 0.0
    %3914 = vmatpush1.msra.mxu0 0.0
    %3915 = vmatprep.subr.mxu0 0.0
    %3916 = vmatpush1.msra.mxu0 0.0
    %3917 = vmatprep.subr.mxu0 0.0
    %3918 = vmatpush1.msra.mxu0 0.0
    %3919 = vmatprep.subr.mxu0 0.0
    %3920 = vmatpush1.msra.mxu0 0.0
    %3921 = vmatprep.subr.mxu0 0.0
    %3922 = vmatpush1.msra.mxu0 0.0
    %3923 = vmatprep.subr.mxu0 0.0
    %3924 = vmatpush1.msra.mxu0 0.0
    %3925 = vmatprep.subr.mxu0 0.0
    %3926 = vmatpush1.msra.mxu0 0.0
    %3927 = vmatprep.subr.mxu0 0.0
    %3928 = vmatpush1.msra.mxu0 0.0
    %3929 = vmatprep.subr.mxu0 0.0
    %3930 = vmatpush1.msra.mxu0 0.0
    %3931 = vmatprep.subr.mxu0 0.0
    %3932 = vmatpush1.msra.mxu0 0.0
    %3933 = vmatprep.subr.mxu0 0.0
    %3934 = vmatpush1.msra.mxu0 0.0
    %3935 = vmatprep.subr.mxu0 0.0
    %3936 = vmatpush1.msra.mxu0 0.0
    %3937 = vmatprep.subr.mxu0 0.0
    %3938 = vmatpush1.msra.mxu0 0.0
    %3939 = vmatprep.subr.mxu0 0.0
    %3940 = vmatpush1.msra.mxu0 0.0
    %3941 = vmatprep.subr.mxu0 0.0
    %3942 = vmatpush1.msra.mxu0 0.0
    %3943 = vmatprep.subr.mxu0 0.0
    %3944 = vmatpush1.msra.mxu0 0.0
    %3945 = vmatprep.subr.mxu0 0.0
    %3946 = vmatpush1.msra.mxu0 0.0
    %3947 = vmatprep.subr.mxu0 0.0
    %3948 = vmatpush1.msra.mxu0 0.0
    %3949 = vmatprep.subr.mxu0 0.0
    %3950 = vmatpush1.msra.mxu0 0.0
    %3951 = vmatprep.subr.mxu0 0.0
    %3952 = vmatpush1.msra.mxu0 0.0
    %3953 = vmatprep.subr.mxu0 0.0
    %3954 = vmatpush1.msra.mxu0 0.0
    %3955 = vmatprep.mubr.f32.mxu0 0.0
    %3956 = vmatmul.mubr.f32.gmra.mrb[0].mxu0 %v1298
    %v3957 = vpop.f32.mrb[0].mxu0
    %v3958 = vadd.f32 0.0, %v3957
    %v3959 = vpop.f32.mrb[0].mxu0
    %v3960 = vadd.f32 0.0, %v3959
    %3961 = vmatprep.mubr.f32.mxu0 0.0
    %3962 = vmatmul.mubr.f32.gmra.mrb[0].mxu0 %v1301
    %v3963 = vpop.f32.mrb[0].mxu0
    %v3964 = vadd.f32 0.0, %v3963
    %v3965 = vpop.f32.mrb[0].mxu0
    %v3966 = vadd.f32 0.0, %v3965
    %3967 = vmatprep.mubr.f32.mxu0 0.0
    %3968 = vmatmul.mubr.f32.gmra.mrb[0].mxu0 %v1304
    %v3969 = vpop.f32.mrb[0].mxu0
    %v3970 = vadd.f32 0.0, %v3969
    %v3971 = vpop.f32.mrb[0].mxu0
    %v3972 = vadd.f32 0.0, %v3971
    %3973 = vmatprep.mubr.f32.mxu0 0.0
    %3974 = vmatmul.mubr.f32.gmra.mrb[0].mxu0 %v1307
    %v3975 = vpop.f32.mrb[0].mxu0
    %v3976 = vadd.f32 0.0, %v3975
    %v3977 = vpop.f32.mrb[0].mxu0
    %v3978 = vadd.f32 0.0, %v3977
    %3979 = vmatprep.mubr.f32.mxu0 0.0
    %3980 = vmatmul.mubr.f32.gmra.mrb[0].mxu0 %v1310
    %v3981 = vpop.f32.mrb[0].mxu0
    %v3982 = vadd.f32 0.0, %v3981
    %v3983 = vpop.f32.mrb[0].mxu0
    %v3984 = vadd.f32 0.0, %v3983
    %3985 = vmatprep.mubr.f32.mxu0 0.0
    %3986 = vmatmul.mubr.f32.gmra.mrb[0].mxu0 %v1313
    %v3987 = vpop.f32.mrb[0].mxu0
    %v3988 = vadd.f32 0.0, %v3987
    %v3989 = vpop.f32.mrb[0].mxu0
    %v3990 = vadd.f32 0.0, %v3989
    %3991 = vdwg.mxu0
    %3992 = vmatprep.subr.mxu0 %v173
    %3993 = vmatpush1.msra.mxu0 %v172
    %3994 = vmatprep.subr.mxu0 %v179
    %3995 = vmatpush1.msra.mxu0 %v178
    %3996 = vmatprep.subr.mxu0 %v185
    %3997 = vmatpush1.msra.mxu0 %v184
    %3998 = vmatprep.subr.mxu0 %v228
    %3999 = vmatpush1.msra.mxu0 %v225
    %4000 = vmatprep.subr.mxu0 0.0
    %4001 = vmatpush1.msra.mxu0 0.0
    %4002 = vmatprep.subr.mxu0 0.0
    %4003 = vmatpush1.msra.mxu0 0.0
    %4004 = vmatprep.subr.mxu0 0.0
    %4005 = vmatpush1.msra.mxu0 0.0
    %4006 = vmatprep.subr.mxu0 0.0
    %4007 = vmatpush1.msra.mxu0 0.0
    %4008 = vmatprep.subr.mxu0 0.0
    %4009 = vmatpush1.msra.mxu0 0.0
    %4010 = vmatprep.subr.mxu0 0.0
    %4011 = vmatpush1.msra.mxu0 0.0
    %4012 = vmatprep.subr.mxu0 0.0
    %4013 = vmatpush1.msra.mxu0 0.0
    %4014 = vmatprep.subr.mxu0 0.0
    %4015 = vmatpush1.msra.mxu0 0.0
    %4016 = vmatprep.subr.mxu0 0.0
    %4017 = vmatpush1.msra.mxu0 0.0
    %4018 = vmatprep.subr.mxu0 0.0
    %4019 = vmatpush1.msra.mxu0 0.0
    %4020 = vmatprep.subr.mxu0 0.0
    %4021 = vmatpush1.msra.mxu0 0.0
    %4022 = vmatprep.subr.mxu0 0.0
    %4023 = vmatpush1.msra.mxu0 0.0
    %4024 = vmatprep.subr.mxu0 0.0
    %4025 = vmatpush1.msra.mxu0 0.0
    %4026 = vmatprep.subr.mxu0 0.0
    %4027 = vmatpush1.msra.mxu0 0.0
    %4028 = vmatprep.subr.mxu0 0.0
    %4029 = vmatpush1.msra.mxu0 0.0
    %4030 = vmatprep.subr.mxu0 0.0
    %4031 = vmatpush1.msra.mxu0 0.0
    %4032 = vmatprep.subr.mxu0 0.0
    %4033 = vmatpush1.msra.mxu0 0.0
    %4034 = vmatprep.subr.mxu0 0.0
    %4035 = vmatpush1.msra.mxu0 0.0
    %4036 = vmatprep.subr.mxu0 0.0
    %4037 = vmatpush1.msra.mxu0 0.0
    %4038 = vmatprep.subr.mxu0 0.0
    %4039 = vmatpush1.msra.mxu0 0.0
    %4040 = vmatprep.subr.mxu0 0.0
    %4041 = vmatpush1.msra.mxu0 0.0
    %4042 = vmatprep.subr.mxu0 0.0
    %4043 = vmatpush1.msra.mxu0 0.0
    %4044 = vmatprep.subr.mxu0 0.0
    %4045 = vmatpush1.msra.mxu0 0.0
    %4046 = vmatprep.subr.mxu0 0.0
    %4047 = vmatpush1.msra.mxu0 0.0
    %4048 = vmatprep.subr.mxu0 0.0
    %4049 = vmatpush1.msra.mxu0 0.0
    %4050 = vmatprep.subr.mxu0 0.0
    %4051 = vmatpush1.msra.mxu0 0.0
    %4052 = vmatprep.subr.mxu0 0.0
    %4053 = vmatpush1.msra.mxu0 0.0
    %4054 = vmatprep.subr.mxu0 0.0
    %4055 = vmatpush1.msra.mxu0 0.0
    %4056 = vmatprep.mubr.f32.mxu0 0.0
    %4057 = vmatmul.mubr.f32.gmra.mrb[0].mxu0 %v1298
    %v4058 = vpop.f32.mrb[0].mxu0
    %v4059 = vadd.f32 0.0, %v4058
    %v4060 = vpop.f32.mrb[0].mxu0
    %v4061 = vadd.f32 0.0, %v4060
    %4062 = vmatprep.mubr.f32.mxu0 0.0
    %4063 = vmatmul.mubr.f32.gmra.mrb[0].mxu0 %v1301
    %v4064 = vpop.f32.mrb[0].mxu0
    %v4065 = vadd.f32 0.0, %v4064
    %v4066 = vpop.f32.mrb[0].mxu0
    %v4067 = vadd.f32 0.0, %v4066
    %4068 = vmatprep.mubr.f32.mxu0 0.0
    %4069 = vmatmul.mubr.f32.gmra.mrb[0].mxu0 %v1304
    %v4070 = vpop.f32.mrb[0].mxu0
    %v4071 = vadd.f32 0.0, %v4070
    %v4072 = vpop.f32.mrb[0].mxu0
    %v4073 = vadd.f32 0.0, %v4072
    %4074 = vmatprep.mubr.f32.mxu0 0.0
    %4075 = vmatmul.mubr.f32.gmra.mrb[0].mxu0 %v1307
    %v4076 = vpop.f32.mrb[0].mxu0
    %v4077 = vadd.f32 0.0, %v4076
    %v4078 = vpop.f32.mrb[0].mxu0
    %v4079 = vadd.f32 0.0, %v4078
    %4080 = vmatprep.mubr.f32.mxu0 0.0
    %4081 = vmatmul.mubr.f32.gmra.mrb[0].mxu0 %v1310
    %v4082 = vpop.f32.mrb[0].mxu0
    %v4083 = vadd.f32 0.0, %v4082
    %v4084 = vpop.f32.mrb[0].mxu0
    %v4085 = vadd.f32 0.0, %v4084
    %4086 = vmatprep.mubr.f32.mxu0 0.0
    %4087 = vmatmul.mubr.f32.gmra.mrb[0].mxu0 %v1313
    %v4088 = vpop.f32.mrb[0].mxu0
    %v4089 = vadd.f32 0.0, %v4088
    %v4090 = vpop.f32.mrb[0].mxu0
    %v4091 = vadd.f32 0.0, %v4090
    %4092 = vdwg.mxu0
    %4093 = vmatprep.subr.mxu0 %v144
    %4094 = vmatpush1.msra.mxu0 %v143
    %4095 = vmatprep.subr.mxu0 %v150
    %4096 = vmatpush1.msra.mxu0 %v149
    %4097 = vmatprep.subr.mxu0 %v156
    %4098 = vmatpush1.msra.mxu0 %v155
    %4099 = vmatprep.subr.mxu0 %v555
    %4100 = vmatpush1.msra.mxu0 %v552
    %4101 = vmatprep.subr.mxu0 0.0
    %4102 = vmatpush1.msra.mxu0 0.0
    %4103 = vmatprep.subr.mxu0 0.0
    %4104 = vmatpush1.msra.mxu0 0.0
    %4105 = vmatprep.subr.mxu0 0.0
    %4106 = vmatpush1.msra.mxu0 0.0
    %4107 = vmatprep.subr.mxu0 0.0
    %4108 = vmatpush1.msra.mxu0 0.0
    %4109 = vmatprep.subr.mxu0 0.0
    %4110 = vmatpush1.msra.mxu0 0.0
    %4111 = vmatprep.subr.mxu0 0.0
    %4112 = vmatpush1.msra.mxu0 0.0
    %4113 = vmatprep.subr.mxu0 0.0
    %4114 = vmatpush1.msra.mxu0 0.0
    %4115 = vmatprep.subr.mxu0 0.0
    %4116 = vmatpush1.msra.mxu0 0.0
    %4117 = vmatprep.subr.mxu0 0.0
    %4118 = vmatpush1.msra.mxu0 0.0
    %4119 = vmatprep.subr.mxu0 0.0
    %4120 = vmatpush1.msra.mxu0 0.0
    %4121 = vmatprep.subr.mxu0 0.0
    %4122 = vmatpush1.msra.mxu0 0.0
    %4123 = vmatprep.subr.mxu0 0.0
    %4124 = vmatpush1.msra.mxu0 0.0
    %4125 = vmatprep.subr.mxu0 0.0
    %4126 = vmatpush1.msra.mxu0 0.0
    %4127 = vmatprep.subr.mxu0 0.0
    %4128 = vmatpush1.msra.mxu0 0.0
    %4129 = vmatprep.subr.mxu0 0.0
    %4130 = vmatpush1.msra.mxu0 0.0
    %4131 = vmatprep.subr.mxu0 0.0
    %4132 = vmatpush1.msra.mxu0 0.0
    %4133 = vmatprep.subr.mxu0 0.0
    %4134 = vmatpush1.msra.mxu0 0.0
    %4135 = vmatprep.subr.mxu0 0.0
    %4136 = vmatpush1.msra.mxu0 0.0
    %4137 = vmatprep.subr.mxu0 0.0
    %4138 = vmatpush1.msra.mxu0 0.0
    %4139 = vmatprep.subr.mxu0 0.0
    %4140 = vmatpush1.msra.mxu0 0.0
    %4141 = vmatprep.subr.mxu0 0.0
    %4142 = vmatpush1.msra.mxu0 0.0
    %4143 = vmatprep.subr.mxu0 0.0
    %4144 = vmatpush1.msra.mxu0 0.0
    %4145 = vmatprep.subr.mxu0 0.0
    %4146 = vmatpush1.msra.mxu0 0.0
    %4147 = vmatprep.subr.mxu0 0.0
    %4148 = vmatpush1.msra.mxu0 0.0
    %4149 = vmatprep.subr.mxu0 0.0
    %4150 = vmatpush1.msra.mxu0 0.0
    %4151 = vmatprep.subr.mxu0 0.0
    %4152 = vmatpush1.msra.mxu0 0.0
    %4153 = vmatprep.subr.mxu0 0.0
    %4154 = vmatpush1.msra.mxu0 0.0
    %4155 = vmatprep.subr.mxu0 0.0
    %4156 = vmatpush1.msra.mxu0 0.0
    %4157 = vmatprep.mubr.f32.mxu0 0.0
    %4158 = vmatmul.mubr.f32.gmra.mrb[0].mxu0 %v898
    %v4159 = vpop.f32.mrb[0].mxu0
    %v4160 = vadd.f32 %v3857, %v4159
    %v4161 = vpop.f32.mrb[0].mxu0
    %v4162 = vadd.f32 %v3859, %v4161
    %4163 = vmatprep.mubr.f32.mxu0 0.0
    %4164 = vmatmul.mubr.f32.gmra.mrb[0].mxu0 %v901
    %v4165 = vpop.f32.mrb[0].mxu0
    %v4166 = vadd.f32 %v3863, %v4165
    %v4167 = vpop.f32.mrb[0].mxu0
    %v4168 = vadd.f32 %v3865, %v4167
    %4169 = vmatprep.mubr.f32.mxu0 0.0
    %4170 = vmatmul.mubr.f32.gmra.mrb[0].mxu0 %v904
    %v4171 = vpop.f32.mrb[0].mxu0
    %v4172 = vadd.f32 %v3869, %v4171
    %v4173 = vpop.f32.mrb[0].mxu0
    %v4174 = vadd.f32 %v3871, %v4173
    %4175 = vmatprep.mubr.f32.mxu0 0.0
    %4176 = vmatmul.mubr.f32.gmra.mrb[0].mxu0 %v907
    %v4177 = vpop.f32.mrb[0].mxu0
    %v4178 = vadd.f32 %v3875, %v4177
    %v4179 = vpop.f32.mrb[0].mxu0
    %v4180 = vadd.f32 %v3877, %v4179
    %4181 = vmatprep.mubr.f32.mxu0 0.0
    %4182 = vmatmul.mubr.f32.gmra.mrb[0].mxu0 %v910
    %v4183 = vpop.f32.mrb[0].mxu0
    %v4184 = vadd.f32 %v3881, %v4183
    %v4185 = vpop.f32.mrb[0].mxu0
    %v4186 = vadd.f32 %v3883, %v4185
    %4187 = vmatprep.mubr.f32.mxu0 0.0
    %4188 = vmatmul.mubr.f32.gmra.mrb[0].mxu0 %v913
    %v4189 = vpop.f32.mrb[0].mxu0
    %v4190 = vadd.f32 %v3887, %v4189
    %v4191 = vpop.f32.mrb[0].mxu0
    %v4192 = vadd.f32 %v3889, %v4191
    %4193 = vdwg.mxu0
    %4194 = vmatprep.subr.mxu0 %v146
    %4195 = vmatpush1.msra.mxu0 %v145
    %4196 = vmatprep.subr.mxu0 %v152
    %4197 = vmatpush1.msra.mxu0 %v151
    %4198 = vmatprep.subr.mxu0 %v158
    %4199 = vmatpush1.msra.mxu0 %v157
    %4200 = vmatprep.subr.mxu0 %v561
    %4201 = vmatpush1.msra.mxu0 %v558
    %4202 = vmatprep.subr.mxu0 0.0
    %4203 = vmatpush1.msra.mxu0 0.0
    %4204 = vmatprep.subr.mxu0 0.0
    %4205 = vmatpush1.msra.mxu0 0.0
    %4206 = vmatprep.subr.mxu0 0.0
    %4207 = vmatpush1.msra.mxu0 0.0
    %4208 = vmatprep.subr.mxu0 0.0
    %4209 = vmatpush1.msra.mxu0 0.0
    %4210 = vmatprep.subr.mxu0 0.0
    %4211 = vmatpush1.msra.mxu0 0.0
    %4212 = vmatprep.subr.mxu0 0.0
    %4213 = vmatpush1.msra.mxu0 0.0
    %4214 = vmatprep.subr.mxu0 0.0
    %4215 = vmatpush1.msra.mxu0 0.0
    %4216 = vmatprep.subr.mxu0 0.0
    %4217 = vmatpush1.msra.mxu0 0.0
    %4218 = vmatprep.subr.mxu0 0.0
    %4219 = vmatpush1.msra.mxu0 0.0
    %4220 = vmatprep.subr.mxu0 0.0
    %4221 = vmatpush1.msra.mxu0 0.0
    %4222 = vmatprep.subr.mxu0 0.0
    %4223 = vmatpush1.msra.mxu0 0.0
    %4224 = vmatprep.subr.mxu0 0.0
    %4225 = vmatpush1.msra.mxu0 0.0
    %4226 = vmatprep.subr.mxu0 0.0
    %4227 = vmatpush1.msra.mxu0 0.0
    %4228 = vmatprep.subr.mxu0 0.0
    %4229 = vmatpush1.msra.mxu0 0.0
    %4230 = vmatprep.subr.mxu0 0.0
    %4231 = vmatpush1.msra.mxu0 0.0
    %4232 = vmatprep.subr.mxu0 0.0
    %4233 = vmatpush1.msra.mxu0 0.0
    %4234 = vmatprep.subr.mxu0 0.0
    %4235 = vmatpush1.msra.mxu0 0.0
    %4236 = vmatprep.subr.mxu0 0.0
    %4237 = vmatpush1.msra.mxu0 0.0
    %4238 = vmatprep.subr.mxu0 0.0
    %4239 = vmatpush1.msra.mxu0 0.0
    %4240 = vmatprep.subr.mxu0 0.0
    %4241 = vmatpush1.msra.mxu0 0.0
    %4242 = vmatprep.subr.mxu0 0.0
    %4243 = vmatpush1.msra.mxu0 0.0
    %4244 = vmatprep.subr.mxu0 0.0
    %4245 = vmatpush1.msra.mxu0 0.0
    %4246 = vmatprep.subr.mxu0 0.0
    %4247 = vmatpush1.msra.mxu0 0.0
    %4248 = vmatprep.subr.mxu0 0.0
    %4249 = vmatpush1.msra.mxu0 0.0
    %4250 = vmatprep.subr.mxu0 0.0
    %4251 = vmatpush1.msra.mxu0 0.0
    %4252 = vmatprep.subr.mxu0 0.0
    %4253 = vmatpush1.msra.mxu0 0.0
    %4254 = vmatprep.subr.mxu0 0.0
    %4255 = vmatpush1.msra.mxu0 0.0
    %4256 = vmatprep.subr.mxu0 0.0
    %4257 = vmatpush1.msra.mxu0 0.0
    %4258 = vmatprep.mubr.f32.mxu0 0.0
    %4259 = vmatmul.mubr.f32.gmra.mrb[0].mxu0 %v898
    %v4260 = vpop.f32.mrb[0].mxu0
    %v4261 = vadd.f32 %v3958, %v4260
    %v4262 = vpop.f32.mrb[0].mxu0
    %v4263 = vadd.f32 %v3960, %v4262
    %4264 = vmatprep.mubr.f32.mxu0 0.0
    %4265 = vmatmul.mubr.f32.gmra.mrb[0].mxu0 %v901
    %v4266 = vpop.f32.mrb[0].mxu0
    %v4267 = vadd.f32 %v3964, %v4266
    %v4268 = vpop.f32.mrb[0].mxu0
    %v4269 = vadd.f32 %v3966, %v4268
    %4270 = vmatprep.mubr.f32.mxu0 0.0
    %4271 = vmatmul.mubr.f32.gmra.mrb[0].mxu0 %v904
    %v4272 = vpop.f32.mrb[0].mxu0
    %v4273 = vadd.f32 %v3970, %v4272
    %v4274 = vpop.f32.mrb[0].mxu0
    %v4275 = vadd.f32 %v3972, %v4274
    %4276 = vmatprep.mubr.f32.mxu0 0.0
    %4277 = vmatmul.mubr.f32.gmra.mrb[0].mxu0 %v907
    %v4278 = vpop.f32.mrb[0].mxu0
    %v4279 = vadd.f32 %v3976, %v4278
    %v4280 = vpop.f32.mrb[0].mxu0
    %v4281 = vadd.f32 %v3978, %v4280
    %4282 = vmatprep.mubr.f32.mxu0 0.0
    %4283 = vmatmul.mubr.f32.gmra.mrb[0].mxu0 %v910
    %v4284 = vpop.f32.mrb[0].mxu0
    %v4285 = vadd.f32 %v3982, %v4284
    %v4286 = vpop.f32.mrb[0].mxu0
    %v4287 = vadd.f32 %v3984, %v4286
    %4288 = vmatprep.mubr.f32.mxu0 0.0
    %4289 = vmatmul.mubr.f32.gmra.mrb[0].mxu0 %v913
    %v4290 = vpop.f32.mrb[0].mxu0
    %v4291 = vadd.f32 %v3988, %v4290
    %v4292 = vpop.f32.mrb[0].mxu0
    %v4293 = vadd.f32 %v3990, %v4292
    %4294 = vdwg.mxu0
    %4295 = vmatprep.subr.mxu0 %v148
    %4296 = vmatpush1.msra.mxu0 %v147
    %4297 = vmatprep.subr.mxu0 %v154
    %4298 = vmatpush1.msra.mxu0 %v153
    %4299 = vmatprep.subr.mxu0 %v160
    %4300 = vmatpush1.msra.mxu0 %v159
    %4301 = vmatprep.subr.mxu0 %v567
    %4302 = vmatpush1.msra.mxu0 %v564
    %4303 = vmatprep.subr.mxu0 0.0
    %4304 = vmatpush1.msra.mxu0 0.0
    %4305 = vmatprep.subr.mxu0 0.0
    %4306 = vmatpush1.msra.mxu0 0.0
    %4307 = vmatprep.subr.mxu0 0.0
    %4308 = vmatpush1.msra.mxu0 0.0
    %4309 = vmatprep.subr.mxu0 0.0
    %4310 = vmatpush1.msra.mxu0 0.0
    %4311 = vmatprep.subr.mxu0 0.0
    %4312 = vmatpush1.msra.mxu0 0.0
    %4313 = vmatprep.subr.mxu0 0.0
    %4314 = vmatpush1.msra.mxu0 0.0
    %4315 = vmatprep.subr.mxu0 0.0
    %4316 = vmatpush1.msra.mxu0 0.0
    %4317 = vmatprep.subr.mxu0 0.0
    %4318 = vmatpush1.msra.mxu0 0.0
    %4319 = vmatprep.subr.mxu0 0.0
    %4320 = vmatpush1.msra.mxu0 0.0
    %4321 = vmatprep.subr.mxu0 0.0
    %4322 = vmatpush1.msra.mxu0 0.0
    %4323 = vmatprep.subr.mxu0 0.0
    %4324 = vmatpush1.msra.mxu0 0.0
    %4325 = vmatprep.subr.mxu0 0.0
    %4326 = vmatpush1.msra.mxu0 0.0
    %4327 = vmatprep.subr.mxu0 0.0
    %4328 = vmatpush1.msra.mxu0 0.0
    %4329 = vmatprep.subr.mxu0 0.0
    %4330 = vmatpush1.msra.mxu0 0.0
    %4331 = vmatprep.subr.mxu0 0.0
    %4332 = vmatpush1.msra.mxu0 0.0
    %4333 = vmatprep.subr.mxu0 0.0
    %4334 = vmatpush1.msra.mxu0 0.0
    %4335 = vmatprep.subr.mxu0 0.0
    %4336 = vmatpush1.msra.mxu0 0.0
    %4337 = vmatprep.subr.mxu0 0.0
    %4338 = vmatpush1.msra.mxu0 0.0
    %4339 = vmatprep.subr.mxu0 0.0
    %4340 = vmatpush1.msra.mxu0 0.0
    %4341 = vmatprep.subr.mxu0 0.0
    %4342 = vmatpush1.msra.mxu0 0.0
    %4343 = vmatprep.subr.mxu0 0.0
    %4344 = vmatpush1.msra.mxu0 0.0
    %4345 = vmatprep.subr.mxu0 0.0
    %4346 = vmatpush1.msra.mxu0 0.0
    %4347 = vmatprep.subr.mxu0 0.0
    %4348 = vmatpush1.msra.mxu0 0.0
    %4349 = vmatprep.subr.mxu0 0.0
    %4350 = vmatpush1.msra.mxu0 0.0
    %4351 = vmatprep.subr.mxu0 0.0
    %4352 = vmatpush1.msra.mxu0 0.0
    %4353 = vmatprep.subr.mxu0 0.0
    %4354 = vmatpush1.msra.mxu0 0.0
    %4355 = vmatprep.subr.mxu0 0.0
    %4356 = vmatpush1.msra.mxu0 0.0
    %4357 = vmatprep.subr.mxu0 0.0
    %4358 = vmatpush1.msra.mxu0 0.0
    %4359 = vmatprep.mubr.f32.mxu0 0.0
    %4360 = vmatmul.mubr.f32.gmra.mrb[0].mxu0 %v898
    %v4361 = vpop.f32.mrb[0].mxu0
    %v4362 = vadd.f32 %v4059, %v4361
    %v4363 = vpop.f32.mrb[0].mxu0
    %v4364 = vadd.f32 %v4061, %v4363
    %4365 = vmatprep.mubr.f32.mxu0 0.0
    %4366 = vmatmul.mubr.f32.gmra.mrb[0].mxu0 %v901
    %v4367 = vpop.f32.mrb[0].mxu0
    %v4368 = vadd.f32 %v4065, %v4367
    %v4369 = vpop.f32.mrb[0].mxu0
    %v4370 = vadd.f32 %v4067, %v4369
    %4371 = vmatprep.mubr.f32.mxu0 0.0
    %4372 = vmatmul.mubr.f32.gmra.mrb[0].mxu0 %v904
    %v4373 = vpop.f32.mrb[0].mxu0
    %v4374 = vadd.f32 %v4071, %v4373
    %v4375 = vpop.f32.mrb[0].mxu0
    %v4376 = vadd.f32 %v4073, %v4375
    %4377 = vmatprep.mubr.f32.mxu0 0.0
    %4378 = vmatmul.mubr.f32.gmra.mrb[0].mxu0 %v907
    %v4379 = vpop.f32.mrb[0].mxu0
    %v4380 = vadd.f32 %v4077, %v4379
    %v4381 = vpop.f32.mrb[0].mxu0
    %v4382 = vadd.f32 %v4079, %v4381
    %4383 = vmatprep.mubr.f32.mxu0 0.0
    %4384 = vmatmul.mubr.f32.gmra.mrb[0].mxu0 %v910
    %v4385 = vpop.f32.mrb[0].mxu0
    %v4386 = vadd.f32 %v4083, %v4385
    %v4387 = vpop.f32.mrb[0].mxu0
    %v4388 = vadd.f32 %v4085, %v4387
    %4389 = vmatprep.mubr.f32.mxu0 0.0
    %4390 = vmatmul.mubr.f32.gmra.mrb[0].mxu0 %v913
    %v4391 = vpop.f32.mrb[0].mxu0
    %v4392 = vadd.f32 %v4089, %v4391
    %v4393 = vpop.f32.mrb[0].mxu0
    %v4394 = vadd.f32 %v4091, %v4393
    %4395 = vdwg.mxu0
    %4396 = vmatprep.subr.mxu0 %v874
    %4397 = vmatpush1.msra.mxu0 %v873
    %4398 = vmatprep.subr.mxu0 %v880
    %4399 = vmatpush1.msra.mxu0 %v879
    %4400 = vmatprep.subr.mxu0 %v886
    %4401 = vmatpush1.msra.mxu0 %v885
    %4402 = vmatprep.subr.mxu0 %v919
    %4403 = vmatpush1.msra.mxu0 %v916
    %4404 = vmatprep.subr.mxu0 0.0
    %4405 = vmatpush1.msra.mxu0 0.0
    %4406 = vmatprep.subr.mxu0 0.0
    %4407 = vmatpush1.msra.mxu0 0.0
    %4408 = vmatprep.subr.mxu0 0.0
    %4409 = vmatpush1.msra.mxu0 0.0
    %4410 = vmatprep.subr.mxu0 0.0
    %4411 = vmatpush1.msra.mxu0 0.0
    %4412 = vmatprep.subr.mxu0 0.0
    %4413 = vmatpush1.msra.mxu0 0.0
    %4414 = vmatprep.subr.mxu0 0.0
    %4415 = vmatpush1.msra.mxu0 0.0
    %4416 = vmatprep.subr.mxu0 0.0
    %4417 = vmatpush1.msra.mxu0 0.0
    %4418 = vmatprep.subr.mxu0 0.0
    %4419 = vmatpush1.msra.mxu0 0.0
    %4420 = vmatprep.subr.mxu0 0.0
    %4421 = vmatpush1.msra.mxu0 0.0
    %4422 = vmatprep.subr.mxu0 0.0
    %4423 = vmatpush1.msra.mxu0 0.0
    %4424 = vmatprep.subr.mxu0 0.0
    %4425 = vmatpush1.msra.mxu0 0.0
    %4426 = vmatprep.subr.mxu0 0.0
    %4427 = vmatpush1.msra.mxu0 0.0
    %4428 = vmatprep.subr.mxu0 0.0
    %4429 = vmatpush1.msra.mxu0 0.0
    %4430 = vmatprep.subr.mxu0 0.0
    %4431 = vmatpush1.msra.mxu0 0.0
    %4432 = vmatprep.subr.mxu0 0.0
    %4433 = vmatpush1.msra.mxu0 0.0
    %4434 = vmatprep.subr.mxu0 0.0
    %4435 = vmatpush1.msra.mxu0 0.0
    %4436 = vmatprep.subr.mxu0 0.0
    %4437 = vmatpush1.msra.mxu0 0.0
    %4438 = vmatprep.subr.mxu0 0.0
    %4439 = vmatpush1.msra.mxu0 0.0
    %4440 = vmatprep.subr.mxu0 0.0
    %4441 = vmatpush1.msra.mxu0 0.0
    %4442 = vmatprep.subr.mxu0 0.0
    %4443 = vmatpush1.msra.mxu0 0.0
    %4444 = vmatprep.subr.mxu0 0.0
    %4445 = vmatpush1.msra.mxu0 0.0
    %4446 = vmatprep.subr.mxu0 0.0
    %4447 = vmatpush1.msra.mxu0 0.0
    %4448 = vmatprep.subr.mxu0 0.0
    %4449 = vmatpush1.msra.mxu0 0.0
    %4450 = vmatprep.subr.mxu0 0.0
    %4451 = vmatpush1.msra.mxu0 0.0
    %4452 = vmatprep.subr.mxu0 0.0
    %4453 = vmatpush1.msra.mxu0 0.0
    %4454 = vmatprep.subr.mxu0 0.0
    %4455 = vmatpush1.msra.mxu0 0.0
    %4456 = vmatprep.subr.mxu0 0.0
    %4457 = vmatpush1.msra.mxu0 0.0
    %4458 = vmatprep.subr.mxu0 0.0
    %4459 = vmatpush1.msra.mxu0 0.0
    %4460 = vmatprep.mubr.f32.mxu0 0.0
    %4461 = vmatmul.mubr.f32.gmra.mrb[0].mxu0 %v537
    %v4462 = vpop.f32.mrb[0].mxu0
    %v4463 = vadd.f32 0.0, %v4462
    %v4464 = vpop.f32.mrb[0].mxu0
    %v4465 = vadd.f32 0.0, %v4464
    %4466 = vmatprep.mubr.f32.mxu0 0.0
    %4467 = vmatmul.mubr.f32.gmra.mrb[0].mxu0 %v540
    %v4468 = vpop.f32.mrb[0].mxu0
    %v4469 = vadd.f32 0.0, %v4468
    %v4470 = vpop.f32.mrb[0].mxu0
    %v4471 = vadd.f32 0.0, %v4470
    %4472 = vmatprep.mubr.f32.mxu0 0.0
    %4473 = vmatmul.mubr.f32.gmra.mrb[0].mxu0 %v543
    %v4474 = vpop.f32.mrb[0].mxu0
    %v4475 = vadd.f32 0.0, %v4474
    %v4476 = vpop.f32.mrb[0].mxu0
    %v4477 = vadd.f32 0.0, %v4476
    %4478 = vmatprep.mubr.f32.mxu0 0.0
    %4479 = vmatmul.mubr.f32.gmra.mrb[0].mxu0 %v546
    %v4480 = vpop.f32.mrb[0].mxu0
    %v4481 = vadd.f32 0.0, %v4480
    %v4482 = vpop.f32.mrb[0].mxu0
    %v4483 = vadd.f32 0.0, %v4482
    %4484 = vmatprep.mubr.f32.mxu0 0.0
    %4485 = vmatmul.mubr.f32.gmra.mrb[0].mxu0 %v549
    %v4486 = vpop.f32.mrb[0].mxu0
    %v4487 = vadd.f32 0.0, %v4486
    %v4488 = vpop.f32.mrb[0].mxu0
    %v4489 = vadd.f32 0.0, %v4488
    %4490 = vmatprep.mubr.f32.mxu0 0.0
    %4491 = vmatmul.mubr.f32.gmra.mrb[0].mxu0 %v1698
    %v4492 = vpop.f32.mrb[0].mxu0
    %v4493 = vadd.f32 0.0, %v4492
    %v4494 = vpop.f32.mrb[0].mxu0
    %v4495 = vadd.f32 0.0, %v4494
    %4496 = vdwg.mxu0
    %4497 = vmatprep.subr.mxu0 %v876
    %4498 = vmatpush1.msra.mxu0 %v875
    %4499 = vmatprep.subr.mxu0 %v882
    %4500 = vmatpush1.msra.mxu0 %v881
    %4501 = vmatprep.subr.mxu0 %v888
    %4502 = vmatpush1.msra.mxu0 %v887
    %4503 = vmatprep.subr.mxu0 %v925
    %4504 = vmatpush1.msra.mxu0 %v922
    %4505 = vmatprep.subr.mxu0 0.0
    %4506 = vmatpush1.msra.mxu0 0.0
    %4507 = vmatprep.subr.mxu0 0.0
    %4508 = vmatpush1.msra.mxu0 0.0
    %4509 = vmatprep.subr.mxu0 0.0
    %4510 = vmatpush1.msra.mxu0 0.0
    %4511 = vmatprep.subr.mxu0 0.0
    %4512 = vmatpush1.msra.mxu0 0.0
    %4513 = vmatprep.subr.mxu0 0.0
    %4514 = vmatpush1.msra.mxu0 0.0
    %4515 = vmatprep.subr.mxu0 0.0
    %4516 = vmatpush1.msra.mxu0 0.0
    %4517 = vmatprep.subr.mxu0 0.0
    %4518 = vmatpush1.msra.mxu0 0.0
    %4519 = vmatprep.subr.mxu0 0.0
    %4520 = vmatpush1.msra.mxu0 0.0
    %4521 = vmatprep.subr.mxu0 0.0
    %4522 = vmatpush1.msra.mxu0 0.0
    %4523 = vmatprep.subr.mxu0 0.0
    %4524 = vmatpush1.msra.mxu0 0.0
    %4525 = vmatprep.subr.mxu0 0.0
    %4526 = vmatpush1.msra.mxu0 0.0
    %4527 = vmatprep.subr.mxu0 0.0
    %4528 = vmatpush1.msra.mxu0 0.0
    %4529 = vmatprep.subr.mxu0 0.0
    %4530 = vmatpush1.msra.mxu0 0.0
    %4531 = vmatprep.subr.mxu0 0.0
    %4532 = vmatpush1.msra.mxu0 0.0
    %4533 = vmatprep.subr.mxu0 0.0
    %4534 = vmatpush1.msra.mxu0 0.0
    %4535 = vmatprep.subr.mxu0 0.0
    %4536 = vmatpush1.msra.mxu0 0.0
    %4537 = vmatprep.subr.mxu0 0.0
    %4538 = vmatpush1.msra.mxu0 0.0
    %4539 = vmatprep.subr.mxu0 0.0
    %4540 = vmatpush1.msra.mxu0 0.0
    %4541 = vmatprep.subr.mxu0 0.0
    %4542 = vmatpush1.msra.mxu0 0.0
    %4543 = vmatprep.subr.mxu0 0.0
    %4544 = vmatpush1.msra.mxu0 0.0
    %4545 = vmatprep.subr.mxu0 0.0
    %4546 = vmatpush1.msra.mxu0 0.0
    %4547 = vmatprep.subr.mxu0 0.0
    %4548 = vmatpush1.msra.mxu0 0.0
    %4549 = vmatprep.subr.mxu0 0.0
    %4550 = vmatpush1.msra.mxu0 0.0
    %4551 = vmatprep.subr.mxu0 0.0
    %4552 = vmatpush1.msra.mxu0 0.0
    %4553 = vmatprep.subr.mxu0 0.0
    %4554 = vmatpush1.msra.mxu0 0.0
    %4555 = vmatprep.subr.mxu0 0.0
    %4556 = vmatpush1.msra.mxu0 0.0
    %4557 = vmatprep.subr.mxu0 0.0
    %4558 = vmatpush1.msra.mxu0 0.0
    %4559 = vmatprep.subr.mxu0 0.0
    %4560 = vmatpush1.msra.mxu0 0.0
    %4561 = vmatprep.mubr.f32.mxu0 0.0
    %4562 = vmatmul.mubr.f32.gmra.mrb[0].mxu0 %v537
    %v4563 = vpop.f32.mrb[0].mxu0
    %v4564 = vadd.f32 0.0, %v4563
    %v4565 = vpop.f32.mrb[0].mxu0
    %v4566 = vadd.f32 0.0, %v4565
    %4567 = vmatprep.mubr.f32.mxu0 0.0
    %4568 = vmatmul.mubr.f32.gmra.mrb[0].mxu0 %v540
    %v4569 = vpop.f32.mrb[0].mxu0
    %v4570 = vadd.f32 0.0, %v4569
    %v4571 = vpop.f32.mrb[0].mxu0
    %v4572 = vadd.f32 0.0, %v4571
    %4573 = vmatprep.mubr.f32.mxu0 0.0
    %4574 = vmatmul.mubr.f32.gmra.mrb[0].mxu0 %v543
    %v4575 = vpop.f32.mrb[0].mxu0
    %v4576 = vadd.f32 0.0, %v4575
    %v4577 = vpop.f32.mrb[0].mxu0
    %v4578 = vadd.f32 0.0, %v4577
    %4579 = vmatprep.mubr.f32.mxu0 0.0
    %4580 = vmatmul.mubr.f32.gmra.mrb[0].mxu0 %v546
    %v4581 = vpop.f32.mrb[0].mxu0
    %v4582 = vadd.f32 0.0, %v4581
    %v4583 = vpop.f32.mrb[0].mxu0
    %v4584 = vadd.f32 0.0, %v4583
    %4585 = vmatprep.mubr.f32.mxu0 0.0
    %4586 = vmatmul.mubr.f32.gmra.mrb[0].mxu0 %v549
    %v4587 = vpop.f32.mrb[0].mxu0
    %v4588 = vadd.f32 0.0, %v4587
    %v4589 = vpop.f32.mrb[0].mxu0
    %v4590 = vadd.f32 0.0, %v4589
    %4591 = vmatprep.mubr.f32.mxu0 0.0
    %4592 = vmatmul.mubr.f32.gmra.mrb[0].mxu0 %v1698
    %v4593 = vpop.f32.mrb[0].mxu0
    %v4594 = vadd.f32 0.0, %v4593
    %v4595 = vpop.f32.mrb[0].mxu0
    %v4596 = vadd.f32 0.0, %v4595
    %4597 = vdwg.mxu0
    %4598 = vmatprep.subr.mxu0 %v878
    %4599 = vmatpush1.msra.mxu0 %v877
    %4600 = vmatprep.subr.mxu0 %v884
    %4601 = vmatpush1.msra.mxu0 %v883
    %4602 = vmatprep.subr.mxu0 %v890
    %4603 = vmatpush1.msra.mxu0 %v889
    %4604 = vmatprep.subr.mxu0 %v931
    %4605 = vmatpush1.msra.mxu0 %v928
    %4606 = vmatprep.subr.mxu0 0.0
    %4607 = vmatpush1.msra.mxu0 0.0
    %4608 = vmatprep.subr.mxu0 0.0
    %4609 = vmatpush1.msra.mxu0 0.0
    %4610 = vmatprep.subr.mxu0 0.0
    %4611 = vmatpush1.msra.mxu0 0.0
    %4612 = vmatprep.subr.mxu0 0.0
    %4613 = vmatpush1.msra.mxu0 0.0
    %4614 = vmatprep.subr.mxu0 0.0
    %4615 = vmatpush1.msra.mxu0 0.0
    %4616 = vmatprep.subr.mxu0 0.0
    %4617 = vmatpush1.msra.mxu0 0.0
    %4618 = vmatprep.subr.mxu0 0.0
    %4619 = vmatpush1.msra.mxu0 0.0
    %4620 = vmatprep.subr.mxu0 0.0
    %4621 = vmatpush1.msra.mxu0 0.0
    %4622 = vmatprep.subr.mxu0 0.0
    %4623 = vmatpush1.msra.mxu0 0.0
    %4624 = vmatprep.subr.mxu0 0.0
    %4625 = vmatpush1.msra.mxu0 0.0
    %4626 = vmatprep.subr.mxu0 0.0
    %4627 = vmatpush1.msra.mxu0 0.0
    %4628 = vmatprep.subr.mxu0 0.0
    %4629 = vmatpush1.msra.mxu0 0.0
    %4630 = vmatprep.subr.mxu0 0.0
    %4631 = vmatpush1.msra.mxu0 0.0
    %4632 = vmatprep.subr.mxu0 0.0
    %4633 = vmatpush1.msra.mxu0 0.0
    %4634 = vmatprep.subr.mxu0 0.0
    %4635 = vmatpush1.msra.mxu0 0.0
    %4636 = vmatprep.subr.mxu0 0.0
    %4637 = vmatpush1.msra.mxu0 0.0
    %4638 = vmatprep.subr.mxu0 0.0
    %4639 = vmatpush1.msra.mxu0 0.0
    %4640 = vmatprep.subr.mxu0 0.0
    %4641 = vmatpush1.msra.mxu0 0.0
    %4642 = vmatprep.subr.mxu0 0.0
    %4643 = vmatpush1.msra.mxu0 0.0
    %4644 = vmatprep.subr.mxu0 0.0
    %4645 = vmatpush1.msra.mxu0 0.0
    %4646 = vmatprep.subr.mxu0 0.0
    %4647 = vmatpush1.msra.mxu0 0.0
    %4648 = vmatprep.subr.mxu0 0.0
    %4649 = vmatpush1.msra.mxu0 0.0
    %4650 = vmatprep.subr.mxu0 0.0
    %4651 = vmatpush1.msra.mxu0 0.0
    %4652 = vmatprep.subr.mxu0 0.0
    %4653 = vmatpush1.msra.mxu0 0.0
    %4654 = vmatprep.subr.mxu0 0.0
    %4655 = vmatpush1.msra.mxu0 0.0
    %4656 = vmatprep.subr.mxu0 0.0
    %4657 = vmatpush1.msra.mxu0 0.0
    %4658 = vmatprep.subr.mxu0 0.0
    %4659 = vmatpush1.msra.mxu0 0.0
    %4660 = vmatprep.subr.mxu0 0.0
    %4661 = vmatpush1.msra.mxu0 0.0
    %4662 = vmatprep.mubr.f32.mxu0 0.0
    %4663 = vmatmul.mubr.f32.gmra.mrb[0].mxu0 %v537
    %v4664 = vpop.f32.mrb[0].mxu0
    %v4665 = vadd.f32 0.0, %v4664
    %v4666 = vpop.f32.mrb[0].mxu0
    %v4667 = vadd.f32 0.0, %v4666
    %4668 = vmatprep.mubr.f32.mxu0 0.0
    %4669 = vmatmul.mubr.f32.gmra.mrb[0].mxu0 %v540
    %v4670 = vpop.f32.mrb[0].mxu0
    %v4671 = vadd.f32 0.0, %v4670
    %v4672 = vpop.f32.mrb[0].mxu0
    %v4673 = vadd.f32 0.0, %v4672
    %4674 = vmatprep.mubr.f32.mxu0 0.0
    %4675 = vmatmul.mubr.f32.gmra.mrb[0].mxu0 %v543
    %v4676 = vpop.f32.mrb[0].mxu0
    %v4677 = vadd.f32 0.0, %v4676
    %v4678 = vpop.f32.mrb[0].mxu0
    %v4679 = vadd.f32 0.0, %v4678
    %4680 = vmatprep.mubr.f32.mxu0 0.0
    %4681 = vmatmul.mubr.f32.gmra.mrb[0].mxu0 %v546
    %v4682 = vpop.f32.mrb[0].mxu0
    %v4683 = vadd.f32 0.0, %v4682
    %v4684 = vpop.f32.mrb[0].mxu0
    %v4685 = vadd.f32 0.0, %v4684
    %4686 = vmatprep.mubr.f32.mxu0 0.0
    %4687 = vmatmul.mubr.f32.gmra.mrb[0].mxu0 %v549
    %v4688 = vpop.f32.mrb[0].mxu0
    %v4689 = vadd.f32 0.0, %v4688
    %v4690 = vpop.f32.mrb[0].mxu0
    %v4691 = vadd.f32 0.0, %v4690
    %4692 = vmatprep.mubr.f32.mxu0 0.0
    %4693 = vmatmul.mubr.f32.gmra.mrb[0].mxu0 %v1698
    %v4694 = vpop.f32.mrb[0].mxu0
    %v4695 = vadd.f32 0.0, %v4694
    %v4696 = vpop.f32.mrb[0].mxu0
    %v4697 = vadd.f32 0.0, %v4696
    %4698 = vdwg.mxu0
    %v4699 = vadd.f32 %v4160, %v4463
    %v4700 = vadd.f32 %v4162, %v4465
    %v4701 = vadd.f32 %v4261, %v4564
    %v4702 = vadd.f32 %v4263, %v4566
    %v4703 = vadd.f32 %v4362, %v4665
    %v4704 = vadd.f32 %v4364, %v4667
    %v4705 = vadd.f32 %v4166, %v4469
    %v4706 = vadd.f32 %v4168, %v4471
    %v4707 = vadd.f32 %v4267, %v4570
    %v4708 = vadd.f32 %v4269, %v4572
    %v4709 = vadd.f32 %v4368, %v4671
    %v4710 = vadd.f32 %v4370, %v4673
    %v4711 = vadd.f32 %v4172, %v4475
    %v4712 = vadd.f32 %v4174, %v4477
    %v4713 = vadd.f32 %v4273, %v4576
    %v4714 = vadd.f32 %v4275, %v4578
    %v4715 = vadd.f32 %v4374, %v4677
    %v4716 = vadd.f32 %v4376, %v4679
    %v4717 = vadd.f32 %v4178, %v4481
    %v4718 = vadd.f32 %v4180, %v4483
    %v4719 = vadd.f32 %v4279, %v4582
    %v4720 = vadd.f32 %v4281, %v4584
    %v4721 = vadd.f32 %v4380, %v4683
    %v4722 = vadd.f32 %v4382, %v4685
    %v4723 = vadd.f32 %v4184, %v4487
    %v4724 = vadd.f32 %v4186, %v4489
    %v4725 = vadd.f32 %v4285, %v4588
    %v4726 = vadd.f32 %v4287, %v4590
    %v4727 = vadd.f32 %v4386, %v4689
    %v4728 = vadd.f32 %v4388, %v4691
    %v4729 = vadd.f32 %v4190, %v4493
    %v4730 = vadd.f32 %v4192, %v4495
    %v4731 = vadd.f32 %v4291, %v4594
    %v4732 = vadd.f32 %v4293, %v4596
    %v4733 = vadd.f32 %v4392, %v4695
    %v4734 = vadd.f32 %v4394, %v4697
    %4735 = vmatprep.subr.mxu0 %v1274
    %4736 = vmatpush1.msra.mxu0 %v1273
    %4737 = vmatprep.subr.mxu0 %v1280
    %4738 = vmatpush1.msra.mxu0 %v1279
    %4739 = vmatprep.subr.mxu0 %v1286
    %4740 = vmatpush1.msra.mxu0 %v1285
    %4741 = vmatprep.subr.mxu0 %v1319
    %4742 = vmatpush1.msra.mxu0 %v1316
    %4743 = vmatprep.subr.mxu0 0.0
    %4744 = vmatpush1.msra.mxu0 0.0
    %4745 = vmatprep.subr.mxu0 0.0
    %4746 = vmatpush1.msra.mxu0 0.0
    %4747 = vmatprep.subr.mxu0 0.0
    %4748 = vmatpush1.msra.mxu0 0.0
    %4749 = vmatprep.subr.mxu0 0.0
    %4750 = vmatpush1.msra.mxu0 0.0
    %4751 = vmatprep.subr.mxu0 0.0
    %4752 = vmatpush1.msra.mxu0 0.0
    %4753 = vmatprep.subr.mxu0 0.0
    %4754 = vmatpush1.msra.mxu0 0.0
    %4755 = vmatprep.subr.mxu0 0.0
    %4756 = vmatpush1.msra.mxu0 0.0
    %4757 = vmatprep.subr.mxu0 0.0
    %4758 = vmatpush1.msra.mxu0 0.0
    %4759 = vmatprep.subr.mxu0 0.0
    %4760 = vmatpush1.msra.mxu0 0.0
    %4761 = vmatprep.subr.mxu0 0.0
    %4762 = vmatpush1.msra.mxu0 0.0
    %4763 = vmatprep.subr.mxu0 0.0
    %4764 = vmatpush1.msra.mxu0 0.0
    %4765 = vmatprep.subr.mxu0 0.0
    %4766 = vmatpush1.msra.mxu0 0.0
    %4767 = vmatprep.subr.mxu0 0.0
    %4768 = vmatpush1.msra.mxu0 0.0
    %4769 = vmatprep.subr.mxu0 0.0
    %4770 = vmatpush1.msra.mxu0 0.0
    %4771 = vmatprep.subr.mxu0 0.0
    %4772 = vmatpush1.msra.mxu0 0.0
    %4773 = vmatprep.subr.mxu0 0.0
    %4774 = vmatpush1.msra.mxu0 0.0
    %4775 = vmatprep.subr.mxu0 0.0
    %4776 = vmatpush1.msra.mxu0 0.0
    %4777 = vmatprep.subr.mxu0 0.0
    %4778 = vmatpush1.msra.mxu0 0.0
    %4779 = vmatprep.subr.mxu0 0.0
    %4780 = vmatpush1.msra.mxu0 0.0
    %4781 = vmatprep.subr.mxu0 0.0
    %4782 = vmatpush1.msra.mxu0 0.0
    %4783 = vmatprep.subr.mxu0 0.0
    %4784 = vmatpush1.msra.mxu0 0.0
    %4785 = vmatprep.subr.mxu0 0.0
    %4786 = vmatpush1.msra.mxu0 0.0
    %4787 = vmatprep.subr.mxu0 0.0
    %4788 = vmatpush1.msra.mxu0 0.0
    %4789 = vmatprep.subr.mxu0 0.0
    %4790 = vmatpush1.msra.mxu0 0.0
    %4791 = vmatprep.subr.mxu0 0.0
    %4792 = vmatpush1.msra.mxu0 0.0
    %4793 = vmatprep.subr.mxu0 0.0
    %4794 = vmatpush1.msra.mxu0 0.0
    %4795 = vmatprep.subr.mxu0 0.0
    %4796 = vmatpush1.msra.mxu0 0.0
    %4797 = vmatprep.subr.mxu0 0.0
    %4798 = vmatpush1.msra.mxu0 0.0
    %4799 = vmatprep.mubr.f32.mxu0 0.0
    %4800 = vmatmul.mubr.f32.gmra.mrb[0].mxu0 %v197
    %v4801 = vpop.f32.mrb[0].mxu0
    %v4802 = vadd.f32 0.0, %v4801
    %v4803 = vpop.f32.mrb[0].mxu0
    %v4804 = vadd.f32 0.0, %v4803
    %4805 = vmatprep.mubr.f32.mxu0 0.0
    %4806 = vmatmul.mubr.f32.gmra.mrb[0].mxu0 %v200
    %v4807 = vpop.f32.mrb[0].mxu0
    %v4808 = vadd.f32 0.0, %v4807
    %v4809 = vpop.f32.mrb[0].mxu0
    %v4810 = vadd.f32 0.0, %v4809
    %4811 = vmatprep.mubr.f32.mxu0 0.0
    %4812 = vmatmul.mubr.f32.gmra.mrb[0].mxu0 %v203
    %v4813 = vpop.f32.mrb[0].mxu0
    %v4814 = vadd.f32 0.0, %v4813
    %v4815 = vpop.f32.mrb[0].mxu0
    %v4816 = vadd.f32 0.0, %v4815
    %4817 = vmatprep.mubr.f32.mxu0 0.0
    %4818 = vmatmul.mubr.f32.gmra.mrb[0].mxu0 %v206
    %v4819 = vpop.f32.mrb[0].mxu0
    %v4820 = vadd.f32 0.0, %v4819
    %v4821 = vpop.f32.mrb[0].mxu0
    %v4822 = vadd.f32 0.0, %v4821
    %4823 = vmatprep.mubr.f32.mxu0 0.0
    %4824 = vmatmul.mubr.f32.gmra.mrb[0].mxu0 %v209
    %v4825 = vpop.f32.mrb[0].mxu0
    %v4826 = vadd.f32 0.0, %v4825
    %v4827 = vpop.f32.mrb[0].mxu0
    %v4828 = vadd.f32 0.0, %v4827
    %4829 = vmatprep.mubr.f32.mxu0 0.0
    %4830 = vmatmul.mubr.f32.gmra.mrb[0].mxu0 %v3342
    %v4831 = vpop.f32.mrb[0].mxu0
    %v4832 = vadd.f32 0.0, %v4831
    %v4833 = vpop.f32.mrb[0].mxu0
    %v4834 = vadd.f32 0.0, %v4833
    %4835 = vdwg.mxu0
    %4836 = vmatprep.subr.mxu0 %v1276
    %4837 = vmatpush1.msra.mxu0 %v1275
    %4838 = vmatprep.subr.mxu0 %v1282
    %4839 = vmatpush1.msra.mxu0 %v1281
    %4840 = vmatprep.subr.mxu0 %v1288
    %4841 = vmatpush1.msra.mxu0 %v1287
    %4842 = vmatprep.subr.mxu0 %v1325
    %4843 = vmatpush1.msra.mxu0 %v1322
    %4844 = vmatprep.subr.mxu0 0.0
    %4845 = vmatpush1.msra.mxu0 0.0
    %4846 = vmatprep.subr.mxu0 0.0
    %4847 = vmatpush1.msra.mxu0 0.0
    %4848 = vmatprep.subr.mxu0 0.0
    %4849 = vmatpush1.msra.mxu0 0.0
    %4850 = vmatprep.subr.mxu0 0.0
    %4851 = vmatpush1.msra.mxu0 0.0
    %4852 = vmatprep.subr.mxu0 0.0
    %4853 = vmatpush1.msra.mxu0 0.0
    %4854 = vmatprep.subr.mxu0 0.0
    %4855 = vmatpush1.msra.mxu0 0.0
    %4856 = vmatprep.subr.mxu0 0.0
    %4857 = vmatpush1.msra.mxu0 0.0
    %4858 = vmatprep.subr.mxu0 0.0
    %4859 = vmatpush1.msra.mxu0 0.0
    %4860 = vmatprep.subr.mxu0 0.0
    %4861 = vmatpush1.msra.mxu0 0.0
    %4862 = vmatprep.subr.mxu0 0.0
    %4863 = vmatpush1.msra.mxu0 0.0
    %4864 = vmatprep.subr.mxu0 0.0
    %4865 = vmatpush1.msra.mxu0 0.0
    %4866 = vmatprep.subr.mxu0 0.0
    %4867 = vmatpush1.msra.mxu0 0.0
    %4868 = vmatprep.subr.mxu0 0.0
    %4869 = vmatpush1.msra.mxu0 0.0
    %4870 = vmatprep.subr.mxu0 0.0
    %4871 = vmatpush1.msra.mxu0 0.0
    %4872 = vmatprep.subr.mxu0 0.0
    %4873 = vmatpush1.msra.mxu0 0.0
    %4874 = vmatprep.subr.mxu0 0.0
    %4875 = vmatpush1.msra.mxu0 0.0
    %4876 = vmatprep.subr.mxu0 0.0
    %4877 = vmatpush1.msra.mxu0 0.0
    %4878 = vmatprep.subr.mxu0 0.0
    %4879 = vmatpush1.msra.mxu0 0.0
    %4880 = vmatprep.subr.mxu0 0.0
    %4881 = vmatpush1.msra.mxu0 0.0
    %4882 = vmatprep.subr.mxu0 0.0
    %4883 = vmatpush1.msra.mxu0 0.0
    %4884 = vmatprep.subr.mxu0 0.0
    %4885 = vmatpush1.msra.mxu0 0.0
    %4886 = vmatprep.subr.mxu0 0.0
    %4887 = vmatpush1.msra.mxu0 0.0
    %4888 = vmatprep.subr.mxu0 0.0
    %4889 = vmatpush1.msra.mxu0 0.0
    %4890 = vmatprep.subr.mxu0 0.0
    %4891 = vmatpush1.msra.mxu0 0.0
    %4892 = vmatprep.subr.mxu0 0.0
    %4893 = vmatpush1.msra.mxu0 0.0
    %4894 = vmatprep.subr.mxu0 0.0
    %4895 = vmatpush1.msra.mxu0 0.0
    %4896 = vmatprep.subr.mxu0 0.0
    %4897 = vmatpush1.msra.mxu0 0.0
    %4898 = vmatprep.subr.mxu0 0.0
    %4899 = vmatpush1.msra.mxu0 0.0
    %4900 = vmatprep.mubr.f32.mxu0 0.0
    %4901 = vmatmul.mubr.f32.gmra.mrb[0].mxu0 %v197
    %v4902 = vpop.f32.mrb[0].mxu0
    %v4903 = vadd.f32 0.0, %v4902
    %v4904 = vpop.f32.mrb[0].mxu0
    %v4905 = vadd.f32 0.0, %v4904
    %4906 = vmatprep.mubr.f32.mxu0 0.0
    %4907 = vmatmul.mubr.f32.gmra.mrb[0].mxu0 %v200
    %v4908 = vpop.f32.mrb[0].mxu0
    %v4909 = vadd.f32 0.0, %v4908
    %v4910 = vpop.f32.mrb[0].mxu0
    %v4911 = vadd.f32 0.0, %v4910
    %4912 = vmatprep.mubr.f32.mxu0 0.0
    %4913 = vmatmul.mubr.f32.gmra.mrb[0].mxu0 %v203
    %v4914 = vpop.f32.mrb[0].mxu0
    %v4915 = vadd.f32 0.0, %v4914
    %v4916 = vpop.f32.mrb[0].mxu0
    %v4917 = vadd.f32 0.0, %v4916
    %4918 = vmatprep.mubr.f32.mxu0 0.0
    %4919 = vmatmul.mubr.f32.gmra.mrb[0].mxu0 %v206
    %v4920 = vpop.f32.mrb[0].mxu0
    %v4921 = vadd.f32 0.0, %v4920
    %v4922 = vpop.f32.mrb[0].mxu0
    %v4923 = vadd.f32 0.0, %v4922
    %4924 = vmatprep.mubr.f32.mxu0 0.0
    %4925 = vmatmul.mubr.f32.gmra.mrb[0].mxu0 %v209
    %v4926 = vpop.f32.mrb[0].mxu0
    %v4927 = vadd.f32 0.0, %v4926
    %v4928 = vpop.f32.mrb[0].mxu0
    %v4929 = vadd.f32 0.0, %v4928
    %4930 = vmatprep.mubr.f32.mxu0 0.0
    %4931 = vmatmul.mubr.f32.gmra.mrb[0].mxu0 %v3342
    %v4932 = vpop.f32.mrb[0].mxu0
    %v4933 = vadd.f32 0.0, %v4932
    %v4934 = vpop.f32.mrb[0].mxu0
    %v4935 = vadd.f32 0.0, %v4934
    %4936 = vdwg.mxu0
    %4937 = vmatprep.subr.mxu0 %v1278
    %4938 = vmatpush1.msra.mxu0 %v1277
    %4939 = vmatprep.subr.mxu0 %v1284
    %4940 = vmatpush1.msra.mxu0 %v1283
    %4941 = vmatprep.subr.mxu0 %v1290
    %4942 = vmatpush1.msra.mxu0 %v1289
    %4943 = vmatprep.subr.mxu0 %v1331
    %4944 = vmatpush1.msra.mxu0 %v1328
    %4945 = vmatprep.subr.mxu0 0.0
    %4946 = vmatpush1.msra.mxu0 0.0
    %4947 = vmatprep.subr.mxu0 0.0
    %4948 = vmatpush1.msra.mxu0 0.0
    %4949 = vmatprep.subr.mxu0 0.0
    %4950 = vmatpush1.msra.mxu0 0.0
    %4951 = vmatprep.subr.mxu0 0.0
    %4952 = vmatpush1.msra.mxu0 0.0
    %4953 = vmatprep.subr.mxu0 0.0
    %4954 = vmatpush1.msra.mxu0 0.0
    %4955 = vmatprep.subr.mxu0 0.0
    %4956 = vmatpush1.msra.mxu0 0.0
    %4957 = vmatprep.subr.mxu0 0.0
    %4958 = vmatpush1.msra.mxu0 0.0
    %4959 = vmatprep.subr.mxu0 0.0
    %4960 = vmatpush1.msra.mxu0 0.0
    %4961 = vmatprep.subr.mxu0 0.0
    %4962 = vmatpush1.msra.mxu0 0.0
    %4963 = vmatprep.subr.mxu0 0.0
    %4964 = vmatpush1.msra.mxu0 0.0
    %4965 = vmatprep.subr.mxu0 0.0
    %4966 = vmatpush1.msra.mxu0 0.0
    %4967 = vmatprep.subr.mxu0 0.0
    %4968 = vmatpush1.msra.mxu0 0.0
    %4969 = vmatprep.subr.mxu0 0.0
    %4970 = vmatpush1.msra.mxu0 0.0
    %4971 = vmatprep.subr.mxu0 0.0
    %4972 = vmatpush1.msra.mxu0 0.0
    %4973 = vmatprep.subr.mxu0 0.0
    %4974 = vmatpush1.msra.mxu0 0.0
    %4975 = vmatprep.subr.mxu0 0.0
    %4976 = vmatpush1.msra.mxu0 0.0
    %4977 = vmatprep.subr.mxu0 0.0
    %4978 = vmatpush1.msra.mxu0 0.0
    %4979 = vmatprep.subr.mxu0 0.0
    %4980 = vmatpush1.msra.mxu0 0.0
    %4981 = vmatprep.subr.mxu0 0.0
    %4982 = vmatpush1.msra.mxu0 0.0
    %4983 = vmatprep.subr.mxu0 0.0
    %4984 = vmatpush1.msra.mxu0 0.0
    %4985 = vmatprep.subr.mxu0 0.0
    %4986 = vmatpush1.msra.mxu0 0.0
    %4987 = vmatprep.subr.mxu0 0.0
    %4988 = vmatpush1.msra.mxu0 0.0
    %4989 = vmatprep.subr.mxu0 0.0
    %4990 = vmatpush1.msra.mxu0 0.0
    %4991 = vmatprep.subr.mxu0 0.0
    %4992 = vmatpush1.msra.mxu0 0.0
    %4993 = vmatprep.subr.mxu0 0.0
    %4994 = vmatpush1.msra.mxu0 0.0
    %4995 = vmatprep.subr.mxu0 0.0
    %4996 = vmatpush1.msra.mxu0 0.0
    %4997 = vmatprep.subr.mxu0 0.0
    %4998 = vmatpush1.msra.mxu0 0.0
    %4999 = vmatprep.subr.mxu0 0.0
    %5000 = vmatpush1.msra.mxu0 0.0
    %5001 = vmatprep.mubr.f32.mxu0 0.0
    %5002 = vmatmul.mubr.f32.gmra.mrb[0].mxu0 %v197
    %v5003 = vpop.f32.mrb[0].mxu0
    %v5004 = vadd.f32 0.0, %v5003
    %v5005 = vpop.f32.mrb[0].mxu0
    %v5006 = vadd.f32 0.0, %v5005
    %5007 = vmatprep.mubr.f32.mxu0 0.0
    %5008 = vmatmul.mubr.f32.gmra.mrb[0].mxu0 %v200
    %v5009 = vpop.f32.mrb[0].mxu0
    %v5010 = vadd.f32 0.0, %v5009
    %v5011 = vpop.f32.mrb[0].mxu0
    %v5012 = vadd.f32 0.0, %v5011
    %5013 = vmatprep.mubr.f32.mxu0 0.0
    %5014 = vmatmul.mubr.f32.gmra.mrb[0].mxu0 %v203
    %v5015 = vpop.f32.mrb[0].mxu0
    %v5016 = vadd.f32 0.0, %v5015
    %v5017 = vpop.f32.mrb[0].mxu0
    %v5018 = vadd.f32 0.0, %v5017
    %5019 = vmatprep.mubr.f32.mxu0 0.0
    %5020 = vmatmul.mubr.f32.gmra.mrb[0].mxu0 %v206
    %v5021 = vpop.f32.mrb[0].mxu0
    %v5022 = vadd.f32 0.0, %v5021
    %v5023 = vpop.f32.mrb[0].mxu0
    %v5024 = vadd.f32 0.0, %v5023
    %5025 = vmatprep.mubr.f32.mxu0 0.0
    %5026 = vmatmul.mubr.f32.gmra.mrb[0].mxu0 %v209
    %v5027 = vpop.f32.mrb[0].mxu0
    %v5028 = vadd.f32 0.0, %v5027
    %v5029 = vpop.f32.mrb[0].mxu0
    %v5030 = vadd.f32 0.0, %v5029
    %5031 = vmatprep.mubr.f32.mxu0 0.0
    %5032 = vmatmul.mubr.f32.gmra.mrb[0].mxu0 %v3342
    %v5033 = vpop.f32.mrb[0].mxu0
    %v5034 = vadd.f32 0.0, %v5033
    %v5035 = vpop.f32.mrb[0].mxu0
    %v5036 = vadd.f32 0.0, %v5035
    %5037 = vdwg.mxu0
    %v5038 = vadd.f32 %v4699, %v4802
    %v5039 = vadd.f32 %v4700, %v4804
    %v5040 = vadd.f32 %v4701, %v4903
    %v5041 = vadd.f32 %v4702, %v4905
    %v5042 = vadd.f32 %v4703, %v5004
    %v5043 = vadd.f32 %v4704, %v5006
    %v5044 = vadd.f32 %v4705, %v4808
    %v5045 = vadd.f32 %v4706, %v4810
    %v5046 = vadd.f32 %v4707, %v4909
    %v5047 = vadd.f32 %v4708, %v4911
    %v5048 = vadd.f32 %v4709, %v5010
    %v5049 = vadd.f32 %v4710, %v5012
    %v5050 = vadd.f32 %v4711, %v4814
    %v5051 = vadd.f32 %v4712, %v4816
    %v5052 = vadd.f32 %v4713, %v4915
    %v5053 = vadd.f32 %v4714, %v4917
    %v5054 = vadd.f32 %v4715, %v5016
    %v5055 = vadd.f32 %v4716, %v5018
    %v5056 = vadd.f32 %v4717, %v4820
    %v5057 = vadd.f32 %v4718, %v4822
    %v5058 = vadd.f32 %v4719, %v4921
    %v5059 = vadd.f32 %v4720, %v4923
    %v5060 = vadd.f32 %v4721, %v5022
    %v5061 = vadd.f32 %v4722, %v5024
    %v5062 = vadd.f32 %v4723, %v4826
    %v5063 = vadd.f32 %v4724, %v4828
    %v5064 = vadd.f32 %v4725, %v4927
    %v5065 = vadd.f32 %v4726, %v4929
    %v5066 = vadd.f32 %v4727, %v5028
    %v5067 = vadd.f32 %v4728, %v5030
    %v5068 = vadd.f32 %v4729, %v4832
    %v5069 = vadd.f32 %v4730, %v4834
    %v5070 = vadd.f32 %v4731, %v4933
    %v5071 = vadd.f32 %v4732, %v4935
    %v5072 = vadd.f32 %v4733, %v5034
    %v5073 = vadd.f32 %v4734, %v5036
    %v5075 = vsel %vm192, %v135, 0
    %5077 = vmatprep.subr.mxu0 %v1674
    %5078 = vmatpush1.msra.mxu0 %v1673
    %5079 = vmatprep.subr.mxu0 %v1680
    %5080 = vmatpush1.msra.mxu0 %v1679
    %5081 = vmatprep.subr.mxu0 %v1686
    %5082 = vmatpush1.msra.mxu0 %v1685
    %5083 = vmatprep.subr.mxu0 %v1704
    %5084 = vmatpush1.msra.mxu0 %v1701
    %5085 = vmatprep.subr.mxu0 0.0
    %5086 = vmatpush1.msra.mxu0 0.0
    %5087 = vmatprep.subr.mxu0 0.0
    %5088 = vmatpush1.msra.mxu0 0.0
    %5089 = vmatprep.subr.mxu0 0.0
    %5090 = vmatpush1.msra.mxu0 0.0
    %5091 = vmatprep.subr.mxu0 0.0
    %5092 = vmatpush1.msra.mxu0 0.0
    %5093 = vmatprep.subr.mxu0 0.0
    %5094 = vmatpush1.msra.mxu0 0.0
    %5095 = vmatprep.subr.mxu0 0.0
    %5096 = vmatpush1.msra.mxu0 0.0
    %5097 = vmatprep.subr.mxu0 0.0
    %5098 = vmatpush1.msra.mxu0 0.0
    %5099 = vmatprep.subr.mxu0 0.0
    %5100 = vmatpush1.msra.mxu0 0.0
    %5101 = vmatprep.subr.mxu0 0.0
    %5102 = vmatpush1.msra.mxu0 0.0
    %5103 = vmatprep.subr.mxu0 0.0
    %5104 = vmatpush1.msra.mxu0 0.0
    %5105 = vmatprep.subr.mxu0 0.0
    %5106 = vmatpush1.msra.mxu0 0.0
    %5107 = vmatprep.subr.mxu0 0.0
    %5108 = vmatpush1.msra.mxu0 0.0
    %5109 = vmatprep.subr.mxu0 0.0
    %5110 = vmatpush1.msra.mxu0 0.0
    %5111 = vmatprep.subr.mxu0 0.0
    %5112 = vmatpush1.msra.mxu0 0.0
    %5113 = vmatprep.subr.mxu0 0.0
    %5114 = vmatpush1.msra.mxu0 0.0
    %5115 = vmatprep.subr.mxu0 0.0
    %5116 = vmatpush1.msra.mxu0 0.0
    %5117 = vmatprep.subr.mxu0 0.0
    %5118 = vmatpush1.msra.mxu0 0.0
    %5119 = vmatprep.subr.mxu0 0.0
    %5120 = vmatpush1.msra.mxu0 0.0
    %5121 = vmatprep.subr.mxu0 0.0
    %5122 = vmatpush1.msra.mxu0 0.0
    %5123 = vmatprep.subr.mxu0 0.0
    %5124 = vmatpush1.msra.mxu0 0.0
    %5125 = vmatprep.subr.mxu0 0.0
    %5126 = vmatpush1.msra.mxu0 0.0
    %5127 = vmatprep.subr.mxu0 0.0
    %5128 = vmatpush1.msra.mxu0 0.0
    %5129 = vmatprep.subr.mxu0 0.0
    %5130 = vmatpush1.msra.mxu0 0.0
    %5131 = vmatprep.subr.mxu0 0.0
    %5132 = vmatpush1.msra.mxu0 0.0
    %5133 = vmatprep.subr.mxu0 0.0
    %5134 = vmatpush1.msra.mxu0 0.0
    %5135 = vmatprep.subr.mxu0 0.0
    %5136 = vmatpush1.msra.mxu0 0.0
    %5137 = vmatprep.subr.mxu0 0.0
    %5138 = vmatpush1.msra.mxu0 0.0
    %5139 = vmatprep.subr.mxu0 0.0
    %5140 = vmatpush1.msra.mxu0 0.0
    %5141 = vmatprep.mubr.f32.mxu0 0.0
    %5142 = vmatmul.mubr.f32.gmra.mrb[0].mxu0 %v901
    %v5143 = vpop.f32.mrb[0].mxu0
    %v5144 = vadd.f32 0.0, %v5143
    %v5145 = vpop.f32.mrb[0].mxu0
    %v5146 = vadd.f32 0.0, %v5145
    %5147 = vmatprep.mubr.f32.mxu0 0.0
    %5148 = vmatmul.mubr.f32.gmra.mrb[0].mxu0 %v904
    %v5149 = vpop.f32.mrb[0].mxu0
    %v5150 = vadd.f32 0.0, %v5149
    %v5151 = vpop.f32.mrb[0].mxu0
    %v5152 = vadd.f32 0.0, %v5151
    %5153 = vmatprep.mubr.f32.mxu0 0.0
    %5154 = vmatmul.mubr.f32.gmra.mrb[0].mxu0 %v907
    %v5155 = vpop.f32.mrb[0].mxu0
    %v5156 = vadd.f32 0.0, %v5155
    %v5157 = vpop.f32.mrb[0].mxu0
    %v5158 = vadd.f32 0.0, %v5157
    %5159 = vmatprep.mubr.f32.mxu0 0.0
    %5160 = vmatmul.mubr.f32.gmra.mrb[0].mxu0 %v910
    %v5161 = vpop.f32.mrb[0].mxu0
    %v5162 = vadd.f32 0.0, %v5161
    %v5163 = vpop.f32.mrb[0].mxu0
    %v5164 = vadd.f32 0.0, %v5163
    %5165 = vmatprep.mubr.f32.mxu0 0.0
    %5166 = vmatmul.mubr.f32.gmra.mrb[0].mxu0 %v913
    %v5167 = vpop.f32.mrb[0].mxu0
    %v5168 = vadd.f32 0.0, %v5167
    %v5169 = vpop.f32.mrb[0].mxu0
    %v5170 = vadd.f32 0.0, %v5169
    %5171 = vmatprep.mubr.f32.mxu0 0.0
    %5172 = vmatmul.mubr.f32.gmra.mrb[0].mxu0 %v5075
    %v5173 = vpop.f32.mrb[0].mxu0
    %v5174 = vadd.f32 0.0, %v5173
    %v5175 = vpop.f32.mrb[0].mxu0
    %v5176 = vadd.f32 0.0, %v5175
    %5177 = vdwg.mxu0
    %5178 = vmatprep.subr.mxu0 %v1676
    %5179 = vmatpush1.msra.mxu0 %v1675
    %5180 = vmatprep.subr.mxu0 %v1682
    %5181 = vmatpush1.msra.mxu0 %v1681
    %5182 = vmatprep.subr.mxu0 %v1688
    %5183 = vmatpush1.msra.mxu0 %v1687
    %5184 = vmatprep.subr.mxu0 %v1710
    %5185 = vmatpush1.msra.mxu0 %v1707
    %5186 = vmatprep.subr.mxu0 0.0
    %5187 = vmatpush1.msra.mxu0 0.0
    %5188 = vmatprep.subr.mxu0 0.0
    %5189 = vmatpush1.msra.mxu0 0.0
    %5190 = vmatprep.subr.mxu0 0.0
    %5191 = vmatpush1.msra.mxu0 0.0
    %5192 = vmatprep.subr.mxu0 0.0
    %5193 = vmatpush1.msra.mxu0 0.0
    %5194 = vmatprep.subr.mxu0 0.0
    %5195 = vmatpush1.msra.mxu0 0.0
    %5196 = vmatprep.subr.mxu0 0.0
    %5197 = vmatpush1.msra.mxu0 0.0
    %5198 = vmatprep.subr.mxu0 0.0
    %5199 = vmatpush1.msra.mxu0 0.0
    %5200 = vmatprep.subr.mxu0 0.0
    %5201 = vmatpush1.msra.mxu0 0.0
    %5202 = vmatprep.subr.mxu0 0.0
    %5203 = vmatpush1.msra.mxu0 0.0
    %5204 = vmatprep.subr.mxu0 0.0
    %5205 = vmatpush1.msra.mxu0 0.0
    %5206 = vmatprep.subr.mxu0 0.0
    %5207 = vmatpush1.msra.mxu0 0.0
    %5208 = vmatprep.subr.mxu0 0.0
    %5209 = vmatpush1.msra.mxu0 0.0
    %5210 = vmatprep.subr.mxu0 0.0
    %5211 = vmatpush1.msra.mxu0 0.0
    %5212 = vmatprep.subr.mxu0 0.0
    %5213 = vmatpush1.msra.mxu0 0.0
    %5214 = vmatprep.subr.mxu0 0.0
    %5215 = vmatpush1.msra.mxu0 0.0
    %5216 = vmatprep.subr.mxu0 0.0
    %5217 = vmatpush1.msra.mxu0 0.0
    %5218 = vmatprep.subr.mxu0 0.0
    %5219 = vmatpush1.msra.mxu0 0.0
    %5220 = vmatprep.subr.mxu0 0.0
    %5221 = vmatpush1.msra.mxu0 0.0
    %5222 = vmatprep.subr.mxu0 0.0
    %5223 = vmatpush1.msra.mxu0 0.0
    %5224 = vmatprep.subr.mxu0 0.0
    %5225 = vmatpush1.msra.mxu0 0.0
    %5226 = vmatprep.subr.mxu0 0.0
    %5227 = vmatpush1.msra.mxu0 0.0
    %5228 = vmatprep.subr.mxu0 0.0
    %5229 = vmatpush1.msra.mxu0 0.0
    %5230 = vmatprep.subr.mxu0 0.0
    %5231 = vmatpush1.msra.mxu0 0.0
    %5232 = vmatprep.subr.mxu0 0.0
    %5233 = vmatpush1.msra.mxu0 0.0
    %5234 = vmatprep.subr.mxu0 0.0
    %5235 = vmatpush1.msra.mxu0 0.0
    %5236 = vmatprep.subr.mxu0 0.0
    %5237 = vmatpush1.msra.mxu0 0.0
    %5238 = vmatprep.subr.mxu0 0.0
    %5239 = vmatpush1.msra.mxu0 0.0
    %5240 = vmatprep.subr.mxu0 0.0
    %5241 = vmatpush1.msra.mxu0 0.0
    %5242 = vmatprep.mubr.f32.mxu0 0.0
    %5243 = vmatmul.mubr.f32.gmra.mrb[0].mxu0 %v901
    %v5244 = vpop.f32.mrb[0].mxu0
    %v5245 = vadd.f32 0.0, %v5244
    %v5246 = vpop.f32.mrb[0].mxu0
    %v5247 = vadd.f32 0.0, %v5246
    %5248 = vmatprep.mubr.f32.mxu0 0.0
    %5249 = vmatmul.mubr.f32.gmra.mrb[0].mxu0 %v904
    %v5250 = vpop.f32.mrb[0].mxu0
    %v5251 = vadd.f32 0.0, %v5250
    %v5252 = vpop.f32.mrb[0].mxu0
    %v5253 = vadd.f32 0.0, %v5252
    %5254 = vmatprep.mubr.f32.mxu0 0.0
    %5255 = vmatmul.mubr.f32.gmra.mrb[0].mxu0 %v907
    %v5256 = vpop.f32.mrb[0].mxu0
    %v5257 = vadd.f32 0.0, %v5256
    %v5258 = vpop.f32.mrb[0].mxu0
    %v5259 = vadd.f32 0.0, %v5258
    %5260 = vmatprep.mubr.f32.mxu0 0.0
    %5261 = vmatmul.mubr.f32.gmra.mrb[0].mxu0 %v910
    %v5262 = vpop.f32.mrb[0].mxu0
    %v5263 = vadd.f32 0.0, %v5262
    %v5264 = vpop.f32.mrb[0].mxu0
    %v5265 = vadd.f32 0.0, %v5264
    %5266 = vmatprep.mubr.f32.mxu0 0.0
    %5267 = vmatmul.mubr.f32.gmra.mrb[0].mxu0 %v913
    %v5268 = vpop.f32.mrb[0].mxu0
    %v5269 = vadd.f32 0.0, %v5268
    %v5270 = vpop.f32.mrb[0].mxu0
    %v5271 = vadd.f32 0.0, %v5270
    %5272 = vmatprep.mubr.f32.mxu0 0.0
    %5273 = vmatmul.mubr.f32.gmra.mrb[0].mxu0 %v5075
    %v5274 = vpop.f32.mrb[0].mxu0
    %v5275 = vadd.f32 0.0, %v5274
    %v5276 = vpop.f32.mrb[0].mxu0
    %v5277 = vadd.f32 0.0, %v5276
    %5278 = vdwg.mxu0
    %5279 = vmatprep.subr.mxu0 %v1678
    %5280 = vmatpush1.msra.mxu0 %v1677
    %5281 = vmatprep.subr.mxu0 %v1684
    %5282 = vmatpush1.msra.mxu0 %v1683
    %5283 = vmatprep.subr.mxu0 %v1690
    %5284 = vmatpush1.msra.mxu0 %v1689
    %5285 = vmatprep.subr.mxu0 %v1716
    %5286 = vmatpush1.msra.mxu0 %v1713
    %5287 = vmatprep.subr.mxu0 0.0
    %5288 = vmatpush1.msra.mxu0 0.0
    %5289 = vmatprep.subr.mxu0 0.0
    %5290 = vmatpush1.msra.mxu0 0.0
    %5291 = vmatprep.subr.mxu0 0.0
    %5292 = vmatpush1.msra.mxu0 0.0
    %5293 = vmatprep.subr.mxu0 0.0
    %5294 = vmatpush1.msra.mxu0 0.0
    %5295 = vmatprep.subr.mxu0 0.0
    %5296 = vmatpush1.msra.mxu0 0.0
    %5297 = vmatprep.subr.mxu0 0.0
    %5298 = vmatpush1.msra.mxu0 0.0
    %5299 = vmatprep.subr.mxu0 0.0
    %5300 = vmatpush1.msra.mxu0 0.0
    %5301 = vmatprep.subr.mxu0 0.0
    %5302 = vmatpush1.msra.mxu0 0.0
    %5303 = vmatprep.subr.mxu0 0.0
    %5304 = vmatpush1.msra.mxu0 0.0
    %5305 = vmatprep.subr.mxu0 0.0
    %5306 = vmatpush1.msra.mxu0 0.0
    %5307 = vmatprep.subr.mxu0 0.0
    %5308 = vmatpush1.msra.mxu0 0.0
    %5309 = vmatprep.subr.mxu0 0.0
    %5310 = vmatpush1.msra.mxu0 0.0
    %5311 = vmatprep.subr.mxu0 0.0
    %5312 = vmatpush1.msra.mxu0 0.0
    %5313 = vmatprep.subr.mxu0 0.0
    %5314 = vmatpush1.msra.mxu0 0.0
    %5315 = vmatprep.subr.mxu0 0.0
    %5316 = vmatpush1.msra.mxu0 0.0
    %5317 = vmatprep.subr.mxu0 0.0
    %5318 = vmatpush1.msra.mxu0 0.0
    %5319 = vmatprep.subr.mxu0 0.0
    %5320 = vmatpush1.msra.mxu0 0.0
    %5321 = vmatprep.subr.mxu0 0.0
    %5322 = vmatpush1.msra.mxu0 0.0
    %5323 = vmatprep.subr.mxu0 0.0
    %5324 = vmatpush1.msra.mxu0 0.0
    %5325 = vmatprep.subr.mxu0 0.0
    %5326 = vmatpush1.msra.mxu0 0.0
    %5327 = vmatprep.subr.mxu0 0.0
    %5328 = vmatpush1.msra.mxu0 0.0
    %5329 = vmatprep.subr.mxu0 0.0
    %5330 = vmatpush1.msra.mxu0 0.0
    %5331 = vmatprep.subr.mxu0 0.0
    %5332 = vmatpush1.msra.mxu0 0.0
    %5333 = vmatprep.subr.mxu0 0.0
    %5334 = vmatpush1.msra.mxu0 0.0
    %5335 = vmatprep.subr.mxu0 0.0
    %5336 = vmatpush1.msra.mxu0 0.0
    %5337 = vmatprep.subr.mxu0 0.0
    %5338 = vmatpush1.msra.mxu0 0.0
    %5339 = vmatprep.subr.mxu0 0.0
    %5340 = vmatpush1.msra.mxu0 0.0
    %5341 = vmatprep.subr.mxu0 0.0
    %5342 = vmatpush1.msra.mxu0 0.0
    %5343 = vmatprep.mubr.f32.mxu0 0.0
    %5344 = vmatmul.mubr.f32.gmra.mrb[0].mxu0 %v901
    %v5345 = vpop.f32.mrb[0].mxu0
    %v5346 = vadd.f32 0.0, %v5345
    %v5347 = vpop.f32.mrb[0].mxu0
    %v5348 = vadd.f32 0.0, %v5347
    %5349 = vmatprep.mubr.f32.mxu0 0.0
    %5350 = vmatmul.mubr.f32.gmra.mrb[0].mxu0 %v904
    %v5351 = vpop.f32.mrb[0].mxu0
    %v5352 = vadd.f32 0.0, %v5351
    %v5353 = vpop.f32.mrb[0].mxu0
    %v5354 = vadd.f32 0.0, %v5353
    %5355 = vmatprep.mubr.f32.mxu0 0.0
    %5356 = vmatmul.mubr.f32.gmra.mrb[0].mxu0 %v907
    %v5357 = vpop.f32.mrb[0].mxu0
    %v5358 = vadd.f32 0.0, %v5357
    %v5359 = vpop.f32.mrb[0].mxu0
    %v5360 = vadd.f32 0.0, %v5359
    %5361 = vmatprep.mubr.f32.mxu0 0.0
    %5362 = vmatmul.mubr.f32.gmra.mrb[0].mxu0 %v910
    %v5363 = vpop.f32.mrb[0].mxu0
    %v5364 = vadd.f32 0.0, %v5363
    %v5365 = vpop.f32.mrb[0].mxu0
    %v5366 = vadd.f32 0.0, %v5365
    %5367 = vmatprep.mubr.f32.mxu0 0.0
    %5368 = vmatmul.mubr.f32.gmra.mrb[0].mxu0 %v913
    %v5369 = vpop.f32.mrb[0].mxu0
    %v5370 = vadd.f32 0.0, %v5369
    %v5371 = vpop.f32.mrb[0].mxu0
    %v5372 = vadd.f32 0.0, %v5371
    %5373 = vmatprep.mubr.f32.mxu0 0.0
    %5374 = vmatmul.mubr.f32.gmra.mrb[0].mxu0 %v5075
    %v5375 = vpop.f32.mrb[0].mxu0
    %v5376 = vadd.f32 0.0, %v5375
    %v5377 = vpop.f32.mrb[0].mxu0
    %v5378 = vadd.f32 0.0, %v5377
    %5379 = vdwg.mxu0
    %v5380 = vadd.f32 %v5038, %v5144
    %v5381 = vadd.f32 %v5039, %v5146
    %v5382 = vadd.f32 %v5040, %v5245
    %v5383 = vadd.f32 %v5041, %v5247
    %v5384 = vadd.f32 %v5042, %v5346
    %v5385 = vadd.f32 %v5043, %v5348
    %v5386 = vadd.f32 %v5044, %v5150
    %v5387 = vadd.f32 %v5045, %v5152
    %v5388 = vadd.f32 %v5046, %v5251
    %v5389 = vadd.f32 %v5047, %v5253
    %v5390 = vadd.f32 %v5048, %v5352
    %v5391 = vadd.f32 %v5049, %v5354
    %v5392 = vadd.f32 %v5050, %v5156
    %v5393 = vadd.f32 %v5051, %v5158
    %v5394 = vadd.f32 %v5052, %v5257
    %v5395 = vadd.f32 %v5053, %v5259
    %v5396 = vadd.f32 %v5054, %v5358
    %v5397 = vadd.f32 %v5055, %v5360
    %v5398 = vadd.f32 %v5056, %v5162
    %v5399 = vadd.f32 %v5057, %v5164
    %v5400 = vadd.f32 %v5058, %v5263
    %v5401 = vadd.f32 %v5059, %v5265
    %v5402 = vadd.f32 %v5060, %v5364
    %v5403 = vadd.f32 %v5061, %v5366
    %v5404 = vadd.f32 %v5062, %v5168
    %v5405 = vadd.f32 %v5063, %v5170
    %v5406 = vadd.f32 %v5064, %v5269
    %v5407 = vadd.f32 %v5065, %v5271
    %v5408 = vadd.f32 %v5066, %v5370
    %v5409 = vadd.f32 %v5067, %v5372
    %v5410 = vadd.f32 %v5068, %v5174
    %v5411 = vadd.f32 %v5069, %v5176
    %v5412 = vadd.f32 %v5070, %v5275
    %v5413 = vadd.f32 %v5071, %v5277
    %v5414 = vadd.f32 %v5072, %v5376
    %v5415 = vadd.f32 %v5073, %v5378
    %5416 = vmatprep.subr.mxu0 %v169
    %5417 = vmatpush1.msra.mxu0 %v168
    %5418 = vmatprep.subr.mxu0 %v175
    %5419 = vmatpush1.msra.mxu0 %v174
    %5420 = vmatprep.subr.mxu0 %v181
    %5421 = vmatpush1.msra.mxu0 %v180
    %5422 = vmatprep.subr.mxu0 %v216
    %5423 = vmatpush1.msra.mxu0 %v213
    %5424 = vmatprep.subr.mxu0 0.0
    %5425 = vmatpush1.msra.mxu0 0.0
    %5426 = vmatprep.subr.mxu0 0.0
    %5427 = vmatpush1.msra.mxu0 0.0
    %5428 = vmatprep.subr.mxu0 0.0
    %5429 = vmatpush1.msra.mxu0 0.0
    %5430 = vmatprep.subr.mxu0 0.0
    %5431 = vmatpush1.msra.mxu0 0.0
    %5432 = vmatprep.subr.mxu0 0.0
    %5433 = vmatpush1.msra.mxu0 0.0
    %5434 = vmatprep.subr.mxu0 0.0
    %5435 = vmatpush1.msra.mxu0 0.0
    %5436 = vmatprep.subr.mxu0 0.0
    %5437 = vmatpush1.msra.mxu0 0.0
    %5438 = vmatprep.subr.mxu0 0.0
    %5439 = vmatpush1.msra.mxu0 0.0
    %5440 = vmatprep.subr.mxu0 0.0
    %5441 = vmatpush1.msra.mxu0 0.0
    %5442 = vmatprep.subr.mxu0 0.0
    %5443 = vmatpush1.msra.mxu0 0.0
    %5444 = vmatprep.subr.mxu0 0.0
    %5445 = vmatpush1.msra.mxu0 0.0
    %5446 = vmatprep.subr.mxu0 0.0
    %5447 = vmatpush1.msra.mxu0 0.0
    %5448 = vmatprep.subr.mxu0 0.0
    %5449 = vmatpush1.msra.mxu0 0.0
    %5450 = vmatprep.subr.mxu0 0.0
    %5451 = vmatpush1.msra.mxu0 0.0
    %5452 = vmatprep.subr.mxu0 0.0
    %5453 = vmatpush1.msra.mxu0 0.0
    %5454 = vmatprep.subr.mxu0 0.0
    %5455 = vmatpush1.msra.mxu0 0.0
    %5456 = vmatprep.subr.mxu0 0.0
    %5457 = vmatpush1.msra.mxu0 0.0
    %5458 = vmatprep.subr.mxu0 0.0
    %5459 = vmatpush1.msra.mxu0 0.0
    %5460 = vmatprep.subr.mxu0 0.0
    %5461 = vmatpush1.msra.mxu0 0.0
    %5462 = vmatprep.subr.mxu0 0.0
    %5463 = vmatpush1.msra.mxu0 0.0
    %5464 = vmatprep.subr.mxu0 0.0
    %5465 = vmatpush1.msra.mxu0 0.0
    %5466 = vmatprep.subr.mxu0 0.0
    %5467 = vmatpush1.msra.mxu0 0.0
    %5468 = vmatprep.subr.mxu0 0.0
    %5469 = vmatpush1.msra.mxu0 0.0
    %5470 = vmatprep.subr.mxu0 0.0
    %5471 = vmatpush1.msra.mxu0 0.0
    %5472 = vmatprep.subr.mxu0 0.0
    %5473 = vmatpush1.msra.mxu0 0.0
    %5474 = vmatprep.subr.mxu0 0.0
    %5475 = vmatpush1.msra.mxu0 0.0
    %5476 = vmatprep.subr.mxu0 0.0
    %5477 = vmatpush1.msra.mxu0 0.0
    %5478 = vmatprep.subr.mxu0 0.0
    %5479 = vmatpush1.msra.mxu0 0.0
    %5480 = vmatprep.mubr.f32.mxu0 0.0
    %5481 = vmatmul.mubr.f32.gmra.mrb[0].mxu0 %v537
    %v5482 = vpop.f32.mrb[0].mxu0
    %v5483 = vadd.f32 0.0, %v5482
    %v5484 = vpop.f32.mrb[0].mxu0
    %v5485 = vadd.f32 0.0, %v5484
    %5486 = vmatprep.mubr.f32.mxu0 0.0
    %5487 = vmatmul.mubr.f32.gmra.mrb[0].mxu0 %v540
    %v5488 = vpop.f32.mrb[0].mxu0
    %v5489 = vadd.f32 0.0, %v5488
    %v5490 = vpop.f32.mrb[0].mxu0
    %v5491 = vadd.f32 0.0, %v5490
    %5492 = vmatprep.mubr.f32.mxu0 0.0
    %5493 = vmatmul.mubr.f32.gmra.mrb[0].mxu0 %v543
    %v5494 = vpop.f32.mrb[0].mxu0
    %v5495 = vadd.f32 0.0, %v5494
    %v5496 = vpop.f32.mrb[0].mxu0
    %v5497 = vadd.f32 0.0, %v5496
    %5498 = vmatprep.mubr.f32.mxu0 0.0
    %5499 = vmatmul.mubr.f32.gmra.mrb[0].mxu0 %v546
    %v5500 = vpop.f32.mrb[0].mxu0
    %v5501 = vadd.f32 0.0, %v5500
    %v5502 = vpop.f32.mrb[0].mxu0
    %v5503 = vadd.f32 0.0, %v5502
    %5504 = vmatprep.mubr.f32.mxu0 0.0
    %5505 = vmatmul.mubr.f32.gmra.mrb[0].mxu0 %v549
    %v5506 = vpop.f32.mrb[0].mxu0
    %v5507 = vadd.f32 0.0, %v5506
    %v5508 = vpop.f32.mrb[0].mxu0
    %v5509 = vadd.f32 0.0, %v5508
    %5510 = vmatprep.mubr.f32.mxu0 0.0
    %5511 = vmatmul.mubr.f32.gmra.mrb[0].mxu0 %v1698
    %v5512 = vpop.f32.mrb[0].mxu0
    %v5513 = vadd.f32 0.0, %v5512
    %v5514 = vpop.f32.mrb[0].mxu0
    %v5515 = vadd.f32 0.0, %v5514
    %5516 = vdwg.mxu0
    %5517 = vmatprep.subr.mxu0 %v171
    %5518 = vmatpush1.msra.mxu0 %v170
    %5519 = vmatprep.subr.mxu0 %v177
    %5520 = vmatpush1.msra.mxu0 %v176
    %5521 = vmatprep.subr.mxu0 %v183
    %5522 = vmatpush1.msra.mxu0 %v182
    %5523 = vmatprep.subr.mxu0 %v222
    %5524 = vmatpush1.msra.mxu0 %v219
    %5525 = vmatprep.subr.mxu0 0.0
    %5526 = vmatpush1.msra.mxu0 0.0
    %5527 = vmatprep.subr.mxu0 0.0
    %5528 = vmatpush1.msra.mxu0 0.0
    %5529 = vmatprep.subr.mxu0 0.0
    %5530 = vmatpush1.msra.mxu0 0.0
    %5531 = vmatprep.subr.mxu0 0.0
    %5532 = vmatpush1.msra.mxu0 0.0
    %5533 = vmatprep.subr.mxu0 0.0
    %5534 = vmatpush1.msra.mxu0 0.0
    %5535 = vmatprep.subr.mxu0 0.0
    %5536 = vmatpush1.msra.mxu0 0.0
    %5537 = vmatprep.subr.mxu0 0.0
    %5538 = vmatpush1.msra.mxu0 0.0
    %5539 = vmatprep.subr.mxu0 0.0
    %5540 = vmatpush1.msra.mxu0 0.0
    %5541 = vmatprep.subr.mxu0 0.0
    %5542 = vmatpush1.msra.mxu0 0.0
    %5543 = vmatprep.subr.mxu0 0.0
    %5544 = vmatpush1.msra.mxu0 0.0
    %5545 = vmatprep.subr.mxu0 0.0
    %5546 = vmatpush1.msra.mxu0 0.0
    %5547 = vmatprep.subr.mxu0 0.0
    %5548 = vmatpush1.msra.mxu0 0.0
    %5549 = vmatprep.subr.mxu0 0.0
    %5550 = vmatpush1.msra.mxu0 0.0
    %5551 = vmatprep.subr.mxu0 0.0
    %5552 = vmatpush1.msra.mxu0 0.0
    %5553 = vmatprep.subr.mxu0 0.0
    %5554 = vmatpush1.msra.mxu0 0.0
    %5555 = vmatprep.subr.mxu0 0.0
    %5556 = vmatpush1.msra.mxu0 0.0
    %5557 = vmatprep.subr.mxu0 0.0
    %5558 = vmatpush1.msra.mxu0 0.0
    %5559 = vmatprep.subr.mxu0 0.0
    %5560 = vmatpush1.msra.mxu0 0.0
    %5561 = vmatprep.subr.mxu0 0.0
    %5562 = vmatpush1.msra.mxu0 0.0
    %5563 = vmatprep.subr.mxu0 0.0
    %5564 = vmatpush1.msra.mxu0 0.0
    %5565 = vmatprep.subr.mxu0 0.0
    %5566 = vmatpush1.msra.mxu0 0.0
    %5567 = vmatprep.subr.mxu0 0.0
    %5568 = vmatpush1.msra.mxu0 0.0
    %5569 = vmatprep.subr.mxu0 0.0
    %5570 = vmatpush1.msra.mxu0 0.0
    %5571 = vmatprep.subr.mxu0 0.0
    %5572 = vmatpush1.msra.mxu0 0.0
    %5573 = vmatprep.subr.mxu0 0.0
    %5574 = vmatpush1.msra.mxu0 0.0
    %5575 = vmatprep.subr.mxu0 0.0
    %5576 = vmatpush1.msra.mxu0 0.0
    %5577 = vmatprep.subr.mxu0 0.0
    %5578 = vmatpush1.msra.mxu0 0.0
    %5579 = vmatprep.subr.mxu0 0.0
    %5580 = vmatpush1.msra.mxu0 0.0
    %5581 = vmatprep.mubr.f32.mxu0 0.0
    %5582 = vmatmul.mubr.f32.gmra.mrb[0].mxu0 %v537
    %v5583 = vpop.f32.mrb[0].mxu0
    %v5584 = vadd.f32 0.0, %v5583
    %v5585 = vpop.f32.mrb[0].mxu0
    %v5586 = vadd.f32 0.0, %v5585
    %5587 = vmatprep.mubr.f32.mxu0 0.0
    %5588 = vmatmul.mubr.f32.gmra.mrb[0].mxu0 %v540
    %v5589 = vpop.f32.mrb[0].mxu0
    %v5590 = vadd.f32 0.0, %v5589
    %v5591 = vpop.f32.mrb[0].mxu0
    %v5592 = vadd.f32 0.0, %v5591
    %5593 = vmatprep.mubr.f32.mxu0 0.0
    %5594 = vmatmul.mubr.f32.gmra.mrb[0].mxu0 %v543
    %v5595 = vpop.f32.mrb[0].mxu0
    %v5596 = vadd.f32 0.0, %v5595
    %v5597 = vpop.f32.mrb[0].mxu0
    %v5598 = vadd.f32 0.0, %v5597
    %5599 = vmatprep.mubr.f32.mxu0 0.0
    %5600 = vmatmul.mubr.f32.gmra.mrb[0].mxu0 %v546
    %v5601 = vpop.f32.mrb[0].mxu0
    %v5602 = vadd.f32 0.0, %v5601
    %v5603 = vpop.f32.mrb[0].mxu0
    %v5604 = vadd.f32 0.0, %v5603
    %5605 = vmatprep.mubr.f32.mxu0 0.0
    %5606 = vmatmul.mubr.f32.gmra.mrb[0].mxu0 %v549
    %v5607 = vpop.f32.mrb[0].mxu0
    %v5608 = vadd.f32 0.0, %v5607
    %v5609 = vpop.f32.mrb[0].mxu0
    %v5610 = vadd.f32 0.0, %v5609
    %5611 = vmatprep.mubr.f32.mxu0 0.0
    %5612 = vmatmul.mubr.f32.gmra.mrb[0].mxu0 %v1698
    %v5613 = vpop.f32.mrb[0].mxu0
    %v5614 = vadd.f32 0.0, %v5613
    %v5615 = vpop.f32.mrb[0].mxu0
    %v5616 = vadd.f32 0.0, %v5615
    %5617 = vdwg.mxu0
    %5618 = vmatprep.subr.mxu0 %v173
    %5619 = vmatpush1.msra.mxu0 %v172
    %5620 = vmatprep.subr.mxu0 %v179
    %5621 = vmatpush1.msra.mxu0 %v178
    %5622 = vmatprep.subr.mxu0 %v185
    %5623 = vmatpush1.msra.mxu0 %v184
    %5624 = vmatprep.subr.mxu0 %v228
    %5625 = vmatpush1.msra.mxu0 %v225
    %5626 = vmatprep.subr.mxu0 0.0
    %5627 = vmatpush1.msra.mxu0 0.0
    %5628 = vmatprep.subr.mxu0 0.0
    %5629 = vmatpush1.msra.mxu0 0.0
    %5630 = vmatprep.subr.mxu0 0.0
    %5631 = vmatpush1.msra.mxu0 0.0
    %5632 = vmatprep.subr.mxu0 0.0
    %5633 = vmatpush1.msra.mxu0 0.0
    %5634 = vmatprep.subr.mxu0 0.0
    %5635 = vmatpush1.msra.mxu0 0.0
    %5636 = vmatprep.subr.mxu0 0.0
    %5637 = vmatpush1.msra.mxu0 0.0
    %5638 = vmatprep.subr.mxu0 0.0
    %5639 = vmatpush1.msra.mxu0 0.0
    %5640 = vmatprep.subr.mxu0 0.0
    %5641 = vmatpush1.msra.mxu0 0.0
    %5642 = vmatprep.subr.mxu0 0.0
    %5643 = vmatpush1.msra.mxu0 0.0
    %5644 = vmatprep.subr.mxu0 0.0
    %5645 = vmatpush1.msra.mxu0 0.0
    %5646 = vmatprep.subr.mxu0 0.0
    %5647 = vmatpush1.msra.mxu0 0.0
    %5648 = vmatprep.subr.mxu0 0.0
    %5649 = vmatpush1.msra.mxu0 0.0
    %5650 = vmatprep.subr.mxu0 0.0
    %5651 = vmatpush1.msra.mxu0 0.0
    %5652 = vmatprep.subr.mxu0 0.0
    %5653 = vmatpush1.msra.mxu0 0.0
    %5654 = vmatprep.subr.mxu0 0.0
    %5655 = vmatpush1.msra.mxu0 0.0
    %5656 = vmatprep.subr.mxu0 0.0
    %5657 = vmatpush1.msra.mxu0 0.0
    %5658 = vmatprep.subr.mxu0 0.0
    %5659 = vmatpush1.msra.mxu0 0.0
    %5660 = vmatprep.subr.mxu0 0.0
    %5661 = vmatpush1.msra.mxu0 0.0
    %5662 = vmatprep.subr.mxu0 0.0
    %5663 = vmatpush1.msra.mxu0 0.0
    %5664 = vmatprep.subr.mxu0 0.0
    %5665 = vmatpush1.msra.mxu0 0.0
    %5666 = vmatprep.subr.mxu0 0.0
    %5667 = vmatpush1.msra.mxu0 0.0
    %5668 = vmatprep.subr.mxu0 0.0
    %5669 = vmatpush1.msra.mxu0 0.0
    %5670 = vmatprep.subr.mxu0 0.0
    %5671 = vmatpush1.msra.mxu0 0.0
    %5672 = vmatprep.subr.mxu0 0.0
    %5673 = vmatpush1.msra.mxu0 0.0
    %5674 = vmatprep.subr.mxu0 0.0
    %5675 = vmatpush1.msra.mxu0 0.0
    %5676 = vmatprep.subr.mxu0 0.0
    %5677 = vmatpush1.msra.mxu0 0.0
    %5678 = vmatprep.subr.mxu0 0.0
    %5679 = vmatpush1.msra.mxu0 0.0
    %5680 = vmatprep.subr.mxu0 0.0
    %5681 = vmatpush1.msra.mxu0 0.0
    %5682 = vmatprep.mubr.f32.mxu0 0.0
    %5683 = vmatmul.mubr.f32.gmra.mrb[0].mxu0 %v537
    %v5684 = vpop.f32.mrb[0].mxu0
    %v5685 = vadd.f32 0.0, %v5684
    %v5686 = vpop.f32.mrb[0].mxu0
    %v5687 = vadd.f32 0.0, %v5686
    %5688 = vmatprep.mubr.f32.mxu0 0.0
    %5689 = vmatmul.mubr.f32.gmra.mrb[0].mxu0 %v540
    %v5690 = vpop.f32.mrb[0].mxu0
    %v5691 = vadd.f32 0.0, %v5690
    %v5692 = vpop.f32.mrb[0].mxu0
    %v5693 = vadd.f32 0.0, %v5692
    %5694 = vmatprep.mubr.f32.mxu0 0.0
    %5695 = vmatmul.mubr.f32.gmra.mrb[0].mxu0 %v543
    %v5696 = vpop.f32.mrb[0].mxu0
    %v5697 = vadd.f32 0.0, %v5696
    %v5698 = vpop.f32.mrb[0].mxu0
    %v5699 = vadd.f32 0.0, %v5698
    %5700 = vmatprep.mubr.f32.mxu0 0.0
    %5701 = vmatmul.mubr.f32.gmra.mrb[0].mxu0 %v546
    %v5702 = vpop.f32.mrb[0].mxu0
    %v5703 = vadd.f32 0.0, %v5702
    %v5704 = vpop.f32.mrb[0].mxu0
    %v5705 = vadd.f32 0.0, %v5704
    %5706 = vmatprep.mubr.f32.mxu0 0.0
    %5707 = vmatmul.mubr.f32.gmra.mrb[0].mxu0 %v549
    %v5708 = vpop.f32.mrb[0].mxu0
    %v5709 = vadd.f32 0.0, %v5708
    %v5710 = vpop.f32.mrb[0].mxu0
    %v5711 = vadd.f32 0.0, %v5710
    %5712 = vmatprep.mubr.f32.mxu0 0.0
    %5713 = vmatmul.mubr.f32.gmra.mrb[0].mxu0 %v1698
    %v5714 = vpop.f32.mrb[0].mxu0
    %v5715 = vadd.f32 0.0, %v5714
    %v5716 = vpop.f32.mrb[0].mxu0
    %v5717 = vadd.f32 0.0, %v5716
    %5718 = vdwg.mxu0
    %5719 = vmatprep.subr.mxu0 %v144
    %5720 = vmatpush1.msra.mxu0 %v143
    %5721 = vmatprep.subr.mxu0 %v150
    %5722 = vmatpush1.msra.mxu0 %v149
    %5723 = vmatprep.subr.mxu0 %v156
    %5724 = vmatpush1.msra.mxu0 %v155
    %5725 = vmatprep.subr.mxu0 %v555
    %5726 = vmatpush1.msra.mxu0 %v552
    %5727 = vmatprep.subr.mxu0 0.0
    %5728 = vmatpush1.msra.mxu0 0.0
    %5729 = vmatprep.subr.mxu0 0.0
    %5730 = vmatpush1.msra.mxu0 0.0
    %5731 = vmatprep.subr.mxu0 0.0
    %5732 = vmatpush1.msra.mxu0 0.0
    %5733 = vmatprep.subr.mxu0 0.0
    %5734 = vmatpush1.msra.mxu0 0.0
    %5735 = vmatprep.subr.mxu0 0.0
    %5736 = vmatpush1.msra.mxu0 0.0
    %5737 = vmatprep.subr.mxu0 0.0
    %5738 = vmatpush1.msra.mxu0 0.0
    %5739 = vmatprep.subr.mxu0 0.0
    %5740 = vmatpush1.msra.mxu0 0.0
    %5741 = vmatprep.subr.mxu0 0.0
    %5742 = vmatpush1.msra.mxu0 0.0
    %5743 = vmatprep.subr.mxu0 0.0
    %5744 = vmatpush1.msra.mxu0 0.0
    %5745 = vmatprep.subr.mxu0 0.0
    %5746 = vmatpush1.msra.mxu0 0.0
    %5747 = vmatprep.subr.mxu0 0.0
    %5748 = vmatpush1.msra.mxu0 0.0
    %5749 = vmatprep.subr.mxu0 0.0
    %5750 = vmatpush1.msra.mxu0 0.0
    %5751 = vmatprep.subr.mxu0 0.0
    %5752 = vmatpush1.msra.mxu0 0.0
    %5753 = vmatprep.subr.mxu0 0.0
    %5754 = vmatpush1.msra.mxu0 0.0
    %5755 = vmatprep.subr.mxu0 0.0
    %5756 = vmatpush1.msra.mxu0 0.0
    %5757 = vmatprep.subr.mxu0 0.0
    %5758 = vmatpush1.msra.mxu0 0.0
    %5759 = vmatprep.subr.mxu0 0.0
    %5760 = vmatpush1.msra.mxu0 0.0
    %5761 = vmatprep.subr.mxu0 0.0
    %5762 = vmatpush1.msra.mxu0 0.0
    %5763 = vmatprep.subr.mxu0 0.0
    %5764 = vmatpush1.msra.mxu0 0.0
    %5765 = vmatprep.subr.mxu0 0.0
    %5766 = vmatpush1.msra.mxu0 0.0
    %5767 = vmatprep.subr.mxu0 0.0
    %5768 = vmatpush1.msra.mxu0 0.0
    %5769 = vmatprep.subr.mxu0 0.0
    %5770 = vmatpush1.msra.mxu0 0.0
    %5771 = vmatprep.subr.mxu0 0.0
    %5772 = vmatpush1.msra.mxu0 0.0
    %5773 = vmatprep.subr.mxu0 0.0
    %5774 = vmatpush1.msra.mxu0 0.0
    %5775 = vmatprep.subr.mxu0 0.0
    %5776 = vmatpush1.msra.mxu0 0.0
    %5777 = vmatprep.subr.mxu0 0.0
    %5778 = vmatpush1.msra.mxu0 0.0
    %5779 = vmatprep.subr.mxu0 0.0
    %5780 = vmatpush1.msra.mxu0 0.0
    %5781 = vmatprep.subr.mxu0 0.0
    %5782 = vmatpush1.msra.mxu0 0.0
    %5783 = vmatprep.mubr.f32.mxu0 0.0
    %5784 = vmatmul.mubr.f32.gmra.mrb[0].mxu0 %v1298
    %v5785 = vpop.f32.mrb[0].mxu0
    %v5786 = vadd.f32 %v5483, %v5785
    %v5787 = vpop.f32.mrb[0].mxu0
    %v5788 = vadd.f32 %v5485, %v5787
    %5789 = vmatprep.mubr.f32.mxu0 0.0
    %5790 = vmatmul.mubr.f32.gmra.mrb[0].mxu0 %v1301
    %v5791 = vpop.f32.mrb[0].mxu0
    %v5792 = vadd.f32 %v5489, %v5791
    %v5793 = vpop.f32.mrb[0].mxu0
    %v5794 = vadd.f32 %v5491, %v5793
    %5795 = vmatprep.mubr.f32.mxu0 0.0
    %5796 = vmatmul.mubr.f32.gmra.mrb[0].mxu0 %v1304
    %v5797 = vpop.f32.mrb[0].mxu0
    %v5798 = vadd.f32 %v5495, %v5797
    %v5799 = vpop.f32.mrb[0].mxu0
    %v5800 = vadd.f32 %v5497, %v5799
    %5801 = vmatprep.mubr.f32.mxu0 0.0
    %5802 = vmatmul.mubr.f32.gmra.mrb[0].mxu0 %v1307
    %v5803 = vpop.f32.mrb[0].mxu0
    %v5804 = vadd.f32 %v5501, %v5803
    %v5805 = vpop.f32.mrb[0].mxu0
    %v5806 = vadd.f32 %v5503, %v5805
    %5807 = vmatprep.mubr.f32.mxu0 0.0
    %5808 = vmatmul.mubr.f32.gmra.mrb[0].mxu0 %v1310
    %v5809 = vpop.f32.mrb[0].mxu0
    %v5810 = vadd.f32 %v5507, %v5809
    %v5811 = vpop.f32.mrb[0].mxu0
    %v5812 = vadd.f32 %v5509, %v5811
    %5813 = vmatprep.mubr.f32.mxu0 0.0
    %5814 = vmatmul.mubr.f32.gmra.mrb[0].mxu0 %v1313
    %v5815 = vpop.f32.mrb[0].mxu0
    %v5816 = vadd.f32 %v5513, %v5815
    %v5817 = vpop.f32.mrb[0].mxu0
    %v5818 = vadd.f32 %v5515, %v5817
    %5819 = vdwg.mxu0
    %5820 = vmatprep.subr.mxu0 %v146
    %5821 = vmatpush1.msra.mxu0 %v145
    %5822 = vmatprep.subr.mxu0 %v152
    %5823 = vmatpush1.msra.mxu0 %v151
    %5824 = vmatprep.subr.mxu0 %v158
    %5825 = vmatpush1.msra.mxu0 %v157
    %5826 = vmatprep.subr.mxu0 %v561
    %5827 = vmatpush1.msra.mxu0 %v558
    %5828 = vmatprep.subr.mxu0 0.0
    %5829 = vmatpush1.msra.mxu0 0.0
    %5830 = vmatprep.subr.mxu0 0.0
    %5831 = vmatpush1.msra.mxu0 0.0
    %5832 = vmatprep.subr.mxu0 0.0
    %5833 = vmatpush1.msra.mxu0 0.0
    %5834 = vmatprep.subr.mxu0 0.0
    %5835 = vmatpush1.msra.mxu0 0.0
    %5836 = vmatprep.subr.mxu0 0.0
    %5837 = vmatpush1.msra.mxu0 0.0
    %5838 = vmatprep.subr.mxu0 0.0
    %5839 = vmatpush1.msra.mxu0 0.0
    %5840 = vmatprep.subr.mxu0 0.0
    %5841 = vmatpush1.msra.mxu0 0.0
    %5842 = vmatprep.subr.mxu0 0.0
    %5843 = vmatpush1.msra.mxu0 0.0
    %5844 = vmatprep.subr.mxu0 0.0
    %5845 = vmatpush1.msra.mxu0 0.0
    %5846 = vmatprep.subr.mxu0 0.0
    %5847 = vmatpush1.msra.mxu0 0.0
    %5848 = vmatprep.subr.mxu0 0.0
    %5849 = vmatpush1.msra.mxu0 0.0
    %5850 = vmatprep.subr.mxu0 0.0
    %5851 = vmatpush1.msra.mxu0 0.0
    %5852 = vmatprep.subr.mxu0 0.0
    %5853 = vmatpush1.msra.mxu0 0.0
    %5854 = vmatprep.subr.mxu0 0.0
    %5855 = vmatpush1.msra.mxu0 0.0
    %5856 = vmatprep.subr.mxu0 0.0
    %5857 = vmatpush1.msra.mxu0 0.0
    %5858 = vmatprep.subr.mxu0 0.0
    %5859 = vmatpush1.msra.mxu0 0.0
    %5860 = vmatprep.subr.mxu0 0.0
    %5861 = vmatpush1.msra.mxu0 0.0
    %5862 = vmatprep.subr.mxu0 0.0
    %5863 = vmatpush1.msra.mxu0 0.0
    %5864 = vmatprep.subr.mxu0 0.0
    %5865 = vmatpush1.msra.mxu0 0.0
    %5866 = vmatprep.subr.mxu0 0.0
    %5867 = vmatpush1.msra.mxu0 0.0
    %5868 = vmatprep.subr.mxu0 0.0
    %5869 = vmatpush1.msra.mxu0 0.0
    %5870 = vmatprep.subr.mxu0 0.0
    %5871 = vmatpush1.msra.mxu0 0.0
    %5872 = vmatprep.subr.mxu0 0.0
    %5873 = vmatpush1.msra.mxu0 0.0
    %5874 = vmatprep.subr.mxu0 0.0
    %5875 = vmatpush1.msra.mxu0 0.0
    %5876 = vmatprep.subr.mxu0 0.0
    %5877 = vmatpush1.msra.mxu0 0.0
    %5878 = vmatprep.subr.mxu0 0.0
    %5879 = vmatpush1.msra.mxu0 0.0
    %5880 = vmatprep.subr.mxu0 0.0
    %5881 = vmatpush1.msra.mxu0 0.0
    %5882 = vmatprep.subr.mxu0 0.0
    %5883 = vmatpush1.msra.mxu0 0.0
    %5884 = vmatprep.mubr.f32.mxu0 0.0
    %5885 = vmatmul.mubr.f32.gmra.mrb[0].mxu0 %v1298
    %v5886 = vpop.f32.mrb[0].mxu0
    %v5887 = vadd.f32 %v5584, %v5886
    %v5888 = vpop.f32.mrb[0].mxu0
    %v5889 = vadd.f32 %v5586, %v5888
    %5890 = vmatprep.mubr.f32.mxu0 0.0
    %5891 = vmatmul.mubr.f32.gmra.mrb[0].mxu0 %v1301
    %v5892 = vpop.f32.mrb[0].mxu0
    %v5893 = vadd.f32 %v5590, %v5892
    %v5894 = vpop.f32.mrb[0].mxu0
    %v5895 = vadd.f32 %v5592, %v5894
    %5896 = vmatprep.mubr.f32.mxu0 0.0
    %5897 = vmatmul.mubr.f32.gmra.mrb[0].mxu0 %v1304
    %v5898 = vpop.f32.mrb[0].mxu0
    %v5899 = vadd.f32 %v5596, %v5898
    %v5900 = vpop.f32.mrb[0].mxu0
    %v5901 = vadd.f32 %v5598, %v5900
    %5902 = vmatprep.mubr.f32.mxu0 0.0
    %5903 = vmatmul.mubr.f32.gmra.mrb[0].mxu0 %v1307
    %v5904 = vpop.f32.mrb[0].mxu0
    %v5905 = vadd.f32 %v5602, %v5904
    %v5906 = vpop.f32.mrb[0].mxu0
    %v5907 = vadd.f32 %v5604, %v5906
    %5908 = vmatprep.mubr.f32.mxu0 0.0
    %5909 = vmatmul.mubr.f32.gmra.mrb[0].mxu0 %v1310
    %v5910 = vpop.f32.mrb[0].mxu0
    %v5911 = vadd.f32 %v5608, %v5910
    %v5912 = vpop.f32.mrb[0].mxu0
    %v5913 = vadd.f32 %v5610, %v5912
    %5914 = vmatprep.mubr.f32.mxu0 0.0
    %5915 = vmatmul.mubr.f32.gmra.mrb[0].mxu0 %v1313
    %v5916 = vpop.f32.mrb[0].mxu0
    %v5917 = vadd.f32 %v5614, %v5916
    %v5918 = vpop.f32.mrb[0].mxu0
    %v5919 = vadd.f32 %v5616, %v5918
    %5920 = vdwg.mxu0
    %5921 = vmatprep.subr.mxu0 %v148
    %5922 = vmatpush1.msra.mxu0 %v147
    %5923 = vmatprep.subr.mxu0 %v154
    %5924 = vmatpush1.msra.mxu0 %v153
    %5925 = vmatprep.subr.mxu0 %v160
    %5926 = vmatpush1.msra.mxu0 %v159
    %5927 = vmatprep.subr.mxu0 %v567
    %5928 = vmatpush1.msra.mxu0 %v564
    %5929 = vmatprep.subr.mxu0 0.0
    %5930 = vmatpush1.msra.mxu0 0.0
    %5931 = vmatprep.subr.mxu0 0.0
    %5932 = vmatpush1.msra.mxu0 0.0
    %5933 = vmatprep.subr.mxu0 0.0
    %5934 = vmatpush1.msra.mxu0 0.0
    %5935 = vmatprep.subr.mxu0 0.0
    %5936 = vmatpush1.msra.mxu0 0.0
    %5937 = vmatprep.subr.mxu0 0.0
    %5938 = vmatpush1.msra.mxu0 0.0
    %5939 = vmatprep.subr.mxu0 0.0
    %5940 = vmatpush1.msra.mxu0 0.0
    %5941 = vmatprep.subr.mxu0 0.0
    %5942 = vmatpush1.msra.mxu0 0.0
    %5943 = vmatprep.subr.mxu0 0.0
    %5944 = vmatpush1.msra.mxu0 0.0
    %5945 = vmatprep.subr.mxu0 0.0
    %5946 = vmatpush1.msra.mxu0 0.0
    %5947 = vmatprep.subr.mxu0 0.0
    %5948 = vmatpush1.msra.mxu0 0.0
    %5949 = vmatprep.subr.mxu0 0.0
    %5950 = vmatpush1.msra.mxu0 0.0
    %5951 = vmatprep.subr.mxu0 0.0
    %5952 = vmatpush1.msra.mxu0 0.0
    %5953 = vmatprep.subr.mxu0 0.0
    %5954 = vmatpush1.msra.mxu0 0.0
    %5955 = vmatprep.subr.mxu0 0.0
    %5956 = vmatpush1.msra.mxu0 0.0
    %5957 = vmatprep.subr.mxu0 0.0
    %5958 = vmatpush1.msra.mxu0 0.0
    %5959 = vmatprep.subr.mxu0 0.0
    %5960 = vmatpush1.msra.mxu0 0.0
    %5961 = vmatprep.subr.mxu0 0.0
    %5962 = vmatpush1.msra.mxu0 0.0
    %5963 = vmatprep.subr.mxu0 0.0
    %5964 = vmatpush1.msra.mxu0 0.0
    %5965 = vmatprep.subr.mxu0 0.0
    %5966 = vmatpush1.msra.mxu0 0.0
    %5967 = vmatprep.subr.mxu0 0.0
    %5968 = vmatpush1.msra.mxu0 0.0
    %5969 = vmatprep.subr.mxu0 0.0
    %5970 = vmatpush1.msra.mxu0 0.0
    %5971 = vmatprep.subr.mxu0 0.0
    %5972 = vmatpush1.msra.mxu0 0.0
    %5973 = vmatprep.subr.mxu0 0.0
    %5974 = vmatpush1.msra.mxu0 0.0
    %5975 = vmatprep.subr.mxu0 0.0
    %5976 = vmatpush1.msra.mxu0 0.0
    %5977 = vmatprep.subr.mxu0 0.0
    %5978 = vmatpush1.msra.mxu0 0.0
    %5979 = vmatprep.subr.mxu0 0.0
    %5980 = vmatpush1.msra.mxu0 0.0
    %5981 = vmatprep.subr.mxu0 0.0
    %5982 = vmatpush1.msra.mxu0 0.0
    %5983 = vmatprep.subr.mxu0 0.0
    %5984 = vmatpush1.msra.mxu0 0.0
    %5985 = vmatprep.mubr.f32.mxu0 0.0
    %5986 = vmatmul.mubr.f32.gmra.mrb[0].mxu0 %v1298
    %v5987 = vpop.f32.mrb[0].mxu0
    %v5988 = vadd.f32 %v5685, %v5987
    %v5989 = vpop.f32.mrb[0].mxu0
    %v5990 = vadd.f32 %v5687, %v5989
    %5991 = vmatprep.mubr.f32.mxu0 0.0
    %5992 = vmatmul.mubr.f32.gmra.mrb[0].mxu0 %v1301
    %v5993 = vpop.f32.mrb[0].mxu0
    %v5994 = vadd.f32 %v5691, %v5993
    %v5995 = vpop.f32.mrb[0].mxu0
    %v5996 = vadd.f32 %v5693, %v5995
    %5997 = vmatprep.mubr.f32.mxu0 0.0
    %5998 = vmatmul.mubr.f32.gmra.mrb[0].mxu0 %v1304
    %v5999 = vpop.f32.mrb[0].mxu0
    %v6000 = vadd.f32 %v5697, %v5999
    %v6001 = vpop.f32.mrb[0].mxu0
    %v6002 = vadd.f32 %v5699, %v6001
    %6003 = vmatprep.mubr.f32.mxu0 0.0
    %6004 = vmatmul.mubr.f32.gmra.mrb[0].mxu0 %v1307
    %v6005 = vpop.f32.mrb[0].mxu0
    %v6006 = vadd.f32 %v5703, %v6005
    %v6007 = vpop.f32.mrb[0].mxu0
    %v6008 = vadd.f32 %v5705, %v6007
    %6009 = vmatprep.mubr.f32.mxu0 0.0
    %6010 = vmatmul.mubr.f32.gmra.mrb[0].mxu0 %v1310
    %v6011 = vpop.f32.mrb[0].mxu0
    %v6012 = vadd.f32 %v5709, %v6011
    %v6013 = vpop.f32.mrb[0].mxu0
    %v6014 = vadd.f32 %v5711, %v6013
    %6015 = vmatprep.mubr.f32.mxu0 0.0
    %6016 = vmatmul.mubr.f32.gmra.mrb[0].mxu0 %v1313
    %v6017 = vpop.f32.mrb[0].mxu0
    %v6018 = vadd.f32 %v5715, %v6017
    %v6019 = vpop.f32.mrb[0].mxu0
    %v6020 = vadd.f32 %v5717, %v6019
    %6021 = vdwg.mxu0
    %6022 = vmatprep.subr.mxu0 %v874
    %6023 = vmatpush1.msra.mxu0 %v873
    %6024 = vmatprep.subr.mxu0 %v880
    %6025 = vmatpush1.msra.mxu0 %v879
    %6026 = vmatprep.subr.mxu0 %v886
    %6027 = vmatpush1.msra.mxu0 %v885
    %6028 = vmatprep.subr.mxu0 %v919
    %6029 = vmatpush1.msra.mxu0 %v916
    %6030 = vmatprep.subr.mxu0 0.0
    %6031 = vmatpush1.msra.mxu0 0.0
    %6032 = vmatprep.subr.mxu0 0.0
    %6033 = vmatpush1.msra.mxu0 0.0
    %6034 = vmatprep.subr.mxu0 0.0
    %6035 = vmatpush1.msra.mxu0 0.0
    %6036 = vmatprep.subr.mxu0 0.0
    %6037 = vmatpush1.msra.mxu0 0.0
    %6038 = vmatprep.subr.mxu0 0.0
    %6039 = vmatpush1.msra.mxu0 0.0
    %6040 = vmatprep.subr.mxu0 0.0
    %6041 = vmatpush1.msra.mxu0 0.0
    %6042 = vmatprep.subr.mxu0 0.0
    %6043 = vmatpush1.msra.mxu0 0.0
    %6044 = vmatprep.subr.mxu0 0.0
    %6045 = vmatpush1.msra.mxu0 0.0
    %6046 = vmatprep.subr.mxu0 0.0
    %6047 = vmatpush1.msra.mxu0 0.0
    %6048 = vmatprep.subr.mxu0 0.0
    %6049 = vmatpush1.msra.mxu0 0.0
    %6050 = vmatprep.subr.mxu0 0.0
    %6051 = vmatpush1.msra.mxu0 0.0
    %6052 = vmatprep.subr.mxu0 0.0
    %6053 = vmatpush1.msra.mxu0 0.0
    %6054 = vmatprep.subr.mxu0 0.0
    %6055 = vmatpush1.msra.mxu0 0.0
    %6056 = vmatprep.subr.mxu0 0.0
    %6057 = vmatpush1.msra.mxu0 0.0
    %6058 = vmatprep.subr.mxu0 0.0
    %6059 = vmatpush1.msra.mxu0 0.0
    %6060 = vmatprep.subr.mxu0 0.0
    %6061 = vmatpush1.msra.mxu0 0.0
    %6062 = vmatprep.subr.mxu0 0.0
    %6063 = vmatpush1.msra.mxu0 0.0
    %6064 = vmatprep.subr.mxu0 0.0
    %6065 = vmatpush1.msra.mxu0 0.0
    %6066 = vmatprep.subr.mxu0 0.0
    %6067 = vmatpush1.msra.mxu0 0.0
    %6068 = vmatprep.subr.mxu0 0.0
    %6069 = vmatpush1.msra.mxu0 0.0
    %6070 = vmatprep.subr.mxu0 0.0
    %6071 = vmatpush1.msra.mxu0 0.0
    %6072 = vmatprep.subr.mxu0 0.0
    %6073 = vmatpush1.msra.mxu0 0.0
    %6074 = vmatprep.subr.mxu0 0.0
    %6075 = vmatpush1.msra.mxu0 0.0
    %6076 = vmatprep.subr.mxu0 0.0
    %6077 = vmatpush1.msra.mxu0 0.0
    %6078 = vmatprep.subr.mxu0 0.0
    %6079 = vmatpush1.msra.mxu0 0.0
    %6080 = vmatprep.subr.mxu0 0.0
    %6081 = vmatpush1.msra.mxu0 0.0
    %6082 = vmatprep.subr.mxu0 0.0
    %6083 = vmatpush1.msra.mxu0 0.0
    %6084 = vmatprep.subr.mxu0 0.0
    %6085 = vmatpush1.msra.mxu0 0.0
    %6086 = vmatprep.mubr.f32.mxu0 0.0
    %6087 = vmatmul.mubr.f32.gmra.mrb[0].mxu0 %v197
    %v6088 = vpop.f32.mrb[0].mxu0
    %v6089 = vadd.f32 0.0, %v6088
    %v6090 = vpop.f32.mrb[0].mxu0
    %v6091 = vadd.f32 0.0, %v6090
    %6092 = vmatprep.mubr.f32.mxu0 0.0
    %6093 = vmatmul.mubr.f32.gmra.mrb[0].mxu0 %v200
    %v6094 = vpop.f32.mrb[0].mxu0
    %v6095 = vadd.f32 0.0, %v6094
    %v6096 = vpop.f32.mrb[0].mxu0
    %v6097 = vadd.f32 0.0, %v6096
    %6098 = vmatprep.mubr.f32.mxu0 0.0
    %6099 = vmatmul.mubr.f32.gmra.mrb[0].mxu0 %v203
    %v6100 = vpop.f32.mrb[0].mxu0
    %v6101 = vadd.f32 0.0, %v6100
    %v6102 = vpop.f32.mrb[0].mxu0
    %v6103 = vadd.f32 0.0, %v6102
    %6104 = vmatprep.mubr.f32.mxu0 0.0
    %6105 = vmatmul.mubr.f32.gmra.mrb[0].mxu0 %v206
    %v6106 = vpop.f32.mrb[0].mxu0
    %v6107 = vadd.f32 0.0, %v6106
    %v6108 = vpop.f32.mrb[0].mxu0
    %v6109 = vadd.f32 0.0, %v6108
    %6110 = vmatprep.mubr.f32.mxu0 0.0
    %6111 = vmatmul.mubr.f32.gmra.mrb[0].mxu0 %v209
    %v6112 = vpop.f32.mrb[0].mxu0
    %v6113 = vadd.f32 0.0, %v6112
    %v6114 = vpop.f32.mrb[0].mxu0
    %v6115 = vadd.f32 0.0, %v6114
    %6116 = vmatprep.mubr.f32.mxu0 0.0
    %6117 = vmatmul.mubr.f32.gmra.mrb[0].mxu0 %v3342
    %v6118 = vpop.f32.mrb[0].mxu0
    %v6119 = vadd.f32 0.0, %v6118
    %v6120 = vpop.f32.mrb[0].mxu0
    %v6121 = vadd.f32 0.0, %v6120
    %6122 = vdwg.mxu0
    %6123 = vmatprep.subr.mxu0 %v876
    %6124 = vmatpush1.msra.mxu0 %v875
    %6125 = vmatprep.subr.mxu0 %v882
    %6126 = vmatpush1.msra.mxu0 %v881
    %6127 = vmatprep.subr.mxu0 %v888
    %6128 = vmatpush1.msra.mxu0 %v887
    %6129 = vmatprep.subr.mxu0 %v925
    %6130 = vmatpush1.msra.mxu0 %v922
    %6131 = vmatprep.subr.mxu0 0.0
    %6132 = vmatpush1.msra.mxu0 0.0
    %6133 = vmatprep.subr.mxu0 0.0
    %6134 = vmatpush1.msra.mxu0 0.0
    %6135 = vmatprep.subr.mxu0 0.0
    %6136 = vmatpush1.msra.mxu0 0.0
    %6137 = vmatprep.subr.mxu0 0.0
    %6138 = vmatpush1.msra.mxu0 0.0
    %6139 = vmatprep.subr.mxu0 0.0
    %6140 = vmatpush1.msra.mxu0 0.0
    %6141 = vmatprep.subr.mxu0 0.0
    %6142 = vmatpush1.msra.mxu0 0.0
    %6143 = vmatprep.subr.mxu0 0.0
    %6144 = vmatpush1.msra.mxu0 0.0
    %6145 = vmatprep.subr.mxu0 0.0
    %6146 = vmatpush1.msra.mxu0 0.0
    %6147 = vmatprep.subr.mxu0 0.0
    %6148 = vmatpush1.msra.mxu0 0.0
    %6149 = vmatprep.subr.mxu0 0.0
    %6150 = vmatpush1.msra.mxu0 0.0
    %6151 = vmatprep.subr.mxu0 0.0
    %6152 = vmatpush1.msra.mxu0 0.0
    %6153 = vmatprep.subr.mxu0 0.0
    %6154 = vmatpush1.msra.mxu0 0.0
    %6155 = vmatprep.subr.mxu0 0.0
    %6156 = vmatpush1.msra.mxu0 0.0
    %6157 = vmatprep.subr.mxu0 0.0
    %6158 = vmatpush1.msra.mxu0 0.0
    %6159 = vmatprep.subr.mxu0 0.0
    %6160 = vmatpush1.msra.mxu0 0.0
    %6161 = vmatprep.subr.mxu0 0.0
    %6162 = vmatpush1.msra.mxu0 0.0
    %6163 = vmatprep.subr.mxu0 0.0
    %6164 = vmatpush1.msra.mxu0 0.0
    %6165 = vmatprep.subr.mxu0 0.0
    %6166 = vmatpush1.msra.mxu0 0.0
    %6167 = vmatprep.subr.mxu0 0.0
    %6168 = vmatpush1.msra.mxu0 0.0
    %6169 = vmatprep.subr.mxu0 0.0
    %6170 = vmatpush1.msra.mxu0 0.0
    %6171 = vmatprep.subr.mxu0 0.0
    %6172 = vmatpush1.msra.mxu0 0.0
    %6173 = vmatprep.subr.mxu0 0.0
    %6174 = vmatpush1.msra.mxu0 0.0
    %6175 = vmatprep.subr.mxu0 0.0
    %6176 = vmatpush1.msra.mxu0 0.0
    %6177 = vmatprep.subr.mxu0 0.0
    %6178 = vmatpush1.msra.mxu0 0.0
    %6179 = vmatprep.subr.mxu0 0.0
    %6180 = vmatpush1.msra.mxu0 0.0
    %6181 = vmatprep.subr.mxu0 0.0
    %6182 = vmatpush1.msra.mxu0 0.0
    %6183 = vmatprep.subr.mxu0 0.0
    %6184 = vmatpush1.msra.mxu0 0.0
    %6185 = vmatprep.subr.mxu0 0.0
    %6186 = vmatpush1.msra.mxu0 0.0
    %6187 = vmatprep.mubr.f32.mxu0 0.0
    %6188 = vmatmul.mubr.f32.gmra.mrb[0].mxu0 %v197
    %v6189 = vpop.f32.mrb[0].mxu0
    %v6190 = vadd.f32 0.0, %v6189
    %v6191 = vpop.f32.mrb[0].mxu0
    %v6192 = vadd.f32 0.0, %v6191
    %6193 = vmatprep.mubr.f32.mxu0 0.0
    %6194 = vmatmul.mubr.f32.gmra.mrb[0].mxu0 %v200
    %v6195 = vpop.f32.mrb[0].mxu0
    %v6196 = vadd.f32 0.0, %v6195
    %v6197 = vpop.f32.mrb[0].mxu0
    %v6198 = vadd.f32 0.0, %v6197
    %6199 = vmatprep.mubr.f32.mxu0 0.0
    %6200 = vmatmul.mubr.f32.gmra.mrb[0].mxu0 %v203
    %v6201 = vpop.f32.mrb[0].mxu0
    %v6202 = vadd.f32 0.0, %v6201
    %v6203 = vpop.f32.mrb[0].mxu0
    %v6204 = vadd.f32 0.0, %v6203
    %6205 = vmatprep.mubr.f32.mxu0 0.0
    %6206 = vmatmul.mubr.f32.gmra.mrb[0].mxu0 %v206
    %v6207 = vpop.f32.mrb[0].mxu0
    %v6208 = vadd.f32 0.0, %v6207
    %v6209 = vpop.f32.mrb[0].mxu0
    %v6210 = vadd.f32 0.0, %v6209
    %6211 = vmatprep.mubr.f32.mxu0 0.0
    %6212 = vmatmul.mubr.f32.gmra.mrb[0].mxu0 %v209
    %v6213 = vpop.f32.mrb[0].mxu0
    %v6214 = vadd.f32 0.0, %v6213
    %v6215 = vpop.f32.mrb[0].mxu0
    %v6216 = vadd.f32 0.0, %v6215
    %6217 = vmatprep.mubr.f32.mxu0 0.0
    %6218 = vmatmul.mubr.f32.gmra.mrb[0].mxu0 %v3342
    %v6219 = vpop.f32.mrb[0].mxu0
    %v6220 = vadd.f32 0.0, %v6219
    %v6221 = vpop.f32.mrb[0].mxu0
    %v6222 = vadd.f32 0.0, %v6221
    %6223 = vdwg.mxu0
    %6224 = vmatprep.subr.mxu0 %v878
    %6225 = vmatpush1.msra.mxu0 %v877
    %6226 = vmatprep.subr.mxu0 %v884
    %6227 = vmatpush1.msra.mxu0 %v883
    %6228 = vmatprep.subr.mxu0 %v890
    %6229 = vmatpush1.msra.mxu0 %v889
    %6230 = vmatprep.subr.mxu0 %v931
    %6231 = vmatpush1.msra.mxu0 %v928
    %6232 = vmatprep.subr.mxu0 0.0
    %6233 = vmatpush1.msra.mxu0 0.0
    %6234 = vmatprep.subr.mxu0 0.0
    %6235 = vmatpush1.msra.mxu0 0.0
    %6236 = vmatprep.subr.mxu0 0.0
    %6237 = vmatpush1.msra.mxu0 0.0
    %6238 = vmatprep.subr.mxu0 0.0
    %6239 = vmatpush1.msra.mxu0 0.0
    %6240 = vmatprep.subr.mxu0 0.0
    %6241 = vmatpush1.msra.mxu0 0.0
    %6242 = vmatprep.subr.mxu0 0.0
    %6243 = vmatpush1.msra.mxu0 0.0
    %6244 = vmatprep.subr.mxu0 0.0
    %6245 = vmatpush1.msra.mxu0 0.0
    %6246 = vmatprep.subr.mxu0 0.0
    %6247 = vmatpush1.msra.mxu0 0.0
    %6248 = vmatprep.subr.mxu0 0.0
    %6249 = vmatpush1.msra.mxu0 0.0
    %6250 = vmatprep.subr.mxu0 0.0
    %6251 = vmatpush1.msra.mxu0 0.0
    %6252 = vmatprep.subr.mxu0 0.0
    %6253 = vmatpush1.msra.mxu0 0.0
    %6254 = vmatprep.subr.mxu0 0.0
    %6255 = vmatpush1.msra.mxu0 0.0
    %6256 = vmatprep.subr.mxu0 0.0
    %6257 = vmatpush1.msra.mxu0 0.0
    %6258 = vmatprep.subr.mxu0 0.0
    %6259 = vmatpush1.msra.mxu0 0.0
    %6260 = vmatprep.subr.mxu0 0.0
    %6261 = vmatpush1.msra.mxu0 0.0
    %6262 = vmatprep.subr.mxu0 0.0
    %6263 = vmatpush1.msra.mxu0 0.0
    %6264 = vmatprep.subr.mxu0 0.0
    %6265 = vmatpush1.msra.mxu0 0.0
    %6266 = vmatprep.subr.mxu0 0.0
    %6267 = vmatpush1.msra.mxu0 0.0
    %6268 = vmatprep.subr.mxu0 0.0
    %6269 = vmatpush1.msra.mxu0 0.0
    %6270 = vmatprep.subr.mxu0 0.0
    %6271 = vmatpush1.msra.mxu0 0.0
    %6272 = vmatprep.subr.mxu0 0.0
    %6273 = vmatpush1.msra.mxu0 0.0
    %6274 = vmatprep.subr.mxu0 0.0
    %6275 = vmatpush1.msra.mxu0 0.0
    %6276 = vmatprep.subr.mxu0 0.0
    %6277 = vmatpush1.msra.mxu0 0.0
    %6278 = vmatprep.subr.mxu0 0.0
    %6279 = vmatpush1.msra.mxu0 0.0
    %6280 = vmatprep.subr.mxu0 0.0
    %6281 = vmatpush1.msra.mxu0 0.0
    %6282 = vmatprep.subr.mxu0 0.0
    %6283 = vmatpush1.msra.mxu0 0.0
    %6284 = vmatprep.subr.mxu0 0.0
    %6285 = vmatpush1.msra.mxu0 0.0
    %6286 = vmatprep.subr.mxu0 0.0
    %6287 = vmatpush1.msra.mxu0 0.0
    %6288 = vmatprep.mubr.f32.mxu0 0.0
    %6289 = vmatmul.mubr.f32.gmra.mrb[0].mxu0 %v197
    %v6290 = vpop.f32.mrb[0].mxu0
    %v6291 = vadd.f32 0.0, %v6290
    %v6292 = vpop.f32.mrb[0].mxu0
    %v6293 = vadd.f32 0.0, %v6292
    %6294 = vmatprep.mubr.f32.mxu0 0.0
    %6295 = vmatmul.mubr.f32.gmra.mrb[0].mxu0 %v200
    %v6296 = vpop.f32.mrb[0].mxu0
    %v6297 = vadd.f32 0.0, %v6296
    %v6298 = vpop.f32.mrb[0].mxu0
    %v6299 = vadd.f32 0.0, %v6298
    %6300 = vmatprep.mubr.f32.mxu0 0.0
    %6301 = vmatmul.mubr.f32.gmra.mrb[0].mxu0 %v203
    %v6302 = vpop.f32.mrb[0].mxu0
    %v6303 = vadd.f32 0.0, %v6302
    %v6304 = vpop.f32.mrb[0].mxu0
    %v6305 = vadd.f32 0.0, %v6304
    %6306 = vmatprep.mubr.f32.mxu0 0.0
    %6307 = vmatmul.mubr.f32.gmra.mrb[0].mxu0 %v206
    %v6308 = vpop.f32.mrb[0].mxu0
    %v6309 = vadd.f32 0.0, %v6308
    %v6310 = vpop.f32.mrb[0].mxu0
    %v6311 = vadd.f32 0.0, %v6310
    %6312 = vmatprep.mubr.f32.mxu0 0.0
    %6313 = vmatmul.mubr.f32.gmra.mrb[0].mxu0 %v209
    %v6314 = vpop.f32.mrb[0].mxu0
    %v6315 = vadd.f32 0.0, %v6314
    %v6316 = vpop.f32.mrb[0].mxu0
    %v6317 = vadd.f32 0.0, %v6316
    %6318 = vmatprep.mubr.f32.mxu0 0.0
    %6319 = vmatmul.mubr.f32.gmra.mrb[0].mxu0 %v3342
    %v6320 = vpop.f32.mrb[0].mxu0
    %v6321 = vadd.f32 0.0, %v6320
    %v6322 = vpop.f32.mrb[0].mxu0
    %v6323 = vadd.f32 0.0, %v6322
    %6324 = vdwg.mxu0
    %v6325 = vadd.f32 %v5786, %v6089
    %v6326 = vadd.f32 %v5788, %v6091
    %v6327 = vadd.f32 %v5887, %v6190
    %v6328 = vadd.f32 %v5889, %v6192
    %v6329 = vadd.f32 %v5988, %v6291
    %v6330 = vadd.f32 %v5990, %v6293
    %v6331 = vadd.f32 %v5792, %v6095
    %v6332 = vadd.f32 %v5794, %v6097
    %v6333 = vadd.f32 %v5893, %v6196
    %v6334 = vadd.f32 %v5895, %v6198
    %v6335 = vadd.f32 %v5994, %v6297
    %v6336 = vadd.f32 %v5996, %v6299
    %v6337 = vadd.f32 %v5798, %v6101
    %v6338 = vadd.f32 %v5800, %v6103
    %v6339 = vadd.f32 %v5899, %v6202
    %v6340 = vadd.f32 %v5901, %v6204
    %v6341 = vadd.f32 %v6000, %v6303
    %v6342 = vadd.f32 %v6002, %v6305
    %v6343 = vadd.f32 %v5804, %v6107
    %v6344 = vadd.f32 %v5806, %v6109
    %v6345 = vadd.f32 %v5905, %v6208
    %v6346 = vadd.f32 %v5907, %v6210
    %v6347 = vadd.f32 %v6006, %v6309
    %v6348 = vadd.f32 %v6008, %v6311
    %v6349 = vadd.f32 %v5810, %v6113
    %v6350 = vadd.f32 %v5812, %v6115
    %v6351 = vadd.f32 %v5911, %v6214
    %v6352 = vadd.f32 %v5913, %v6216
    %v6353 = vadd.f32 %v6012, %v6315
    %v6354 = vadd.f32 %v6014, %v6317
    %v6355 = vadd.f32 %v5816, %v6119
    %v6356 = vadd.f32 %v5818, %v6121
    %v6357 = vadd.f32 %v5917, %v6220
    %v6358 = vadd.f32 %v5919, %v6222
    %v6359 = vadd.f32 %v6018, %v6321
    %v6360 = vadd.f32 %v6020, %v6323
    %6361 = vmatprep.subr.mxu0 %v1274
    %6362 = vmatpush1.msra.mxu0 %v1273
    %6363 = vmatprep.subr.mxu0 %v1280
    %6364 = vmatpush1.msra.mxu0 %v1279
    %6365 = vmatprep.subr.mxu0 %v1286
    %6366 = vmatpush1.msra.mxu0 %v1285
    %6367 = vmatprep.subr.mxu0 %v1319
    %6368 = vmatpush1.msra.mxu0 %v1316
    %6369 = vmatprep.subr.mxu0 0.0
    %6370 = vmatpush1.msra.mxu0 0.0
    %6371 = vmatprep.subr.mxu0 0.0
    %6372 = vmatpush1.msra.mxu0 0.0
    %6373 = vmatprep.subr.mxu0 0.0
    %6374 = vmatpush1.msra.mxu0 0.0
    %6375 = vmatprep.subr.mxu0 0.0
    %6376 = vmatpush1.msra.mxu0 0.0
    %6377 = vmatprep.subr.mxu0 0.0
    %6378 = vmatpush1.msra.mxu0 0.0
    %6379 = vmatprep.subr.mxu0 0.0
    %6380 = vmatpush1.msra.mxu0 0.0
    %6381 = vmatprep.subr.mxu0 0.0
    %6382 = vmatpush1.msra.mxu0 0.0
    %6383 = vmatprep.subr.mxu0 0.0
    %6384 = vmatpush1.msra.mxu0 0.0
    %6385 = vmatprep.subr.mxu0 0.0
    %6386 = vmatpush1.msra.mxu0 0.0
    %6387 = vmatprep.subr.mxu0 0.0
    %6388 = vmatpush1.msra.mxu0 0.0
    %6389 = vmatprep.subr.mxu0 0.0
    %6390 = vmatpush1.msra.mxu0 0.0
    %6391 = vmatprep.subr.mxu0 0.0
    %6392 = vmatpush1.msra.mxu0 0.0
    %6393 = vmatprep.subr.mxu0 0.0
    %6394 = vmatpush1.msra.mxu0 0.0
    %6395 = vmatprep.subr.mxu0 0.0
    %6396 = vmatpush1.msra.mxu0 0.0
    %6397 = vmatprep.subr.mxu0 0.0
    %6398 = vmatpush1.msra.mxu0 0.0
    %6399 = vmatprep.subr.mxu0 0.0
    %6400 = vmatpush1.msra.mxu0 0.0
    %6401 = vmatprep.subr.mxu0 0.0
    %6402 = vmatpush1.msra.mxu0 0.0
    %6403 = vmatprep.subr.mxu0 0.0
    %6404 = vmatpush1.msra.mxu0 0.0
    %6405 = vmatprep.subr.mxu0 0.0
    %6406 = vmatpush1.msra.mxu0 0.0
    %6407 = vmatprep.subr.mxu0 0.0
    %6408 = vmatpush1.msra.mxu0 0.0
    %6409 = vmatprep.subr.mxu0 0.0
    %6410 = vmatpush1.msra.mxu0 0.0
    %6411 = vmatprep.subr.mxu0 0.0
    %6412 = vmatpush1.msra.mxu0 0.0
    %6413 = vmatprep.subr.mxu0 0.0
    %6414 = vmatpush1.msra.mxu0 0.0
    %6415 = vmatprep.subr.mxu0 0.0
    %6416 = vmatpush1.msra.mxu0 0.0
    %6417 = vmatprep.subr.mxu0 0.0
    %6418 = vmatpush1.msra.mxu0 0.0
    %6419 = vmatprep.subr.mxu0 0.0
    %6420 = vmatpush1.msra.mxu0 0.0
    %6421 = vmatprep.subr.mxu0 0.0
    %6422 = vmatpush1.msra.mxu0 0.0
    %6423 = vmatprep.subr.mxu0 0.0
    %6424 = vmatpush1.msra.mxu0 0.0
    %6425 = vmatprep.mubr.f32.mxu0 0.0
    %6426 = vmatmul.mubr.f32.gmra.mrb[0].mxu0 %v901
    %v6427 = vpop.f32.mrb[0].mxu0
    %v6428 = vadd.f32 0.0, %v6427
    %v6429 = vpop.f32.mrb[0].mxu0
    %v6430 = vadd.f32 0.0, %v6429
    %6431 = vmatprep.mubr.f32.mxu0 0.0
    %6432 = vmatmul.mubr.f32.gmra.mrb[0].mxu0 %v904
    %v6433 = vpop.f32.mrb[0].mxu0
    %v6434 = vadd.f32 0.0, %v6433
    %v6435 = vpop.f32.mrb[0].mxu0
    %v6436 = vadd.f32 0.0, %v6435
    %6437 = vmatprep.mubr.f32.mxu0 0.0
    %6438 = vmatmul.mubr.f32.gmra.mrb[0].mxu0 %v907
    %v6439 = vpop.f32.mrb[0].mxu0
    %v6440 = vadd.f32 0.0, %v6439
    %v6441 = vpop.f32.mrb[0].mxu0
    %v6442 = vadd.f32 0.0, %v6441
    %6443 = vmatprep.mubr.f32.mxu0 0.0
    %6444 = vmatmul.mubr.f32.gmra.mrb[0].mxu0 %v910
    %v6445 = vpop.f32.mrb[0].mxu0
    %v6446 = vadd.f32 0.0, %v6445
    %v6447 = vpop.f32.mrb[0].mxu0
    %v6448 = vadd.f32 0.0, %v6447
    %6449 = vmatprep.mubr.f32.mxu0 0.0
    %6450 = vmatmul.mubr.f32.gmra.mrb[0].mxu0 %v913
    %v6451 = vpop.f32.mrb[0].mxu0
    %v6452 = vadd.f32 0.0, %v6451
    %v6453 = vpop.f32.mrb[0].mxu0
    %v6454 = vadd.f32 0.0, %v6453
    %6455 = vmatprep.mubr.f32.mxu0 0.0
    %6456 = vmatmul.mubr.f32.gmra.mrb[0].mxu0 %v5075
    %v6457 = vpop.f32.mrb[0].mxu0
    %v6458 = vadd.f32 0.0, %v6457
    %v6459 = vpop.f32.mrb[0].mxu0
    %v6460 = vadd.f32 0.0, %v6459
    %6461 = vdwg.mxu0
    %6462 = vmatprep.subr.mxu0 %v1276
    %6463 = vmatpush1.msra.mxu0 %v1275
    %6464 = vmatprep.subr.mxu0 %v1282
    %6465 = vmatpush1.msra.mxu0 %v1281
    %6466 = vmatprep.subr.mxu0 %v1288
    %6467 = vmatpush1.msra.mxu0 %v1287
    %6468 = vmatprep.subr.mxu0 %v1325
    %6469 = vmatpush1.msra.mxu0 %v1322
    %6470 = vmatprep.subr.mxu0 0.0
    %6471 = vmatpush1.msra.mxu0 0.0
    %6472 = vmatprep.subr.mxu0 0.0
    %6473 = vmatpush1.msra.mxu0 0.0
    %6474 = vmatprep.subr.mxu0 0.0
    %6475 = vmatpush1.msra.mxu0 0.0
    %6476 = vmatprep.subr.mxu0 0.0
    %6477 = vmatpush1.msra.mxu0 0.0
    %6478 = vmatprep.subr.mxu0 0.0
    %6479 = vmatpush1.msra.mxu0 0.0
    %6480 = vmatprep.subr.mxu0 0.0
    %6481 = vmatpush1.msra.mxu0 0.0
    %6482 = vmatprep.subr.mxu0 0.0
    %6483 = vmatpush1.msra.mxu0 0.0
    %6484 = vmatprep.subr.mxu0 0.0
    %6485 = vmatpush1.msra.mxu0 0.0
    %6486 = vmatprep.subr.mxu0 0.0
    %6487 = vmatpush1.msra.mxu0 0.0
    %6488 = vmatprep.subr.mxu0 0.0
    %6489 = vmatpush1.msra.mxu0 0.0
    %6490 = vmatprep.subr.mxu0 0.0
    %6491 = vmatpush1.msra.mxu0 0.0
    %6492 = vmatprep.subr.mxu0 0.0
    %6493 = vmatpush1.msra.mxu0 0.0
    %6494 = vmatprep.subr.mxu0 0.0
    %6495 = vmatpush1.msra.mxu0 0.0
    %6496 = vmatprep.subr.mxu0 0.0
    %6497 = vmatpush1.msra.mxu0 0.0
    %6498 = vmatprep.subr.mxu0 0.0
    %6499 = vmatpush1.msra.mxu0 0.0
    %6500 = vmatprep.subr.mxu0 0.0
    %6501 = vmatpush1.msra.mxu0 0.0
    %6502 = vmatprep.subr.mxu0 0.0
    %6503 = vmatpush1.msra.mxu0 0.0
    %6504 = vmatprep.subr.mxu0 0.0
    %6505 = vmatpush1.msra.mxu0 0.0
    %6506 = vmatprep.subr.mxu0 0.0
    %6507 = vmatpush1.msra.mxu0 0.0
    %6508 = vmatprep.subr.mxu0 0.0
    %6509 = vmatpush1.msra.mxu0 0.0
    %6510 = vmatprep.subr.mxu0 0.0
    %6511 = vmatpush1.msra.mxu0 0.0
    %6512 = vmatprep.subr.mxu0 0.0
    %6513 = vmatpush1.msra.mxu0 0.0
    %6514 = vmatprep.subr.mxu0 0.0
    %6515 = vmatpush1.msra.mxu0 0.0
    %6516 = vmatprep.subr.mxu0 0.0
    %6517 = vmatpush1.msra.mxu0 0.0
    %6518 = vmatprep.subr.mxu0 0.0
    %6519 = vmatpush1.msra.mxu0 0.0
    %6520 = vmatprep.subr.mxu0 0.0
    %6521 = vmatpush1.msra.mxu0 0.0
    %6522 = vmatprep.subr.mxu0 0.0
    %6523 = vmatpush1.msra.mxu0 0.0
    %6524 = vmatprep.subr.mxu0 0.0
    %6525 = vmatpush1.msra.mxu0 0.0
    %6526 = vmatprep.mubr.f32.mxu0 0.0
    %6527 = vmatmul.mubr.f32.gmra.mrb[0].mxu0 %v901
    %v6528 = vpop.f32.mrb[0].mxu0
    %v6529 = vadd.f32 0.0, %v6528
    %v6530 = vpop.f32.mrb[0].mxu0
    %v6531 = vadd.f32 0.0, %v6530
    %6532 = vmatprep.mubr.f32.mxu0 0.0
    %6533 = vmatmul.mubr.f32.gmra.mrb[0].mxu0 %v904
    %v6534 = vpop.f32.mrb[0].mxu0
    %v6535 = vadd.f32 0.0, %v6534
    %v6536 = vpop.f32.mrb[0].mxu0
    %v6537 = vadd.f32 0.0, %v6536
    %6538 = vmatprep.mubr.f32.mxu0 0.0
    %6539 = vmatmul.mubr.f32.gmra.mrb[0].mxu0 %v907
    %v6540 = vpop.f32.mrb[0].mxu0
    %v6541 = vadd.f32 0.0, %v6540
    %v6542 = vpop.f32.mrb[0].mxu0
    %v6543 = vadd.f32 0.0, %v6542
    %6544 = vmatprep.mubr.f32.mxu0 0.0
    %6545 = vmatmul.mubr.f32.gmra.mrb[0].mxu0 %v910
    %v6546 = vpop.f32.mrb[0].mxu0
    %v6547 = vadd.f32 0.0, %v6546
    %v6548 = vpop.f32.mrb[0].mxu0
    %v6549 = vadd.f32 0.0, %v6548
    %6550 = vmatprep.mubr.f32.mxu0 0.0
    %6551 = vmatmul.mubr.f32.gmra.mrb[0].mxu0 %v913
    %v6552 = vpop.f32.mrb[0].mxu0
    %v6553 = vadd.f32 0.0, %v6552
    %v6554 = vpop.f32.mrb[0].mxu0
    %v6555 = vadd.f32 0.0, %v6554
    %6556 = vmatprep.mubr.f32.mxu0 0.0
    %6557 = vmatmul.mubr.f32.gmra.mrb[0].mxu0 %v5075
    %v6558 = vpop.f32.mrb[0].mxu0
    %v6559 = vadd.f32 0.0, %v6558
    %v6560 = vpop.f32.mrb[0].mxu0
    %v6561 = vadd.f32 0.0, %v6560
    %6562 = vdwg.mxu0
    %6563 = vmatprep.subr.mxu0 %v1278
    %6564 = vmatpush1.msra.mxu0 %v1277
    %6565 = vmatprep.subr.mxu0 %v1284
    %6566 = vmatpush1.msra.mxu0 %v1283
    %6567 = vmatprep.subr.mxu0 %v1290
    %6568 = vmatpush1.msra.mxu0 %v1289
    %6569 = vmatprep.subr.mxu0 %v1331
    %6570 = vmatpush1.msra.mxu0 %v1328
    %6571 = vmatprep.subr.mxu0 0.0
    %6572 = vmatpush1.msra.mxu0 0.0
    %6573 = vmatprep.subr.mxu0 0.0
    %6574 = vmatpush1.msra.mxu0 0.0
    %6575 = vmatprep.subr.mxu0 0.0
    %6576 = vmatpush1.msra.mxu0 0.0
    %6577 = vmatprep.subr.mxu0 0.0
    %6578 = vmatpush1.msra.mxu0 0.0
    %6579 = vmatprep.subr.mxu0 0.0
    %6580 = vmatpush1.msra.mxu0 0.0
    %6581 = vmatprep.subr.mxu0 0.0
    %6582 = vmatpush1.msra.mxu0 0.0
    %6583 = vmatprep.subr.mxu0 0.0
    %6584 = vmatpush1.msra.mxu0 0.0
    %6585 = vmatprep.subr.mxu0 0.0
    %6586 = vmatpush1.msra.mxu0 0.0
    %6587 = vmatprep.subr.mxu0 0.0
    %6588 = vmatpush1.msra.mxu0 0.0
    %6589 = vmatprep.subr.mxu0 0.0
    %6590 = vmatpush1.msra.mxu0 0.0
    %6591 = vmatprep.subr.mxu0 0.0
    %6592 = vmatpush1.msra.mxu0 0.0
    %6593 = vmatprep.subr.mxu0 0.0
    %6594 = vmatpush1.msra.mxu0 0.0
    %6595 = vmatprep.subr.mxu0 0.0
    %6596 = vmatpush1.msra.mxu0 0.0
    %6597 = vmatprep.subr.mxu0 0.0
    %6598 = vmatpush1.msra.mxu0 0.0
    %6599 = vmatprep.subr.mxu0 0.0
    %6600 = vmatpush1.msra.mxu0 0.0
    %6601 = vmatprep.subr.mxu0 0.0
    %6602 = vmatpush1.msra.mxu0 0.0
    %6603 = vmatprep.subr.mxu0 0.0
    %6604 = vmatpush1.msra.mxu0 0.0
    %6605 = vmatprep.subr.mxu0 0.0
    %6606 = vmatpush1.msra.mxu0 0.0
    %6607 = vmatprep.subr.mxu0 0.0
    %6608 = vmatpush1.msra.mxu0 0.0
    %6609 = vmatprep.subr.mxu0 0.0
    %6610 = vmatpush1.msra.mxu0 0.0
    %6611 = vmatprep.subr.mxu0 0.0
    %6612 = vmatpush1.msra.mxu0 0.0
    %6613 = vmatprep.subr.mxu0 0.0
    %6614 = vmatpush1.msra.mxu0 0.0
    %6615 = vmatprep.subr.mxu0 0.0
    %6616 = vmatpush1.msra.mxu0 0.0
    %6617 = vmatprep.subr.mxu0 0.0
    %6618 = vmatpush1.msra.mxu0 0.0
    %6619 = vmatprep.subr.mxu0 0.0
    %6620 = vmatpush1.msra.mxu0 0.0
    %6621 = vmatprep.subr.mxu0 0.0
    %6622 = vmatpush1.msra.mxu0 0.0
    %6623 = vmatprep.subr.mxu0 0.0
    %6624 = vmatpush1.msra.mxu0 0.0
    %6625 = vmatprep.subr.mxu0 0.0
    %6626 = vmatpush1.msra.mxu0 0.0
    %6627 = vmatprep.mubr.f32.mxu0 0.0
    %6628 = vmatmul.mubr.f32.gmra.mrb[0].mxu0 %v901
    %v6629 = vpop.f32.mrb[0].mxu0
    %v6630 = vadd.f32 0.0, %v6629
    %v6631 = vpop.f32.mrb[0].mxu0
    %v6632 = vadd.f32 0.0, %v6631
    %6633 = vmatprep.mubr.f32.mxu0 0.0
    %6634 = vmatmul.mubr.f32.gmra.mrb[0].mxu0 %v904
    %v6635 = vpop.f32.mrb[0].mxu0
    %v6636 = vadd.f32 0.0, %v6635
    %v6637 = vpop.f32.mrb[0].mxu0
    %v6638 = vadd.f32 0.0, %v6637
    %6639 = vmatprep.mubr.f32.mxu0 0.0
    %6640 = vmatmul.mubr.f32.gmra.mrb[0].mxu0 %v907
    %v6641 = vpop.f32.mrb[0].mxu0
    %v6642 = vadd.f32 0.0, %v6641
    %v6643 = vpop.f32.mrb[0].mxu0
    %v6644 = vadd.f32 0.0, %v6643
    %6645 = vmatprep.mubr.f32.mxu0 0.0
    %6646 = vmatmul.mubr.f32.gmra.mrb[0].mxu0 %v910
    %v6647 = vpop.f32.mrb[0].mxu0
    %v6648 = vadd.f32 0.0, %v6647
    %v6649 = vpop.f32.mrb[0].mxu0
    %v6650 = vadd.f32 0.0, %v6649
    %6651 = vmatprep.mubr.f32.mxu0 0.0
    %6652 = vmatmul.mubr.f32.gmra.mrb[0].mxu0 %v913
    %v6653 = vpop.f32.mrb[0].mxu0
    %v6654 = vadd.f32 0.0, %v6653
    %v6655 = vpop.f32.mrb[0].mxu0
    %v6656 = vadd.f32 0.0, %v6655
    %6657 = vmatprep.mubr.f32.mxu0 0.0
    %6658 = vmatmul.mubr.f32.gmra.mrb[0].mxu0 %v5075
    %v6659 = vpop.f32.mrb[0].mxu0
    %v6660 = vadd.f32 0.0, %v6659
    %v6661 = vpop.f32.mrb[0].mxu0
    %v6662 = vadd.f32 0.0, %v6661
    %6663 = vdwg.mxu0
    %v6664 = vadd.f32 %v6325, %v6428
    %v6665 = vadd.f32 %v6326, %v6430
    %v6666 = vadd.f32 %v6327, %v6529
    %v6667 = vadd.f32 %v6328, %v6531
    %v6668 = vadd.f32 %v6329, %v6630
    %v6669 = vadd.f32 %v6330, %v6632
    %v6670 = vadd.f32 %v6331, %v6434
    %v6671 = vadd.f32 %v6332, %v6436
    %v6672 = vadd.f32 %v6333, %v6535
    %v6673 = vadd.f32 %v6334, %v6537
    %v6674 = vadd.f32 %v6335, %v6636
    %v6675 = vadd.f32 %v6336, %v6638
    %v6676 = vadd.f32 %v6337, %v6440
    %v6677 = vadd.f32 %v6338, %v6442
    %v6678 = vadd.f32 %v6339, %v6541
    %v6679 = vadd.f32 %v6340, %v6543
    %v6680 = vadd.f32 %v6341, %v6642
    %v6681 = vadd.f32 %v6342, %v6644
    %v6682 = vadd.f32 %v6343, %v6446
    %v6683 = vadd.f32 %v6344, %v6448
    %v6684 = vadd.f32 %v6345, %v6547
    %v6685 = vadd.f32 %v6346, %v6549
    %v6686 = vadd.f32 %v6347, %v6648
    %v6687 = vadd.f32 %v6348, %v6650
    %v6688 = vadd.f32 %v6349, %v6452
    %v6689 = vadd.f32 %v6350, %v6454
    %v6690 = vadd.f32 %v6351, %v6553
    %v6691 = vadd.f32 %v6352, %v6555
    %v6692 = vadd.f32 %v6353, %v6654
    %v6693 = vadd.f32 %v6354, %v6656
    %v6694 = vadd.f32 %v6355, %v6458
    %v6695 = vadd.f32 %v6356, %v6460
    %v6696 = vadd.f32 %v6357, %v6559
    %v6697 = vadd.f32 %v6358, %v6561
    %v6698 = vadd.f32 %v6359, %v6660
    %v6699 = vadd.f32 %v6360, %v6662
    %v6701 = vsel %vm192, %v142, 0
    %6703 = vmatprep.subr.mxu0 %v1674
    %6704 = vmatpush1.msra.mxu0 %v1673
    %6705 = vmatprep.subr.mxu0 %v1680
    %6706 = vmatpush1.msra.mxu0 %v1679
    %6707 = vmatprep.subr.mxu0 %v1686
    %6708 = vmatpush1.msra.mxu0 %v1685
    %6709 = vmatprep.subr.mxu0 %v1704
    %6710 = vmatpush1.msra.mxu0 %v1701
    %6711 = vmatprep.subr.mxu0 0.0
    %6712 = vmatpush1.msra.mxu0 0.0
    %6713 = vmatprep.subr.mxu0 0.0
    %6714 = vmatpush1.msra.mxu0 0.0
    %6715 = vmatprep.subr.mxu0 0.0
    %6716 = vmatpush1.msra.mxu0 0.0
    %6717 = vmatprep.subr.mxu0 0.0
    %6718 = vmatpush1.msra.mxu0 0.0
    %6719 = vmatprep.subr.mxu0 0.0
    %6720 = vmatpush1.msra.mxu0 0.0
    %6721 = vmatprep.subr.mxu0 0.0
    %6722 = vmatpush1.msra.mxu0 0.0
    %6723 = vmatprep.subr.mxu0 0.0
    %6724 = vmatpush1.msra.mxu0 0.0
    %6725 = vmatprep.subr.mxu0 0.0
    %6726 = vmatpush1.msra.mxu0 0.0
    %6727 = vmatprep.subr.mxu0 0.0
    %6728 = vmatpush1.msra.mxu0 0.0
    %6729 = vmatprep.subr.mxu0 0.0
    %6730 = vmatpush1.msra.mxu0 0.0
    %6731 = vmatprep.subr.mxu0 0.0
    %6732 = vmatpush1.msra.mxu0 0.0
    %6733 = vmatprep.subr.mxu0 0.0
    %6734 = vmatpush1.msra.mxu0 0.0
    %6735 = vmatprep.subr.mxu0 0.0
    %6736 = vmatpush1.msra.mxu0 0.0
    %6737 = vmatprep.subr.mxu0 0.0
    %6738 = vmatpush1.msra.mxu0 0.0
    %6739 = vmatprep.subr.mxu0 0.0
    %6740 = vmatpush1.msra.mxu0 0.0
    %6741 = vmatprep.subr.mxu0 0.0
    %6742 = vmatpush1.msra.mxu0 0.0
    %6743 = vmatprep.subr.mxu0 0.0
    %6744 = vmatpush1.msra.mxu0 0.0
    %6745 = vmatprep.subr.mxu0 0.0
    %6746 = vmatpush1.msra.mxu0 0.0
    %6747 = vmatprep.subr.mxu0 0.0
    %6748 = vmatpush1.msra.mxu0 0.0
    %6749 = vmatprep.subr.mxu0 0.0
    %6750 = vmatpush1.msra.mxu0 0.0
    %6751 = vmatprep.subr.mxu0 0.0
    %6752 = vmatpush1.msra.mxu0 0.0
    %6753 = vmatprep.subr.mxu0 0.0
    %6754 = vmatpush1.msra.mxu0 0.0
    %6755 = vmatprep.subr.mxu0 0.0
    %6756 = vmatpush1.msra.mxu0 0.0
    %6757 = vmatprep.subr.mxu0 0.0
    %6758 = vmatpush1.msra.mxu0 0.0
    %6759 = vmatprep.subr.mxu0 0.0
    %6760 = vmatpush1.msra.mxu0 0.0
    %6761 = vmatprep.subr.mxu0 0.0
    %6762 = vmatpush1.msra.mxu0 0.0
    %6763 = vmatprep.subr.mxu0 0.0
    %6764 = vmatpush1.msra.mxu0 0.0
    %6765 = vmatprep.subr.mxu0 0.0
    %6766 = vmatpush1.msra.mxu0 0.0
    %6767 = vmatprep.mubr.f32.mxu0 0.0
    %6768 = vmatmul.mubr.f32.gmra.mrb[0].mxu0 %v1301
    %v6769 = vpop.f32.mrb[0].mxu0
    %v6770 = vadd.f32 0.0, %v6769
    %v6771 = vpop.f32.mrb[0].mxu0
    %v6772 = vadd.f32 0.0, %v6771
    %6773 = vmatprep.mubr.f32.mxu0 0.0
    %6774 = vmatmul.mubr.f32.gmra.mrb[0].mxu0 %v1304
    %v6775 = vpop.f32.mrb[0].mxu0
    %v6776 = vadd.f32 0.0, %v6775
    %v6777 = vpop.f32.mrb[0].mxu0
    %v6778 = vadd.f32 0.0, %v6777
    %6779 = vmatprep.mubr.f32.mxu0 0.0
    %6780 = vmatmul.mubr.f32.gmra.mrb[0].mxu0 %v1307
    %v6781 = vpop.f32.mrb[0].mxu0
    %v6782 = vadd.f32 0.0, %v6781
    %v6783 = vpop.f32.mrb[0].mxu0
    %v6784 = vadd.f32 0.0, %v6783
    %6785 = vmatprep.mubr.f32.mxu0 0.0
    %6786 = vmatmul.mubr.f32.gmra.mrb[0].mxu0 %v1310
    %v6787 = vpop.f32.mrb[0].mxu0
    %v6788 = vadd.f32 0.0, %v6787
    %v6789 = vpop.f32.mrb[0].mxu0
    %v6790 = vadd.f32 0.0, %v6789
    %6791 = vmatprep.mubr.f32.mxu0 0.0
    %6792 = vmatmul.mubr.f32.gmra.mrb[0].mxu0 %v1313
    %v6793 = vpop.f32.mrb[0].mxu0
    %v6794 = vadd.f32 0.0, %v6793
    %v6795 = vpop.f32.mrb[0].mxu0
    %v6796 = vadd.f32 0.0, %v6795
    %6797 = vmatprep.mubr.f32.mxu0 0.0
    %6798 = vmatmul.mubr.f32.gmra.mrb[0].mxu0 %v6701
    %v6799 = vpop.f32.mrb[0].mxu0
    %v6800 = vadd.f32 0.0, %v6799
    %v6801 = vpop.f32.mrb[0].mxu0
    %v6802 = vadd.f32 0.0, %v6801
    %6803 = vdwg.mxu0
    %6804 = vmatprep.subr.mxu0 %v1676
    %6805 = vmatpush1.msra.mxu0 %v1675
    %6806 = vmatprep.subr.mxu0 %v1682
    %6807 = vmatpush1.msra.mxu0 %v1681
    %6808 = vmatprep.subr.mxu0 %v1688
    %6809 = vmatpush1.msra.mxu0 %v1687
    %6810 = vmatprep.subr.mxu0 %v1710
    %6811 = vmatpush1.msra.mxu0 %v1707
    %6812 = vmatprep.subr.mxu0 0.0
    %6813 = vmatpush1.msra.mxu0 0.0
    %6814 = vmatprep.subr.mxu0 0.0
    %6815 = vmatpush1.msra.mxu0 0.0
    %6816 = vmatprep.subr.mxu0 0.0
    %6817 = vmatpush1.msra.mxu0 0.0
    %6818 = vmatprep.subr.mxu0 0.0
    %6819 = vmatpush1.msra.mxu0 0.0
    %6820 = vmatprep.subr.mxu0 0.0
    %6821 = vmatpush1.msra.mxu0 0.0
    %6822 = vmatprep.subr.mxu0 0.0
    %6823 = vmatpush1.msra.mxu0 0.0
    %6824 = vmatprep.subr.mxu0 0.0
    %6825 = vmatpush1.msra.mxu0 0.0
    %6826 = vmatprep.subr.mxu0 0.0
    %6827 = vmatpush1.msra.mxu0 0.0
    %6828 = vmatprep.subr.mxu0 0.0
    %6829 = vmatpush1.msra.mxu0 0.0
    %6830 = vmatprep.subr.mxu0 0.0
    %6831 = vmatpush1.msra.mxu0 0.0
    %6832 = vmatprep.subr.mxu0 0.0
    %6833 = vmatpush1.msra.mxu0 0.0
    %6834 = vmatprep.subr.mxu0 0.0
    %6835 = vmatpush1.msra.mxu0 0.0
    %6836 = vmatprep.subr.mxu0 0.0
    %6837 = vmatpush1.msra.mxu0 0.0
    %6838 = vmatprep.subr.mxu0 0.0
    %6839 = vmatpush1.msra.mxu0 0.0
    %6840 = vmatprep.subr.mxu0 0.0
    %6841 = vmatpush1.msra.mxu0 0.0
    %6842 = vmatprep.subr.mxu0 0.0
    %6843 = vmatpush1.msra.mxu0 0.0
    %6844 = vmatprep.subr.mxu0 0.0
    %6845 = vmatpush1.msra.mxu0 0.0
    %6846 = vmatprep.subr.mxu0 0.0
    %6847 = vmatpush1.msra.mxu0 0.0
    %6848 = vmatprep.subr.mxu0 0.0
    %6849 = vmatpush1.msra.mxu0 0.0
    %6850 = vmatprep.subr.mxu0 0.0
    %6851 = vmatpush1.msra.mxu0 0.0
    %6852 = vmatprep.subr.mxu0 0.0
    %6853 = vmatpush1.msra.mxu0 0.0
    %6854 = vmatprep.subr.mxu0 0.0
    %6855 = vmatpush1.msra.mxu0 0.0
    %6856 = vmatprep.subr.mxu0 0.0
    %6857 = vmatpush1.msra.mxu0 0.0
    %6858 = vmatprep.subr.mxu0 0.0
    %6859 = vmatpush1.msra.mxu0 0.0
    %6860 = vmatprep.subr.mxu0 0.0
    %6861 = vmatpush1.msra.mxu0 0.0
    %6862 = vmatprep.subr.mxu0 0.0
    %6863 = vmatpush1.msra.mxu0 0.0
    %6864 = vmatprep.subr.mxu0 0.0
    %6865 = vmatpush1.msra.mxu0 0.0
    %6866 = vmatprep.subr.mxu0 0.0
    %6867 = vmatpush1.msra.mxu0 0.0
    %6868 = vmatprep.mubr.f32.mxu0 0.0
    %6869 = vmatmul.mubr.f32.gmra.mrb[0].mxu0 %v1301
    %v6870 = vpop.f32.mrb[0].mxu0
    %v6871 = vadd.f32 0.0, %v6870
    %v6872 = vpop.f32.mrb[0].mxu0
    %v6873 = vadd.f32 0.0, %v6872
    %6874 = vmatprep.mubr.f32.mxu0 0.0
    %6875 = vmatmul.mubr.f32.gmra.mrb[0].mxu0 %v1304
    %v6876 = vpop.f32.mrb[0].mxu0
    %v6877 = vadd.f32 0.0, %v6876
    %v6878 = vpop.f32.mrb[0].mxu0
    %v6879 = vadd.f32 0.0, %v6878
    %6880 = vmatprep.mubr.f32.mxu0 0.0
    %6881 = vmatmul.mubr.f32.gmra.mrb[0].mxu0 %v1307
    %v6882 = vpop.f32.mrb[0].mxu0
    %v6883 = vadd.f32 0.0, %v6882
    %v6884 = vpop.f32.mrb[0].mxu0
    %v6885 = vadd.f32 0.0, %v6884
    %6886 = vmatprep.mubr.f32.mxu0 0.0
    %6887 = vmatmul.mubr.f32.gmra.mrb[0].mxu0 %v1310
    %v6888 = vpop.f32.mrb[0].mxu0
    %v6889 = vadd.f32 0.0, %v6888
    %v6890 = vpop.f32.mrb[0].mxu0
    %v6891 = vadd.f32 0.0, %v6890
    %6892 = vmatprep.mubr.f32.mxu0 0.0
    %6893 = vmatmul.mubr.f32.gmra.mrb[0].mxu0 %v1313
    %v6894 = vpop.f32.mrb[0].mxu0
    %v6895 = vadd.f32 0.0, %v6894
    %v6896 = vpop.f32.mrb[0].mxu0
    %v6897 = vadd.f32 0.0, %v6896
    %6898 = vmatprep.mubr.f32.mxu0 0.0
    %6899 = vmatmul.mubr.f32.gmra.mrb[0].mxu0 %v6701
    %v6900 = vpop.f32.mrb[0].mxu0
    %v6901 = vadd.f32 0.0, %v6900
    %v6902 = vpop.f32.mrb[0].mxu0
    %v6903 = vadd.f32 0.0, %v6902
    %6904 = vdwg.mxu0
    %6905 = vmatprep.subr.mxu0 %v1678
    %6906 = vmatpush1.msra.mxu0 %v1677
    %6907 = vmatprep.subr.mxu0 %v1684
    %6908 = vmatpush1.msra.mxu0 %v1683
    %6909 = vmatprep.subr.mxu0 %v1690
    %6910 = vmatpush1.msra.mxu0 %v1689
    %6911 = vmatprep.subr.mxu0 %v1716
    %6912 = vmatpush1.msra.mxu0 %v1713
    %6913 = vmatprep.subr.mxu0 0.0
    %6914 = vmatpush1.msra.mxu0 0.0
    %6915 = vmatprep.subr.mxu0 0.0
    %6916 = vmatpush1.msra.mxu0 0.0
    %6917 = vmatprep.subr.mxu0 0.0
    %6918 = vmatpush1.msra.mxu0 0.0
    %6919 = vmatprep.subr.mxu0 0.0
    %6920 = vmatpush1.msra.mxu0 0.0
    %6921 = vmatprep.subr.mxu0 0.0
    %6922 = vmatpush1.msra.mxu0 0.0
    %6923 = vmatprep.subr.mxu0 0.0
    %6924 = vmatpush1.msra.mxu0 0.0
    %6925 = vmatprep.subr.mxu0 0.0
    %6926 = vmatpush1.msra.mxu0 0.0
    %6927 = vmatprep.subr.mxu0 0.0
    %6928 = vmatpush1.msra.mxu0 0.0
    %6929 = vmatprep.subr.mxu0 0.0
    %6930 = vmatpush1.msra.mxu0 0.0
    %6931 = vmatprep.subr.mxu0 0.0
    %6932 = vmatpush1.msra.mxu0 0.0
    %6933 = vmatprep.subr.mxu0 0.0
    %6934 = vmatpush1.msra.mxu0 0.0
    %6935 = vmatprep.subr.mxu0 0.0
    %6936 = vmatpush1.msra.mxu0 0.0
    %6937 = vmatprep.subr.mxu0 0.0
    %6938 = vmatpush1.msra.mxu0 0.0
    %6939 = vmatprep.subr.mxu0 0.0
    %6940 = vmatpush1.msra.mxu0 0.0
    %6941 = vmatprep.subr.mxu0 0.0
    %6942 = vmatpush1.msra.mxu0 0.0
    %6943 = vmatprep.subr.mxu0 0.0
    %6944 = vmatpush1.msra.mxu0 0.0
    %6945 = vmatprep.subr.mxu0 0.0
    %6946 = vmatpush1.msra.mxu0 0.0
    %6947 = vmatprep.subr.mxu0 0.0
    %6948 = vmatpush1.msra.mxu0 0.0
    %6949 = vmatprep.subr.mxu0 0.0
    %6950 = vmatpush1.msra.mxu0 0.0
    %6951 = vmatprep.subr.mxu0 0.0
    %6952 = vmatpush1.msra.mxu0 0.0
    %6953 = vmatprep.subr.mxu0 0.0
    %6954 = vmatpush1.msra.mxu0 0.0
    %6955 = vmatprep.subr.mxu0 0.0
    %6956 = vmatpush1.msra.mxu0 0.0
    %6957 = vmatprep.subr.mxu0 0.0
    %6958 = vmatpush1.msra.mxu0 0.0
    %6959 = vmatprep.subr.mxu0 0.0
    %6960 = vmatpush1.msra.mxu0 0.0
    %6961 = vmatprep.subr.mxu0 0.0
    %6962 = vmatpush1.msra.mxu0 0.0
    %6963 = vmatprep.subr.mxu0 0.0
    %6964 = vmatpush1.msra.mxu0 0.0
    %6965 = vmatprep.subr.mxu0 0.0
    %6966 = vmatpush1.msra.mxu0 0.0
    %6967 = vmatprep.subr.mxu0 0.0
    %6968 = vmatpush1.msra.mxu0 0.0
    %6969 = vmatprep.mubr.f32.mxu0 0.0
    %6970 = vmatmul.mubr.f32.gmra.mrb[0].mxu0 %v1301
    %v6971 = vpop.f32.mrb[0].mxu0
    %v6972 = vadd.f32 0.0, %v6971
    %v6973 = vpop.f32.mrb[0].mxu0
    %v6974 = vadd.f32 0.0, %v6973
    %6975 = vmatprep.mubr.f32.mxu0 0.0
    %6976 = vmatmul.mubr.f32.gmra.mrb[0].mxu0 %v1304
    %v6977 = vpop.f32.mrb[0].mxu0
    %v6978 = vadd.f32 0.0, %v6977
    %v6979 = vpop.f32.mrb[0].mxu0
    %v6980 = vadd.f32 0.0, %v6979
    %6981 = vmatprep.mubr.f32.mxu0 0.0
    %6982 = vmatmul.mubr.f32.gmra.mrb[0].mxu0 %v1307
    %v6983 = vpop.f32.mrb[0].mxu0
    %v6984 = vadd.f32 0.0, %v6983
    %v6985 = vpop.f32.mrb[0].mxu0
    %v6986 = vadd.f32 0.0, %v6985
    %6987 = vmatprep.mubr.f32.mxu0 0.0
    %6988 = vmatmul.mubr.f32.gmra.mrb[0].mxu0 %v1310
    %v6989 = vpop.f32.mrb[0].mxu0
    %v6990 = vadd.f32 0.0, %v6989
    %v6991 = vpop.f32.mrb[0].mxu0
    %v6992 = vadd.f32 0.0, %v6991
    %6993 = vmatprep.mubr.f32.mxu0 0.0
    %6994 = vmatmul.mubr.f32.gmra.mrb[0].mxu0 %v1313
    %v6995 = vpop.f32.mrb[0].mxu0
    %v6996 = vadd.f32 0.0, %v6995
    %v6997 = vpop.f32.mrb[0].mxu0
    %v6998 = vadd.f32 0.0, %v6997
    %6999 = vmatprep.mubr.f32.mxu0 0.0
    %7000 = vmatmul.mubr.f32.gmra.mrb[0].mxu0 %v6701
    %v7001 = vpop.f32.mrb[0].mxu0
    %v7002 = vadd.f32 0.0, %v7001
    %v7003 = vpop.f32.mrb[0].mxu0
    %v7004 = vadd.f32 0.0, %v7003
    %7005 = vdwg.mxu0
    %v7006 = vadd.f32 %v6664, %v6770
    %v7007 = vadd.f32 %v6665, %v6772
    %v7008 = vadd.f32 %v6666, %v6871
    %v7009 = vadd.f32 %v6667, %v6873
    %v7010 = vadd.f32 %v6668, %v6972
    %v7011 = vadd.f32 %v6669, %v6974
    %v7012 = vadd.f32 %v6670, %v6776
    %v7013 = vadd.f32 %v6671, %v6778
    %v7014 = vadd.f32 %v6672, %v6877
    %v7015 = vadd.f32 %v6673, %v6879
    %v7016 = vadd.f32 %v6674, %v6978
    %v7017 = vadd.f32 %v6675, %v6980
    %v7018 = vadd.f32 %v6676, %v6782
    %v7019 = vadd.f32 %v6677, %v6784
    %v7020 = vadd.f32 %v6678, %v6883
    %v7021 = vadd.f32 %v6679, %v6885
    %v7022 = vadd.f32 %v6680, %v6984
    %v7023 = vadd.f32 %v6681, %v6986
    %v7024 = vadd.f32 %v6682, %v6788
    %v7025 = vadd.f32 %v6683, %v6790
    %v7026 = vadd.f32 %v6684, %v6889
    %v7027 = vadd.f32 %v6685, %v6891
    %v7028 = vadd.f32 %v6686, %v6990
    %v7029 = vadd.f32 %v6687, %v6992
    %v7030 = vadd.f32 %v6688, %v6794
    %v7031 = vadd.f32 %v6689, %v6796
    %v7032 = vadd.f32 %v6690, %v6895
    %v7033 = vadd.f32 %v6691, %v6897
    %v7034 = vadd.f32 %v6692, %v6996
    %v7035 = vadd.f32 %v6693, %v6998
    %v7036 = vadd.f32 %v6694, %v6800
    %v7037 = vadd.f32 %v6695, %v6802
    %v7038 = vadd.f32 %v6696, %v6901
    %v7039 = vadd.f32 %v6697, %v6903
    %v7040 = vadd.f32 %v6698, %v7002
    %v7041 = vadd.f32 %v6699, %v7004
    %v7042 = vmax.f32 %v5380, %v5383
    %v7043 = vmax.f32 %v5381, %v5384
    %v7044 = vmax.f32 %v5382, %v5385
    %v7045 = vmax.f32 %v5386, %v5389
    %v7046 = vmax.f32 %v5387, %v5390
    %v7047 = vmax.f32 %v5388, %v5391
    %v7048 = vmax.f32 %v5392, %v5395
    %v7049 = vmax.f32 %v5393, %v5396
    %v7050 = vmax.f32 %v5394, %v5397
    %v7051 = vmax.f32 %v5398, %v5401
    %v7052 = vmax.f32 %v5399, %v5402
    %v7053 = vmax.f32 %v5400, %v5403
    %v7054 = vmax.f32 %v5404, %v5407
    %v7055 = vmax.f32 %v5405, %v5408
    %v7056 = vmax.f32 %v5406, %v5409
    %v7057 = vmax.f32 %v5410, %v5413
    %v7058 = vmax.f32 %v5411, %v5414
    %v7059 = vmax.f32 %v5412, %v5415
    %v7060 = vmax.f32 %v7006, %v7009
    %v7061 = vmax.f32 %v7007, %v7010
    %v7062 = vmax.f32 %v7008, %v7011
    %v7063 = vmax.f32 %v7012, %v7015
    %v7064 = vmax.f32 %v7013, %v7016
    %v7065 = vmax.f32 %v7014, %v7017
    %v7066 = vmax.f32 %v7018, %v7021
    %v7067 = vmax.f32 %v7019, %v7022
    %v7068 = vmax.f32 %v7020, %v7023
    %v7069 = vmax.f32 %v7024, %v7027
    %v7070 = vmax.f32 %v7025, %v7028
    %v7071 = vmax.f32 %v7026, %v7029
    %v7072 = vmax.f32 %v7030, %v7033
    %v7073 = vmax.f32 %v7031, %v7034
    %v7074 = vmax.f32 %v7032, %v7035
    %v7075 = vmax.f32 %v7036, %v7039
    %v7076 = vmax.f32 %v7037, %v7040
    %v7077 = vmax.f32 %v7038, %v7041
    %v7078 = vmax.f32 %v7042, %v7060
    %v7079 = vmax.f32 %v7043, %v7061
    %v7080 = vmax.f32 %v7044, %v7062
    %v7081 = vmax.f32 %v7045, %v7063
    %v7082 = vmax.f32 %v7046, %v7064
    %v7083 = vmax.f32 %v7047, %v7065
    %v7084 = vmax.f32 %v7048, %v7066
    %v7085 = vmax.f32 %v7049, %v7067
    %v7086 = vmax.f32 %v7050, %v7068
    %v7087 = vmax.f32 %v7051, %v7069
    %v7088 = vmax.f32 %v7052, %v7070
    %v7089 = vmax.f32 %v7053, %v7071
    %v7090 = vmax.f32 %v7054, %v7072
    %v7091 = vmax.f32 %v7055, %v7073
    %v7092 = vmax.f32 %v7056, %v7074
    %v7093 = vmax.f32 %v7057, %v7075
    %v7094 = vmax.f32 %v7058, %v7076
    %v7095 = vmax.f32 %v7059, %v7077
    %v7096 = vadd.f32 %v7078, %v3742
    %v7097 = vadd.f32 %v7079, %v3746
    %v7098 = vadd.f32 %v7080, %v3750
    %v7099 = vadd.f32 %v7081, %v3742
    %v7100 = vadd.f32 %v7082, %v3746
    %v7101 = vadd.f32 %v7083, %v3750
    %v7102 = vadd.f32 %v7084, %v3742
    %v7103 = vadd.f32 %v7085, %v3746
    %v7104 = vadd.f32 %v7086, %v3750
    %v7105 = vadd.f32 %v7087, %v3742
    %v7106 = vadd.f32 %v7088, %v3746
    %v7107 = vadd.f32 %v7089, %v3750
    %v7108 = vadd.f32 %v7090, %v3742
    %v7109 = vadd.f32 %v7091, %v3746
    %v7110 = vadd.f32 %v7092, %v3750
    %v7111 = vadd.f32 %v7093, %v3742
    %v7112 = vadd.f32 %v7094, %v3746
    %v7113 = vadd.f32 %v7095, %v3750
    %v7114 = vmax.f32 %v7096, 0.0
    %v7115 = vmax.f32 %v7097, 0.0
    %v7116 = vmax.f32 %v7098, 0.0
    %v7117 = vmax.f32 %v7099, 0.0
    %v7118 = vmax.f32 %v7100, 0.0
    %v7119 = vmax.f32 %v7101, 0.0
    %v7120 = vmax.f32 %v7102, 0.0
    %v7121 = vmax.f32 %v7103, 0.0
    %v7122 = vmax.f32 %v7104, 0.0
    %v7123 = vmax.f32 %v7105, 0.0
    %v7124 = vmax.f32 %v7106, 0.0
    %v7125 = vmax.f32 %v7107, 0.0
    %v7126 = vmax.f32 %v7108, 0.0
    %v7127 = vmax.f32 %v7109, 0.0
    %v7128 = vmax.f32 %v7110, 0.0
    %v7129 = vmax.f32 %v7111, 0.0
    %v7130 = vmax.f32 %v7112, 0.0
    %v7131 = vmax.f32 %v7113, 0.0
    %v7132 = vld [vmem:[#allocation6] sm:$0xff]
    %v7133 = vld [vmem:[#allocation6 + $0x8] sm:$0xff]
    %v7134 = vld [vmem:[#allocation6 + $0x10] sm:$0xff]
    %v7135 = vld [vmem:[#allocation6 + $0x18] sm:$0xff]
    %v7136 = vld [vmem:[#allocation6 + $0x20] sm:$0xff]
    %v7137 = vld [vmem:[#allocation6 + $0x28] sm:$0xff]
    %v7138 = vld [vmem:[#allocation6 + $0x30] sm:$0xff]
    %v7139 = vld [vmem:[#allocation6 + $0x38] sm:$0xff]
    %v7140 = vld [vmem:[#allocation6 + $0x40] sm:$0xff]
    %v7141 = vld [vmem:[#allocation6 + $0x48] sm:$0xff]
    %v7142 = vld [vmem:[#allocation6 + $0x50] sm:$0xff]
    %v7143 = vld [vmem:[#allocation6 + $0x58] sm:$0xff]
    %v7144 = vld [vmem:[#allocation6 + $0x60] sm:$0xff]
    %v7145 = vld [vmem:[#allocation6 + $0x68] sm:$0xff]
    %v7146 = vld [vmem:[#allocation6 + $0x70] sm:$0xff]
    %v7147 = vld [vmem:[#allocation6 + $0x78] sm:$0xff]
    %v7148 = vld [vmem:[#allocation6 + $0x80] sm:$0xff]
    %v7149 = vld [vmem:[#allocation6 + $0x88] sm:$0xff]
    %v7150 = vld [vmem:[#allocation6 + $0x90] sm:$0xff]
    %v7151 = vld [vmem:[#allocation6 + $0x98] sm:$0xff]
    %v7152 = vld [vmem:[#allocation6 + $0xa0] sm:$0xff]
    %v7153 = vld [vmem:[#allocation6 + $0xa8] sm:$0xff]
    %v7154 = vld [vmem:[#allocation6 + $0xb0] sm:$0xff]
    %v7155 = vld [vmem:[#allocation6 + $0xb8] sm:$0xff]
    %v7156 = vld [vmem:[#allocation6 + $0xc0] sm:$0xff]
    %v7157 = vld [vmem:[#allocation6 + $0xc8] sm:$0xff]
    %v7158 = vld [vmem:[#allocation6 + $0xd0] sm:$0xff]
    %v7159 = vld [vmem:[#allocation6 + $0xd8] sm:$0xff]
    %v7160 = vld [vmem:[#allocation6 + $0xe0] sm:$0xff]
    %v7161 = vld [vmem:[#allocation6 + $0xe8] sm:$0xff]
    %v7162 = vld [vmem:[#allocation6 + $0xf0] sm:$0xff]
    %v7163 = vld [vmem:[#allocation6 + $0xf8] sm:$0xff]
    %v7164 = vld [vmem:[#allocation6 + $0x100] sm:$0xff]
    %v7165 = vld [vmem:[#allocation6 + $0x108] sm:$0xff]
    %v7166 = vld [vmem:[#allocation6 + $0x110] sm:$0xff]
    %v7167 = vld [vmem:[#allocation6 + $0x118] sm:$0xff]
    %v7168 = vld [vmem:[#allocation6 + $0x120] sm:$0xff]
    %v7169 = vld [vmem:[#allocation6 + $0x128] sm:$0xff]
    %v7170 = vld [vmem:[#allocation6 + $0x130] sm:$0xff]
    %v7171 = vld [vmem:[#allocation6 + $0x138] sm:$0xff]
    %v7172 = vld [vmem:[#allocation6 + $0x140] sm:$0xff]
    %v7173 = vld [vmem:[#allocation6 + $0x148] sm:$0xff]
    %v7174 = vld [vmem:[#allocation6 + $0x150] sm:$0xff]
    %v7175 = vld [vmem:[#allocation6 + $0x158] sm:$0xff]
    %v7176 = vld [vmem:[#allocation6 + $0x160] sm:$0xff]
    %v7177 = vld [vmem:[#allocation6 + $0x168] sm:$0xff]
    %v7178 = vld [vmem:[#allocation6 + $0x170] sm:$0xff]
    %v7179 = vld [vmem:[#allocation6 + $0x178] sm:$0xff]
    %v7180 = vld [vmem:[#allocation6 + $0x180] sm:$0xff]
    %v7181 = vld [vmem:[#allocation6 + $0x188] sm:$0xff]
    %v7182 = vld [vmem:[#allocation6 + $0x190] sm:$0xff]
    %v7183 = vld [vmem:[#allocation6 + $0x198] sm:$0xff]
    %v7184 = vld [vmem:[#allocation6 + $0x1a0] sm:$0xff]
    %v7185 = vld [vmem:[#allocation6 + $0x1a8] sm:$0xff]
    %v7186 = vld [vmem:[#allocation6 + $0x1b0] sm:$0xff]
    %v7187 = vld [vmem:[#allocation6 + $0x1b8] sm:$0xff]
    %v7188 = vld [vmem:[#allocation6 + $0x1c0] sm:$0xff]
    %v7189 = vld [vmem:[#allocation6 + $0x1c8] sm:$0xff]
    %v7190 = vld [vmem:[#allocation6 + $0x1d0] sm:$0xff]
    %v7191 = vld [vmem:[#allocation6 + $0x1d8] sm:$0xff]
    %v7192 = vld [vmem:[#allocation6 + $0x1e0] sm:$0xff]
    %v7193 = vld [vmem:[#allocation6 + $0x1e8] sm:$0xff]
    %v7194 = vld [vmem:[#allocation6 + $0x1f0] sm:$0xff]
    %v7195 = vld [vmem:[#allocation6 + $0x1f8] sm:$0xff]
    %v7196 = vld [vmem:[#allocation6 + $0x200] sm:$0xff]
    %v7197 = vld [vmem:[#allocation6 + $0x208] sm:$0xff]
    %v7198 = vld [vmem:[#allocation6 + $0x210] sm:$0xff]
    %v7199 = vld [vmem:[#allocation6 + $0x218] sm:$0xff]
    %v7200 = vld [vmem:[#allocation6 + $0x220] sm:$0xff]
    %v7201 = vld [vmem:[#allocation6 + $0x228] sm:$0xff]
    %v7202 = vld [vmem:[#allocation6 + $0x230] sm:$0xff]
    %v7203 = vld [vmem:[#allocation6 + $0x238] sm:$0xff]
    %v7204 = vld [vmem:[#allocation6 + $0x240] sm:$0xff]
    %v7205 = vld [vmem:[#allocation6 + $0x248] sm:$0xff]
    %v7206 = vld [vmem:[#allocation6 + $0x250] sm:$0xff]
    %v7207 = vld [vmem:[#allocation6 + $0x258] sm:$0xff]
    %v7208 = vld [vmem:[#allocation6 + $0x260] sm:$0xff]
    %v7209 = vld [vmem:[#allocation6 + $0x268] sm:$0xff]
    %v7210 = vld [vmem:[#allocation6 + $0x270] sm:$0xff]
    %v7211 = vld [vmem:[#allocation6 + $0x278] sm:$0xff]
    %v7212 = vld [vmem:[#allocation6 + $0x280] sm:$0xff]
    %v7213 = vld [vmem:[#allocation6 + $0x288] sm:$0xff]
    %v7214 = vld [vmem:[#allocation6 + $0x290] sm:$0xff]
    %v7215 = vld [vmem:[#allocation6 + $0x298] sm:$0xff]
    %v7216 = vld [vmem:[#allocation6 + $0x2a0] sm:$0xff]
    %v7217 = vld [vmem:[#allocation6 + $0x2a8] sm:$0xff]
    %v7218 = vld [vmem:[#allocation6 + $0x2b0] sm:$0xff]
    %v7219 = vld [vmem:[#allocation6 + $0x2b8] sm:$0xff]
    %v7220 = vld [vmem:[#allocation6 + $0x2c0] sm:$0xff]
    %v7221 = vld [vmem:[#allocation6 + $0x2c8] sm:$0xff]
    %v7222 = vld [vmem:[#allocation6 + $0x2d0] sm:$0xff]
    %v7223 = vld [vmem:[#allocation6 + $0x2d8] sm:$0xff]
    %v7224 = vld [vmem:[#allocation6 + $0x2e0] sm:$0xff]
    %v7225 = vld [vmem:[#allocation6 + $0x2e8] sm:$0xff]
    %v7226 = vld [vmem:[#allocation6 + $0x2f0] sm:$0xff]
    %v7227 = vld [vmem:[#allocation6 + $0x2f8] sm:$0xff]
    %s7228 = scalar_lea.vmem [#allocation6], 768
    %v7229 = vld [vmem:[%s7228] sm:$0xff]
    %v7230 = vld [vmem:[%s7228 + $0x8] sm:$0xff]
    %v7231 = vld [vmem:[%s7228 + $0x10] sm:$0xff]
    %v7232 = vld [vmem:[%s7228 + $0x18] sm:$0xff]
    %v7233 = vld [vmem:[%s7228 + $0x20] sm:$0xff]
    %v7234 = vld [vmem:[%s7228 + $0x28] sm:$0xff]
    %v7235 = vld [vmem:[%s7228 + $0x30] sm:$0xff]
    %v7236 = vld [vmem:[%s7228 + $0x38] sm:$0xff]
    %v7237 = vld [vmem:[%s7228 + $0x40] sm:$0xff]
    %v7238 = vld [vmem:[%s7228 + $0x48] sm:$0xff]
    %v7239 = vld [vmem:[%s7228 + $0x50] sm:$0xff]
    %v7240 = vld [vmem:[%s7228 + $0x58] sm:$0xff]
    %v7241 = vld [vmem:[%s7228 + $0x60] sm:$0xff]
    %v7242 = vld [vmem:[%s7228 + $0x68] sm:$0xff]
    %v7243 = vld [vmem:[%s7228 + $0x70] sm:$0xff]
    %v7244 = vld [vmem:[%s7228 + $0x78] sm:$0xff]
    %v7245 = vld [vmem:[%s7228 + $0x80] sm:$0xff]
    %v7246 = vld [vmem:[%s7228 + $0x88] sm:$0xff]
    %v7247 = vld [vmem:[%s7228 + $0x90] sm:$0xff]
    %v7248 = vld [vmem:[%s7228 + $0x98] sm:$0xff]
    %v7249 = vld [vmem:[%s7228 + $0xa0] sm:$0xff]
    %v7250 = vld [vmem:[%s7228 + $0xa8] sm:$0xff]
    %v7251 = vld [vmem:[%s7228 + $0xb0] sm:$0xff]
    %v7252 = vld [vmem:[%s7228 + $0xb8] sm:$0xff]
    %v7253 = vld [vmem:[%s7228 + $0xc0] sm:$0xff]
    %v7254 = vld [vmem:[%s7228 + $0xc8] sm:$0xff]
    %v7255 = vld [vmem:[%s7228 + $0xd0] sm:$0xff]
    %v7256 = vld [vmem:[%s7228 + $0xd8] sm:$0xff]
    %v7257 = vld [vmem:[%s7228 + $0xe0] sm:$0xff]
    %v7258 = vld [vmem:[%s7228 + $0xe8] sm:$0xff]
    %v7259 = vld [vmem:[%s7228 + $0xf0] sm:$0xff]
    %v7260 = vld [vmem:[%s7228 + $0xf8] sm:$0xff]
    %v7261 = vld [vmem:[%s7228 + $0x100] sm:$0xff]
    %v7262 = vld [vmem:[%s7228 + $0x108] sm:$0xff]
    %v7263 = vld [vmem:[%s7228 + $0x110] sm:$0xff]
    %v7264 = vld [vmem:[%s7228 + $0x118] sm:$0xff]
    %v7265 = vld [vmem:[%s7228 + $0x120] sm:$0xff]
    %v7266 = vld [vmem:[%s7228 + $0x128] sm:$0xff]
    %v7267 = vld [vmem:[%s7228 + $0x130] sm:$0xff]
    %v7268 = vld [vmem:[%s7228 + $0x138] sm:$0xff]
    %v7269 = vld [vmem:[%s7228 + $0x140] sm:$0xff]
    %v7270 = vld [vmem:[%s7228 + $0x148] sm:$0xff]
    %v7271 = vld [vmem:[%s7228 + $0x150] sm:$0xff]
    %v7272 = vld [vmem:[%s7228 + $0x158] sm:$0xff]
    %v7273 = vld [vmem:[%s7228 + $0x160] sm:$0xff]
    %v7274 = vld [vmem:[%s7228 + $0x168] sm:$0xff]
    %v7275 = vld [vmem:[%s7228 + $0x170] sm:$0xff]
    %v7276 = vld [vmem:[%s7228 + $0x178] sm:$0xff]
    %v7277 = vld [vmem:[%s7228 + $0x180] sm:$0xff]
    %v7278 = vld [vmem:[%s7228 + $0x188] sm:$0xff]
    %v7279 = vld [vmem:[%s7228 + $0x190] sm:$0xff]
    %v7280 = vld [vmem:[%s7228 + $0x198] sm:$0xff]
    %v7281 = vld [vmem:[%s7228 + $0x1a0] sm:$0xff]
    %v7282 = vld [vmem:[%s7228 + $0x1a8] sm:$0xff]
    %v7283 = vld [vmem:[%s7228 + $0x1b0] sm:$0xff]
    %v7284 = vld [vmem:[%s7228 + $0x1b8] sm:$0xff]
    %v7285 = vld [vmem:[%s7228 + $0x1c0] sm:$0xff]
    %v7286 = vld [vmem:[%s7228 + $0x1c8] sm:$0xff]
    %v7287 = vld [vmem:[%s7228 + $0x1d0] sm:$0xff]
    %v7288 = vld [vmem:[%s7228 + $0x1d8] sm:$0xff]
    %v7289 = vld [vmem:[%s7228 + $0x1e0] sm:$0xff]
    %v7290 = vld [vmem:[%s7228 + $0x1e8] sm:$0xff]
    %v7291 = vld [vmem:[%s7228 + $0x1f0] sm:$0xff]
    %v7292 = vld [vmem:[%s7228 + $0x1f8] sm:$0xff]
    %v7293 = vld [vmem:[%s7228 + $0x200] sm:$0xff]
    %v7294 = vld [vmem:[%s7228 + $0x208] sm:$0xff]
    %v7295 = vld [vmem:[%s7228 + $0x210] sm:$0xff]
    %v7296 = vld [vmem:[%s7228 + $0x218] sm:$0xff]
    %v7297 = vld [vmem:[%s7228 + $0x220] sm:$0xff]
    %v7298 = vld [vmem:[%s7228 + $0x228] sm:$0xff]
    %v7299 = vld [vmem:[%s7228 + $0x230] sm:$0xff]
    %v7300 = vld [vmem:[%s7228 + $0x238] sm:$0xff]
    %v7301 = vld [vmem:[%s7228 + $0x240] sm:$0xff]
    %v7302 = vld [vmem:[%s7228 + $0x248] sm:$0xff]
    %v7303 = vld [vmem:[%s7228 + $0x250] sm:$0xff]
    %v7304 = vld [vmem:[%s7228 + $0x258] sm:$0xff]
    %v7305 = vld [vmem:[%s7228 + $0x260] sm:$0xff]
    %v7306 = vld [vmem:[%s7228 + $0x268] sm:$0xff]
    %v7307 = vld [vmem:[%s7228 + $0x270] sm:$0xff]
    %v7308 = vld [vmem:[%s7228 + $0x278] sm:$0xff]
    %v7309 = vld [vmem:[%s7228 + $0x280] sm:$0xff]
    %v7310 = vld [vmem:[%s7228 + $0x288] sm:$0xff]
    %v7311 = vld [vmem:[%s7228 + $0x290] sm:$0xff]
    %v7312 = vld [vmem:[%s7228 + $0x298] sm:$0xff]
    %v7313 = vld [vmem:[%s7228 + $0x2a0] sm:$0xff]
    %v7314 = vld [vmem:[%s7228 + $0x2a8] sm:$0xff]
    %v7315 = vld [vmem:[%s7228 + $0x2b0] sm:$0xff]
    %v7316 = vld [vmem:[%s7228 + $0x2b8] sm:$0xff]
    %v7317 = vld [vmem:[%s7228 + $0x2c0] sm:$0xff]
    %v7318 = vld [vmem:[%s7228 + $0x2c8] sm:$0xff]
    %v7319 = vld [vmem:[%s7228 + $0x2d0] sm:$0xff]
    %v7320 = vld [vmem:[%s7228 + $0x2d8] sm:$0xff]
    %v7321 = vld [vmem:[%s7228 + $0x2e0] sm:$0xff]
    %v7322 = vld [vmem:[%s7228 + $0x2e8] sm:$0xff]
    %v7323 = vld [vmem:[%s7228 + $0x2f0] sm:$0xff]
    %v7324 = vld [vmem:[%s7228 + $0x2f8] sm:$0xff]
    %7325 = vmatprep.subr.mxu0 %v7230
    %7326 = vmatpush1.msra.mxu0 %v7229
    %7327 = vmatprep.subr.mxu0 %v7232
    %7328 = vmatpush1.msra.mxu0 %v7231
    %7329 = vmatprep.subr.mxu0 %v7234
    %7330 = vmatpush1.msra.mxu0 %v7233
    %7331 = vmatprep.subr.mxu0 %v7236
    %7332 = vmatpush1.msra.mxu0 %v7235
    %7333 = vmatprep.subr.mxu0 %v7238
    %7334 = vmatpush1.msra.mxu0 %v7237
    %7335 = vmatprep.subr.mxu0 %v7240
    %7336 = vmatpush1.msra.mxu0 %v7239
    %7337 = vmatprep.subr.mxu0 %v7242
    %7338 = vmatpush1.msra.mxu0 %v7241
    %7339 = vmatprep.subr.mxu0 %v7244
    %7340 = vmatpush1.msra.mxu0 %v7243
    %7341 = vmatprep.subr.mxu0 %v7246
    %7342 = vmatpush1.msra.mxu0 %v7245
    %7343 = vmatprep.subr.mxu0 %v7248
    %7344 = vmatpush1.msra.mxu0 %v7247
    %7345 = vmatprep.subr.mxu0 %v7250
    %7346 = vmatpush1.msra.mxu0 %v7249
    %7347 = vmatprep.subr.mxu0 %v7252
    %7348 = vmatpush1.msra.mxu0 %v7251
    %7349 = vmatprep.subr.mxu0 %v7254
    %7350 = vmatpush1.msra.mxu0 %v7253
    %7351 = vmatprep.subr.mxu0 %v7256
    %7352 = vmatpush1.msra.mxu0 %v7255
    %7353 = vmatprep.subr.mxu0 %v7258
    %7354 = vmatpush1.msra.mxu0 %v7257
    %7355 = vmatprep.subr.mxu0 %v7260
    %7356 = vmatpush1.msra.mxu0 %v7259
    %7357 = vmatprep.subr.mxu0 %v7262
    %7358 = vmatpush1.msra.mxu0 %v7261
    %7359 = vmatprep.subr.mxu0 %v7264
    %7360 = vmatpush1.msra.mxu0 %v7263
    %7361 = vmatprep.subr.mxu0 %v7266
    %7362 = vmatpush1.msra.mxu0 %v7265
    %7363 = vmatprep.subr.mxu0 %v7268
    %7364 = vmatpush1.msra.mxu0 %v7267
    %7365 = vmatprep.subr.mxu0 %v7270
    %7366 = vmatpush1.msra.mxu0 %v7269
    %7367 = vmatprep.subr.mxu0 %v7272
    %7368 = vmatpush1.msra.mxu0 %v7271
    %7369 = vmatprep.subr.mxu0 %v7274
    %7370 = vmatpush1.msra.mxu0 %v7273
    %7371 = vmatprep.subr.mxu0 %v7276
    %7372 = vmatpush1.msra.mxu0 %v7275
    %7373 = vmatprep.subr.mxu0 %v7278
    %7374 = vmatpush1.msra.mxu0 %v7277
    %7375 = vmatprep.subr.mxu0 %v7280
    %7376 = vmatpush1.msra.mxu0 %v7279
    %7377 = vmatprep.subr.mxu0 %v7282
    %7378 = vmatpush1.msra.mxu0 %v7281
    %7379 = vmatprep.subr.mxu0 %v7284
    %7380 = vmatpush1.msra.mxu0 %v7283
    %7381 = vmatprep.subr.mxu0 %v7286
    %7382 = vmatpush1.msra.mxu0 %v7285
    %7383 = vmatprep.subr.mxu0 %v7288
    %7384 = vmatpush1.msra.mxu0 %v7287
    %7385 = vmatprep.subr.mxu0 %v7290
    %7386 = vmatpush1.msra.mxu0 %v7289
    %7387 = vmatprep.subr.mxu0 %v7292
    %7388 = vmatpush1.msra.mxu0 %v7291
    %7389 = vmatprep.mubr.f32.mxu0 %v7115
    %7390 = vmatmul.mubr.f32.gmra.mrb[0].mxu0 %v7114
    %v7391 = vpop.f32.mrb[0].mxu0
    %v7392 = vadd.f32 0.0, %v7391
    %v7393 = vpop.f32.mrb[0].mxu0
    %v7394 = vadd.f32 0.0, %v7393
    %7395 = vmatprep.mubr.f32.mxu0 %v7118
    %7396 = vmatmul.mubr.f32.gmra.mrb[0].mxu0 %v7117
    %v7397 = vpop.f32.mrb[0].mxu0
    %v7398 = vadd.f32 0.0, %v7397
    %v7399 = vpop.f32.mrb[0].mxu0
    %v7400 = vadd.f32 0.0, %v7399
    %7401 = vmatprep.mubr.f32.mxu0 %v7121
    %7402 = vmatmul.mubr.f32.gmra.mrb[0].mxu0 %v7120
    %v7403 = vpop.f32.mrb[0].mxu0
    %v7404 = vadd.f32 0.0, %v7403
    %v7405 = vpop.f32.mrb[0].mxu0
    %v7406 = vadd.f32 0.0, %v7405
    %7407 = vmatprep.mubr.f32.mxu0 %v7124
    %7408 = vmatmul.mubr.f32.gmra.mrb[0].mxu0 %v7123
    %v7409 = vpop.f32.mrb[0].mxu0
    %v7410 = vadd.f32 0.0, %v7409
    %v7411 = vpop.f32.mrb[0].mxu0
    %v7412 = vadd.f32 0.0, %v7411
    %7413 = vdwg.mxu0
    %7414 = vmatprep.subr.mxu0 %v7294
    %7415 = vmatpush1.msra.mxu0 %v7293
    %7416 = vmatprep.subr.mxu0 %v7296
    %7417 = vmatpush1.msra.mxu0 %v7295
    %7418 = vmatprep.subr.mxu0 %v7298
    %7419 = vmatpush1.msra.mxu0 %v7297
    %7420 = vmatprep.subr.mxu0 %v7300
    %7421 = vmatpush1.msra.mxu0 %v7299
    %7422 = vmatprep.subr.mxu0 %v7302
    %7423 = vmatpush1.msra.mxu0 %v7301
    %7424 = vmatprep.subr.mxu0 %v7304
    %7425 = vmatpush1.msra.mxu0 %v7303
    %7426 = vmatprep.subr.mxu0 %v7306
    %7427 = vmatpush1.msra.mxu0 %v7305
    %7428 = vmatprep.subr.mxu0 %v7308
    %7429 = vmatpush1.msra.mxu0 %v7307
    %7430 = vmatprep.subr.mxu0 %v7310
    %7431 = vmatpush1.msra.mxu0 %v7309
    %7432 = vmatprep.subr.mxu0 %v7312
    %7433 = vmatpush1.msra.mxu0 %v7311
    %7434 = vmatprep.subr.mxu0 %v7314
    %7435 = vmatpush1.msra.mxu0 %v7313
    %7436 = vmatprep.subr.mxu0 %v7316
    %7437 = vmatpush1.msra.mxu0 %v7315
    %7438 = vmatprep.subr.mxu0 %v7318
    %7439 = vmatpush1.msra.mxu0 %v7317
    %7440 = vmatprep.subr.mxu0 %v7320
    %7441 = vmatpush1.msra.mxu0 %v7319
    %7442 = vmatprep.subr.mxu0 %v7322
    %7443 = vmatpush1.msra.mxu0 %v7321
    %7444 = vmatprep.subr.mxu0 %v7324
    %7445 = vmatpush1.msra.mxu0 %v7323
    %7446 = vmatprep.subr.mxu0 0.0
    %7447 = vmatpush1.msra.mxu0 0.0
    %7448 = vmatprep.subr.mxu0 0.0
    %7449 = vmatpush1.msra.mxu0 0.0
    %7450 = vmatprep.subr.mxu0 0.0
    %7451 = vmatpush1.msra.mxu0 0.0
    %7452 = vmatprep.subr.mxu0 0.0
    %7453 = vmatpush1.msra.mxu0 0.0
    %7454 = vmatprep.subr.mxu0 0.0
    %7455 = vmatpush1.msra.mxu0 0.0
    %7456 = vmatprep.subr.mxu0 0.0
    %7457 = vmatpush1.msra.mxu0 0.0
    %7458 = vmatprep.subr.mxu0 0.0
    %7459 = vmatpush1.msra.mxu0 0.0
    %7460 = vmatprep.subr.mxu0 0.0
    %7461 = vmatpush1.msra.mxu0 0.0
    %7462 = vmatprep.subr.mxu0 0.0
    %7463 = vmatpush1.msra.mxu0 0.0
    %7464 = vmatprep.subr.mxu0 0.0
    %7465 = vmatpush1.msra.mxu0 0.0
    %7466 = vmatprep.subr.mxu0 0.0
    %7467 = vmatpush1.msra.mxu0 0.0
    %7468 = vmatprep.subr.mxu0 0.0
    %7469 = vmatpush1.msra.mxu0 0.0
    %7470 = vmatprep.subr.mxu0 0.0
    %7471 = vmatpush1.msra.mxu0 0.0
    %7472 = vmatprep.subr.mxu0 0.0
    %7473 = vmatpush1.msra.mxu0 0.0
    %7474 = vmatprep.subr.mxu0 0.0
    %7475 = vmatpush1.msra.mxu0 0.0
    %7476 = vmatprep.subr.mxu0 0.0
    %7477 = vmatpush1.msra.mxu0 0.0
    %7478 = vmatprep.mubr.f32.mxu0 0.0
    %7479 = vmatmul.mubr.f32.gmra.mrb[0].mxu0 %v7116
    %v7480 = vpop.f32.mrb[0].mxu0
    %v7481 = vadd.f32 %v7392, %v7480
    %v7482 = vpop.f32.mrb[0].mxu0
    %v7483 = vadd.f32 %v7394, %v7482
    %7484 = vmatprep.mubr.f32.mxu0 0.0
    %7485 = vmatmul.mubr.f32.gmra.mrb[0].mxu0 %v7119
    %v7486 = vpop.f32.mrb[0].mxu0
    %v7487 = vadd.f32 %v7398, %v7486
    %v7488 = vpop.f32.mrb[0].mxu0
    %v7489 = vadd.f32 %v7400, %v7488
    %7490 = vmatprep.mubr.f32.mxu0 0.0
    %7491 = vmatmul.mubr.f32.gmra.mrb[0].mxu0 %v7122
    %v7492 = vpop.f32.mrb[0].mxu0
    %v7493 = vadd.f32 %v7404, %v7492
    %v7494 = vpop.f32.mrb[0].mxu0
    %v7495 = vadd.f32 %v7406, %v7494
    %7496 = vmatprep.mubr.f32.mxu0 0.0
    %7497 = vmatmul.mubr.f32.gmra.mrb[0].mxu0 %v7125
    %v7498 = vpop.f32.mrb[0].mxu0
    %v7499 = vadd.f32 %v7410, %v7498
    %v7500 = vpop.f32.mrb[0].mxu0
    %v7501 = vadd.f32 %v7412, %v7500
    %7502 = vdwg.mxu0
    %7503 = vmatprep.subr.mxu0 %v7133
    %7504 = vmatpush1.msra.mxu0 %v7132
    %7505 = vmatprep.subr.mxu0 %v7135
    %7506 = vmatpush1.msra.mxu0 %v7134
    %7507 = vmatprep.subr.mxu0 %v7137
    %7508 = vmatpush1.msra.mxu0 %v7136
    %7509 = vmatprep.subr.mxu0 %v7139
    %7510 = vmatpush1.msra.mxu0 %v7138
    %7511 = vmatprep.subr.mxu0 %v7141
    %7512 = vmatpush1.msra.mxu0 %v7140
    %7513 = vmatprep.subr.mxu0 %v7143
    %7514 = vmatpush1.msra.mxu0 %v7142
    %7515 = vmatprep.subr.mxu0 %v7145
    %7516 = vmatpush1.msra.mxu0 %v7144
    %7517 = vmatprep.subr.mxu0 %v7147
    %7518 = vmatpush1.msra.mxu0 %v7146
    %7519 = vmatprep.subr.mxu0 %v7149
    %7520 = vmatpush1.msra.mxu0 %v7148
    %7521 = vmatprep.subr.mxu0 %v7151
    %7522 = vmatpush1.msra.mxu0 %v7150
    %7523 = vmatprep.subr.mxu0 %v7153
    %7524 = vmatpush1.msra.mxu0 %v7152
    %7525 = vmatprep.subr.mxu0 %v7155
    %7526 = vmatpush1.msra.mxu0 %v7154
    %7527 = vmatprep.subr.mxu0 %v7157
    %7528 = vmatpush1.msra.mxu0 %v7156
    %7529 = vmatprep.subr.mxu0 %v7159
    %7530 = vmatpush1.msra.mxu0 %v7158
    %7531 = vmatprep.subr.mxu0 %v7161
    %7532 = vmatpush1.msra.mxu0 %v7160
    %7533 = vmatprep.subr.mxu0 %v7163
    %7534 = vmatpush1.msra.mxu0 %v7162
    %7535 = vmatprep.subr.mxu0 %v7165
    %7536 = vmatpush1.msra.mxu0 %v7164
    %7537 = vmatprep.subr.mxu0 %v7167
    %7538 = vmatpush1.msra.mxu0 %v7166
    %7539 = vmatprep.subr.mxu0 %v7169
    %7540 = vmatpush1.msra.mxu0 %v7168
    %7541 = vmatprep.subr.mxu0 %v7171
    %7542 = vmatpush1.msra.mxu0 %v7170
    %7543 = vmatprep.subr.mxu0 %v7173
    %7544 = vmatpush1.msra.mxu0 %v7172
    %7545 = vmatprep.subr.mxu0 %v7175
    %7546 = vmatpush1.msra.mxu0 %v7174
    %7547 = vmatprep.subr.mxu0 %v7177
    %7548 = vmatpush1.msra.mxu0 %v7176
    %7549 = vmatprep.subr.mxu0 %v7179
    %7550 = vmatpush1.msra.mxu0 %v7178
    %7551 = vmatprep.subr.mxu0 %v7181
    %7552 = vmatpush1.msra.mxu0 %v7180
    %7553 = vmatprep.subr.mxu0 %v7183
    %7554 = vmatpush1.msra.mxu0 %v7182
    %7555 = vmatprep.subr.mxu0 %v7185
    %7556 = vmatpush1.msra.mxu0 %v7184
    %7557 = vmatprep.subr.mxu0 %v7187
    %7558 = vmatpush1.msra.mxu0 %v7186
    %7559 = vmatprep.subr.mxu0 %v7189
    %7560 = vmatpush1.msra.mxu0 %v7188
    %7561 = vmatprep.subr.mxu0 %v7191
    %7562 = vmatpush1.msra.mxu0 %v7190
    %7563 = vmatprep.subr.mxu0 %v7193
    %7564 = vmatpush1.msra.mxu0 %v7192
    %7565 = vmatprep.subr.mxu0 %v7195
    %7566 = vmatpush1.msra.mxu0 %v7194
    %7567 = vmatprep.mubr.f32.mxu0 %v3773
    %7568 = vmatmul.mubr.f32.gmra.mrb[0].mxu0 %v3772
    %v7569 = vpop.f32.mrb[0].mxu0
    %v7570 = vadd.f32 %v7481, %v7569
    %v7571 = vpop.f32.mrb[0].mxu0
    %v7572 = vadd.f32 %v7483, %v7571
    %7573 = vmatprep.mubr.f32.mxu0 %v3776
    %7574 = vmatmul.mubr.f32.gmra.mrb[0].mxu0 %v3775
    %v7575 = vpop.f32.mrb[0].mxu0
    %v7576 = vadd.f32 %v7487, %v7575
    %v7577 = vpop.f32.mrb[0].mxu0
    %v7578 = vadd.f32 %v7489, %v7577
    %7579 = vmatprep.mubr.f32.mxu0 %v3779
    %7580 = vmatmul.mubr.f32.gmra.mrb[0].mxu0 %v3778
    %v7581 = vpop.f32.mrb[0].mxu0
    %v7582 = vadd.f32 %v7493, %v7581
    %v7583 = vpop.f32.mrb[0].mxu0
    %v7584 = vadd.f32 %v7495, %v7583
    %7585 = vmatprep.mubr.f32.mxu0 %v3782
    %7586 = vmatmul.mubr.f32.gmra.mrb[0].mxu0 %v3781
    %v7587 = vpop.f32.mrb[0].mxu0
    %v7588 = vadd.f32 %v7499, %v7587
    %v7589 = vpop.f32.mrb[0].mxu0
    %v7590 = vadd.f32 %v7501, %v7589
    %7591 = vdwg.mxu0
    %7592 = vmatprep.subr.mxu0 %v7197
    %7593 = vmatpush1.msra.mxu0 %v7196
    %7594 = vmatprep.subr.mxu0 %v7199
    %7595 = vmatpush1.msra.mxu0 %v7198
    %7596 = vmatprep.subr.mxu0 %v7201
    %7597 = vmatpush1.msra.mxu0 %v7200
    %7598 = vmatprep.subr.mxu0 %v7203
    %7599 = vmatpush1.msra.mxu0 %v7202
    %7600 = vmatprep.subr.mxu0 %v7205
    %7601 = vmatpush1.msra.mxu0 %v7204
    %7602 = vmatprep.subr.mxu0 %v7207
    %7603 = vmatpush1.msra.mxu0 %v7206
    %7604 = vmatprep.subr.mxu0 %v7209
    %7605 = vmatpush1.msra.mxu0 %v7208
    %7606 = vmatprep.subr.mxu0 %v7211
    %7607 = vmatpush1.msra.mxu0 %v7210
    %7608 = vmatprep.subr.mxu0 %v7213
    %7609 = vmatpush1.msra.mxu0 %v7212
    %7610 = vmatprep.subr.mxu0 %v7215
    %7611 = vmatpush1.msra.mxu0 %v7214
    %7612 = vmatprep.subr.mxu0 %v7217
    %7613 = vmatpush1.msra.mxu0 %v7216
    %7614 = vmatprep.subr.mxu0 %v7219
    %7615 = vmatpush1.msra.mxu0 %v7218
    %7616 = vmatprep.subr.mxu0 %v7221
    %7617 = vmatpush1.msra.mxu0 %v7220
    %7618 = vmatprep.subr.mxu0 %v7223
    %7619 = vmatpush1.msra.mxu0 %v7222
    %7620 = vmatprep.subr.mxu0 %v7225
    %7621 = vmatpush1.msra.mxu0 %v7224
    %7622 = vmatprep.subr.mxu0 %v7227
    %7623 = vmatpush1.msra.mxu0 %v7226
    %7624 = vmatprep.subr.mxu0 0.0
    %7625 = vmatpush1.msra.mxu0 0.0
    %7626 = vmatprep.subr.mxu0 0.0
    %7627 = vmatpush1.msra.mxu0 0.0
    %7628 = vmatprep.subr.mxu0 0.0
    %7629 = vmatpush1.msra.mxu0 0.0
    %7630 = vmatprep.subr.mxu0 0.0
    %7631 = vmatpush1.msra.mxu0 0.0
    %7632 = vmatprep.subr.mxu0 0.0
    %7633 = vmatpush1.msra.mxu0 0.0
    %7634 = vmatprep.subr.mxu0 0.0
    %7635 = vmatpush1.msra.mxu0 0.0
    %7636 = vmatprep.subr.mxu0 0.0
    %7637 = vmatpush1.msra.mxu0 0.0
    %7638 = vmatprep.subr.mxu0 0.0
    %7639 = vmatpush1.msra.mxu0 0.0
    %7640 = vmatprep.subr.mxu0 0.0
    %7641 = vmatpush1.msra.mxu0 0.0
    %7642 = vmatprep.subr.mxu0 0.0
    %7643 = vmatpush1.msra.mxu0 0.0
    %7644 = vmatprep.subr.mxu0 0.0
    %7645 = vmatpush1.msra.mxu0 0.0
    %7646 = vmatprep.subr.mxu0 0.0
    %7647 = vmatpush1.msra.mxu0 0.0
    %7648 = vmatprep.subr.mxu0 0.0
    %7649 = vmatpush1.msra.mxu0 0.0
    %7650 = vmatprep.subr.mxu0 0.0
    %7651 = vmatpush1.msra.mxu0 0.0
    %7652 = vmatprep.subr.mxu0 0.0
    %7653 = vmatpush1.msra.mxu0 0.0
    %7654 = vmatprep.subr.mxu0 0.0
    %7655 = vmatpush1.msra.mxu0 0.0
    %7656 = vmatprep.mubr.f32.mxu0 0.0
    %7657 = vmatmul.mubr.f32.gmra.mrb[0].mxu0 %v3774
    %v7658 = vpop.f32.mrb[0].mxu0
    %v7659 = vadd.f32 %v7570, %v7658
    %v7660 = vpop.f32.mrb[0].mxu0
    %v7661 = vadd.f32 %v7572, %v7660
    %7662 = vmatprep.mubr.f32.mxu0 0.0
    %7663 = vmatmul.mubr.f32.gmra.mrb[0].mxu0 %v3777
    %v7664 = vpop.f32.mrb[0].mxu0
    %v7665 = vadd.f32 %v7576, %v7664
    %v7666 = vpop.f32.mrb[0].mxu0
    %v7667 = vadd.f32 %v7578, %v7666
    %7668 = vmatprep.mubr.f32.mxu0 0.0
    %7669 = vmatmul.mubr.f32.gmra.mrb[0].mxu0 %v3780
    %v7670 = vpop.f32.mrb[0].mxu0
    %v7671 = vadd.f32 %v7582, %v7670
    %v7672 = vpop.f32.mrb[0].mxu0
    %v7673 = vadd.f32 %v7584, %v7672
    %7674 = vmatprep.mubr.f32.mxu0 0.0
    %7675 = vmatmul.mubr.f32.gmra.mrb[0].mxu0 %v3783
    %v7676 = vpop.f32.mrb[0].mxu0
    %v7677 = vadd.f32 %v7588, %v7676
    %v7678 = vpop.f32.mrb[0].mxu0
    %v7679 = vadd.f32 %v7590, %v7678
    %7680 = vdwg.mxu0
    %s7681 = scalar_lea.vmem [#allocation6], 1536
    %v7682 = vld [vmem:[%s7681] sm:$0xff]
    %v7683 = vld [vmem:[%s7681 + $0x8] sm:$0xff]
    %v7684 = vld [vmem:[%s7681 + $0x10] sm:$0xff]
    %v7685 = vld [vmem:[%s7681 + $0x18] sm:$0xff]
    %v7686 = vld [vmem:[%s7681 + $0x20] sm:$0xff]
    %v7687 = vld [vmem:[%s7681 + $0x28] sm:$0xff]
    %v7688 = vld [vmem:[%s7681 + $0x30] sm:$0xff]
    %v7689 = vld [vmem:[%s7681 + $0x38] sm:$0xff]
    %v7690 = vld [vmem:[%s7681 + $0x40] sm:$0xff]
    %v7691 = vld [vmem:[%s7681 + $0x48] sm:$0xff]
    %v7692 = vld [vmem:[%s7681 + $0x50] sm:$0xff]
    %v7693 = vld [vmem:[%s7681 + $0x58] sm:$0xff]
    %v7694 = vld [vmem:[%s7681 + $0x60] sm:$0xff]
    %v7695 = vld [vmem:[%s7681 + $0x68] sm:$0xff]
    %v7696 = vld [vmem:[%s7681 + $0x70] sm:$0xff]
    %v7697 = vld [vmem:[%s7681 + $0x78] sm:$0xff]
    %v7698 = vld [vmem:[%s7681 + $0x80] sm:$0xff]
    %v7699 = vld [vmem:[%s7681 + $0x88] sm:$0xff]
    %v7700 = vld [vmem:[%s7681 + $0x90] sm:$0xff]
    %v7701 = vld [vmem:[%s7681 + $0x98] sm:$0xff]
    %v7702 = vld [vmem:[%s7681 + $0xa0] sm:$0xff]
    %v7703 = vld [vmem:[%s7681 + $0xa8] sm:$0xff]
    %v7704 = vld [vmem:[%s7681 + $0xb0] sm:$0xff]
    %v7705 = vld [vmem:[%s7681 + $0xb8] sm:$0xff]
    %v7706 = vld [vmem:[%s7681 + $0xc0] sm:$0xff]
    %v7707 = vld [vmem:[%s7681 + $0xc8] sm:$0xff]
    %v7708 = vld [vmem:[%s7681 + $0xd0] sm:$0xff]
    %v7709 = vld [vmem:[%s7681 + $0xd8] sm:$0xff]
    %v7710 = vld [vmem:[%s7681 + $0xe0] sm:$0xff]
    %v7711 = vld [vmem:[%s7681 + $0xe8] sm:$0xff]
    %v7712 = vld [vmem:[%s7681 + $0xf0] sm:$0xff]
    %v7713 = vld [vmem:[%s7681 + $0xf8] sm:$0xff]
    %v7714 = vld [vmem:[%s7681 + $0x100] sm:$0xff]
    %v7715 = vld [vmem:[%s7681 + $0x108] sm:$0xff]
    %v7716 = vld [vmem:[%s7681 + $0x110] sm:$0xff]
    %v7717 = vld [vmem:[%s7681 + $0x118] sm:$0xff]
    %v7718 = vld [vmem:[%s7681 + $0x120] sm:$0xff]
    %v7719 = vld [vmem:[%s7681 + $0x128] sm:$0xff]
    %v7720 = vld [vmem:[%s7681 + $0x130] sm:$0xff]
    %v7721 = vld [vmem:[%s7681 + $0x138] sm:$0xff]
    %v7722 = vld [vmem:[%s7681 + $0x140] sm:$0xff]
    %v7723 = vld [vmem:[%s7681 + $0x148] sm:$0xff]
    %v7724 = vld [vmem:[%s7681 + $0x150] sm:$0xff]
    %v7725 = vld [vmem:[%s7681 + $0x158] sm:$0xff]
    %v7726 = vld [vmem:[%s7681 + $0x160] sm:$0xff]
    %v7727 = vld [vmem:[%s7681 + $0x168] sm:$0xff]
    %v7728 = vld [vmem:[%s7681 + $0x170] sm:$0xff]
    %v7729 = vld [vmem:[%s7681 + $0x178] sm:$0xff]
    %v7730 = vld [vmem:[%s7681 + $0x180] sm:$0xff]
    %v7731 = vld [vmem:[%s7681 + $0x188] sm:$0xff]
    %v7732 = vld [vmem:[%s7681 + $0x190] sm:$0xff]
    %v7733 = vld [vmem:[%s7681 + $0x198] sm:$0xff]
    %v7734 = vld [vmem:[%s7681 + $0x1a0] sm:$0xff]
    %v7735 = vld [vmem:[%s7681 + $0x1a8] sm:$0xff]
    %v7736 = vld [vmem:[%s7681 + $0x1b0] sm:$0xff]
    %v7737 = vld [vmem:[%s7681 + $0x1b8] sm:$0xff]
    %v7738 = vld [vmem:[%s7681 + $0x1c0] sm:$0xff]
    %v7739 = vld [vmem:[%s7681 + $0x1c8] sm:$0xff]
    %v7740 = vld [vmem:[%s7681 + $0x1d0] sm:$0xff]
    %v7741 = vld [vmem:[%s7681 + $0x1d8] sm:$0xff]
    %v7742 = vld [vmem:[%s7681 + $0x1e0] sm:$0xff]
    %v7743 = vld [vmem:[%s7681 + $0x1e8] sm:$0xff]
    %v7744 = vld [vmem:[%s7681 + $0x1f0] sm:$0xff]
    %v7745 = vld [vmem:[%s7681 + $0x1f8] sm:$0xff]
    %v7746 = vld [vmem:[%s7681 + $0x200] sm:$0xff]
    %v7747 = vld [vmem:[%s7681 + $0x208] sm:$0xff]
    %v7748 = vld [vmem:[%s7681 + $0x210] sm:$0xff]
    %v7749 = vld [vmem:[%s7681 + $0x218] sm:$0xff]
    %v7750 = vld [vmem:[%s7681 + $0x220] sm:$0xff]
    %v7751 = vld [vmem:[%s7681 + $0x228] sm:$0xff]
    %v7752 = vld [vmem:[%s7681 + $0x230] sm:$0xff]
    %v7753 = vld [vmem:[%s7681 + $0x238] sm:$0xff]
    %v7754 = vld [vmem:[%s7681 + $0x240] sm:$0xff]
    %v7755 = vld [vmem:[%s7681 + $0x248] sm:$0xff]
    %v7756 = vld [vmem:[%s7681 + $0x250] sm:$0xff]
    %v7757 = vld [vmem:[%s7681 + $0x258] sm:$0xff]
    %v7758 = vld [vmem:[%s7681 + $0x260] sm:$0xff]
    %v7759 = vld [vmem:[%s7681 + $0x268] sm:$0xff]
    %v7760 = vld [vmem:[%s7681 + $0x270] sm:$0xff]
    %v7761 = vld [vmem:[%s7681 + $0x278] sm:$0xff]
    %v7762 = vld [vmem:[%s7681 + $0x280] sm:$0xff]
    %v7763 = vld [vmem:[%s7681 + $0x288] sm:$0xff]
    %v7764 = vld [vmem:[%s7681 + $0x290] sm:$0xff]
    %v7765 = vld [vmem:[%s7681 + $0x298] sm:$0xff]
    %v7766 = vld [vmem:[%s7681 + $0x2a0] sm:$0xff]
    %v7767 = vld [vmem:[%s7681 + $0x2a8] sm:$0xff]
    %v7768 = vld [vmem:[%s7681 + $0x2b0] sm:$0xff]
    %v7769 = vld [vmem:[%s7681 + $0x2b8] sm:$0xff]
    %v7770 = vld [vmem:[%s7681 + $0x2c0] sm:$0xff]
    %v7771 = vld [vmem:[%s7681 + $0x2c8] sm:$0xff]
    %v7772 = vld [vmem:[%s7681 + $0x2d0] sm:$0xff]
    %v7773 = vld [vmem:[%s7681 + $0x2d8] sm:$0xff]
    %v7774 = vld [vmem:[%s7681 + $0x2e0] sm:$0xff]
    %v7775 = vld [vmem:[%s7681 + $0x2e8] sm:$0xff]
    %v7776 = vld [vmem:[%s7681 + $0x2f0] sm:$0xff]
    %v7777 = vld [vmem:[%s7681 + $0x2f8] sm:$0xff]
    %7778 = vmatprep.subr.mxu0 %v7683
    %7779 = vmatpush1.msra.mxu0 %v7682
    %7780 = vmatprep.subr.mxu0 %v7685
    %7781 = vmatpush1.msra.mxu0 %v7684
    %7782 = vmatprep.subr.mxu0 %v7687
    %7783 = vmatpush1.msra.mxu0 %v7686
    %7784 = vmatprep.subr.mxu0 %v7689
    %7785 = vmatpush1.msra.mxu0 %v7688
    %7786 = vmatprep.subr.mxu0 %v7691
    %7787 = vmatpush1.msra.mxu0 %v7690
    %7788 = vmatprep.subr.mxu0 %v7693
    %7789 = vmatpush1.msra.mxu0 %v7692
    %7790 = vmatprep.subr.mxu0 %v7695
    %7791 = vmatpush1.msra.mxu0 %v7694
    %7792 = vmatprep.subr.mxu0 %v7697
    %7793 = vmatpush1.msra.mxu0 %v7696
    %7794 = vmatprep.subr.mxu0 %v7699
    %7795 = vmatpush1.msra.mxu0 %v7698
    %7796 = vmatprep.subr.mxu0 %v7701
    %7797 = vmatpush1.msra.mxu0 %v7700
    %7798 = vmatprep.subr.mxu0 %v7703
    %7799 = vmatpush1.msra.mxu0 %v7702
    %7800 = vmatprep.subr.mxu0 %v7705
    %7801 = vmatpush1.msra.mxu0 %v7704
    %7802 = vmatprep.subr.mxu0 %v7707
    %7803 = vmatpush1.msra.mxu0 %v7706
    %7804 = vmatprep.subr.mxu0 %v7709
    %7805 = vmatpush1.msra.mxu0 %v7708
    %7806 = vmatprep.subr.mxu0 %v7711
    %7807 = vmatpush1.msra.mxu0 %v7710
    %7808 = vmatprep.subr.mxu0 %v7713
    %7809 = vmatpush1.msra.mxu0 %v7712
    %7810 = vmatprep.subr.mxu0 %v7715
    %7811 = vmatpush1.msra.mxu0 %v7714
    %7812 = vmatprep.subr.mxu0 %v7717
    %7813 = vmatpush1.msra.mxu0 %v7716
    %7814 = vmatprep.subr.mxu0 %v7719
    %7815 = vmatpush1.msra.mxu0 %v7718
    %7816 = vmatprep.subr.mxu0 %v7721
    %7817 = vmatpush1.msra.mxu0 %v7720
    %7818 = vmatprep.subr.mxu0 %v7723
    %7819 = vmatpush1.msra.mxu0 %v7722
    %7820 = vmatprep.subr.mxu0 %v7725
    %7821 = vmatpush1.msra.mxu0 %v7724
    %7822 = vmatprep.subr.mxu0 %v7727
    %7823 = vmatpush1.msra.mxu0 %v7726
    %7824 = vmatprep.subr.mxu0 %v7729
    %7825 = vmatpush1.msra.mxu0 %v7728
    %7826 = vmatprep.subr.mxu0 %v7731
    %7827 = vmatpush1.msra.mxu0 %v7730
    %7828 = vmatprep.subr.mxu0 %v7733
    %7829 = vmatpush1.msra.mxu0 %v7732
    %7830 = vmatprep.subr.mxu0 %v7735
    %7831 = vmatpush1.msra.mxu0 %v7734
    %7832 = vmatprep.subr.mxu0 %v7737
    %7833 = vmatpush1.msra.mxu0 %v7736
    %7834 = vmatprep.subr.mxu0 %v7739
    %7835 = vmatpush1.msra.mxu0 %v7738
    %7836 = vmatprep.subr.mxu0 %v7741
    %7837 = vmatpush1.msra.mxu0 %v7740
    %7838 = vmatprep.subr.mxu0 %v7743
    %7839 = vmatpush1.msra.mxu0 %v7742
    %7840 = vmatprep.subr.mxu0 %v7745
    %7841 = vmatpush1.msra.mxu0 %v7744
    %7842 = vmatprep.mubr.f32.mxu0 %v3776
    %7843 = vmatmul.mubr.f32.gmra.mrb[0].mxu0 %v3775
    %v7844 = vpop.f32.mrb[0].mxu0
    %v7845 = vadd.f32 0.0, %v7844
    %v7846 = vpop.f32.mrb[0].mxu0
    %v7847 = vadd.f32 0.0, %v7846
    %7848 = vmatprep.mubr.f32.mxu0 %v3779
    %7849 = vmatmul.mubr.f32.gmra.mrb[0].mxu0 %v3778
    %v7850 = vpop.f32.mrb[0].mxu0
    %v7851 = vadd.f32 0.0, %v7850
    %v7852 = vpop.f32.mrb[0].mxu0
    %v7853 = vadd.f32 0.0, %v7852
    %7854 = vmatprep.mubr.f32.mxu0 %v3782
    %7855 = vmatmul.mubr.f32.gmra.mrb[0].mxu0 %v3781
    %v7856 = vpop.f32.mrb[0].mxu0
    %v7857 = vadd.f32 0.0, %v7856
    %v7858 = vpop.f32.mrb[0].mxu0
    %v7859 = vadd.f32 0.0, %v7858
    %7860 = vmatprep.mubr.f32.mxu0 %v3785
    %7861 = vmatmul.mubr.f32.gmra.mrb[0].mxu0 %v3784
    %v7862 = vpop.f32.mrb[0].mxu0
    %v7863 = vadd.f32 0.0, %v7862
    %v7864 = vpop.f32.mrb[0].mxu0
    %v7865 = vadd.f32 0.0, %v7864
    %7866 = vdwg.mxu0
    %7867 = vmatprep.subr.mxu0 %v7747
    %7868 = vmatpush1.msra.mxu0 %v7746
    %7869 = vmatprep.subr.mxu0 %v7749
    %7870 = vmatpush1.msra.mxu0 %v7748
    %7871 = vmatprep.subr.mxu0 %v7751
    %7872 = vmatpush1.msra.mxu0 %v7750
    %7873 = vmatprep.subr.mxu0 %v7753
    %7874 = vmatpush1.msra.mxu0 %v7752
    %7875 = vmatprep.subr.mxu0 %v7755
    %7876 = vmatpush1.msra.mxu0 %v7754
    %7877 = vmatprep.subr.mxu0 %v7757
    %7878 = vmatpush1.msra.mxu0 %v7756
    %7879 = vmatprep.subr.mxu0 %v7759
    %7880 = vmatpush1.msra.mxu0 %v7758
    %7881 = vmatprep.subr.mxu0 %v7761
    %7882 = vmatpush1.msra.mxu0 %v7760
    %7883 = vmatprep.subr.mxu0 %v7763
    %7884 = vmatpush1.msra.mxu0 %v7762
    %7885 = vmatprep.subr.mxu0 %v7765
    %7886 = vmatpush1.msra.mxu0 %v7764
    %7887 = vmatprep.subr.mxu0 %v7767
    %7888 = vmatpush1.msra.mxu0 %v7766
    %7889 = vmatprep.subr.mxu0 %v7769
    %7890 = vmatpush1.msra.mxu0 %v7768
    %7891 = vmatprep.subr.mxu0 %v7771
    %7892 = vmatpush1.msra.mxu0 %v7770
    %7893 = vmatprep.subr.mxu0 %v7773
    %7894 = vmatpush1.msra.mxu0 %v7772
    %7895 = vmatprep.subr.mxu0 %v7775
    %7896 = vmatpush1.msra.mxu0 %v7774
    %7897 = vmatprep.subr.mxu0 %v7777
    %7898 = vmatpush1.msra.mxu0 %v7776
    %7899 = vmatprep.subr.mxu0 0.0
    %7900 = vmatpush1.msra.mxu0 0.0
    %7901 = vmatprep.subr.mxu0 0.0
    %7902 = vmatpush1.msra.mxu0 0.0
    %7903 = vmatprep.subr.mxu0 0.0
    %7904 = vmatpush1.msra.mxu0 0.0
    %7905 = vmatprep.subr.mxu0 0.0
    %7906 = vmatpush1.msra.mxu0 0.0
    %7907 = vmatprep.subr.mxu0 0.0
    %7908 = vmatpush1.msra.mxu0 0.0
    %7909 = vmatprep.subr.mxu0 0.0
    %7910 = vmatpush1.msra.mxu0 0.0
    %7911 = vmatprep.subr.mxu0 0.0
    %7912 = vmatpush1.msra.mxu0 0.0
    %7913 = vmatprep.subr.mxu0 0.0
    %7914 = vmatpush1.msra.mxu0 0.0
    %7915 = vmatprep.subr.mxu0 0.0
    %7916 = vmatpush1.msra.mxu0 0.0
    %7917 = vmatprep.subr.mxu0 0.0
    %7918 = vmatpush1.msra.mxu0 0.0
    %7919 = vmatprep.subr.mxu0 0.0
    %7920 = vmatpush1.msra.mxu0 0.0
    %7921 = vmatprep.subr.mxu0 0.0
    %7922 = vmatpush1.msra.mxu0 0.0
    %7923 = vmatprep.subr.mxu0 0.0
    %7924 = vmatpush1.msra.mxu0 0.0
    %7925 = vmatprep.subr.mxu0 0.0
    %7926 = vmatpush1.msra.mxu0 0.0
    %7927 = vmatprep.subr.mxu0 0.0
    %7928 = vmatpush1.msra.mxu0 0.0
    %7929 = vmatprep.subr.mxu0 0.0
    %7930 = vmatpush1.msra.mxu0 0.0
    %7931 = vmatprep.mubr.f32.mxu0 0.0
    %7932 = vmatmul.mubr.f32.gmra.mrb[0].mxu0 %v3777
    %v7933 = vpop.f32.mrb[0].mxu0
    %v7934 = vadd.f32 %v7845, %v7933
    %v7935 = vpop.f32.mrb[0].mxu0
    %v7936 = vadd.f32 %v7847, %v7935
    %7937 = vmatprep.mubr.f32.mxu0 0.0
    %7938 = vmatmul.mubr.f32.gmra.mrb[0].mxu0 %v3780
    %v7939 = vpop.f32.mrb[0].mxu0
    %v7940 = vadd.f32 %v7851, %v7939
    %v7941 = vpop.f32.mrb[0].mxu0
    %v7942 = vadd.f32 %v7853, %v7941
    %7943 = vmatprep.mubr.f32.mxu0 0.0
    %7944 = vmatmul.mubr.f32.gmra.mrb[0].mxu0 %v3783
    %v7945 = vpop.f32.mrb[0].mxu0
    %v7946 = vadd.f32 %v7857, %v7945
    %v7947 = vpop.f32.mrb[0].mxu0
    %v7948 = vadd.f32 %v7859, %v7947
    %7949 = vmatprep.mubr.f32.mxu0 0.0
    %7950 = vmatmul.mubr.f32.gmra.mrb[0].mxu0 %v3786
    %v7951 = vpop.f32.mrb[0].mxu0
    %v7952 = vadd.f32 %v7863, %v7951
    %v7953 = vpop.f32.mrb[0].mxu0
    %v7954 = vadd.f32 %v7865, %v7953
    %7955 = vdwg.mxu0
    %v7956 = vadd.f32 %v7659, %v7934
    %v7957 = vadd.f32 %v7661, %v7936
    %v7958 = vadd.f32 %v7665, %v7940
    %v7959 = vadd.f32 %v7667, %v7942
    %v7960 = vadd.f32 %v7671, %v7946
    %v7961 = vadd.f32 %v7673, %v7948
    %v7962 = vadd.f32 %v7677, %v7952
    %v7963 = vadd.f32 %v7679, %v7954
    %s7964 = scalar_lea.vmem [#allocation6], 2304
    %v7965 = vld [vmem:[%s7964] sm:$0xff]
    %v7966 = vld [vmem:[%s7964 + $0x8] sm:$0xff]
    %v7967 = vld [vmem:[%s7964 + $0x10] sm:$0xff]
    %v7968 = vld [vmem:[%s7964 + $0x18] sm:$0xff]
    %v7969 = vld [vmem:[%s7964 + $0x20] sm:$0xff]
    %v7970 = vld [vmem:[%s7964 + $0x28] sm:$0xff]
    %v7971 = vld [vmem:[%s7964 + $0x30] sm:$0xff]
    %v7972 = vld [vmem:[%s7964 + $0x38] sm:$0xff]
    %v7973 = vld [vmem:[%s7964 + $0x40] sm:$0xff]
    %v7974 = vld [vmem:[%s7964 + $0x48] sm:$0xff]
    %v7975 = vld [vmem:[%s7964 + $0x50] sm:$0xff]
    %v7976 = vld [vmem:[%s7964 + $0x58] sm:$0xff]
    %v7977 = vld [vmem:[%s7964 + $0x60] sm:$0xff]
    %v7978 = vld [vmem:[%s7964 + $0x68] sm:$0xff]
    %v7979 = vld [vmem:[%s7964 + $0x70] sm:$0xff]
    %v7980 = vld [vmem:[%s7964 + $0x78] sm:$0xff]
    %v7981 = vld [vmem:[%s7964 + $0x80] sm:$0xff]
    %v7982 = vld [vmem:[%s7964 + $0x88] sm:$0xff]
    %v7983 = vld [vmem:[%s7964 + $0x90] sm:$0xff]
    %v7984 = vld [vmem:[%s7964 + $0x98] sm:$0xff]
    %v7985 = vld [vmem:[%s7964 + $0xa0] sm:$0xff]
    %v7986 = vld [vmem:[%s7964 + $0xa8] sm:$0xff]
    %v7987 = vld [vmem:[%s7964 + $0xb0] sm:$0xff]
    %v7988 = vld [vmem:[%s7964 + $0xb8] sm:$0xff]
    %v7989 = vld [vmem:[%s7964 + $0xc0] sm:$0xff]
    %v7990 = vld [vmem:[%s7964 + $0xc8] sm:$0xff]
    %v7991 = vld [vmem:[%s7964 + $0xd0] sm:$0xff]
    %v7992 = vld [vmem:[%s7964 + $0xd8] sm:$0xff]
    %v7993 = vld [vmem:[%s7964 + $0xe0] sm:$0xff]
    %v7994 = vld [vmem:[%s7964 + $0xe8] sm:$0xff]
    %v7995 = vld [vmem:[%s7964 + $0xf0] sm:$0xff]
    %v7996 = vld [vmem:[%s7964 + $0xf8] sm:$0xff]
    %v7997 = vld [vmem:[%s7964 + $0x100] sm:$0xff]
    %v7998 = vld [vmem:[%s7964 + $0x108] sm:$0xff]
    %v7999 = vld [vmem:[%s7964 + $0x110] sm:$0xff]
    %v8000 = vld [vmem:[%s7964 + $0x118] sm:$0xff]
    %v8001 = vld [vmem:[%s7964 + $0x120] sm:$0xff]
    %v8002 = vld [vmem:[%s7964 + $0x128] sm:$0xff]
    %v8003 = vld [vmem:[%s7964 + $0x130] sm:$0xff]
    %v8004 = vld [vmem:[%s7964 + $0x138] sm:$0xff]
    %v8005 = vld [vmem:[%s7964 + $0x140] sm:$0xff]
    %v8006 = vld [vmem:[%s7964 + $0x148] sm:$0xff]
    %v8007 = vld [vmem:[%s7964 + $0x150] sm:$0xff]
    %v8008 = vld [vmem:[%s7964 + $0x158] sm:$0xff]
    %v8009 = vld [vmem:[%s7964 + $0x160] sm:$0xff]
    %v8010 = vld [vmem:[%s7964 + $0x168] sm:$0xff]
    %v8011 = vld [vmem:[%s7964 + $0x170] sm:$0xff]
    %v8012 = vld [vmem:[%s7964 + $0x178] sm:$0xff]
    %v8013 = vld [vmem:[%s7964 + $0x180] sm:$0xff]
    %v8014 = vld [vmem:[%s7964 + $0x188] sm:$0xff]
    %v8015 = vld [vmem:[%s7964 + $0x190] sm:$0xff]
    %v8016 = vld [vmem:[%s7964 + $0x198] sm:$0xff]
    %v8017 = vld [vmem:[%s7964 + $0x1a0] sm:$0xff]
    %v8018 = vld [vmem:[%s7964 + $0x1a8] sm:$0xff]
    %v8019 = vld [vmem:[%s7964 + $0x1b0] sm:$0xff]
    %v8020 = vld [vmem:[%s7964 + $0x1b8] sm:$0xff]
    %v8021 = vld [vmem:[%s7964 + $0x1c0] sm:$0xff]
    %v8022 = vld [vmem:[%s7964 + $0x1c8] sm:$0xff]
    %v8023 = vld [vmem:[%s7964 + $0x1d0] sm:$0xff]
    %v8024 = vld [vmem:[%s7964 + $0x1d8] sm:$0xff]
    %v8025 = vld [vmem:[%s7964 + $0x1e0] sm:$0xff]
    %v8026 = vld [vmem:[%s7964 + $0x1e8] sm:$0xff]
    %v8027 = vld [vmem:[%s7964 + $0x1f0] sm:$0xff]
    %v8028 = vld [vmem:[%s7964 + $0x1f8] sm:$0xff]
    %v8029 = vld [vmem:[%s7964 + $0x200] sm:$0xff]
    %v8030 = vld [vmem:[%s7964 + $0x208] sm:$0xff]
    %v8031 = vld [vmem:[%s7964 + $0x210] sm:$0xff]
    %v8032 = vld [vmem:[%s7964 + $0x218] sm:$0xff]
    %v8033 = vld [vmem:[%s7964 + $0x220] sm:$0xff]
    %v8034 = vld [vmem:[%s7964 + $0x228] sm:$0xff]
    %v8035 = vld [vmem:[%s7964 + $0x230] sm:$0xff]
    %v8036 = vld [vmem:[%s7964 + $0x238] sm:$0xff]
    %v8037 = vld [vmem:[%s7964 + $0x240] sm:$0xff]
    %v8038 = vld [vmem:[%s7964 + $0x248] sm:$0xff]
    %v8039 = vld [vmem:[%s7964 + $0x250] sm:$0xff]
    %v8040 = vld [vmem:[%s7964 + $0x258] sm:$0xff]
    %v8041 = vld [vmem:[%s7964 + $0x260] sm:$0xff]
    %v8042 = vld [vmem:[%s7964 + $0x268] sm:$0xff]
    %v8043 = vld [vmem:[%s7964 + $0x270] sm:$0xff]
    %v8044 = vld [vmem:[%s7964 + $0x278] sm:$0xff]
    %v8045 = vld [vmem:[%s7964 + $0x280] sm:$0xff]
    %v8046 = vld [vmem:[%s7964 + $0x288] sm:$0xff]
    %v8047 = vld [vmem:[%s7964 + $0x290] sm:$0xff]
    %v8048 = vld [vmem:[%s7964 + $0x298] sm:$0xff]
    %v8049 = vld [vmem:[%s7964 + $0x2a0] sm:$0xff]
    %v8050 = vld [vmem:[%s7964 + $0x2a8] sm:$0xff]
    %v8051 = vld [vmem:[%s7964 + $0x2b0] sm:$0xff]
    %v8052 = vld [vmem:[%s7964 + $0x2b8] sm:$0xff]
    %v8053 = vld [vmem:[%s7964 + $0x2c0] sm:$0xff]
    %v8054 = vld [vmem:[%s7964 + $0x2c8] sm:$0xff]
    %v8055 = vld [vmem:[%s7964 + $0x2d0] sm:$0xff]
    %v8056 = vld [vmem:[%s7964 + $0x2d8] sm:$0xff]
    %v8057 = vld [vmem:[%s7964 + $0x2e0] sm:$0xff]
    %v8058 = vld [vmem:[%s7964 + $0x2e8] sm:$0xff]
    %v8059 = vld [vmem:[%s7964 + $0x2f0] sm:$0xff]
    %v8060 = vld [vmem:[%s7964 + $0x2f8] sm:$0xff]
    %8061 = vmatprep.subr.mxu0 %v7966
    %8062 = vmatpush1.msra.mxu0 %v7965
    %8063 = vmatprep.subr.mxu0 %v7968
    %8064 = vmatpush1.msra.mxu0 %v7967
    %8065 = vmatprep.subr.mxu0 %v7970
    %8066 = vmatpush1.msra.mxu0 %v7969
    %8067 = vmatprep.subr.mxu0 %v7972
    %8068 = vmatpush1.msra.mxu0 %v7971
    %8069 = vmatprep.subr.mxu0 %v7974
    %8070 = vmatpush1.msra.mxu0 %v7973
    %8071 = vmatprep.subr.mxu0 %v7976
    %8072 = vmatpush1.msra.mxu0 %v7975
    %8073 = vmatprep.subr.mxu0 %v7978
    %8074 = vmatpush1.msra.mxu0 %v7977
    %8075 = vmatprep.subr.mxu0 %v7980
    %8076 = vmatpush1.msra.mxu0 %v7979
    %8077 = vmatprep.subr.mxu0 %v7982
    %8078 = vmatpush1.msra.mxu0 %v7981
    %8079 = vmatprep.subr.mxu0 %v7984
    %8080 = vmatpush1.msra.mxu0 %v7983
    %8081 = vmatprep.subr.mxu0 %v7986
    %8082 = vmatpush1.msra.mxu0 %v7985
    %8083 = vmatprep.subr.mxu0 %v7988
    %8084 = vmatpush1.msra.mxu0 %v7987
    %8085 = vmatprep.subr.mxu0 %v7990
    %8086 = vmatpush1.msra.mxu0 %v7989
    %8087 = vmatprep.subr.mxu0 %v7992
    %8088 = vmatpush1.msra.mxu0 %v7991
    %8089 = vmatprep.subr.mxu0 %v7994
    %8090 = vmatpush1.msra.mxu0 %v7993
    %8091 = vmatprep.subr.mxu0 %v7996
    %8092 = vmatpush1.msra.mxu0 %v7995
    %8093 = vmatprep.subr.mxu0 %v7998
    %8094 = vmatpush1.msra.mxu0 %v7997
    %8095 = vmatprep.subr.mxu0 %v8000
    %8096 = vmatpush1.msra.mxu0 %v7999
    %8097 = vmatprep.subr.mxu0 %v8002
    %8098 = vmatpush1.msra.mxu0 %v8001
    %8099 = vmatprep.subr.mxu0 %v8004
    %8100 = vmatpush1.msra.mxu0 %v8003
    %8101 = vmatprep.subr.mxu0 %v8006
    %8102 = vmatpush1.msra.mxu0 %v8005
    %8103 = vmatprep.subr.mxu0 %v8008
    %8104 = vmatpush1.msra.mxu0 %v8007
    %8105 = vmatprep.subr.mxu0 %v8010
    %8106 = vmatpush1.msra.mxu0 %v8009
    %8107 = vmatprep.subr.mxu0 %v8012
    %8108 = vmatpush1.msra.mxu0 %v8011
    %8109 = vmatprep.subr.mxu0 %v8014
    %8110 = vmatpush1.msra.mxu0 %v8013
    %8111 = vmatprep.subr.mxu0 %v8016
    %8112 = vmatpush1.msra.mxu0 %v8015
    %8113 = vmatprep.subr.mxu0 %v8018
    %8114 = vmatpush1.msra.mxu0 %v8017
    %8115 = vmatprep.subr.mxu0 %v8020
    %8116 = vmatpush1.msra.mxu0 %v8019
    %8117 = vmatprep.subr.mxu0 %v8022
    %8118 = vmatpush1.msra.mxu0 %v8021
    %8119 = vmatprep.subr.mxu0 %v8024
    %8120 = vmatpush1.msra.mxu0 %v8023
    %8121 = vmatprep.subr.mxu0 %v8026
    %8122 = vmatpush1.msra.mxu0 %v8025
    %8123 = vmatprep.subr.mxu0 %v8028
    %8124 = vmatpush1.msra.mxu0 %v8027
    %8125 = vmatprep.mubr.f32.mxu0 %v7118
    %8126 = vmatmul.mubr.f32.gmra.mrb[0].mxu0 %v7117
    %v8127 = vpop.f32.mrb[0].mxu0
    %v8128 = vadd.f32 0.0, %v8127
    %v8129 = vpop.f32.mrb[0].mxu0
    %v8130 = vadd.f32 0.0, %v8129
    %8131 = vmatprep.mubr.f32.mxu0 %v7121
    %8132 = vmatmul.mubr.f32.gmra.mrb[0].mxu0 %v7120
    %v8133 = vpop.f32.mrb[0].mxu0
    %v8134 = vadd.f32 0.0, %v8133
    %v8135 = vpop.f32.mrb[0].mxu0
    %v8136 = vadd.f32 0.0, %v8135
    %8137 = vmatprep.mubr.f32.mxu0 %v7124
    %8138 = vmatmul.mubr.f32.gmra.mrb[0].mxu0 %v7123
    %v8139 = vpop.f32.mrb[0].mxu0
    %v8140 = vadd.f32 0.0, %v8139
    %v8141 = vpop.f32.mrb[0].mxu0
    %v8142 = vadd.f32 0.0, %v8141
    %8143 = vmatprep.mubr.f32.mxu0 %v7127
    %8144 = vmatmul.mubr.f32.gmra.mrb[0].mxu0 %v7126
    %v8145 = vpop.f32.mrb[0].mxu0
    %v8146 = vadd.f32 0.0, %v8145
    %v8147 = vpop.f32.mrb[0].mxu0
    %v8148 = vadd.f32 0.0, %v8147
    %8149 = vdwg.mxu0
    %8150 = vmatprep.subr.mxu0 %v8030
    %8151 = vmatpush1.msra.mxu0 %v8029
    %8152 = vmatprep.subr.mxu0 %v8032
    %8153 = vmatpush1.msra.mxu0 %v8031
    %8154 = vmatprep.subr.mxu0 %v8034
    %8155 = vmatpush1.msra.mxu0 %v8033
    %8156 = vmatprep.subr.mxu0 %v8036
    %8157 = vmatpush1.msra.mxu0 %v8035
    %8158 = vmatprep.subr.mxu0 %v8038
    %8159 = vmatpush1.msra.mxu0 %v8037
    %8160 = vmatprep.subr.mxu0 %v8040
    %8161 = vmatpush1.msra.mxu0 %v8039
    %8162 = vmatprep.subr.mxu0 %v8042
    %8163 = vmatpush1.msra.mxu0 %v8041
    %8164 = vmatprep.subr.mxu0 %v8044
    %8165 = vmatpush1.msra.mxu0 %v8043
    %8166 = vmatprep.subr.mxu0 %v8046
    %8167 = vmatpush1.msra.mxu0 %v8045
    %8168 = vmatprep.subr.mxu0 %v8048
    %8169 = vmatpush1.msra.mxu0 %v8047
    %8170 = vmatprep.subr.mxu0 %v8050
    %8171 = vmatpush1.msra.mxu0 %v8049
    %8172 = vmatprep.subr.mxu0 %v8052
    %8173 = vmatpush1.msra.mxu0 %v8051
    %8174 = vmatprep.subr.mxu0 %v8054
    %8175 = vmatpush1.msra.mxu0 %v8053
    %8176 = vmatprep.subr.mxu0 %v8056
    %8177 = vmatpush1.msra.mxu0 %v8055
    %8178 = vmatprep.subr.mxu0 %v8058
    %8179 = vmatpush1.msra.mxu0 %v8057
    %8180 = vmatprep.subr.mxu0 %v8060
    %8181 = vmatpush1.msra.mxu0 %v8059
    %8182 = vmatprep.subr.mxu0 0.0
    %8183 = vmatpush1.msra.mxu0 0.0
    %8184 = vmatprep.subr.mxu0 0.0
    %8185 = vmatpush1.msra.mxu0 0.0
    %8186 = vmatprep.subr.mxu0 0.0
    %8187 = vmatpush1.msra.mxu0 0.0
    %8188 = vmatprep.subr.mxu0 0.0
    %8189 = vmatpush1.msra.mxu0 0.0
    %8190 = vmatprep.subr.mxu0 0.0
    %8191 = vmatpush1.msra.mxu0 0.0
    %8192 = vmatprep.subr.mxu0 0.0
    %8193 = vmatpush1.msra.mxu0 0.0
    %8194 = vmatprep.subr.mxu0 0.0
    %8195 = vmatpush1.msra.mxu0 0.0
    %8196 = vmatprep.subr.mxu0 0.0
    %8197 = vmatpush1.msra.mxu0 0.0
    %8198 = vmatprep.subr.mxu0 0.0
    %8199 = vmatpush1.msra.mxu0 0.0
    %8200 = vmatprep.subr.mxu0 0.0
    %8201 = vmatpush1.msra.mxu0 0.0
    %8202 = vmatprep.subr.mxu0 0.0
    %8203 = vmatpush1.msra.mxu0 0.0
    %8204 = vmatprep.subr.mxu0 0.0
    %8205 = vmatpush1.msra.mxu0 0.0
    %8206 = vmatprep.subr.mxu0 0.0
    %8207 = vmatpush1.msra.mxu0 0.0
    %8208 = vmatprep.subr.mxu0 0.0
    %8209 = vmatpush1.msra.mxu0 0.0
    %8210 = vmatprep.subr.mxu0 0.0
    %8211 = vmatpush1.msra.mxu0 0.0
    %8212 = vmatprep.subr.mxu0 0.0
    %8213 = vmatpush1.msra.mxu0 0.0
    %8214 = vmatprep.mubr.f32.mxu0 0.0
    %8215 = vmatmul.mubr.f32.gmra.mrb[0].mxu0 %v7119
    %v8216 = vpop.f32.mrb[0].mxu0
    %v8217 = vadd.f32 %v8128, %v8216
    %v8218 = vpop.f32.mrb[0].mxu0
    %v8219 = vadd.f32 %v8130, %v8218
    %8220 = vmatprep.mubr.f32.mxu0 0.0
    %8221 = vmatmul.mubr.f32.gmra.mrb[0].mxu0 %v7122
    %v8222 = vpop.f32.mrb[0].mxu0
    %v8223 = vadd.f32 %v8134, %v8222
    %v8224 = vpop.f32.mrb[0].mxu0
    %v8225 = vadd.f32 %v8136, %v8224
    %8226 = vmatprep.mubr.f32.mxu0 0.0
    %8227 = vmatmul.mubr.f32.gmra.mrb[0].mxu0 %v7125
    %v8228 = vpop.f32.mrb[0].mxu0
    %v8229 = vadd.f32 %v8140, %v8228
    %v8230 = vpop.f32.mrb[0].mxu0
    %v8231 = vadd.f32 %v8142, %v8230
    %8232 = vmatprep.mubr.f32.mxu0 0.0
    %8233 = vmatmul.mubr.f32.gmra.mrb[0].mxu0 %v7128
    %v8234 = vpop.f32.mrb[0].mxu0
    %v8235 = vadd.f32 %v8146, %v8234
    %v8236 = vpop.f32.mrb[0].mxu0
    %v8237 = vadd.f32 %v8148, %v8236
    %8238 = vdwg.mxu0
    %v8239 = vadd.f32 %v7956, %v8217
    %v8240 = vadd.f32 %v7957, %v8219
    %v8241 = vadd.f32 %v7958, %v8223
    %v8242 = vadd.f32 %v7959, %v8225
    %v8243 = vadd.f32 %v7960, %v8229
    %v8244 = vadd.f32 %v7961, %v8231
    %v8245 = vadd.f32 %v7962, %v8235
    %v8246 = vadd.f32 %v7963, %v8237
    %s8247 = scalar_lea.vmem [#allocation6], 3072
    %v8248 = vld [vmem:[%s8247] sm:$0xff]
    %v8249 = vld [vmem:[%s8247 + $0x8] sm:$0xff]
    %v8250 = vld [vmem:[%s8247 + $0x10] sm:$0xff]
    %v8251 = vld [vmem:[%s8247 + $0x18] sm:$0xff]
    %v8252 = vld [vmem:[%s8247 + $0x20] sm:$0xff]
    %v8253 = vld [vmem:[%s8247 + $0x28] sm:$0xff]
    %v8254 = vld [vmem:[%s8247 + $0x30] sm:$0xff]
    %v8255 = vld [vmem:[%s8247 + $0x38] sm:$0xff]
    %v8256 = vld [vmem:[%s8247 + $0x40] sm:$0xff]
    %v8257 = vld [vmem:[%s8247 + $0x48] sm:$0xff]
    %v8258 = vld [vmem:[%s8247 + $0x50] sm:$0xff]
    %v8259 = vld [vmem:[%s8247 + $0x58] sm:$0xff]
    %v8260 = vld [vmem:[%s8247 + $0x60] sm:$0xff]
    %v8261 = vld [vmem:[%s8247 + $0x68] sm:$0xff]
    %v8262 = vld [vmem:[%s8247 + $0x70] sm:$0xff]
    %v8263 = vld [vmem:[%s8247 + $0x78] sm:$0xff]
    %v8264 = vld [vmem:[%s8247 + $0x80] sm:$0xff]
    %v8265 = vld [vmem:[%s8247 + $0x88] sm:$0xff]
    %v8266 = vld [vmem:[%s8247 + $0x90] sm:$0xff]
    %v8267 = vld [vmem:[%s8247 + $0x98] sm:$0xff]
    %v8268 = vld [vmem:[%s8247 + $0xa0] sm:$0xff]
    %v8269 = vld [vmem:[%s8247 + $0xa8] sm:$0xff]
    %v8270 = vld [vmem:[%s8247 + $0xb0] sm:$0xff]
    %v8271 = vld [vmem:[%s8247 + $0xb8] sm:$0xff]
    %v8272 = vld [vmem:[%s8247 + $0xc0] sm:$0xff]
    %v8273 = vld [vmem:[%s8247 + $0xc8] sm:$0xff]
    %v8274 = vld [vmem:[%s8247 + $0xd0] sm:$0xff]
    %v8275 = vld [vmem:[%s8247 + $0xd8] sm:$0xff]
    %v8276 = vld [vmem:[%s8247 + $0xe0] sm:$0xff]
    %v8277 = vld [vmem:[%s8247 + $0xe8] sm:$0xff]
    %v8278 = vld [vmem:[%s8247 + $0xf0] sm:$0xff]
    %v8279 = vld [vmem:[%s8247 + $0xf8] sm:$0xff]
    %v8280 = vld [vmem:[%s8247 + $0x100] sm:$0xff]
    %v8281 = vld [vmem:[%s8247 + $0x108] sm:$0xff]
    %v8282 = vld [vmem:[%s8247 + $0x110] sm:$0xff]
    %v8283 = vld [vmem:[%s8247 + $0x118] sm:$0xff]
    %v8284 = vld [vmem:[%s8247 + $0x120] sm:$0xff]
    %v8285 = vld [vmem:[%s8247 + $0x128] sm:$0xff]
    %v8286 = vld [vmem:[%s8247 + $0x130] sm:$0xff]
    %v8287 = vld [vmem:[%s8247 + $0x138] sm:$0xff]
    %v8288 = vld [vmem:[%s8247 + $0x140] sm:$0xff]
    %v8289 = vld [vmem:[%s8247 + $0x148] sm:$0xff]
    %v8290 = vld [vmem:[%s8247 + $0x150] sm:$0xff]
    %v8291 = vld [vmem:[%s8247 + $0x158] sm:$0xff]
    %v8292 = vld [vmem:[%s8247 + $0x160] sm:$0xff]
    %v8293 = vld [vmem:[%s8247 + $0x168] sm:$0xff]
    %v8294 = vld [vmem:[%s8247 + $0x170] sm:$0xff]
    %v8295 = vld [vmem:[%s8247 + $0x178] sm:$0xff]
    %v8296 = vld [vmem:[%s8247 + $0x180] sm:$0xff]
    %v8297 = vld [vmem:[%s8247 + $0x188] sm:$0xff]
    %v8298 = vld [vmem:[%s8247 + $0x190] sm:$0xff]
    %v8299 = vld [vmem:[%s8247 + $0x198] sm:$0xff]
    %v8300 = vld [vmem:[%s8247 + $0x1a0] sm:$0xff]
    %v8301 = vld [vmem:[%s8247 + $0x1a8] sm:$0xff]
    %v8302 = vld [vmem:[%s8247 + $0x1b0] sm:$0xff]
    %v8303 = vld [vmem:[%s8247 + $0x1b8] sm:$0xff]
    %v8304 = vld [vmem:[%s8247 + $0x1c0] sm:$0xff]
    %v8305 = vld [vmem:[%s8247 + $0x1c8] sm:$0xff]
    %v8306 = vld [vmem:[%s8247 + $0x1d0] sm:$0xff]
    %v8307 = vld [vmem:[%s8247 + $0x1d8] sm:$0xff]
    %v8308 = vld [vmem:[%s8247 + $0x1e0] sm:$0xff]
    %v8309 = vld [vmem:[%s8247 + $0x1e8] sm:$0xff]
    %v8310 = vld [vmem:[%s8247 + $0x1f0] sm:$0xff]
    %v8311 = vld [vmem:[%s8247 + $0x1f8] sm:$0xff]
    %v8312 = vld [vmem:[%s8247 + $0x200] sm:$0xff]
    %v8313 = vld [vmem:[%s8247 + $0x208] sm:$0xff]
    %v8314 = vld [vmem:[%s8247 + $0x210] sm:$0xff]
    %v8315 = vld [vmem:[%s8247 + $0x218] sm:$0xff]
    %v8316 = vld [vmem:[%s8247 + $0x220] sm:$0xff]
    %v8317 = vld [vmem:[%s8247 + $0x228] sm:$0xff]
    %v8318 = vld [vmem:[%s8247 + $0x230] sm:$0xff]
    %v8319 = vld [vmem:[%s8247 + $0x238] sm:$0xff]
    %v8320 = vld [vmem:[%s8247 + $0x240] sm:$0xff]
    %v8321 = vld [vmem:[%s8247 + $0x248] sm:$0xff]
    %v8322 = vld [vmem:[%s8247 + $0x250] sm:$0xff]
    %v8323 = vld [vmem:[%s8247 + $0x258] sm:$0xff]
    %v8324 = vld [vmem:[%s8247 + $0x260] sm:$0xff]
    %v8325 = vld [vmem:[%s8247 + $0x268] sm:$0xff]
    %v8326 = vld [vmem:[%s8247 + $0x270] sm:$0xff]
    %v8327 = vld [vmem:[%s8247 + $0x278] sm:$0xff]
    %v8328 = vld [vmem:[%s8247 + $0x280] sm:$0xff]
    %v8329 = vld [vmem:[%s8247 + $0x288] sm:$0xff]
    %v8330 = vld [vmem:[%s8247 + $0x290] sm:$0xff]
    %v8331 = vld [vmem:[%s8247 + $0x298] sm:$0xff]
    %v8332 = vld [vmem:[%s8247 + $0x2a0] sm:$0xff]
    %v8333 = vld [vmem:[%s8247 + $0x2a8] sm:$0xff]
    %v8334 = vld [vmem:[%s8247 + $0x2b0] sm:$0xff]
    %v8335 = vld [vmem:[%s8247 + $0x2b8] sm:$0xff]
    %v8336 = vld [vmem:[%s8247 + $0x2c0] sm:$0xff]
    %v8337 = vld [vmem:[%s8247 + $0x2c8] sm:$0xff]
    %v8338 = vld [vmem:[%s8247 + $0x2d0] sm:$0xff]
    %v8339 = vld [vmem:[%s8247 + $0x2d8] sm:$0xff]
    %v8340 = vld [vmem:[%s8247 + $0x2e0] sm:$0xff]
    %v8341 = vld [vmem:[%s8247 + $0x2e8] sm:$0xff]
    %v8342 = vld [vmem:[%s8247 + $0x2f0] sm:$0xff]
    %v8343 = vld [vmem:[%s8247 + $0x2f8] sm:$0xff]
    %8344 = vmatprep.subr.mxu0 %v8249
    %8345 = vmatpush1.msra.mxu0 %v8248
    %8346 = vmatprep.subr.mxu0 %v8251
    %8347 = vmatpush1.msra.mxu0 %v8250
    %8348 = vmatprep.subr.mxu0 %v8253
    %8349 = vmatpush1.msra.mxu0 %v8252
    %8350 = vmatprep.subr.mxu0 %v8255
    %8351 = vmatpush1.msra.mxu0 %v8254
    %8352 = vmatprep.subr.mxu0 %v8257
    %8353 = vmatpush1.msra.mxu0 %v8256
    %8354 = vmatprep.subr.mxu0 %v8259
    %8355 = vmatpush1.msra.mxu0 %v8258
    %8356 = vmatprep.subr.mxu0 %v8261
    %8357 = vmatpush1.msra.mxu0 %v8260
    %8358 = vmatprep.subr.mxu0 %v8263
    %8359 = vmatpush1.msra.mxu0 %v8262
    %8360 = vmatprep.subr.mxu0 %v8265
    %8361 = vmatpush1.msra.mxu0 %v8264
    %8362 = vmatprep.subr.mxu0 %v8267
    %8363 = vmatpush1.msra.mxu0 %v8266
    %8364 = vmatprep.subr.mxu0 %v8269
    %8365 = vmatpush1.msra.mxu0 %v8268
    %8366 = vmatprep.subr.mxu0 %v8271
    %8367 = vmatpush1.msra.mxu0 %v8270
    %8368 = vmatprep.subr.mxu0 %v8273
    %8369 = vmatpush1.msra.mxu0 %v8272
    %8370 = vmatprep.subr.mxu0 %v8275
    %8371 = vmatpush1.msra.mxu0 %v8274
    %8372 = vmatprep.subr.mxu0 %v8277
    %8373 = vmatpush1.msra.mxu0 %v8276
    %8374 = vmatprep.subr.mxu0 %v8279
    %8375 = vmatpush1.msra.mxu0 %v8278
    %8376 = vmatprep.subr.mxu0 %v8281
    %8377 = vmatpush1.msra.mxu0 %v8280
    %8378 = vmatprep.subr.mxu0 %v8283
    %8379 = vmatpush1.msra.mxu0 %v8282
    %8380 = vmatprep.subr.mxu0 %v8285
    %8381 = vmatpush1.msra.mxu0 %v8284
    %8382 = vmatprep.subr.mxu0 %v8287
    %8383 = vmatpush1.msra.mxu0 %v8286
    %8384 = vmatprep.subr.mxu0 %v8289
    %8385 = vmatpush1.msra.mxu0 %v8288
    %8386 = vmatprep.subr.mxu0 %v8291
    %8387 = vmatpush1.msra.mxu0 %v8290
    %8388 = vmatprep.subr.mxu0 %v8293
    %8389 = vmatpush1.msra.mxu0 %v8292
    %8390 = vmatprep.subr.mxu0 %v8295
    %8391 = vmatpush1.msra.mxu0 %v8294
    %8392 = vmatprep.subr.mxu0 %v8297
    %8393 = vmatpush1.msra.mxu0 %v8296
    %8394 = vmatprep.subr.mxu0 %v8299
    %8395 = vmatpush1.msra.mxu0 %v8298
    %8396 = vmatprep.subr.mxu0 %v8301
    %8397 = vmatpush1.msra.mxu0 %v8300
    %8398 = vmatprep.subr.mxu0 %v8303
    %8399 = vmatpush1.msra.mxu0 %v8302
    %8400 = vmatprep.subr.mxu0 %v8305
    %8401 = vmatpush1.msra.mxu0 %v8304
    %8402 = vmatprep.subr.mxu0 %v8307
    %8403 = vmatpush1.msra.mxu0 %v8306
    %8404 = vmatprep.subr.mxu0 %v8309
    %8405 = vmatpush1.msra.mxu0 %v8308
    %8406 = vmatprep.subr.mxu0 %v8311
    %8407 = vmatpush1.msra.mxu0 %v8310
    %8408 = vmatprep.mubr.f32.mxu0 %v3779
    %8409 = vmatmul.mubr.f32.gmra.mrb[0].mxu0 %v3778
    %v8410 = vpop.f32.mrb[0].mxu0
    %v8411 = vadd.f32 0.0, %v8410
    %v8412 = vpop.f32.mrb[0].mxu0
    %v8413 = vadd.f32 0.0, %v8412
    %8414 = vmatprep.mubr.f32.mxu0 %v3782
    %8415 = vmatmul.mubr.f32.gmra.mrb[0].mxu0 %v3781
    %v8416 = vpop.f32.mrb[0].mxu0
    %v8417 = vadd.f32 0.0, %v8416
    %v8418 = vpop.f32.mrb[0].mxu0
    %v8419 = vadd.f32 0.0, %v8418
    %8420 = vmatprep.mubr.f32.mxu0 %v3785
    %8421 = vmatmul.mubr.f32.gmra.mrb[0].mxu0 %v3784
    %v8422 = vpop.f32.mrb[0].mxu0
    %v8423 = vadd.f32 0.0, %v8422
    %v8424 = vpop.f32.mrb[0].mxu0
    %v8425 = vadd.f32 0.0, %v8424
    %8426 = vmatprep.mubr.f32.mxu0 %v3788
    %8427 = vmatmul.mubr.f32.gmra.mrb[0].mxu0 %v3787
    %v8428 = vpop.f32.mrb[0].mxu0
    %v8429 = vadd.f32 0.0, %v8428
    %v8430 = vpop.f32.mrb[0].mxu0
    %v8431 = vadd.f32 0.0, %v8430
    %8432 = vdwg.mxu0
    %8433 = vmatprep.subr.mxu0 %v8313
    %8434 = vmatpush1.msra.mxu0 %v8312
    %8435 = vmatprep.subr.mxu0 %v8315
    %8436 = vmatpush1.msra.mxu0 %v8314
    %8437 = vmatprep.subr.mxu0 %v8317
    %8438 = vmatpush1.msra.mxu0 %v8316
    %8439 = vmatprep.subr.mxu0 %v8319
    %8440 = vmatpush1.msra.mxu0 %v8318
    %8441 = vmatprep.subr.mxu0 %v8321
    %8442 = vmatpush1.msra.mxu0 %v8320
    %8443 = vmatprep.subr.mxu0 %v8323
    %8444 = vmatpush1.msra.mxu0 %v8322
    %8445 = vmatprep.subr.mxu0 %v8325
    %8446 = vmatpush1.msra.mxu0 %v8324
    %8447 = vmatprep.subr.mxu0 %v8327
    %8448 = vmatpush1.msra.mxu0 %v8326
    %8449 = vmatprep.subr.mxu0 %v8329
    %8450 = vmatpush1.msra.mxu0 %v8328
    %8451 = vmatprep.subr.mxu0 %v8331
    %8452 = vmatpush1.msra.mxu0 %v8330
    %8453 = vmatprep.subr.mxu0 %v8333
    %8454 = vmatpush1.msra.mxu0 %v8332
    %8455 = vmatprep.subr.mxu0 %v8335
    %8456 = vmatpush1.msra.mxu0 %v8334
    %8457 = vmatprep.subr.mxu0 %v8337
    %8458 = vmatpush1.msra.mxu0 %v8336
    %8459 = vmatprep.subr.mxu0 %v8339
    %8460 = vmatpush1.msra.mxu0 %v8338
    %8461 = vmatprep.subr.mxu0 %v8341
    %8462 = vmatpush1.msra.mxu0 %v8340
    %8463 = vmatprep.subr.mxu0 %v8343
    %8464 = vmatpush1.msra.mxu0 %v8342
    %8465 = vmatprep.subr.mxu0 0.0
    %8466 = vmatpush1.msra.mxu0 0.0
    %8467 = vmatprep.subr.mxu0 0.0
    %8468 = vmatpush1.msra.mxu0 0.0
    %8469 = vmatprep.subr.mxu0 0.0
    %8470 = vmatpush1.msra.mxu0 0.0
    %8471 = vmatprep.subr.mxu0 0.0
    %8472 = vmatpush1.msra.mxu0 0.0
    %8473 = vmatprep.subr.mxu0 0.0
    %8474 = vmatpush1.msra.mxu0 0.0
    %8475 = vmatprep.subr.mxu0 0.0
    %8476 = vmatpush1.msra.mxu0 0.0
    %8477 = vmatprep.subr.mxu0 0.0
    %8478 = vmatpush1.msra.mxu0 0.0
    %8479 = vmatprep.subr.mxu0 0.0
    %8480 = vmatpush1.msra.mxu0 0.0
    %8481 = vmatprep.subr.mxu0 0.0
    %8482 = vmatpush1.msra.mxu0 0.0
    %8483 = vmatprep.subr.mxu0 0.0
    %8484 = vmatpush1.msra.mxu0 0.0
    %8485 = vmatprep.subr.mxu0 0.0
    %8486 = vmatpush1.msra.mxu0 0.0
    %8487 = vmatprep.subr.mxu0 0.0
    %8488 = vmatpush1.msra.mxu0 0.0
    %8489 = vmatprep.subr.mxu0 0.0
    %8490 = vmatpush1.msra.mxu0 0.0
    %8491 = vmatprep.subr.mxu0 0.0
    %8492 = vmatpush1.msra.mxu0 0.0
    %8493 = vmatprep.subr.mxu0 0.0
    %8494 = vmatpush1.msra.mxu0 0.0
    %8495 = vmatprep.subr.mxu0 0.0
    %8496 = vmatpush1.msra.mxu0 0.0
    %8497 = vmatprep.mubr.f32.mxu0 0.0
    %8498 = vmatmul.mubr.f32.gmra.mrb[0].mxu0 %v3780
    %v8499 = vpop.f32.mrb[0].mxu0
    %v8500 = vadd.f32 %v8411, %v8499
    %v8501 = vpop.f32.mrb[0].mxu0
    %v8502 = vadd.f32 %v8413, %v8501
    %8503 = vmatprep.mubr.f32.mxu0 0.0
    %8504 = vmatmul.mubr.f32.gmra.mrb[0].mxu0 %v3783
    %v8505 = vpop.f32.mrb[0].mxu0
    %v8506 = vadd.f32 %v8417, %v8505
    %v8507 = vpop.f32.mrb[0].mxu0
    %v8508 = vadd.f32 %v8419, %v8507
    %8509 = vmatprep.mubr.f32.mxu0 0.0
    %8510 = vmatmul.mubr.f32.gmra.mrb[0].mxu0 %v3786
    %v8511 = vpop.f32.mrb[0].mxu0
    %v8512 = vadd.f32 %v8423, %v8511
    %v8513 = vpop.f32.mrb[0].mxu0
    %v8514 = vadd.f32 %v8425, %v8513
    %8515 = vmatprep.mubr.f32.mxu0 0.0
    %8516 = vmatmul.mubr.f32.gmra.mrb[0].mxu0 %v3789
    %v8517 = vpop.f32.mrb[0].mxu0
    %v8518 = vadd.f32 %v8429, %v8517
    %v8519 = vpop.f32.mrb[0].mxu0
    %v8520 = vadd.f32 %v8431, %v8519
    %8521 = vdwg.mxu0
    %v8522 = vadd.f32 %v8239, %v8500
    %v8523 = vadd.f32 %v8240, %v8502
    %v8524 = vadd.f32 %v8241, %v8506
    %v8525 = vadd.f32 %v8242, %v8508
    %v8526 = vadd.f32 %v8243, %v8512
    %v8527 = vadd.f32 %v8244, %v8514
    %v8528 = vadd.f32 %v8245, %v8518
    %v8529 = vadd.f32 %v8246, %v8520
    %8530 = vmatprep.subr.mxu0 %v7230
    %8531 = vmatpush1.msra.mxu0 %v7229
    %8532 = vmatprep.subr.mxu0 %v7232
    %8533 = vmatpush1.msra.mxu0 %v7231
    %8534 = vmatprep.subr.mxu0 %v7234
    %8535 = vmatpush1.msra.mxu0 %v7233
    %8536 = vmatprep.subr.mxu0 %v7236
    %8537 = vmatpush1.msra.mxu0 %v7235
    %8538 = vmatprep.subr.mxu0 %v7238
    %8539 = vmatpush1.msra.mxu0 %v7237
    %8540 = vmatprep.subr.mxu0 %v7240
    %8541 = vmatpush1.msra.mxu0 %v7239
    %8542 = vmatprep.subr.mxu0 %v7242
    %8543 = vmatpush1.msra.mxu0 %v7241
    %8544 = vmatprep.subr.mxu0 %v7244
    %8545 = vmatpush1.msra.mxu0 %v7243
    %8546 = vmatprep.subr.mxu0 %v7246
    %8547 = vmatpush1.msra.mxu0 %v7245
    %8548 = vmatprep.subr.mxu0 %v7248
    %8549 = vmatpush1.msra.mxu0 %v7247
    %8550 = vmatprep.subr.mxu0 %v7250
    %8551 = vmatpush1.msra.mxu0 %v7249
    %8552 = vmatprep.subr.mxu0 %v7252
    %8553 = vmatpush1.msra.mxu0 %v7251
    %8554 = vmatprep.subr.mxu0 %v7254
    %8555 = vmatpush1.msra.mxu0 %v7253
    %8556 = vmatprep.subr.mxu0 %v7256
    %8557 = vmatpush1.msra.mxu0 %v7255
    %8558 = vmatprep.subr.mxu0 %v7258
    %8559 = vmatpush1.msra.mxu0 %v7257
    %8560 = vmatprep.subr.mxu0 %v7260
    %8561 = vmatpush1.msra.mxu0 %v7259
    %8562 = vmatprep.subr.mxu0 %v7262
    %8563 = vmatpush1.msra.mxu0 %v7261
    %8564 = vmatprep.subr.mxu0 %v7264
    %8565 = vmatpush1.msra.mxu0 %v7263
    %8566 = vmatprep.subr.mxu0 %v7266
    %8567 = vmatpush1.msra.mxu0 %v7265
    %8568 = vmatprep.subr.mxu0 %v7268
    %8569 = vmatpush1.msra.mxu0 %v7267
    %8570 = vmatprep.subr.mxu0 %v7270
    %8571 = vmatpush1.msra.mxu0 %v7269
    %8572 = vmatprep.subr.mxu0 %v7272
    %8573 = vmatpush1.msra.mxu0 %v7271
    %8574 = vmatprep.subr.mxu0 %v7274
    %8575 = vmatpush1.msra.mxu0 %v7273
    %8576 = vmatprep.subr.mxu0 %v7276
    %8577 = vmatpush1.msra.mxu0 %v7275
    %8578 = vmatprep.subr.mxu0 %v7278
    %8579 = vmatpush1.msra.mxu0 %v7277
    %8580 = vmatprep.subr.mxu0 %v7280
    %8581 = vmatpush1.msra.mxu0 %v7279
    %8582 = vmatprep.subr.mxu0 %v7282
    %8583 = vmatpush1.msra.mxu0 %v7281
    %8584 = vmatprep.subr.mxu0 %v7284
    %8585 = vmatpush1.msra.mxu0 %v7283
    %8586 = vmatprep.subr.mxu0 %v7286
    %8587 = vmatpush1.msra.mxu0 %v7285
    %8588 = vmatprep.subr.mxu0 %v7288
    %8589 = vmatpush1.msra.mxu0 %v7287
    %8590 = vmatprep.subr.mxu0 %v7290
    %8591 = vmatpush1.msra.mxu0 %v7289
    %8592 = vmatprep.subr.mxu0 %v7292
    %8593 = vmatpush1.msra.mxu0 %v7291
    %8594 = vmatprep.mubr.f32.mxu0 %v3776
    %8595 = vmatmul.mubr.f32.gmra.mrb[0].mxu0 %v3775
    %v8596 = vpop.f32.mrb[0].mxu0
    %v8597 = vadd.f32 0.0, %v8596
    %v8598 = vpop.f32.mrb[0].mxu0
    %v8599 = vadd.f32 0.0, %v8598
    %8600 = vmatprep.mubr.f32.mxu0 %v3779
    %8601 = vmatmul.mubr.f32.gmra.mrb[0].mxu0 %v3778
    %v8602 = vpop.f32.mrb[0].mxu0
    %v8603 = vadd.f32 0.0, %v8602
    %v8604 = vpop.f32.mrb[0].mxu0
    %v8605 = vadd.f32 0.0, %v8604
    %8606 = vmatprep.mubr.f32.mxu0 %v3782
    %8607 = vmatmul.mubr.f32.gmra.mrb[0].mxu0 %v3781
    %v8608 = vpop.f32.mrb[0].mxu0
    %v8609 = vadd.f32 0.0, %v8608
    %v8610 = vpop.f32.mrb[0].mxu0
    %v8611 = vadd.f32 0.0, %v8610
    %8612 = vmatprep.mubr.f32.mxu0 %v3785
    %8613 = vmatmul.mubr.f32.gmra.mrb[0].mxu0 %v3784
    %v8614 = vpop.f32.mrb[0].mxu0
    %v8615 = vadd.f32 0.0, %v8614
    %v8616 = vpop.f32.mrb[0].mxu0
    %v8617 = vadd.f32 0.0, %v8616
    %8618 = vdwg.mxu0
    %8619 = vmatprep.subr.mxu0 %v7294
    %8620 = vmatpush1.msra.mxu0 %v7293
    %8621 = vmatprep.subr.mxu0 %v7296
    %8622 = vmatpush1.msra.mxu0 %v7295
    %8623 = vmatprep.subr.mxu0 %v7298
    %8624 = vmatpush1.msra.mxu0 %v7297
    %8625 = vmatprep.subr.mxu0 %v7300
    %8626 = vmatpush1.msra.mxu0 %v7299
    %8627 = vmatprep.subr.mxu0 %v7302
    %8628 = vmatpush1.msra.mxu0 %v7301
    %8629 = vmatprep.subr.mxu0 %v7304
    %8630 = vmatpush1.msra.mxu0 %v7303
    %8631 = vmatprep.subr.mxu0 %v7306
    %8632 = vmatpush1.msra.mxu0 %v7305
    %8633 = vmatprep.subr.mxu0 %v7308
    %8634 = vmatpush1.msra.mxu0 %v7307
    %8635 = vmatprep.subr.mxu0 %v7310
    %8636 = vmatpush1.msra.mxu0 %v7309
    %8637 = vmatprep.subr.mxu0 %v7312
    %8638 = vmatpush1.msra.mxu0 %v7311
    %8639 = vmatprep.subr.mxu0 %v7314
    %8640 = vmatpush1.msra.mxu0 %v7313
    %8641 = vmatprep.subr.mxu0 %v7316
    %8642 = vmatpush1.msra.mxu0 %v7315
    %8643 = vmatprep.subr.mxu0 %v7318
    %8644 = vmatpush1.msra.mxu0 %v7317
    %8645 = vmatprep.subr.mxu0 %v7320
    %8646 = vmatpush1.msra.mxu0 %v7319
    %8647 = vmatprep.subr.mxu0 %v7322
    %8648 = vmatpush1.msra.mxu0 %v7321
    %8649 = vmatprep.subr.mxu0 %v7324
    %8650 = vmatpush1.msra.mxu0 %v7323
    %8651 = vmatprep.subr.mxu0 0.0
    %8652 = vmatpush1.msra.mxu0 0.0
    %8653 = vmatprep.subr.mxu0 0.0
    %8654 = vmatpush1.msra.mxu0 0.0
    %8655 = vmatprep.subr.mxu0 0.0
    %8656 = vmatpush1.msra.mxu0 0.0
    %8657 = vmatprep.subr.mxu0 0.0
    %8658 = vmatpush1.msra.mxu0 0.0
    %8659 = vmatprep.subr.mxu0 0.0
    %8660 = vmatpush1.msra.mxu0 0.0
    %8661 = vmatprep.subr.mxu0 0.0
    %8662 = vmatpush1.msra.mxu0 0.0
    %8663 = vmatprep.subr.mxu0 0.0
    %8664 = vmatpush1.msra.mxu0 0.0
    %8665 = vmatprep.subr.mxu0 0.0
    %8666 = vmatpush1.msra.mxu0 0.0
    %8667 = vmatprep.subr.mxu0 0.0
    %8668 = vmatpush1.msra.mxu0 0.0
    %8669 = vmatprep.subr.mxu0 0.0
    %8670 = vmatpush1.msra.mxu0 0.0
    %8671 = vmatprep.subr.mxu0 0.0
    %8672 = vmatpush1.msra.mxu0 0.0
    %8673 = vmatprep.subr.mxu0 0.0
    %8674 = vmatpush1.msra.mxu0 0.0
    %8675 = vmatprep.subr.mxu0 0.0
    %8676 = vmatpush1.msra.mxu0 0.0
    %8677 = vmatprep.subr.mxu0 0.0
    %8678 = vmatpush1.msra.mxu0 0.0
    %8679 = vmatprep.subr.mxu0 0.0
    %8680 = vmatpush1.msra.mxu0 0.0
    %8681 = vmatprep.subr.mxu0 0.0
    %8682 = vmatpush1.msra.mxu0 0.0
    %8683 = vmatprep.mubr.f32.mxu0 0.0
    %8684 = vmatmul.mubr.f32.gmra.mrb[0].mxu0 %v3777
    %v8685 = vpop.f32.mrb[0].mxu0
    %v8686 = vadd.f32 %v8597, %v8685
    %v8687 = vpop.f32.mrb[0].mxu0
    %v8688 = vadd.f32 %v8599, %v8687
    %8689 = vmatprep.mubr.f32.mxu0 0.0
    %8690 = vmatmul.mubr.f32.gmra.mrb[0].mxu0 %v3780
    %v8691 = vpop.f32.mrb[0].mxu0
    %v8692 = vadd.f32 %v8603, %v8691
    %v8693 = vpop.f32.mrb[0].mxu0
    %v8694 = vadd.f32 %v8605, %v8693
    %8695 = vmatprep.mubr.f32.mxu0 0.0
    %8696 = vmatmul.mubr.f32.gmra.mrb[0].mxu0 %v3783
    %v8697 = vpop.f32.mrb[0].mxu0
    %v8698 = vadd.f32 %v8609, %v8697
    %v8699 = vpop.f32.mrb[0].mxu0
    %v8700 = vadd.f32 %v8611, %v8699
    %8701 = vmatprep.mubr.f32.mxu0 0.0
    %8702 = vmatmul.mubr.f32.gmra.mrb[0].mxu0 %v3786
    %v8703 = vpop.f32.mrb[0].mxu0
    %v8704 = vadd.f32 %v8615, %v8703
    %v8705 = vpop.f32.mrb[0].mxu0
    %v8706 = vadd.f32 %v8617, %v8705
    %8707 = vdwg.mxu0
    %8708 = vmatprep.subr.mxu0 %v7133
    %8709 = vmatpush1.msra.mxu0 %v7132
    %8710 = vmatprep.subr.mxu0 %v7135
    %8711 = vmatpush1.msra.mxu0 %v7134
    %8712 = vmatprep.subr.mxu0 %v7137
    %8713 = vmatpush1.msra.mxu0 %v7136
    %8714 = vmatprep.subr.mxu0 %v7139
    %8715 = vmatpush1.msra.mxu0 %v7138
    %8716 = vmatprep.subr.mxu0 %v7141
    %8717 = vmatpush1.msra.mxu0 %v7140
    %8718 = vmatprep.subr.mxu0 %v7143
    %8719 = vmatpush1.msra.mxu0 %v7142
    %8720 = vmatprep.subr.mxu0 %v7145
    %8721 = vmatpush1.msra.mxu0 %v7144
    %8722 = vmatprep.subr.mxu0 %v7147
    %8723 = vmatpush1.msra.mxu0 %v7146
    %8724 = vmatprep.subr.mxu0 %v7149
    %8725 = vmatpush1.msra.mxu0 %v7148
    %8726 = vmatprep.subr.mxu0 %v7151
    %8727 = vmatpush1.msra.mxu0 %v7150
    %8728 = vmatprep.subr.mxu0 %v7153
    %8729 = vmatpush1.msra.mxu0 %v7152
    %8730 = vmatprep.subr.mxu0 %v7155
    %8731 = vmatpush1.msra.mxu0 %v7154
    %8732 = vmatprep.subr.mxu0 %v7157
    %8733 = vmatpush1.msra.mxu0 %v7156
    %8734 = vmatprep.subr.mxu0 %v7159
    %8735 = vmatpush1.msra.mxu0 %v7158
    %8736 = vmatprep.subr.mxu0 %v7161
    %8737 = vmatpush1.msra.mxu0 %v7160
    %8738 = vmatprep.subr.mxu0 %v7163
    %8739 = vmatpush1.msra.mxu0 %v7162
    %8740 = vmatprep.subr.mxu0 %v7165
    %8741 = vmatpush1.msra.mxu0 %v7164
    %8742 = vmatprep.subr.mxu0 %v7167
    %8743 = vmatpush1.msra.mxu0 %v7166
    %8744 = vmatprep.subr.mxu0 %v7169
    %8745 = vmatpush1.msra.mxu0 %v7168
    %8746 = vmatprep.subr.mxu0 %v7171
    %8747 = vmatpush1.msra.mxu0 %v7170
    %8748 = vmatprep.subr.mxu0 %v7173
    %8749 = vmatpush1.msra.mxu0 %v7172
    %8750 = vmatprep.subr.mxu0 %v7175
    %8751 = vmatpush1.msra.mxu0 %v7174
    %8752 = vmatprep.subr.mxu0 %v7177
    %8753 = vmatpush1.msra.mxu0 %v7176
    %8754 = vmatprep.subr.mxu0 %v7179
    %8755 = vmatpush1.msra.mxu0 %v7178
    %8756 = vmatprep.subr.mxu0 %v7181
    %8757 = vmatpush1.msra.mxu0 %v7180
    %8758 = vmatprep.subr.mxu0 %v7183
    %8759 = vmatpush1.msra.mxu0 %v7182
    %8760 = vmatprep.subr.mxu0 %v7185
    %8761 = vmatpush1.msra.mxu0 %v7184
    %8762 = vmatprep.subr.mxu0 %v7187
    %8763 = vmatpush1.msra.mxu0 %v7186
    %8764 = vmatprep.subr.mxu0 %v7189
    %8765 = vmatpush1.msra.mxu0 %v7188
    %8766 = vmatprep.subr.mxu0 %v7191
    %8767 = vmatpush1.msra.mxu0 %v7190
    %8768 = vmatprep.subr.mxu0 %v7193
    %8769 = vmatpush1.msra.mxu0 %v7192
    %8770 = vmatprep.subr.mxu0 %v7195
    %8771 = vmatpush1.msra.mxu0 %v7194
    %8772 = vmatprep.mubr.f32.mxu0 %v7115
    %8773 = vmatmul.mubr.f32.gmra.mrb[0].mxu0 %v7114
    %v8774 = vpop.f32.mrb[0].mxu0
    %v8775 = vadd.f32 %v8686, %v8774
    %v8776 = vpop.f32.mrb[0].mxu0
    %v8777 = vadd.f32 %v8688, %v8776
    %8778 = vmatprep.mubr.f32.mxu0 %v7118
    %8779 = vmatmul.mubr.f32.gmra.mrb[0].mxu0 %v7117
    %v8780 = vpop.f32.mrb[0].mxu0
    %v8781 = vadd.f32 %v8692, %v8780
    %v8782 = vpop.f32.mrb[0].mxu0
    %v8783 = vadd.f32 %v8694, %v8782
    %8784 = vmatprep.mubr.f32.mxu0 %v7121
    %8785 = vmatmul.mubr.f32.gmra.mrb[0].mxu0 %v7120
    %v8786 = vpop.f32.mrb[0].mxu0
    %v8787 = vadd.f32 %v8698, %v8786
    %v8788 = vpop.f32.mrb[0].mxu0
    %v8789 = vadd.f32 %v8700, %v8788
    %8790 = vmatprep.mubr.f32.mxu0 %v7124
    %8791 = vmatmul.mubr.f32.gmra.mrb[0].mxu0 %v7123
    %v8792 = vpop.f32.mrb[0].mxu0
    %v8793 = vadd.f32 %v8704, %v8792
    %v8794 = vpop.f32.mrb[0].mxu0
    %v8795 = vadd.f32 %v8706, %v8794
    %8796 = vdwg.mxu0
    %8797 = vmatprep.subr.mxu0 %v7197
    %8798 = vmatpush1.msra.mxu0 %v7196
    %8799 = vmatprep.subr.mxu0 %v7199
    %8800 = vmatpush1.msra.mxu0 %v7198
    %8801 = vmatprep.subr.mxu0 %v7201
    %8802 = vmatpush1.msra.mxu0 %v7200
    %8803 = vmatprep.subr.mxu0 %v7203
    %8804 = vmatpush1.msra.mxu0 %v7202
    %8805 = vmatprep.subr.mxu0 %v7205
    %8806 = vmatpush1.msra.mxu0 %v7204
    %8807 = vmatprep.subr.mxu0 %v7207
    %8808 = vmatpush1.msra.mxu0 %v7206
    %8809 = vmatprep.subr.mxu0 %v7209
    %8810 = vmatpush1.msra.mxu0 %v7208
    %8811 = vmatprep.subr.mxu0 %v7211
    %8812 = vmatpush1.msra.mxu0 %v7210
    %8813 = vmatprep.subr.mxu0 %v7213
    %8814 = vmatpush1.msra.mxu0 %v7212
    %8815 = vmatprep.subr.mxu0 %v7215
    %8816 = vmatpush1.msra.mxu0 %v7214
    %8817 = vmatprep.subr.mxu0 %v7217
    %8818 = vmatpush1.msra.mxu0 %v7216
    %8819 = vmatprep.subr.mxu0 %v7219
    %8820 = vmatpush1.msra.mxu0 %v7218
    %8821 = vmatprep.subr.mxu0 %v7221
    %8822 = vmatpush1.msra.mxu0 %v7220
    %8823 = vmatprep.subr.mxu0 %v7223
    %8824 = vmatpush1.msra.mxu0 %v7222
    %8825 = vmatprep.subr.mxu0 %v7225
    %8826 = vmatpush1.msra.mxu0 %v7224
    %8827 = vmatprep.subr.mxu0 %v7227
    %8828 = vmatpush1.msra.mxu0 %v7226
    %8829 = vmatprep.subr.mxu0 0.0
    %8830 = vmatpush1.msra.mxu0 0.0
    %8831 = vmatprep.subr.mxu0 0.0
    %8832 = vmatpush1.msra.mxu0 0.0
    %8833 = vmatprep.subr.mxu0 0.0
    %8834 = vmatpush1.msra.mxu0 0.0
    %8835 = vmatprep.subr.mxu0 0.0
    %8836 = vmatpush1.msra.mxu0 0.0
    %8837 = vmatprep.subr.mxu0 0.0
    %8838 = vmatpush1.msra.mxu0 0.0
    %8839 = vmatprep.subr.mxu0 0.0
    %8840 = vmatpush1.msra.mxu0 0.0
    %8841 = vmatprep.subr.mxu0 0.0
    %8842 = vmatpush1.msra.mxu0 0.0
    %8843 = vmatprep.subr.mxu0 0.0
    %8844 = vmatpush1.msra.mxu0 0.0
    %8845 = vmatprep.subr.mxu0 0.0
    %8846 = vmatpush1.msra.mxu0 0.0
    %8847 = vmatprep.subr.mxu0 0.0
    %8848 = vmatpush1.msra.mxu0 0.0
    %8849 = vmatprep.subr.mxu0 0.0
    %8850 = vmatpush1.msra.mxu0 0.0
    %8851 = vmatprep.subr.mxu0 0.0
    %8852 = vmatpush1.msra.mxu0 0.0
    %8853 = vmatprep.subr.mxu0 0.0
    %8854 = vmatpush1.msra.mxu0 0.0
    %8855 = vmatprep.subr.mxu0 0.0
    %8856 = vmatpush1.msra.mxu0 0.0
    %8857 = vmatprep.subr.mxu0 0.0
    %8858 = vmatpush1.msra.mxu0 0.0
    %8859 = vmatprep.subr.mxu0 0.0
    %8860 = vmatpush1.msra.mxu0 0.0
    %8861 = vmatprep.mubr.f32.mxu0 0.0
    %8862 = vmatmul.mubr.f32.gmra.mrb[0].mxu0 %v7116
    %v8863 = vpop.f32.mrb[0].mxu0
    %v8864 = vadd.f32 %v8775, %v8863
    %v8865 = vpop.f32.mrb[0].mxu0
    %v8866 = vadd.f32 %v8777, %v8865
    %8867 = vmatprep.mubr.f32.mxu0 0.0
    %8868 = vmatmul.mubr.f32.gmra.mrb[0].mxu0 %v7119
    %v8869 = vpop.f32.mrb[0].mxu0
    %v8870 = vadd.f32 %v8781, %v8869
    %v8871 = vpop.f32.mrb[0].mxu0
    %v8872 = vadd.f32 %v8783, %v8871
    %8873 = vmatprep.mubr.f32.mxu0 0.0
    %8874 = vmatmul.mubr.f32.gmra.mrb[0].mxu0 %v7122
    %v8875 = vpop.f32.mrb[0].mxu0
    %v8876 = vadd.f32 %v8787, %v8875
    %v8877 = vpop.f32.mrb[0].mxu0
    %v8878 = vadd.f32 %v8789, %v8877
    %8879 = vmatprep.mubr.f32.mxu0 0.0
    %8880 = vmatmul.mubr.f32.gmra.mrb[0].mxu0 %v7125
    %v8881 = vpop.f32.mrb[0].mxu0
    %v8882 = vadd.f32 %v8793, %v8881
    %v8883 = vpop.f32.mrb[0].mxu0
    %v8884 = vadd.f32 %v8795, %v8883
    %8885 = vdwg.mxu0
    %8886 = vmatprep.subr.mxu0 %v7683
    %8887 = vmatpush1.msra.mxu0 %v7682
    %8888 = vmatprep.subr.mxu0 %v7685
    %8889 = vmatpush1.msra.mxu0 %v7684
    %8890 = vmatprep.subr.mxu0 %v7687
    %8891 = vmatpush1.msra.mxu0 %v7686
    %8892 = vmatprep.subr.mxu0 %v7689
    %8893 = vmatpush1.msra.mxu0 %v7688
    %8894 = vmatprep.subr.mxu0 %v7691
    %8895 = vmatpush1.msra.mxu0 %v7690
    %8896 = vmatprep.subr.mxu0 %v7693
    %8897 = vmatpush1.msra.mxu0 %v7692
    %8898 = vmatprep.subr.mxu0 %v7695
    %8899 = vmatpush1.msra.mxu0 %v7694
    %8900 = vmatprep.subr.mxu0 %v7697
    %8901 = vmatpush1.msra.mxu0 %v7696
    %8902 = vmatprep.subr.mxu0 %v7699
    %8903 = vmatpush1.msra.mxu0 %v7698
    %8904 = vmatprep.subr.mxu0 %v7701
    %8905 = vmatpush1.msra.mxu0 %v7700
    %8906 = vmatprep.subr.mxu0 %v7703
    %8907 = vmatpush1.msra.mxu0 %v7702
    %8908 = vmatprep.subr.mxu0 %v7705
    %8909 = vmatpush1.msra.mxu0 %v7704
    %8910 = vmatprep.subr.mxu0 %v7707
    %8911 = vmatpush1.msra.mxu0 %v7706
    %8912 = vmatprep.subr.mxu0 %v7709
    %8913 = vmatpush1.msra.mxu0 %v7708
    %8914 = vmatprep.subr.mxu0 %v7711
    %8915 = vmatpush1.msra.mxu0 %v7710
    %8916 = vmatprep.subr.mxu0 %v7713
    %8917 = vmatpush1.msra.mxu0 %v7712
    %8918 = vmatprep.subr.mxu0 %v7715
    %8919 = vmatpush1.msra.mxu0 %v7714
    %8920 = vmatprep.subr.mxu0 %v7717
    %8921 = vmatpush1.msra.mxu0 %v7716
    %8922 = vmatprep.subr.mxu0 %v7719
    %8923 = vmatpush1.msra.mxu0 %v7718
    %8924 = vmatprep.subr.mxu0 %v7721
    %8925 = vmatpush1.msra.mxu0 %v7720
    %8926 = vmatprep.subr.mxu0 %v7723
    %8927 = vmatpush1.msra.mxu0 %v7722
    %8928 = vmatprep.subr.mxu0 %v7725
    %8929 = vmatpush1.msra.mxu0 %v7724
    %8930 = vmatprep.subr.mxu0 %v7727
    %8931 = vmatpush1.msra.mxu0 %v7726
    %8932 = vmatprep.subr.mxu0 %v7729
    %8933 = vmatpush1.msra.mxu0 %v7728
    %8934 = vmatprep.subr.mxu0 %v7731
    %8935 = vmatpush1.msra.mxu0 %v7730
    %8936 = vmatprep.subr.mxu0 %v7733
    %8937 = vmatpush1.msra.mxu0 %v7732
    %8938 = vmatprep.subr.mxu0 %v7735
    %8939 = vmatpush1.msra.mxu0 %v7734
    %8940 = vmatprep.subr.mxu0 %v7737
    %8941 = vmatpush1.msra.mxu0 %v7736
    %8942 = vmatprep.subr.mxu0 %v7739
    %8943 = vmatpush1.msra.mxu0 %v7738
    %8944 = vmatprep.subr.mxu0 %v7741
    %8945 = vmatpush1.msra.mxu0 %v7740
    %8946 = vmatprep.subr.mxu0 %v7743
    %8947 = vmatpush1.msra.mxu0 %v7742
    %8948 = vmatprep.subr.mxu0 %v7745
    %8949 = vmatpush1.msra.mxu0 %v7744
    %8950 = vmatprep.mubr.f32.mxu0 %v7118
    %8951 = vmatmul.mubr.f32.gmra.mrb[0].mxu0 %v7117
    %v8952 = vpop.f32.mrb[0].mxu0
    %v8953 = vadd.f32 0.0, %v8952
    %v8954 = vpop.f32.mrb[0].mxu0
    %v8955 = vadd.f32 0.0, %v8954
    %8956 = vmatprep.mubr.f32.mxu0 %v7121
    %8957 = vmatmul.mubr.f32.gmra.mrb[0].mxu0 %v7120
    %v8958 = vpop.f32.mrb[0].mxu0
    %v8959 = vadd.f32 0.0, %v8958
    %v8960 = vpop.f32.mrb[0].mxu0
    %v8961 = vadd.f32 0.0, %v8960
    %8962 = vmatprep.mubr.f32.mxu0 %v7124
    %8963 = vmatmul.mubr.f32.gmra.mrb[0].mxu0 %v7123
    %v8964 = vpop.f32.mrb[0].mxu0
    %v8965 = vadd.f32 0.0, %v8964
    %v8966 = vpop.f32.mrb[0].mxu0
    %v8967 = vadd.f32 0.0, %v8966
    %8968 = vmatprep.mubr.f32.mxu0 %v7127
    %8969 = vmatmul.mubr.f32.gmra.mrb[0].mxu0 %v7126
    %v8970 = vpop.f32.mrb[0].mxu0
    %v8971 = vadd.f32 0.0, %v8970
    %v8972 = vpop.f32.mrb[0].mxu0
    %v8973 = vadd.f32 0.0, %v8972
    %8974 = vdwg.mxu0
    %8975 = vmatprep.subr.mxu0 %v7747
    %8976 = vmatpush1.msra.mxu0 %v7746
    %8977 = vmatprep.subr.mxu0 %v7749
    %8978 = vmatpush1.msra.mxu0 %v7748
    %8979 = vmatprep.subr.mxu0 %v7751
    %8980 = vmatpush1.msra.mxu0 %v7750
    %8981 = vmatprep.subr.mxu0 %v7753
    %8982 = vmatpush1.msra.mxu0 %v7752
    %8983 = vmatprep.subr.mxu0 %v7755
    %8984 = vmatpush1.msra.mxu0 %v7754
    %8985 = vmatprep.subr.mxu0 %v7757
    %8986 = vmatpush1.msra.mxu0 %v7756
    %8987 = vmatprep.subr.mxu0 %v7759
    %8988 = vmatpush1.msra.mxu0 %v7758
    %8989 = vmatprep.subr.mxu0 %v7761
    %8990 = vmatpush1.msra.mxu0 %v7760
    %8991 = vmatprep.subr.mxu0 %v7763
    %8992 = vmatpush1.msra.mxu0 %v7762
    %8993 = vmatprep.subr.mxu0 %v7765
    %8994 = vmatpush1.msra.mxu0 %v7764
    %8995 = vmatprep.subr.mxu0 %v7767
    %8996 = vmatpush1.msra.mxu0 %v7766
    %8997 = vmatprep.subr.mxu0 %v7769
    %8998 = vmatpush1.msra.mxu0 %v7768
    %8999 = vmatprep.subr.mxu0 %v7771
    %9000 = vmatpush1.msra.mxu0 %v7770
    %9001 = vmatprep.subr.mxu0 %v7773
    %9002 = vmatpush1.msra.mxu0 %v7772
    %9003 = vmatprep.subr.mxu0 %v7775
    %9004 = vmatpush1.msra.mxu0 %v7774
    %9005 = vmatprep.subr.mxu0 %v7777
    %9006 = vmatpush1.msra.mxu0 %v7776
    %9007 = vmatprep.subr.mxu0 0.0
    %9008 = vmatpush1.msra.mxu0 0.0
    %9009 = vmatprep.subr.mxu0 0.0
    %9010 = vmatpush1.msra.mxu0 0.0
    %9011 = vmatprep.subr.mxu0 0.0
    %9012 = vmatpush1.msra.mxu0 0.0
    %9013 = vmatprep.subr.mxu0 0.0
    %9014 = vmatpush1.msra.mxu0 0.0
    %9015 = vmatprep.subr.mxu0 0.0
    %9016 = vmatpush1.msra.mxu0 0.0
    %9017 = vmatprep.subr.mxu0 0.0
    %9018 = vmatpush1.msra.mxu0 0.0
    %9019 = vmatprep.subr.mxu0 0.0
    %9020 = vmatpush1.msra.mxu0 0.0
    %9021 = vmatprep.subr.mxu0 0.0
    %9022 = vmatpush1.msra.mxu0 0.0
    %9023 = vmatprep.subr.mxu0 0.0
    %9024 = vmatpush1.msra.mxu0 0.0
    %9025 = vmatprep.subr.mxu0 0.0
    %9026 = vmatpush1.msra.mxu0 0.0
    %9027 = vmatprep.subr.mxu0 0.0
    %9028 = vmatpush1.msra.mxu0 0.0
    %9029 = vmatprep.subr.mxu0 0.0
    %9030 = vmatpush1.msra.mxu0 0.0
    %9031 = vmatprep.subr.mxu0 0.0
    %9032 = vmatpush1.msra.mxu0 0.0
    %9033 = vmatprep.subr.mxu0 0.0
    %9034 = vmatpush1.msra.mxu0 0.0
    %9035 = vmatprep.subr.mxu0 0.0
    %9036 = vmatpush1.msra.mxu0 0.0
    %9037 = vmatprep.subr.mxu0 0.0
    %9038 = vmatpush1.msra.mxu0 0.0
    %9039 = vmatprep.mubr.f32.mxu0 0.0
    %9040 = vmatmul.mubr.f32.gmra.mrb[0].mxu0 %v7119
    %v9041 = vpop.f32.mrb[0].mxu0
    %v9042 = vadd.f32 %v8953, %v9041
    %v9043 = vpop.f32.mrb[0].mxu0
    %v9044 = vadd.f32 %v8955, %v9043
    %9045 = vmatprep.mubr.f32.mxu0 0.0
    %9046 = vmatmul.mubr.f32.gmra.mrb[0].mxu0 %v7122
    %v9047 = vpop.f32.mrb[0].mxu0
    %v9048 = vadd.f32 %v8959, %v9047
    %v9049 = vpop.f32.mrb[0].mxu0
    %v9050 = vadd.f32 %v8961, %v9049
    %9051 = vmatprep.mubr.f32.mxu0 0.0
    %9052 = vmatmul.mubr.f32.gmra.mrb[0].mxu0 %v7125
    %v9053 = vpop.f32.mrb[0].mxu0
    %v9054 = vadd.f32 %v8965, %v9053
    %v9055 = vpop.f32.mrb[0].mxu0
    %v9056 = vadd.f32 %v8967, %v9055
    %9057 = vmatprep.mubr.f32.mxu0 0.0
    %9058 = vmatmul.mubr.f32.gmra.mrb[0].mxu0 %v7128
    %v9059 = vpop.f32.mrb[0].mxu0
    %v9060 = vadd.f32 %v8971, %v9059
    %v9061 = vpop.f32.mrb[0].mxu0
    %v9062 = vadd.f32 %v8973, %v9061
    %9063 = vdwg.mxu0
    %v9064 = vadd.f32 %v8864, %v9042
    %v9065 = vadd.f32 %v8866, %v9044
    %v9066 = vadd.f32 %v8870, %v9048
    %v9067 = vadd.f32 %v8872, %v9050
    %v9068 = vadd.f32 %v8876, %v9054
    %v9069 = vadd.f32 %v8878, %v9056
    %v9070 = vadd.f32 %v8882, %v9060
    %v9071 = vadd.f32 %v8884, %v9062
    %9072 = vmatprep.subr.mxu0 %v7966
    %9073 = vmatpush1.msra.mxu0 %v7965
    %9074 = vmatprep.subr.mxu0 %v7968
    %9075 = vmatpush1.msra.mxu0 %v7967
    %9076 = vmatprep.subr.mxu0 %v7970
    %9077 = vmatpush1.msra.mxu0 %v7969
    %9078 = vmatprep.subr.mxu0 %v7972
    %9079 = vmatpush1.msra.mxu0 %v7971
    %9080 = vmatprep.subr.mxu0 %v7974
    %9081 = vmatpush1.msra.mxu0 %v7973
    %9082 = vmatprep.subr.mxu0 %v7976
    %9083 = vmatpush1.msra.mxu0 %v7975
    %9084 = vmatprep.subr.mxu0 %v7978
    %9085 = vmatpush1.msra.mxu0 %v7977
    %9086 = vmatprep.subr.mxu0 %v7980
    %9087 = vmatpush1.msra.mxu0 %v7979
    %9088 = vmatprep.subr.mxu0 %v7982
    %9089 = vmatpush1.msra.mxu0 %v7981
    %9090 = vmatprep.subr.mxu0 %v7984
    %9091 = vmatpush1.msra.mxu0 %v7983
    %9092 = vmatprep.subr.mxu0 %v7986
    %9093 = vmatpush1.msra.mxu0 %v7985
    %9094 = vmatprep.subr.mxu0 %v7988
    %9095 = vmatpush1.msra.mxu0 %v7987
    %9096 = vmatprep.subr.mxu0 %v7990
    %9097 = vmatpush1.msra.mxu0 %v7989
    %9098 = vmatprep.subr.mxu0 %v7992
    %9099 = vmatpush1.msra.mxu0 %v7991
    %9100 = vmatprep.subr.mxu0 %v7994
    %9101 = vmatpush1.msra.mxu0 %v7993
    %9102 = vmatprep.subr.mxu0 %v7996
    %9103 = vmatpush1.msra.mxu0 %v7995
    %9104 = vmatprep.subr.mxu0 %v7998
    %9105 = vmatpush1.msra.mxu0 %v7997
    %9106 = vmatprep.subr.mxu0 %v8000
    %9107 = vmatpush1.msra.mxu0 %v7999
    %9108 = vmatprep.subr.mxu0 %v8002
    %9109 = vmatpush1.msra.mxu0 %v8001
    %9110 = vmatprep.subr.mxu0 %v8004
    %9111 = vmatpush1.msra.mxu0 %v8003
    %9112 = vmatprep.subr.mxu0 %v8006
    %9113 = vmatpush1.msra.mxu0 %v8005
    %9114 = vmatprep.subr.mxu0 %v8008
    %9115 = vmatpush1.msra.mxu0 %v8007
    %9116 = vmatprep.subr.mxu0 %v8010
    %9117 = vmatpush1.msra.mxu0 %v8009
    %9118 = vmatprep.subr.mxu0 %v8012
    %9119 = vmatpush1.msra.mxu0 %v8011
    %9120 = vmatprep.subr.mxu0 %v8014
    %9121 = vmatpush1.msra.mxu0 %v8013
    %9122 = vmatprep.subr.mxu0 %v8016
    %9123 = vmatpush1.msra.mxu0 %v8015
    %9124 = vmatprep.subr.mxu0 %v8018
    %9125 = vmatpush1.msra.mxu0 %v8017
    %9126 = vmatprep.subr.mxu0 %v8020
    %9127 = vmatpush1.msra.mxu0 %v8019
    %9128 = vmatprep.subr.mxu0 %v8022
    %9129 = vmatpush1.msra.mxu0 %v8021
    %9130 = vmatprep.subr.mxu0 %v8024
    %9131 = vmatpush1.msra.mxu0 %v8023
    %9132 = vmatprep.subr.mxu0 %v8026
    %9133 = vmatpush1.msra.mxu0 %v8025
    %9134 = vmatprep.subr.mxu0 %v8028
    %9135 = vmatpush1.msra.mxu0 %v8027
    %9136 = vmatprep.mubr.f32.mxu0 %v3779
    %9137 = vmatmul.mubr.f32.gmra.mrb[0].mxu0 %v3778
    %v9138 = vpop.f32.mrb[0].mxu0
    %v9139 = vadd.f32 0.0, %v9138
    %v9140 = vpop.f32.mrb[0].mxu0
    %v9141 = vadd.f32 0.0, %v9140
    %9142 = vmatprep.mubr.f32.mxu0 %v3782
    %9143 = vmatmul.mubr.f32.gmra.mrb[0].mxu0 %v3781
    %v9144 = vpop.f32.mrb[0].mxu0
    %v9145 = vadd.f32 0.0, %v9144
    %v9146 = vpop.f32.mrb[0].mxu0
    %v9147 = vadd.f32 0.0, %v9146
    %9148 = vmatprep.mubr.f32.mxu0 %v3785
    %9149 = vmatmul.mubr.f32.gmra.mrb[0].mxu0 %v3784
    %v9150 = vpop.f32.mrb[0].mxu0
    %v9151 = vadd.f32 0.0, %v9150
    %v9152 = vpop.f32.mrb[0].mxu0
    %v9153 = vadd.f32 0.0, %v9152
    %9154 = vmatprep.mubr.f32.mxu0 %v3788
    %9155 = vmatmul.mubr.f32.gmra.mrb[0].mxu0 %v3787
    %v9156 = vpop.f32.mrb[0].mxu0
    %v9157 = vadd.f32 0.0, %v9156
    %v9158 = vpop.f32.mrb[0].mxu0
    %v9159 = vadd.f32 0.0, %v9158
    %9160 = vdwg.mxu0
    %9161 = vmatprep.subr.mxu0 %v8030
    %9162 = vmatpush1.msra.mxu0 %v8029
    %9163 = vmatprep.subr.mxu0 %v8032
    %9164 = vmatpush1.msra.mxu0 %v8031
    %9165 = vmatprep.subr.mxu0 %v8034
    %9166 = vmatpush1.msra.mxu0 %v8033
    %9167 = vmatprep.subr.mxu0 %v8036
    %9168 = vmatpush1.msra.mxu0 %v8035
    %9169 = vmatprep.subr.mxu0 %v8038
    %9170 = vmatpush1.msra.mxu0 %v8037
    %9171 = vmatprep.subr.mxu0 %v8040
    %9172 = vmatpush1.msra.mxu0 %v8039
    %9173 = vmatprep.subr.mxu0 %v8042
    %9174 = vmatpush1.msra.mxu0 %v8041
    %9175 = vmatprep.subr.mxu0 %v8044
    %9176 = vmatpush1.msra.mxu0 %v8043
    %9177 = vmatprep.subr.mxu0 %v8046
    %9178 = vmatpush1.msra.mxu0 %v8045
    %9179 = vmatprep.subr.mxu0 %v8048
    %9180 = vmatpush1.msra.mxu0 %v8047
    %9181 = vmatprep.subr.mxu0 %v8050
    %9182 = vmatpush1.msra.mxu0 %v8049
    %9183 = vmatprep.subr.mxu0 %v8052
    %9184 = vmatpush1.msra.mxu0 %v8051
    %9185 = vmatprep.subr.mxu0 %v8054
    %9186 = vmatpush1.msra.mxu0 %v8053
    %9187 = vmatprep.subr.mxu0 %v8056
    %9188 = vmatpush1.msra.mxu0 %v8055
    %9189 = vmatprep.subr.mxu0 %v8058
    %9190 = vmatpush1.msra.mxu0 %v8057
    %9191 = vmatprep.subr.mxu0 %v8060
    %9192 = vmatpush1.msra.mxu0 %v8059
    %9193 = vmatprep.subr.mxu0 0.0
    %9194 = vmatpush1.msra.mxu0 0.0
    %9195 = vmatprep.subr.mxu0 0.0
    %9196 = vmatpush1.msra.mxu0 0.0
    %9197 = vmatprep.subr.mxu0 0.0
    %9198 = vmatpush1.msra.mxu0 0.0
    %9199 = vmatprep.subr.mxu0 0.0
    %9200 = vmatpush1.msra.mxu0 0.0
    %9201 = vmatprep.subr.mxu0 0.0
    %9202 = vmatpush1.msra.mxu0 0.0
    %9203 = vmatprep.subr.mxu0 0.0
    %9204 = vmatpush1.msra.mxu0 0.0
    %9205 = vmatprep.subr.mxu0 0.0
    %9206 = vmatpush1.msra.mxu0 0.0
    %9207 = vmatprep.subr.mxu0 0.0
    %9208 = vmatpush1.msra.mxu0 0.0
    %9209 = vmatprep.subr.mxu0 0.0
    %9210 = vmatpush1.msra.mxu0 0.0
    %9211 = vmatprep.subr.mxu0 0.0
    %9212 = vmatpush1.msra.mxu0 0.0
    %9213 = vmatprep.subr.mxu0 0.0
    %9214 = vmatpush1.msra.mxu0 0.0
    %9215 = vmatprep.subr.mxu0 0.0
    %9216 = vmatpush1.msra.mxu0 0.0
    %9217 = vmatprep.subr.mxu0 0.0
    %9218 = vmatpush1.msra.mxu0 0.0
    %9219 = vmatprep.subr.mxu0 0.0
    %9220 = vmatpush1.msra.mxu0 0.0
    %9221 = vmatprep.subr.mxu0 0.0
    %9222 = vmatpush1.msra.mxu0 0.0
    %9223 = vmatprep.subr.mxu0 0.0
    %9224 = vmatpush1.msra.mxu0 0.0
    %9225 = vmatprep.mubr.f32.mxu0 0.0
    %9226 = vmatmul.mubr.f32.gmra.mrb[0].mxu0 %v3780
    %v9227 = vpop.f32.mrb[0].mxu0
    %v9228 = vadd.f32 %v9139, %v9227
    %v9229 = vpop.f32.mrb[0].mxu0
    %v9230 = vadd.f32 %v9141, %v9229
    %9231 = vmatprep.mubr.f32.mxu0 0.0
    %9232 = vmatmul.mubr.f32.gmra.mrb[0].mxu0 %v3783
    %v9233 = vpop.f32.mrb[0].mxu0
    %v9234 = vadd.f32 %v9145, %v9233
    %v9235 = vpop.f32.mrb[0].mxu0
    %v9236 = vadd.f32 %v9147, %v9235
    %9237 = vmatprep.mubr.f32.mxu0 0.0
    %9238 = vmatmul.mubr.f32.gmra.mrb[0].mxu0 %v3786
    %v9239 = vpop.f32.mrb[0].mxu0
    %v9240 = vadd.f32 %v9151, %v9239
    %v9241 = vpop.f32.mrb[0].mxu0
    %v9242 = vadd.f32 %v9153, %v9241
    %9243 = vmatprep.mubr.f32.mxu0 0.0
    %9244 = vmatmul.mubr.f32.gmra.mrb[0].mxu0 %v3789
    %v9245 = vpop.f32.mrb[0].mxu0
    %v9246 = vadd.f32 %v9157, %v9245
    %v9247 = vpop.f32.mrb[0].mxu0
    %v9248 = vadd.f32 %v9159, %v9247
    %9249 = vdwg.mxu0
    %v9250 = vadd.f32 %v9064, %v9228
    %v9251 = vadd.f32 %v9065, %v9230
    %v9252 = vadd.f32 %v9066, %v9234
    %v9253 = vadd.f32 %v9067, %v9236
    %v9254 = vadd.f32 %v9068, %v9240
    %v9255 = vadd.f32 %v9069, %v9242
    %v9256 = vadd.f32 %v9070, %v9246
    %v9257 = vadd.f32 %v9071, %v9248
    %9258 = vmatprep.subr.mxu0 %v8249
    %9259 = vmatpush1.msra.mxu0 %v8248
    %9260 = vmatprep.subr.mxu0 %v8251
    %9261 = vmatpush1.msra.mxu0 %v8250
    %9262 = vmatprep.subr.mxu0 %v8253
    %9263 = vmatpush1.msra.mxu0 %v8252
    %9264 = vmatprep.subr.mxu0 %v8255
    %9265 = vmatpush1.msra.mxu0 %v8254
    %9266 = vmatprep.subr.mxu0 %v8257
    %9267 = vmatpush1.msra.mxu0 %v8256
    %9268 = vmatprep.subr.mxu0 %v8259
    %9269 = vmatpush1.msra.mxu0 %v8258
    %9270 = vmatprep.subr.mxu0 %v8261
    %9271 = vmatpush1.msra.mxu0 %v8260
    %9272 = vmatprep.subr.mxu0 %v8263
    %9273 = vmatpush1.msra.mxu0 %v8262
    %9274 = vmatprep.subr.mxu0 %v8265
    %9275 = vmatpush1.msra.mxu0 %v8264
    %9276 = vmatprep.subr.mxu0 %v8267
    %9277 = vmatpush1.msra.mxu0 %v8266
    %9278 = vmatprep.subr.mxu0 %v8269
    %9279 = vmatpush1.msra.mxu0 %v8268
    %9280 = vmatprep.subr.mxu0 %v8271
    %9281 = vmatpush1.msra.mxu0 %v8270
    %9282 = vmatprep.subr.mxu0 %v8273
    %9283 = vmatpush1.msra.mxu0 %v8272
    %9284 = vmatprep.subr.mxu0 %v8275
    %9285 = vmatpush1.msra.mxu0 %v8274
    %9286 = vmatprep.subr.mxu0 %v8277
    %9287 = vmatpush1.msra.mxu0 %v8276
    %9288 = vmatprep.subr.mxu0 %v8279
    %9289 = vmatpush1.msra.mxu0 %v8278
    %9290 = vmatprep.subr.mxu0 %v8281
    %9291 = vmatpush1.msra.mxu0 %v8280
    %9292 = vmatprep.subr.mxu0 %v8283
    %9293 = vmatpush1.msra.mxu0 %v8282
    %9294 = vmatprep.subr.mxu0 %v8285
    %9295 = vmatpush1.msra.mxu0 %v8284
    %9296 = vmatprep.subr.mxu0 %v8287
    %9297 = vmatpush1.msra.mxu0 %v8286
    %9298 = vmatprep.subr.mxu0 %v8289
    %9299 = vmatpush1.msra.mxu0 %v8288
    %9300 = vmatprep.subr.mxu0 %v8291
    %9301 = vmatpush1.msra.mxu0 %v8290
    %9302 = vmatprep.subr.mxu0 %v8293
    %9303 = vmatpush1.msra.mxu0 %v8292
    %9304 = vmatprep.subr.mxu0 %v8295
    %9305 = vmatpush1.msra.mxu0 %v8294
    %9306 = vmatprep.subr.mxu0 %v8297
    %9307 = vmatpush1.msra.mxu0 %v8296
    %9308 = vmatprep.subr.mxu0 %v8299
    %9309 = vmatpush1.msra.mxu0 %v8298
    %9310 = vmatprep.subr.mxu0 %v8301
    %9311 = vmatpush1.msra.mxu0 %v8300
    %9312 = vmatprep.subr.mxu0 %v8303
    %9313 = vmatpush1.msra.mxu0 %v8302
    %9314 = vmatprep.subr.mxu0 %v8305
    %9315 = vmatpush1.msra.mxu0 %v8304
    %9316 = vmatprep.subr.mxu0 %v8307
    %9317 = vmatpush1.msra.mxu0 %v8306
    %9318 = vmatprep.subr.mxu0 %v8309
    %9319 = vmatpush1.msra.mxu0 %v8308
    %9320 = vmatprep.subr.mxu0 %v8311
    %9321 = vmatpush1.msra.mxu0 %v8310
    %9322 = vmatprep.mubr.f32.mxu0 %v7121
    %9323 = vmatmul.mubr.f32.gmra.mrb[0].mxu0 %v7120
    %v9324 = vpop.f32.mrb[0].mxu0
    %v9325 = vadd.f32 0.0, %v9324
    %v9326 = vpop.f32.mrb[0].mxu0
    %v9327 = vadd.f32 0.0, %v9326
    %9328 = vmatprep.mubr.f32.mxu0 %v7124
    %9329 = vmatmul.mubr.f32.gmra.mrb[0].mxu0 %v7123
    %v9330 = vpop.f32.mrb[0].mxu0
    %v9331 = vadd.f32 0.0, %v9330
    %v9332 = vpop.f32.mrb[0].mxu0
    %v9333 = vadd.f32 0.0, %v9332
    %9334 = vmatprep.mubr.f32.mxu0 %v7127
    %9335 = vmatmul.mubr.f32.gmra.mrb[0].mxu0 %v7126
    %v9336 = vpop.f32.mrb[0].mxu0
    %v9337 = vadd.f32 0.0, %v9336
    %v9338 = vpop.f32.mrb[0].mxu0
    %v9339 = vadd.f32 0.0, %v9338
    %9340 = vmatprep.mubr.f32.mxu0 %v7130
    %9341 = vmatmul.mubr.f32.gmra.mrb[0].mxu0 %v7129
    %v9342 = vpop.f32.mrb[0].mxu0
    %v9343 = vadd.f32 0.0, %v9342
    %v9344 = vpop.f32.mrb[0].mxu0
    %v9345 = vadd.f32 0.0, %v9344
    %9346 = vdwg.mxu0
    %9347 = vmatprep.subr.mxu0 %v8313
    %9348 = vmatpush1.msra.mxu0 %v8312
    %9349 = vmatprep.subr.mxu0 %v8315
    %9350 = vmatpush1.msra.mxu0 %v8314
    %9351 = vmatprep.subr.mxu0 %v8317
    %9352 = vmatpush1.msra.mxu0 %v8316
    %9353 = vmatprep.subr.mxu0 %v8319
    %9354 = vmatpush1.msra.mxu0 %v8318
    %9355 = vmatprep.subr.mxu0 %v8321
    %9356 = vmatpush1.msra.mxu0 %v8320
    %9357 = vmatprep.subr.mxu0 %v8323
    %9358 = vmatpush1.msra.mxu0 %v8322
    %9359 = vmatprep.subr.mxu0 %v8325
    %9360 = vmatpush1.msra.mxu0 %v8324
    %9361 = vmatprep.subr.mxu0 %v8327
    %9362 = vmatpush1.msra.mxu0 %v8326
    %9363 = vmatprep.subr.mxu0 %v8329
    %9364 = vmatpush1.msra.mxu0 %v8328
    %9365 = vmatprep.subr.mxu0 %v8331
    %9366 = vmatpush1.msra.mxu0 %v8330
    %9367 = vmatprep.subr.mxu0 %v8333
    %9368 = vmatpush1.msra.mxu0 %v8332
    %9369 = vmatprep.subr.mxu0 %v8335
    %9370 = vmatpush1.msra.mxu0 %v8334
    %9371 = vmatprep.subr.mxu0 %v8337
    %9372 = vmatpush1.msra.mxu0 %v8336
    %9373 = vmatprep.subr.mxu0 %v8339
    %9374 = vmatpush1.msra.mxu0 %v8338
    %9375 = vmatprep.subr.mxu0 %v8341
    %9376 = vmatpush1.msra.mxu0 %v8340
    %9377 = vmatprep.subr.mxu0 %v8343
    %9378 = vmatpush1.msra.mxu0 %v8342
    %9379 = vmatprep.subr.mxu0 0.0
    %9380 = vmatpush1.msra.mxu0 0.0
    %9381 = vmatprep.subr.mxu0 0.0
    %9382 = vmatpush1.msra.mxu0 0.0
    %9383 = vmatprep.subr.mxu0 0.0
    %9384 = vmatpush1.msra.mxu0 0.0
    %9385 = vmatprep.subr.mxu0 0.0
    %9386 = vmatpush1.msra.mxu0 0.0
    %9387 = vmatprep.subr.mxu0 0.0
    %9388 = vmatpush1.msra.mxu0 0.0
    %9389 = vmatprep.subr.mxu0 0.0
    %9390 = vmatpush1.msra.mxu0 0.0
    %9391 = vmatprep.subr.mxu0 0.0
    %9392 = vmatpush1.msra.mxu0 0.0
    %9393 = vmatprep.subr.mxu0 0.0
    %9394 = vmatpush1.msra.mxu0 0.0
    %9395 = vmatprep.subr.mxu0 0.0
    %9396 = vmatpush1.msra.mxu0 0.0
    %9397 = vmatprep.subr.mxu0 0.0
    %9398 = vmatpush1.msra.mxu0 0.0
    %9399 = vmatprep.subr.mxu0 0.0
    %9400 = vmatpush1.msra.mxu0 0.0
    %9401 = vmatprep.subr.mxu0 0.0
    %9402 = vmatpush1.msra.mxu0 0.0
    %9403 = vmatprep.subr.mxu0 0.0
    %9404 = vmatpush1.msra.mxu0 0.0
    %9405 = vmatprep.subr.mxu0 0.0
    %9406 = vmatpush1.msra.mxu0 0.0
    %9407 = vmatprep.subr.mxu0 0.0
    %9408 = vmatpush1.msra.mxu0 0.0
    %9409 = vmatprep.subr.mxu0 0.0
    %9410 = vmatpush1.msra.mxu0 0.0
    %9411 = vmatprep.mubr.f32.mxu0 0.0
    %9412 = vmatmul.mubr.f32.gmra.mrb[0].mxu0 %v7122
    %v9413 = vpop.f32.mrb[0].mxu0
    %v9414 = vadd.f32 %v9325, %v9413
    %v9415 = vpop.f32.mrb[0].mxu0
    %v9416 = vadd.f32 %v9327, %v9415
    %9417 = vmatprep.mubr.f32.mxu0 0.0
    %9418 = vmatmul.mubr.f32.gmra.mrb[0].mxu0 %v7125
    %v9419 = vpop.f32.mrb[0].mxu0
    %v9420 = vadd.f32 %v9331, %v9419
    %v9421 = vpop.f32.mrb[0].mxu0
    %v9422 = vadd.f32 %v9333, %v9421
    %9423 = vmatprep.mubr.f32.mxu0 0.0
    %9424 = vmatmul.mubr.f32.gmra.mrb[0].mxu0 %v7128
    %v9425 = vpop.f32.mrb[0].mxu0
    %v9426 = vadd.f32 %v9337, %v9425
    %v9427 = vpop.f32.mrb[0].mxu0
    %v9428 = vadd.f32 %v9339, %v9427
    %9429 = vmatprep.mubr.f32.mxu0 0.0
    %9430 = vmatmul.mubr.f32.gmra.mrb[0].mxu0 %v7131
    %v9431 = vpop.f32.mrb[0].mxu0
    %v9432 = vadd.f32 %v9343, %v9431
    %v9433 = vpop.f32.mrb[0].mxu0
    %v9434 = vadd.f32 %v9345, %v9433
    %9435 = vdwg.mxu0
    %v9436 = vadd.f32 %v9250, %v9414
    %v9437 = vadd.f32 %v9251, %v9416
    %v9438 = vadd.f32 %v9252, %v9420
    %v9439 = vadd.f32 %v9253, %v9422
    %v9440 = vadd.f32 %v9254, %v9426
    %v9441 = vadd.f32 %v9255, %v9428
    %v9442 = vadd.f32 %v9256, %v9432
    %v9443 = vadd.f32 %v9257, %v9434
    %v9444 = vmax.f32 %v8522, %v8523
    %v9445 = vmax.f32 %v8524, %v8525
    %v9446 = vmax.f32 %v8526, %v8527
    %v9447 = vmax.f32 %v8528, %v8529
    %v9448 = vmax.f32 %v9436, %v9437
    %v9449 = vmax.f32 %v9438, %v9439
    %v9450 = vmax.f32 %v9440, %v9441
    %v9451 = vmax.f32 %v9442, %v9443
    %v9452 = vmax.f32 %v9444, %v9448
    %v9453 = vmax.f32 %v9445, %v9449
    %v9454 = vmax.f32 %v9446, %v9450
    %v9455 = vmax.f32 %v9447, %v9451
    %v9456 = vld [vmem:[#allocation7] sm:$0x1]
    %v9458 = vlaneseq
    %v9459 = vshrl.u32 %v9458, 7
    %v9460 = vsub.s32 0, %v9459
    %v9461 = vrot.slane %v9456, %v9460
    %v9463 = vadd.f32 %v9452, %v9461
    %v9464 = vadd.f32 %v9453, %v9461
    %v9465 = vadd.f32 %v9454, %v9461
    %v9466 = vadd.f32 %v9455, %v9461
    %v9467 = vmax.f32 %v9463, 0.0
    %v9468 = vmax.f32 %v9464, 0.0
    %v9469 = vmax.f32 %v9465, 0.0
    %v9470 = vmax.f32 %v9466, 0.0
    %v9471 = vld [vmem:[%s8] sm:$0xff]
    %v9472 = vld [vmem:[%s8 + $0x8] sm:$0xff]
    %v9473 = vld [vmem:[%s8 + $0x10] sm:$0xff]
    %v9474 = vld [vmem:[%s8 + $0x18] sm:$0xff]
    %v9475 = vld [vmem:[%s8 + $0x20] sm:$0xff]
    %v9476 = vld [vmem:[%s8 + $0x28] sm:$0xff]
    %v9477 = vld [vmem:[%s8 + $0x30] sm:$0xff]
    %v9478 = vld [vmem:[%s8 + $0x38] sm:$0xff]
    %v9479 = vld [vmem:[%s8 + $0x40] sm:$0xff]
    %v9480 = vld [vmem:[%s8 + $0x48] sm:$0xff]
    %v9481 = vld [vmem:[%s8 + $0x50] sm:$0xff]
    %v9482 = vld [vmem:[%s8 + $0x58] sm:$0xff]
    %v9483 = vld [vmem:[%s8 + $0x60] sm:$0xff]
    %v9484 = vld [vmem:[%s8 + $0x68] sm:$0xff]
    %v9485 = vld [vmem:[%s8 + $0x70] sm:$0xff]
    %v9486 = vld [vmem:[%s8 + $0x78] sm:$0xff]
    %s9487 = scalar_lea.vmem %s8, 128
    %v9488 = vld [vmem:[%s9487] sm:$0xff]
    %v9489 = vld [vmem:[%s9487 + $0x8] sm:$0xff]
    %v9490 = vld [vmem:[%s9487 + $0x10] sm:$0xff]
    %v9491 = vld [vmem:[%s9487 + $0x18] sm:$0xff]
    %v9492 = vld [vmem:[%s9487 + $0x20] sm:$0xff]
    %v9493 = vld [vmem:[%s9487 + $0x28] sm:$0xff]
    %v9494 = vld [vmem:[%s9487 + $0x30] sm:$0xff]
    %v9495 = vld [vmem:[%s9487 + $0x38] sm:$0xff]
    %v9496 = vld [vmem:[%s9487 + $0x40] sm:$0xff]
    %v9497 = vld [vmem:[%s9487 + $0x48] sm:$0xff]
    %v9498 = vld [vmem:[%s9487 + $0x50] sm:$0xff]
    %v9499 = vld [vmem:[%s9487 + $0x58] sm:$0xff]
    %v9500 = vld [vmem:[%s9487 + $0x60] sm:$0xff]
    %v9501 = vld [vmem:[%s9487 + $0x68] sm:$0xff]
    %v9502 = vld [vmem:[%s9487 + $0x70] sm:$0xff]
    %v9503 = vld [vmem:[%s9487 + $0x78] sm:$0xff]
    %9504 = vmatprep.subr.mxu0 0.0
    %9505 = vmatpush1.msra.mxu0 %v9488
    %9506 = vmatprep.subr.mxu0 0.0
    %9507 = vmatpush1.msra.mxu0 %v9489
    %9508 = vmatprep.subr.mxu0 0.0
    %9509 = vmatpush1.msra.mxu0 %v9490
    %9510 = vmatprep.subr.mxu0 0.0
    %9511 = vmatpush1.msra.mxu0 %v9491
    %9512 = vmatprep.subr.mxu0 0.0
    %9513 = vmatpush1.msra.mxu0 %v9492
    %9514 = vmatprep.subr.mxu0 0.0
    %9515 = vmatpush1.msra.mxu0 %v9493
    %9516 = vmatprep.subr.mxu0 0.0
    %9517 = vmatpush1.msra.mxu0 %v9494
    %9518 = vmatprep.subr.mxu0 0.0
    %9519 = vmatpush1.msra.mxu0 %v9495
    %9520 = vmatprep.subr.mxu0 0.0
    %9521 = vmatpush1.msra.mxu0 %v9496
    %9522 = vmatprep.subr.mxu0 0.0
    %9523 = vmatpush1.msra.mxu0 %v9497
    %9524 = vmatprep.subr.mxu0 0.0
    %9525 = vmatpush1.msra.mxu0 %v9498
    %9526 = vmatprep.subr.mxu0 0.0
    %9527 = vmatpush1.msra.mxu0 %v9499
    %9528 = vmatprep.subr.mxu0 0.0
    %9529 = vmatpush1.msra.mxu0 %v9500
    %9530 = vmatprep.subr.mxu0 0.0
    %9531 = vmatpush1.msra.mxu0 %v9501
    %9532 = vmatprep.subr.mxu0 0.0
    %9533 = vmatpush1.msra.mxu0 %v9502
    %9534 = vmatprep.subr.mxu0 0.0
    %9535 = vmatpush1.msra.mxu0 %v9503
    %9536 = vmatprep.subr.mxu0 0.0
    %9537 = vmatpush1.msra.mxu0 0.0
    %9538 = vmatprep.subr.mxu0 0.0
    %9539 = vmatpush1.msra.mxu0 0.0
    %9540 = vmatprep.subr.mxu0 0.0
    %9541 = vmatpush1.msra.mxu0 0.0
    %9542 = vmatprep.subr.mxu0 0.0
    %9543 = vmatpush1.msra.mxu0 0.0
    %9544 = vmatprep.subr.mxu0 0.0
    %9545 = vmatpush1.msra.mxu0 0.0
    %9546 = vmatprep.subr.mxu0 0.0
    %9547 = vmatpush1.msra.mxu0 0.0
    %9548 = vmatprep.subr.mxu0 0.0
    %9549 = vmatpush1.msra.mxu0 0.0
    %9550 = vmatprep.subr.mxu0 0.0
    %9551 = vmatpush1.msra.mxu0 0.0
    %9552 = vmatprep.subr.mxu0 0.0
    %9553 = vmatpush1.msra.mxu0 0.0
    %9554 = vmatprep.subr.mxu0 0.0
    %9555 = vmatpush1.msra.mxu0 0.0
    %9556 = vmatprep.subr.mxu0 0.0
    %9557 = vmatpush1.msra.mxu0 0.0
    %9558 = vmatprep.subr.mxu0 0.0
    %9559 = vmatpush1.msra.mxu0 0.0
    %9560 = vmatprep.subr.mxu0 0.0
    %9561 = vmatpush1.msra.mxu0 0.0
    %9562 = vmatprep.subr.mxu0 0.0
    %9563 = vmatpush1.msra.mxu0 0.0
    %9564 = vmatprep.subr.mxu0 0.0
    %9565 = vmatpush1.msra.mxu0 0.0
    %9566 = vmatprep.subr.mxu0 0.0
    %9567 = vmatpush1.msra.mxu0 0.0
    %9568 = vmatprep.mubr.f32.mxu0 0.0
    %9569 = vmatmul.mubr.f32.gmra.mrb[0].mxu0 %v9468
    %v9570 = vpop.f32.mrb[0].mxu0
    %v9571 = vadd.f32 0.0, %v9570
    %v9572 = vpop.f32.mrb[0].mxu0
    %9573 = vdwg.mxu0
    %9574 = vmatprep.subr.mxu0 0.0
    %9575 = vmatpush1.msra.mxu0 %v9471
    %9576 = vmatprep.subr.mxu0 0.0
    %9577 = vmatpush1.msra.mxu0 %v9472
    %9578 = vmatprep.subr.mxu0 0.0
    %9579 = vmatpush1.msra.mxu0 %v9473
    %9580 = vmatprep.subr.mxu0 0.0
    %9581 = vmatpush1.msra.mxu0 %v9474
    %9582 = vmatprep.subr.mxu0 0.0
    %9583 = vmatpush1.msra.mxu0 %v9475
    %9584 = vmatprep.subr.mxu0 0.0
    %9585 = vmatpush1.msra.mxu0 %v9476
    %9586 = vmatprep.subr.mxu0 0.0
    %9587 = vmatpush1.msra.mxu0 %v9477
    %9588 = vmatprep.subr.mxu0 0.0
    %9589 = vmatpush1.msra.mxu0 %v9478
    %9590 = vmatprep.subr.mxu0 0.0
    %9591 = vmatpush1.msra.mxu0 %v9479
    %9592 = vmatprep.subr.mxu0 0.0
    %9593 = vmatpush1.msra.mxu0 %v9480
    %9594 = vmatprep.subr.mxu0 0.0
    %9595 = vmatpush1.msra.mxu0 %v9481
    %9596 = vmatprep.subr.mxu0 0.0
    %9597 = vmatpush1.msra.mxu0 %v9482
    %9598 = vmatprep.subr.mxu0 0.0
    %9599 = vmatpush1.msra.mxu0 %v9483
    %9600 = vmatprep.subr.mxu0 0.0
    %9601 = vmatpush1.msra.mxu0 %v9484
    %9602 = vmatprep.subr.mxu0 0.0
    %9603 = vmatpush1.msra.mxu0 %v9485
    %9604 = vmatprep.subr.mxu0 0.0
    %9605 = vmatpush1.msra.mxu0 %v9486
    %9606 = vmatprep.subr.mxu0 0.0
    %9607 = vmatpush1.msra.mxu0 0.0
    %9608 = vmatprep.subr.mxu0 0.0
    %9609 = vmatpush1.msra.mxu0 0.0
    %9610 = vmatprep.subr.mxu0 0.0
    %9611 = vmatpush1.msra.mxu0 0.0
    %9612 = vmatprep.subr.mxu0 0.0
    %9613 = vmatpush1.msra.mxu0 0.0
    %9614 = vmatprep.subr.mxu0 0.0
    %9615 = vmatpush1.msra.mxu0 0.0
    %9616 = vmatprep.subr.mxu0 0.0
    %9617 = vmatpush1.msra.mxu0 0.0
    %9618 = vmatprep.subr.mxu0 0.0
    %9619 = vmatpush1.msra.mxu0 0.0
    %9620 = vmatprep.subr.mxu0 0.0
    %9621 = vmatpush1.msra.mxu0 0.0
    %9622 = vmatprep.subr.mxu0 0.0
    %9623 = vmatpush1.msra.mxu0 0.0
    %9624 = vmatprep.subr.mxu0 0.0
    %9625 = vmatpush1.msra.mxu0 0.0
    %9626 = vmatprep.subr.mxu0 0.0
    %9627 = vmatpush1.msra.mxu0 0.0
    %9628 = vmatprep.subr.mxu0 0.0
    %9629 = vmatpush1.msra.mxu0 0.0
    %9630 = vmatprep.subr.mxu0 0.0
    %9631 = vmatpush1.msra.mxu0 0.0
    %9632 = vmatprep.subr.mxu0 0.0
    %9633 = vmatpush1.msra.mxu0 0.0
    %9634 = vmatprep.subr.mxu0 0.0
    %9635 = vmatpush1.msra.mxu0 0.0
    %9636 = vmatprep.subr.mxu0 0.0
    %9637 = vmatpush1.msra.mxu0 0.0
    %9638 = vmatprep.mubr.f32.mxu0 0.0
    %9639 = vmatmul.mubr.f32.gmra.mrb[0].mxu0 %v9467
    %v9640 = vpop.f32.mrb[0].mxu0
    %v9641 = vadd.f32 %v9571, %v9640
    %v9642 = vpop.f32.mrb[0].mxu0
    %9643 = vdwg.mxu0
    %s9644 = scalar_lea.vmem %s8, 256
    %v9645 = vld [vmem:[%s9644] sm:$0xff]
    %v9646 = vld [vmem:[%s9644 + $0x8] sm:$0xff]
    %v9647 = vld [vmem:[%s9644 + $0x10] sm:$0xff]
    %v9648 = vld [vmem:[%s9644 + $0x18] sm:$0xff]
    %v9649 = vld [vmem:[%s9644 + $0x20] sm:$0xff]
    %v9650 = vld [vmem:[%s9644 + $0x28] sm:$0xff]
    %v9651 = vld [vmem:[%s9644 + $0x30] sm:$0xff]
    %v9652 = vld [vmem:[%s9644 + $0x38] sm:$0xff]
    %v9653 = vld [vmem:[%s9644 + $0x40] sm:$0xff]
    %v9654 = vld [vmem:[%s9644 + $0x48] sm:$0xff]
    %v9655 = vld [vmem:[%s9644 + $0x50] sm:$0xff]
    %v9656 = vld [vmem:[%s9644 + $0x58] sm:$0xff]
    %v9657 = vld [vmem:[%s9644 + $0x60] sm:$0xff]
    %v9658 = vld [vmem:[%s9644 + $0x68] sm:$0xff]
    %v9659 = vld [vmem:[%s9644 + $0x70] sm:$0xff]
    %v9660 = vld [vmem:[%s9644 + $0x78] sm:$0xff]
    %9661 = vmatprep.subr.mxu0 0.0
    %9662 = vmatpush1.msra.mxu0 %v9645
    %9663 = vmatprep.subr.mxu0 0.0
    %9664 = vmatpush1.msra.mxu0 %v9646
    %9665 = vmatprep.subr.mxu0 0.0
    %9666 = vmatpush1.msra.mxu0 %v9647
    %9667 = vmatprep.subr.mxu0 0.0
    %9668 = vmatpush1.msra.mxu0 %v9648
    %9669 = vmatprep.subr.mxu0 0.0
    %9670 = vmatpush1.msra.mxu0 %v9649
    %9671 = vmatprep.subr.mxu0 0.0
    %9672 = vmatpush1.msra.mxu0 %v9650
    %9673 = vmatprep.subr.mxu0 0.0
    %9674 = vmatpush1.msra.mxu0 %v9651
    %9675 = vmatprep.subr.mxu0 0.0
    %9676 = vmatpush1.msra.mxu0 %v9652
    %9677 = vmatprep.subr.mxu0 0.0
    %9678 = vmatpush1.msra.mxu0 %v9653
    %9679 = vmatprep.subr.mxu0 0.0
    %9680 = vmatpush1.msra.mxu0 %v9654
    %9681 = vmatprep.subr.mxu0 0.0
    %9682 = vmatpush1.msra.mxu0 %v9655
    %9683 = vmatprep.subr.mxu0 0.0
    %9684 = vmatpush1.msra.mxu0 %v9656
    %9685 = vmatprep.subr.mxu0 0.0
    %9686 = vmatpush1.msra.mxu0 %v9657
    %9687 = vmatprep.subr.mxu0 0.0
    %9688 = vmatpush1.msra.mxu0 %v9658
    %9689 = vmatprep.subr.mxu0 0.0
    %9690 = vmatpush1.msra.mxu0 %v9659
    %9691 = vmatprep.subr.mxu0 0.0
    %9692 = vmatpush1.msra.mxu0 %v9660
    %9693 = vmatprep.subr.mxu0 0.0
    %9694 = vmatpush1.msra.mxu0 0.0
    %9695 = vmatprep.subr.mxu0 0.0
    %9696 = vmatpush1.msra.mxu0 0.0
    %9697 = vmatprep.subr.mxu0 0.0
    %9698 = vmatpush1.msra.mxu0 0.0
    %9699 = vmatprep.subr.mxu0 0.0
    %9700 = vmatpush1.msra.mxu0 0.0
    %9701 = vmatprep.subr.mxu0 0.0
    %9702 = vmatpush1.msra.mxu0 0.0
    %9703 = vmatprep.subr.mxu0 0.0
    %9704 = vmatpush1.msra.mxu0 0.0
    %9705 = vmatprep.subr.mxu0 0.0
    %9706 = vmatpush1.msra.mxu0 0.0
    %9707 = vmatprep.subr.mxu0 0.0
    %9708 = vmatpush1.msra.mxu0 0.0
    %9709 = vmatprep.subr.mxu0 0.0
    %9710 = vmatpush1.msra.mxu0 0.0
    %9711 = vmatprep.subr.mxu0 0.0
    %9712 = vmatpush1.msra.mxu0 0.0
    %9713 = vmatprep.subr.mxu0 0.0
    %9714 = vmatpush1.msra.mxu0 0.0
    %9715 = vmatprep.subr.mxu0 0.0
    %9716 = vmatpush1.msra.mxu0 0.0
    %9717 = vmatprep.subr.mxu0 0.0
    %9718 = vmatpush1.msra.mxu0 0.0
    %9719 = vmatprep.subr.mxu0 0.0
    %9720 = vmatpush1.msra.mxu0 0.0
    %9721 = vmatprep.subr.mxu0 0.0
    %9722 = vmatpush1.msra.mxu0 0.0
    %9723 = vmatprep.subr.mxu0 0.0
    %9724 = vmatpush1.msra.mxu0 0.0
    %9725 = vmatprep.mubr.f32.mxu0 0.0
    %9726 = vmatmul.mubr.f32.gmra.mrb[0].mxu0 %v9469
    %v9727 = vpop.f32.mrb[0].mxu0
    %v9728 = vadd.f32 0.0, %v9727
    %v9729 = vpop.f32.mrb[0].mxu0
    %9730 = vdwg.mxu0
    %v9731 = vadd.f32 %v9641, %v9728
    %s9732 = scalar_lea.vmem %s8, 384
    %v9733 = vld [vmem:[%s9732] sm:$0xff]
    %v9734 = vld [vmem:[%s9732 + $0x8] sm:$0xff]
    %v9735 = vld [vmem:[%s9732 + $0x10] sm:$0xff]
    %v9736 = vld [vmem:[%s9732 + $0x18] sm:$0xff]
    %v9737 = vld [vmem:[%s9732 + $0x20] sm:$0xff]
    %v9738 = vld [vmem:[%s9732 + $0x28] sm:$0xff]
    %v9739 = vld [vmem:[%s9732 + $0x30] sm:$0xff]
    %v9740 = vld [vmem:[%s9732 + $0x38] sm:$0xff]
    %v9741 = vld [vmem:[%s9732 + $0x40] sm:$0xff]
    %v9742 = vld [vmem:[%s9732 + $0x48] sm:$0xff]
    %v9743 = vld [vmem:[%s9732 + $0x50] sm:$0xff]
    %v9744 = vld [vmem:[%s9732 + $0x58] sm:$0xff]
    %v9745 = vld [vmem:[%s9732 + $0x60] sm:$0xff]
    %v9746 = vld [vmem:[%s9732 + $0x68] sm:$0xff]
    %v9747 = vld [vmem:[%s9732 + $0x70] sm:$0xff]
    %v9748 = vld [vmem:[%s9732 + $0x78] sm:$0xff]
    %9749 = vmatprep.subr.mxu0 0.0
    %9750 = vmatpush1.msra.mxu0 %v9733
    %9751 = vmatprep.subr.mxu0 0.0
    %9752 = vmatpush1.msra.mxu0 %v9734
    %9753 = vmatprep.subr.mxu0 0.0
    %9754 = vmatpush1.msra.mxu0 %v9735
    %9755 = vmatprep.subr.mxu0 0.0
    %9756 = vmatpush1.msra.mxu0 %v9736
    %9757 = vmatprep.subr.mxu0 0.0
    %9758 = vmatpush1.msra.mxu0 %v9737
    %9759 = vmatprep.subr.mxu0 0.0
    %9760 = vmatpush1.msra.mxu0 %v9738
    %9761 = vmatprep.subr.mxu0 0.0
    %9762 = vmatpush1.msra.mxu0 %v9739
    %9763 = vmatprep.subr.mxu0 0.0
    %9764 = vmatpush1.msra.mxu0 %v9740
    %9765 = vmatprep.subr.mxu0 0.0
    %9766 = vmatpush1.msra.mxu0 %v9741
    %9767 = vmatprep.subr.mxu0 0.0
    %9768 = vmatpush1.msra.mxu0 %v9742
    %9769 = vmatprep.subr.mxu0 0.0
    %9770 = vmatpush1.msra.mxu0 %v9743
    %9771 = vmatprep.subr.mxu0 0.0
    %9772 = vmatpush1.msra.mxu0 %v9744
    %9773 = vmatprep.subr.mxu0 0.0
    %9774 = vmatpush1.msra.mxu0 %v9745
    %9775 = vmatprep.subr.mxu0 0.0
    %9776 = vmatpush1.msra.mxu0 %v9746
    %9777 = vmatprep.subr.mxu0 0.0
    %9778 = vmatpush1.msra.mxu0 %v9747
    %9779 = vmatprep.subr.mxu0 0.0
    %9780 = vmatpush1.msra.mxu0 %v9748
    %9781 = vmatprep.subr.mxu0 0.0
    %9782 = vmatpush1.msra.mxu0 0.0
    %9783 = vmatprep.subr.mxu0 0.0
    %9784 = vmatpush1.msra.mxu0 0.0
    %9785 = vmatprep.subr.mxu0 0.0
    %9786 = vmatpush1.msra.mxu0 0.0
    %9787 = vmatprep.subr.mxu0 0.0
    %9788 = vmatpush1.msra.mxu0 0.0
    %9789 = vmatprep.subr.mxu0 0.0
    %9790 = vmatpush1.msra.mxu0 0.0
    %9791 = vmatprep.subr.mxu0 0.0
    %9792 = vmatpush1.msra.mxu0 0.0
    %9793 = vmatprep.subr.mxu0 0.0
    %9794 = vmatpush1.msra.mxu0 0.0
    %9795 = vmatprep.subr.mxu0 0.0
    %9796 = vmatpush1.msra.mxu0 0.0
    %9797 = vmatprep.subr.mxu0 0.0
    %9798 = vmatpush1.msra.mxu0 0.0
    %9799 = vmatprep.subr.mxu0 0.0
    %9800 = vmatpush1.msra.mxu0 0.0
    %9801 = vmatprep.subr.mxu0 0.0
    %9802 = vmatpush1.msra.mxu0 0.0
    %9803 = vmatprep.subr.mxu0 0.0
    %9804 = vmatpush1.msra.mxu0 0.0
    %9805 = vmatprep.subr.mxu0 0.0
    %9806 = vmatpush1.msra.mxu0 0.0
    %9807 = vmatprep.subr.mxu0 0.0
    %9808 = vmatpush1.msra.mxu0 0.0
    %9809 = vmatprep.subr.mxu0 0.0
    %9810 = vmatpush1.msra.mxu0 0.0
    %9811 = vmatprep.subr.mxu0 0.0
    %9812 = vmatpush1.msra.mxu0 0.0
    %9813 = vmatprep.mubr.f32.mxu0 0.0
    %9814 = vmatmul.mubr.f32.gmra.mrb[0].mxu0 %v9470
    %v9815 = vpop.f32.mrb[0].mxu0
    %v9816 = vadd.f32 0.0, %v9815
    %v9817 = vpop.f32.mrb[0].mxu0
    %9818 = vdwg.mxu0
    %v9819 = vadd.f32 %v9731, %v9816
    %v9820 = vld [vmem:[#allocation9] sm:$0x1]
    %v9822 = vlaneseq
    %v9823 = vshrl.u32 %v9822, 7
    %v9824 = vsub.s32 0, %v9823
    %v9825 = vrot.slane %v9820, %v9824
    %v9827 = vadd.f32 %v9819, %v9825
    %v9828 = vtanh.pop %v9827
    %v9829 = vld [vmem:[%s10] sm:$0xff]
    %v9830 = vld [vmem:[%s10 + $0x8] sm:$0xff]
    %v9831 = vld [vmem:[%s10 + $0x10] sm:$0xff]
    %v9832 = vld [vmem:[%s10 + $0x18] sm:$0xff]
    %v9833 = vld [vmem:[%s10 + $0x20] sm:$0xff]
    %v9834 = vld [vmem:[%s10 + $0x28] sm:$0xff]
    %v9835 = vld [vmem:[%s10 + $0x30] sm:$0x3]
    %v9836 = vld [vmem:[#allocation10] sm:$0x1]
    %v9838 = vlaneseq
    %v9839 = vshrl.u32 %v9838, 7
    %v9840 = vsub.s32 0, %v9839
    %v9841 = vrot.slane %v9836, %v9840
    %vm9843 = vcmask 408576
    %v9845 = vsel %vm9843, %v9828, 0
    %vm9847 = vcmask 1041408
    %v9849 = vsel %vm9847, %v9835, 0
    %9851 = vmatprep.subr.mxu0 0.0
    %9852 = vmatpush1.msra.mxu0 %v9829
    %9853 = vmatprep.subr.mxu0 0.0
    %9854 = vmatpush1.msra.mxu0 %v9830
    %9855 = vmatprep.subr.mxu0 0.0
    %9856 = vmatpush1.msra.mxu0 %v9831
    %9857 = vmatprep.subr.mxu0 0.0
    %9858 = vmatpush1.msra.mxu0 %v9832
    %9859 = vmatprep.subr.mxu0 0.0
    %9860 = vmatpush1.msra.mxu0 %v9833
    %9861 = vmatprep.subr.mxu0 0.0
    %9862 = vmatpush1.msra.mxu0 %v9834
    %9863 = vmatprep.subr.mxu0 0.0
    %9864 = vmatpush1.msra.mxu0 %v9849
    %9865 = vmatprep.subr.mxu0 0.0
    %9866 = vmatpush1.msra.mxu0 0.0
    %9867 = vmatprep.subr.mxu0 0.0
    %9868 = vmatpush1.msra.mxu0 0.0
    %9869 = vmatprep.subr.mxu0 0.0
    %9870 = vmatpush1.msra.mxu0 0.0
    %9871 = vmatprep.subr.mxu0 0.0
    %9872 = vmatpush1.msra.mxu0 0.0
    %9873 = vmatprep.subr.mxu0 0.0
    %9874 = vmatpush1.msra.mxu0 0.0
    %9875 = vmatprep.subr.mxu0 0.0
    %9876 = vmatpush1.msra.mxu0 0.0
    %9877 = vmatprep.subr.mxu0 0.0
    %9878 = vmatpush1.msra.mxu0 0.0
    %9879 = vmatprep.subr.mxu0 0.0
    %9880 = vmatpush1.msra.mxu0 0.0
    %9881 = vmatprep.subr.mxu0 0.0
    %9882 = vmatpush1.msra.mxu0 0.0
    %9883 = vmatprep.subr.mxu0 0.0
    %9884 = vmatpush1.msra.mxu0 0.0
    %9885 = vmatprep.subr.mxu0 0.0
    %9886 = vmatpush1.msra.mxu0 0.0
    %9887 = vmatprep.subr.mxu0 0.0
    %9888 = vmatpush1.msra.mxu0 0.0
    %9889 = vmatprep.subr.mxu0 0.0
    %9890 = vmatpush1.msra.mxu0 0.0
    %9891 = vmatprep.subr.mxu0 0.0
    %9892 = vmatpush1.msra.mxu0 0.0
    %9893 = vmatprep.subr.mxu0 0.0
    %9894 = vmatpush1.msra.mxu0 0.0
    %9895 = vmatprep.subr.mxu0 0.0
    %9896 = vmatpush1.msra.mxu0 0.0
    %9897 = vmatprep.subr.mxu0 0.0
    %9898 = vmatpush1.msra.mxu0 0.0
    %9899 = vmatprep.subr.mxu0 0.0
    %9900 = vmatpush1.msra.mxu0 0.0
    %9901 = vmatprep.subr.mxu0 0.0
    %9902 = vmatpush1.msra.mxu0 0.0
    %9903 = vmatprep.subr.mxu0 0.0
    %9904 = vmatpush1.msra.mxu0 0.0
    %9905 = vmatprep.subr.mxu0 0.0
    %9906 = vmatpush1.msra.mxu0 0.0
    %9907 = vmatprep.subr.mxu0 0.0
    %9908 = vmatpush1.msra.mxu0 0.0
    %9909 = vmatprep.subr.mxu0 0.0
    %9910 = vmatpush1.msra.mxu0 0.0
    %9911 = vmatprep.subr.mxu0 0.0
    %9912 = vmatpush1.msra.mxu0 0.0
    %9913 = vmatprep.subr.mxu0 0.0
    %9914 = vmatpush1.msra.mxu0 0.0
    %9915 = vmatprep.mubr.f32.mxu0 0.0
    %9916 = vmatmul.mubr.f32.gmra.mrb[0].mxu0 %v9845
    %v9917 = vpop.f32.mrb[0].mxu0
    %v9918 = vadd.f32 %v9841, %v9917
    %v9919 = vpop.f32.mrb[0].mxu0
    %9920 = vdwg.mxu0
    %vm9921 = vcmask 80896
    %v9922 = vsel %vm9921, %v9918, -inf
    %9923 = vmax.xlane.f32.xlu0 %v9922
    %v9924 = vpop.xlane.xlu0 %9923
    %v9925 = vsub.f32 %v9918, %v9924
    %v9926 = vmul.f32 %v9925, 1.442695
    %v9927 = vpow.pop %v9926
    %v9928 = vsel %vm9921, %v9927, 0.0
    %9929 = vadd.xlane.f32.xlu0 %v9928
    %v9930 = vpop.xlane.xlu0 %9929
    %v9931 = vrcp.pop %v9930
    %v9932 = vmul.f32 %v9927, %v9931
    %9933 = vst.msk [vmem:[%s12] sm:$0xff] %vm9921, %v9932
    // Predicated region
    $region74: #{conv_mnist_forward.1} parent=1 // pred_check
      _
    $region75: #{conv_mnist_forward.1} parent=1 // pred_check_branch
      %9935 = sbr.rel (0) target = $region77
    $region76: #{conv_mnist_forward.1} parent=1 // pred_region
      _
    $region77: #{conv_mnist_forward.1} parent=1 // pred_fallthru
      _
    // Predicated region
    $region78: #{conv_mnist_forward.1} parent=1 // pred_check
      _
    $region79: #{conv_mnist_forward.1} parent=1 // pred_check_branch
      %9937 = sbr.rel (0) target = $region81
    $region80: #{conv_mnist_forward.1} parent=1 // pred_region
      _
    $region81: #{conv_mnist_forward.1} parent=1 // pred_fallthru
      _
    %9938 = vsyncpa [#allocation3], 1
    %9939 = vsyncpa [#allocation5], 1
    %9940 = vsyncpa [#allocation8], 1
    %9941 = vsyncpa [#allocation11], 1

</llo_original>
